<compile_context>
chip_gen: v7x
topology: tpu7x:2x2x1
jax: 0.10.0
libtpu: 0.0.40
codegen_flags: <defaults>
</compile_context>

<pallas_src>
import functools

import numpy as np

import jax
import jax.numpy as jnp
from jax.experimental import pallas as pl
from jax.experimental.pallas import tpu as pltpu


# ------------------------------ fused kernel -------------------------------

def _fedavg_fused_kernel(x_ref, w1_ref, b1_ref, w2_ref, b2_ref,
                         wf1_ref, bf1_ref, wfc_ref, bfc_ref,
                         o_ref, z1_ref, *, B, H, W, K, C1, C2):
    f32 = jnp.float32
    Ho1, Wo1 = H - K + 1, W - K + 1            # conv1 output spatial (24, 24)
    Hp1, Wp1 = Ho1 // 2, Wo1 // 2              # after pool1            (12, 12)
    Ho2, Wo2 = Hp1 - K + 1, Wp1 - K + 1        # conv2 output spatial   (8, 8)
    Hp2, Wp2 = Ho2 // 2, Wo2 // 2              # after pool2            (4, 4)
    dim1 = wf1_ref.shape[1]

    # -------- conv1: accumulate K row-tap matmuls against Toeplitz weights --------
    y1 = jnp.zeros((B * Ho1, Wo1 * C1), f32)
    for di in range(K):
        patch = jnp.concatenate(
            [x_ref[pl.ds(b * H + di, Ho1), :] for b in range(B)], axis=0)
        y1 = y1 + jnp.dot(patch, w1_ref[di], preferred_element_type=f32)
    y1 = jnp.maximum(y1 + b1_ref[...], 0.0)            # [B*Ho1, Wo1*C1] (48, 768)

    # -------- maxpool 2x2 #1 (H via one-hot matmul, W via lane-half max) ----------
    ri = jax.lax.broadcasted_iota(jnp.int32, (B * Hp1, B * Ho1), 0)
    ci = jax.lax.broadcasted_iota(jnp.int32, (B * Hp1, B * Ho1), 1)
    a1 = jnp.maximum(
        jnp.dot((ci == 2 * ri).astype(f32), y1, preferred_element_type=f32),
        jnp.dot((ci == 2 * ri + 1).astype(f32), y1, preferred_element_type=f32))
    half1 = Wp1 * C1
    # conv1 lanes are (w parity, w//2, c): W-pool = max of the two 128-aligned halves
    z1_ref[...] = jnp.maximum(a1[:, :half1], a1[:, half1:])   # [B*Hp1, Wp1*C1]

    # -------- conv2 ----------------------------------------------------------------
    y2 = jnp.zeros((B * Ho2, Wo2 * C2), f32)
    for di in range(K):
        patch = jnp.concatenate(
            [z1_ref[pl.ds(b * Hp1 + di, Ho2), :] for b in range(B)], axis=0)
        y2 = y2 + jnp.dot(patch, w2_ref[di], preferred_element_type=f32)
    y2 = jnp.maximum(y2 + b2_ref[...], 0.0)            # [B*Ho2, Wo2*C2] (16, 512)

    # -------- maxpool 2x2 #2 -------------------------------------------------------
    ri2 = jax.lax.broadcasted_iota(jnp.int32, (B * Hp2, B * Ho2), 0)
    ci2 = jax.lax.broadcasted_iota(jnp.int32, (B * Hp2, B * Ho2), 1)
    a2 = jnp.maximum(
        jnp.dot((ci2 == 2 * ri2).astype(f32), y2, preferred_element_type=f32),
        jnp.dot((ci2 == 2 * ri2 + 1).astype(f32), y2, preferred_element_type=f32))
    half2 = Wp2 * C2
    z2 = jnp.maximum(a2[:, :half2], a2[:, half2:])     # [B*Hp2, Wp2*C2] (8, 256)

    # -------- fc1 (+ReLU) fused with fc ---------------------------------------------
    # For each pooled row hp2, gather the per-sample rows (b*Hp2 + hp2) with a tiny
    # one-hot matmul and accumulate against the matching 256-row block of wf1.
    gr = jax.lax.broadcasted_iota(jnp.int32, (B, B * Hp2), 0)
    gc = jax.lax.broadcasted_iota(jnp.int32, (B, B * Hp2), 1)
    acc = jnp.zeros((B, dim1), f32)
    for hp2 in range(Hp2):
        sel = (gc == gr * Hp2 + hp2).astype(f32)                    # [B, B*Hp2]
        rows = jnp.dot(sel, z2, preferred_element_type=f32)         # [B, Wp2*C2]
        acc = acc + jnp.dot(rows, wf1_ref[pl.ds(hp2 * half2, half2), :],
                            preferred_element_type=f32)
    h1 = jnp.maximum(acc + bf1_ref[...], 0.0)                       # [B, dim1]
    o_ref[...] = jnp.dot(h1, wfc_ref[...], preferred_element_type=f32) + bfc_ref[...]


# --------------------------- one-time parameter prep ------------------------

def _conv_toeplitz_pooled(w_oihw, w_in):
    """PyTorch conv weight [O, I, K, K] -> T[K, w_in*I, w_out*O].

    For kernel-row tap di:  out[(b,h2), col(w2, o)] += sum_{w, i}
        act[(b, h2+di), w*I + i] * T[di, w*I + i, col(w2, o)]
    with col(w2, o) = (w2 % 2) * (w_out//2 * O) + (w2 // 2) * O + o, i.e. the
    conv output columns come out parity-split so the 2x W max-pool is just a
    max of the two lane halves.
    """
    w_np = np.asarray(w_oihw, dtype=np.float32)
    O, I, K, _ = w_np.shape
    w_out = w_in - K + 1
    assert w_out % 2 == 0
    half = (w_out // 2) * O
    T = np.zeros((K, w_in * I, w_out * O), np.float32)
    for di in range(K):
        for dj in range(K):
            blk = w_np[:, :, di, dj].T                 # [I, O]
            for w2 in range(w_out):
                ws = w2 + dj
                col = (w2 % 2) * half + (w2 // 2) * O
                T[di, ws * I:(ws + 1) * I, col:col + O] = blk
    return T


def prepare_params(params, in_hw=(28, 28)):
    """Hoisted weight preprocessing (runs once, outside the forward pass)."""
    H, W = in_hw
    c1w = np.asarray(params["conv1_w"], np.float32)    # [C1, C0, K, K]
    c2w = np.asarray(params["conv2_w"], np.float32)    # [C2, C1, K, K]
    C1, _, K, _ = c1w.shape
    C2 = c2w.shape[0]
    Wo1 = W - K + 1
    Wp1 = Wo1 // 2
    Wo2 = Wp1 - K + 1
    Wp2 = Wo2 // 2
    Ho1 = H - K + 1
    Hp1 = Ho1 // 2
    Ho2 = Hp1 - K + 1
    Hp2 = Ho2 // 2

    w1t = _conv_toeplitz_pooled(c1w, W)                # [K, W*C0,   Wo1*C1]
    w2t = _conv_toeplitz_pooled(c2w, Wp1)              # [K, Wp1*C1, Wo2*C2]
    b1t = np.tile(np.asarray(params["conv1_b"], np.float32), Wo1)[None, :]
    b2t = np.tile(np.asarray(params["conv2_b"], np.float32), Wo2)[None, :]

    fc1_w = np.asarray(params["fc1_w"], np.float32)    # [dim1, dim] (torch: out, in)
    dim1 = fc1_w.shape[0]
    # torch.flatten of the NCHW conv output uses index c2*Hp2*Wp2 + h*Wp2 + w;
    # the kernel feeds fc1 in blocks ordered (hp2, wp2, c2).
    wf1 = (fc1_w.reshape(dim1, C2, Hp2, Wp2)
                 .transpose(2, 3, 1, 0)
                 .reshape(Hp2 * Wp2 * C2, dim1))
    bf1 = np.asarray(params["fc1_b"], np.float32)[None, :]
    wfc = np.asarray(params["fc_w"], np.float32).T     # [dim1, num_classes]
    bfc = np.asarray(params["fc_b"], np.float32)[None, :]

    to = lambda a: jnp.asarray(a, jnp.float32)
    return {"w1t": to(w1t), "b1t": to(b1t), "w2t": to(w2t), "b2t": to(b2t),
            "wf1": to(wf1), "bf1": to(bf1), "wfc": to(wfc), "bfc": to(bfc)}


def init_params(key, in_features=3, num_classes=10, dim=1024, dim1=512):
    """Deterministic PyTorch-default-style init (uniform +/- 1/sqrt(fan_in))."""
    def u(k, shape, fan_in):
        bound = 1.0 / float(fan_in) ** 0.5
        return jax.random.uniform(k, shape, jnp.float32, -bound, bound)

    ks = jax.random.split(key, 8)
    p = {}
    p["conv1_w"] = u(ks[0], (32, in_features, 5, 5), in_features * 25)
    p["conv1_b"] = u(ks[1], (32,), in_features * 25)
    p["conv2_w"] = u(ks[2], (64, 32, 5, 5), 32 * 25)
    p["conv2_b"] = u(ks[3], (64,), 32 * 25)
    p["fc1_w"] = u(ks[4], (dim1, dim), dim)            # PyTorch Linear: (out, in)
    p["fc1_b"] = u(ks[5], (dim1,), dim)
    p["fc_w"] = u(ks[6], (num_classes, dim1), dim1)
    p["fc_b"] = u(ks[7], (num_classes,), dim1)
    return p


# --------------------------------- forward ----------------------------------

def fedavg_cnn_forward(x_nchw, prep):
    """Forward pass equivalent to FedAvgCNN.forward. x_nchw: [B, C, H, W] f32."""
    B, C0, H, W = x_nchw.shape
    w1t, w2t = prep["w1t"], prep["w2t"]
    K = w1t.shape[0]
    Ho1, Wo1 = H - K + 1, W - K + 1
    Hp1, Wp1 = Ho1 // 2, Wo1 // 2
    Ho2, Wo2 = Hp1 - K + 1, Wp1 - K + 1
    C1 = w1t.shape[2] // Wo1
    C2 = w2t.shape[2] // Wo2
    ncls = prep["wfc"].shape[1]

    # NCHW -> channels-last "row of pixels" layout [B*H, W*C0] (tiny XLA glue on
    # the 18 KB input only; everything else happens inside the single kernel).
    x2d = jnp.transpose(x_nchw, (0, 2, 3, 1)).reshape(B * H, W * C0)

    kernel = functools.partial(_fedavg_fused_kernel,
                               B=B, H=H, W=W, K=K, C1=C1, C2=C2)
    vmem = pl.BlockSpec(memory_space=pltpu.MemorySpace.VMEM)
    return pl.pallas_call(
        kernel,
        out_shape=jax.ShapeDtypeStruct((B, ncls), jnp.float32),
        in_specs=[vmem] * 9,
        out_specs=vmem,
        scratch_shapes=[pltpu.VMEM((B * Hp1, Wp1 * C1), jnp.float32)],
        compiler_params=pltpu.CompilerParams(vmem_limit_bytes=32 * 1024 * 1024),
    )(x2d, prep["w1t"], prep["b1t"], prep["w2t"], prep["b2t"],
      prep["wf1"], prep["bf1"], prep["wfc"], prep["bfc"])


# ----------------------------------- main ------------------------------------

if __name__ == "__main__":
    key = jax.random.PRNGKey(0)
    k_params, k_x = jax.random.split(key)

    # With in_features=3 and a 28x28 input, the flattened conv output is
    # 64 * 4 * 4 = 1024, matching the module's default dim=1024.
    B, C, H, W = 2, 3, 28, 28
    x = jax.random.normal(k_x, (B, C, H, W), jnp.float32)

    params = init_params(k_params, in_features=C, num_classes=10, dim=1024, dim1=512)
    prep = prepare_params(params, in_hw=(H, W))       # one-time weight packing

    fwd = jax.jit(fedavg_cnn_forward)
    out = fwd(x, prep)
    out = jax.block_until_ready(out)
    assert out.shape == (B, 10), out.shape
    print("KERNEL_OK")
</pallas_src>

<mosaic_0001>
module attributes {stable_mosaic.version = 11 : i64} {
  func.func @_fedavg_fused_kernel(%arg0: memref<56x84xf32, #tpu.memory_space<vmem>>, %arg1: memref<5x84x768xf32, #tpu.memory_space<vmem>>, %arg2: memref<1x768xf32, #tpu.memory_space<vmem>>, %arg3: memref<5x384x512xf32, #tpu.memory_space<vmem>>, %arg4: memref<1x512xf32, #tpu.memory_space<vmem>>, %arg5: memref<1024x512xf32, #tpu.memory_space<vmem>>, %arg6: memref<1x512xf32, #tpu.memory_space<vmem>>, %arg7: memref<512x10xf32, #tpu.memory_space<vmem>>, %arg8: memref<1x10xf32, #tpu.memory_space<vmem>>, %arg9: memref<2x10xf32, #tpu.memory_space<vmem>>, %arg10: memref<24x384xf32, #tpu.memory_space<vmem>>) attributes {dimension_semantics = [], scalar_prefetch = 0 : i64, scratch_operands = 1 : i64, tpu.core_type = #tpu.core_type<tc>} {
    %cst = arith.constant 0.000000e+00 : f32
    %0 = vector.broadcast %cst : f32 to vector<48x768xf32>
    %c0 = arith.constant 0 : index
    %c0_0 = arith.constant 0 : index
    %1 = vector.load %arg0[%c0, %c0_0] : memref<56x84xf32, #tpu.memory_space<vmem>>, vector<24x84xf32>
    %c28 = arith.constant 28 : index
    %c0_1 = arith.constant 0 : index
    %2 = vector.load %arg0[%c28, %c0_1] : memref<56x84xf32, #tpu.memory_space<vmem>>, vector<24x84xf32>
    %3 = tpu.concatenate %1, %2 in 0 : vector<24x84xf32>, vector<24x84xf32> -> vector<48x84xf32>
    %c0_2 = arith.constant 0 : index
    %c0_3 = arith.constant 0 : index
    %c0_4 = arith.constant 0 : index
    %4 = vector.load %arg1[%c0_2, %c0_3, %c0_4] : memref<5x84x768xf32, #tpu.memory_space<vmem>>, vector<1x84x768xf32>
    %5 = vector.shape_cast %4 : vector<1x84x768xf32> to vector<84x768xf32>
    %cst_5 = arith.constant dense<0.000000e+00> : vector<48x768xf32>
    %6 = tpu.matmul %3, %5, %cst_5 {dimension_numbers = #tpu.dot_dimension_numbers<[1], [0], [0], [1], [0, 0, 1, 1], [], []>} : vector<48x84xf32>, vector<84x768xf32>, vector<48x768xf32> -> vector<48x768xf32>
    %7 = arith.addf %0, %6 : vector<48x768xf32>
    %c1 = arith.constant 1 : index
    %c0_6 = arith.constant 0 : index
    %8 = vector.load %arg0[%c1, %c0_6] : memref<56x84xf32, #tpu.memory_space<vmem>>, vector<24x84xf32>
    %c29 = arith.constant 29 : index
    %c0_7 = arith.constant 0 : index
    %9 = vector.load %arg0[%c29, %c0_7] : memref<56x84xf32, #tpu.memory_space<vmem>>, vector<24x84xf32>
    %10 = tpu.concatenate %8, %9 in 0 : vector<24x84xf32>, vector<24x84xf32> -> vector<48x84xf32>
    %c1_8 = arith.constant 1 : index
    %c0_9 = arith.constant 0 : index
    %c0_10 = arith.constant 0 : index
    %11 = vector.load %arg1[%c1_8, %c0_9, %c0_10] : memref<5x84x768xf32, #tpu.memory_space<vmem>>, vector<1x84x768xf32>
    %12 = vector.shape_cast %11 : vector<1x84x768xf32> to vector<84x768xf32>
    %cst_11 = arith.constant dense<0.000000e+00> : vector<48x768xf32>
    %13 = tpu.matmul %10, %12, %cst_11 {dimension_numbers = #tpu.dot_dimension_numbers<[1], [0], [0], [1], [0, 0, 1, 1], [], []>} : vector<48x84xf32>, vector<84x768xf32>, vector<48x768xf32> -> vector<48x768xf32>
    %14 = arith.addf %7, %13 : vector<48x768xf32>
    %c2 = arith.constant 2 : index
    %c0_12 = arith.constant 0 : index
    %15 = vector.load %arg0[%c2, %c0_12] : memref<56x84xf32, #tpu.memory_space<vmem>>, vector<24x84xf32>
    %c30 = arith.constant 30 : index
    %c0_13 = arith.constant 0 : index
    %16 = vector.load %arg0[%c30, %c0_13] : memref<56x84xf32, #tpu.memory_space<vmem>>, vector<24x84xf32>
    %17 = tpu.concatenate %15, %16 in 0 : vector<24x84xf32>, vector<24x84xf32> -> vector<48x84xf32>
    %c2_14 = arith.constant 2 : index
    %c0_15 = arith.constant 0 : index
    %c0_16 = arith.constant 0 : index
    %18 = vector.load %arg1[%c2_14, %c0_15, %c0_16] : memref<5x84x768xf32, #tpu.memory_space<vmem>>, vector<1x84x768xf32>
    %19 = vector.shape_cast %18 : vector<1x84x768xf32> to vector<84x768xf32>
    %cst_17 = arith.constant dense<0.000000e+00> : vector<48x768xf32>
    %20 = tpu.matmul %17, %19, %cst_17 {dimension_numbers = #tpu.dot_dimension_numbers<[1], [0], [0], [1], [0, 0, 1, 1], [], []>} : vector<48x84xf32>, vector<84x768xf32>, vector<48x768xf32> -> vector<48x768xf32>
    %21 = arith.addf %14, %20 : vector<48x768xf32>
    %c3 = arith.constant 3 : index
    %c0_18 = arith.constant 0 : index
    %22 = vector.load %arg0[%c3, %c0_18] : memref<56x84xf32, #tpu.memory_space<vmem>>, vector<24x84xf32>
    %c31 = arith.constant 31 : index
    %c0_19 = arith.constant 0 : index
    %23 = vector.load %arg0[%c31, %c0_19] : memref<56x84xf32, #tpu.memory_space<vmem>>, vector<24x84xf32>
    %24 = tpu.concatenate %22, %23 in 0 : vector<24x84xf32>, vector<24x84xf32> -> vector<48x84xf32>
    %c3_20 = arith.constant 3 : index
    %c0_21 = arith.constant 0 : index
    %c0_22 = arith.constant 0 : index
    %25 = vector.load %arg1[%c3_20, %c0_21, %c0_22] : memref<5x84x768xf32, #tpu.memory_space<vmem>>, vector<1x84x768xf32>
    %26 = vector.shape_cast %25 : vector<1x84x768xf32> to vector<84x768xf32>
    %cst_23 = arith.constant dense<0.000000e+00> : vector<48x768xf32>
    %27 = tpu.matmul %24, %26, %cst_23 {dimension_numbers = #tpu.dot_dimension_numbers<[1], [0], [0], [1], [0, 0, 1, 1], [], []>} : vector<48x84xf32>, vector<84x768xf32>, vector<48x768xf32> -> vector<48x768xf32>
    %28 = arith.addf %21, %27 : vector<48x768xf32>
    %c4 = arith.constant 4 : index
    %c0_24 = arith.constant 0 : index
    %29 = vector.load %arg0[%c4, %c0_24] : memref<56x84xf32, #tpu.memory_space<vmem>>, vector<24x84xf32>
    %c32 = arith.constant 32 : index
    %c0_25 = arith.constant 0 : index
    %30 = vector.load %arg0[%c32, %c0_25] : memref<56x84xf32, #tpu.memory_space<vmem>>, vector<24x84xf32>
    %31 = tpu.concatenate %29, %30 in 0 : vector<24x84xf32>, vector<24x84xf32> -> vector<48x84xf32>
    %c4_26 = arith.constant 4 : index
    %c0_27 = arith.constant 0 : index
    %c0_28 = arith.constant 0 : index
    %32 = vector.load %arg1[%c4_26, %c0_27, %c0_28] : memref<5x84x768xf32, #tpu.memory_space<vmem>>, vector<1x84x768xf32>
    %33 = vector.shape_cast %32 : vector<1x84x768xf32> to vector<84x768xf32>
    %cst_29 = arith.constant dense<0.000000e+00> : vector<48x768xf32>
    %34 = tpu.matmul %31, %33, %cst_29 {dimension_numbers = #tpu.dot_dimension_numbers<[1], [0], [0], [1], [0, 0, 1, 1], [], []>} : vector<48x84xf32>, vector<84x768xf32>, vector<48x768xf32> -> vector<48x768xf32>
    %35 = arith.addf %28, %34 : vector<48x768xf32>
    %c0_30 = arith.constant 0 : index
    %c0_31 = arith.constant 0 : index
    %36 = vector.load %arg2[%c0_30, %c0_31] : memref<1x768xf32, #tpu.memory_space<vmem>>, vector<1x768xf32>
    %37 = vector.broadcast %36 : vector<1x768xf32> to vector<48x768xf32>
    %38 = arith.addf %35, %37 : vector<48x768xf32>
    %cst_32 = arith.constant 0.000000e+00 : f32
    %39 = vector.broadcast %cst_32 : f32 to vector<48x768xf32>
    %40 = arith.maximumf %38, %39 : vector<48x768xf32>
    %41 = tpu.iota {dimensions = array<i32: 0>} : vector<24x48xi32>
    %42 = tpu.iota {dimensions = array<i32: 1>} : vector<24x48xi32>
    %c2_i32 = arith.constant 2 : i32
    %43 = vector.broadcast %c2_i32 : i32 to vector<24x48xi32>
    %44 = arith.muli %43, %41 : vector<24x48xi32>
    %45 = arith.cmpi eq, %42, %44 : vector<24x48xi32>
    %46 = arith.extui %45 : vector<24x48xi1> to vector<24x48xi32>
    %47 = arith.sitofp %46 : vector<24x48xi32> to vector<24x48xf32>
    %cst_33 = arith.constant dense<0.000000e+00> : vector<24x768xf32>
    %48 = tpu.matmul %47, %40, %cst_33 {dimension_numbers = #tpu.dot_dimension_numbers<[1], [0], [0], [1], [0, 0, 1, 1], [], []>} : vector<24x48xf32>, vector<48x768xf32>, vector<24x768xf32> -> vector<24x768xf32>
    %c2_i32_34 = arith.constant 2 : i32
    %49 = vector.broadcast %c2_i32_34 : i32 to vector<24x48xi32>
    %50 = arith.muli %49, %41 : vector<24x48xi32>
    %c1_i32 = arith.constant 1 : i32
    %51 = vector.broadcast %c1_i32 : i32 to vector<24x48xi32>
    %52 = arith.addi %50, %51 : vector<24x48xi32>
    %53 = arith.cmpi eq, %42, %52 : vector<24x48xi32>
    %54 = arith.extui %53 : vector<24x48xi1> to vector<24x48xi32>
    %55 = arith.sitofp %54 : vector<24x48xi32> to vector<24x48xf32>
    %cst_35 = arith.constant dense<0.000000e+00> : vector<24x768xf32>
    %56 = tpu.matmul %55, %40, %cst_35 {dimension_numbers = #tpu.dot_dimension_numbers<[1], [0], [0], [1], [0, 0, 1, 1], [], []>} : vector<24x48xf32>, vector<48x768xf32>, vector<24x768xf32> -> vector<24x768xf32>
    %57 = arith.maximumf %48, %56 : vector<24x768xf32>
    %58 = vector.extract_strided_slice %57 {offsets = [0, 0], sizes = [24, 384], strides = [1, 1]} : vector<24x768xf32> to vector<24x384xf32>
    %59 = vector.extract_strided_slice %57 {offsets = [0, 384], sizes = [24, 384], strides = [1, 1]} : vector<24x768xf32> to vector<24x384xf32>
    %60 = arith.maximumf %58, %59 : vector<24x384xf32>
    %c0_36 = arith.constant 0 : index
    %c0_37 = arith.constant 0 : index
    %61 = vector.load %arg10[%c0_36, %c0_37] : memref<24x384xf32, #tpu.memory_space<vmem>>, vector<24x384xf32>
    tpu.vector_store %arg10[%c0_36, %c0_37], %60 {strides = array<i32>} : memref<24x384xf32, #tpu.memory_space<vmem>>, vector<24x384xf32>,
    %cst_38 = arith.constant 0.000000e+00 : f32
    %62 = vector.broadcast %cst_38 : f32 to vector<16x512xf32>
    %c0_39 = arith.constant 0 : index
    %c0_40 = arith.constant 0 : index
    %63 = vector.load %arg10[%c0_39, %c0_40] : memref<24x384xf32, #tpu.memory_space<vmem>>, vector<8x384xf32>
    %c12 = arith.constant 12 : index
    %c0_41 = arith.constant 0 : index
    %64 = vector.load %arg10[%c12, %c0_41] : memref<24x384xf32, #tpu.memory_space<vmem>>, vector<8x384xf32>
    %65 = tpu.concatenate %63, %64 in 0 : vector<8x384xf32>, vector<8x384xf32> -> vector<16x384xf32>
    %c0_42 = arith.constant 0 : index
    %c0_43 = arith.constant 0 : index
    %c0_44 = arith.constant 0 : index
    %66 = vector.load %arg3[%c0_42, %c0_43, %c0_44] : memref<5x384x512xf32, #tpu.memory_space<vmem>>, vector<1x384x512xf32>
    %67 = vector.shape_cast %66 : vector<1x384x512xf32> to vector<384x512xf32>
    %cst_45 = arith.constant dense<0.000000e+00> : vector<16x512xf32>
    %68 = tpu.matmul %65, %67, %cst_45 {dimension_numbers = #tpu.dot_dimension_numbers<[1], [0], [0], [1], [0, 0, 1, 1], [], []>} : vector<16x384xf32>, vector<384x512xf32>, vector<16x512xf32> -> vector<16x512xf32>
    %69 = arith.addf %62, %68 : vector<16x512xf32>
    %c1_46 = arith.constant 1 : index
    %c0_47 = arith.constant 0 : index
    %70 = vector.load %arg10[%c1_46, %c0_47] : memref<24x384xf32, #tpu.memory_space<vmem>>, vector<8x384xf32>
    %c13 = arith.constant 13 : index
    %c0_48 = arith.constant 0 : index
    %71 = vector.load %arg10[%c13, %c0_48] : memref<24x384xf32, #tpu.memory_space<vmem>>, vector<8x384xf32>
    %72 = tpu.concatenate %70, %71 in 0 : vector<8x384xf32>, vector<8x384xf32> -> vector<16x384xf32>
    %c1_49 = arith.constant 1 : index
    %c0_50 = arith.constant 0 : index
    %c0_51 = arith.constant 0 : index
    %73 = vector.load %arg3[%c1_49, %c0_50, %c0_51] : memref<5x384x512xf32, #tpu.memory_space<vmem>>, vector<1x384x512xf32>
    %74 = vector.shape_cast %73 : vector<1x384x512xf32> to vector<384x512xf32>
    %cst_52 = arith.constant dense<0.000000e+00> : vector<16x512xf32>
    %75 = tpu.matmul %72, %74, %cst_52 {dimension_numbers = #tpu.dot_dimension_numbers<[1], [0], [0], [1], [0, 0, 1, 1], [], []>} : vector<16x384xf32>, vector<384x512xf32>, vector<16x512xf32> -> vector<16x512xf32>
    %76 = arith.addf %69, %75 : vector<16x512xf32>
    %c2_53 = arith.constant 2 : index
    %c0_54 = arith.constant 0 : index
    %77 = vector.load %arg10[%c2_53, %c0_54] : memref<24x384xf32, #tpu.memory_space<vmem>>, vector<8x384xf32>
    %c14 = arith.constant 14 : index
    %c0_55 = arith.constant 0 : index
    %78 = vector.load %arg10[%c14, %c0_55] : memref<24x384xf32, #tpu.memory_space<vmem>>, vector<8x384xf32>
    %79 = tpu.concatenate %77, %78 in 0 : vector<8x384xf32>, vector<8x384xf32> -> vector<16x384xf32>
    %c2_56 = arith.constant 2 : index
    %c0_57 = arith.constant 0 : index
    %c0_58 = arith.constant 0 : index
    %80 = vector.load %arg3[%c2_56, %c0_57, %c0_58] : memref<5x384x512xf32, #tpu.memory_space<vmem>>, vector<1x384x512xf32>
    %81 = vector.shape_cast %80 : vector<1x384x512xf32> to vector<384x512xf32>
    %cst_59 = arith.constant dense<0.000000e+00> : vector<16x512xf32>
    %82 = tpu.matmul %79, %81, %cst_59 {dimension_numbers = #tpu.dot_dimension_numbers<[1], [0], [0], [1], [0, 0, 1, 1], [], []>} : vector<16x384xf32>, vector<384x512xf32>, vector<16x512xf32> -> vector<16x512xf32>
    %83 = arith.addf %76, %82 : vector<16x512xf32>
    %c3_60 = arith.constant 3 : index
    %c0_61 = arith.constant 0 : index
    %84 = vector.load %arg10[%c3_60, %c0_61] : memref<24x384xf32, #tpu.memory_space<vmem>>, vector<8x384xf32>
    %c15 = arith.constant 15 : index
    %c0_62 = arith.constant 0 : index
    %85 = vector.load %arg10[%c15, %c0_62] : memref<24x384xf32, #tpu.memory_space<vmem>>, vector<8x384xf32>
    %86 = tpu.concatenate %84, %85 in 0 : vector<8x384xf32>, vector<8x384xf32> -> vector<16x384xf32>
    %c3_63 = arith.constant 3 : index
    %c0_64 = arith.constant 0 : index
    %c0_65 = arith.constant 0 : index
    %87 = vector.load %arg3[%c3_63, %c0_64, %c0_65] : memref<5x384x512xf32, #tpu.memory_space<vmem>>, vector<1x384x512xf32>
    %88 = vector.shape_cast %87 : vector<1x384x512xf32> to vector<384x512xf32>
    %cst_66 = arith.constant dense<0.000000e+00> : vector<16x512xf32>
    %89 = tpu.matmul %86, %88, %cst_66 {dimension_numbers = #tpu.dot_dimension_numbers<[1], [0], [0], [1], [0, 0, 1, 1], [], []>} : vector<16x384xf32>, vector<384x512xf32>, vector<16x512xf32> -> vector<16x512xf32>
    %90 = arith.addf %83, %89 : vector<16x512xf32>
    %c4_67 = arith.constant 4 : index
    %c0_68 = arith.constant 0 : index
    %91 = vector.load %arg10[%c4_67, %c0_68] : memref<24x384xf32, #tpu.memory_space<vmem>>, vector<8x384xf32>
    %c16 = arith.constant 16 : index
    %c0_69 = arith.constant 0 : index
    %92 = vector.load %arg10[%c16, %c0_69] : memref<24x384xf32, #tpu.memory_space<vmem>>, vector<8x384xf32>
    %93 = tpu.concatenate %91, %92 in 0 : vector<8x384xf32>, vector<8x384xf32> -> vector<16x384xf32>
    %c4_70 = arith.constant 4 : index
    %c0_71 = arith.constant 0 : index
    %c0_72 = arith.constant 0 : index
    %94 = vector.load %arg3[%c4_70, %c0_71, %c0_72] : memref<5x384x512xf32, #tpu.memory_space<vmem>>, vector<1x384x512xf32>
    %95 = vector.shape_cast %94 : vector<1x384x512xf32> to vector<384x512xf32>
    %cst_73 = arith.constant dense<0.000000e+00> : vector<16x512xf32>
    %96 = tpu.matmul %93, %95, %cst_73 {dimension_numbers = #tpu.dot_dimension_numbers<[1], [0], [0], [1], [0, 0, 1, 1], [], []>} : vector<16x384xf32>, vector<384x512xf32>, vector<16x512xf32> -> vector<16x512xf32>
    %97 = arith.addf %90, %96 : vector<16x512xf32>
    %c0_74 = arith.constant 0 : index
    %c0_75 = arith.constant 0 : index
    %98 = vector.load %arg4[%c0_74, %c0_75] : memref<1x512xf32, #tpu.memory_space<vmem>>, vector<1x512xf32>
    %99 = vector.broadcast %98 : vector<1x512xf32> to vector<16x512xf32>
    %100 = arith.addf %97, %99 : vector<16x512xf32>
    %cst_76 = arith.constant 0.000000e+00 : f32
    %101 = vector.broadcast %cst_76 : f32 to vector<16x512xf32>
    %102 = arith.maximumf %100, %101 : vector<16x512xf32>
    %103 = tpu.iota {dimensions = array<i32: 0>} : vector<8x16xi32>
    %104 = tpu.iota {dimensions = array<i32: 1>} : vector<8x16xi32>
    %c2_i32_77 = arith.constant 2 : i32
    %105 = vector.broadcast %c2_i32_77 : i32 to vector<8x16xi32>
    %106 = arith.muli %105, %103 : vector<8x16xi32>
    %107 = arith.cmpi eq, %104, %106 : vector<8x16xi32>
    %108 = arith.extui %107 : vector<8x16xi1> to vector<8x16xi32>
    %109 = arith.sitofp %108 : vector<8x16xi32> to vector<8x16xf32>
    %cst_78 = arith.constant dense<0.000000e+00> : vector<8x512xf32>
    %110 = tpu.matmul %109, %102, %cst_78 {dimension_numbers = #tpu.dot_dimension_numbers<[1], [0], [0], [1], [0, 0, 1, 1], [], []>} : vector<8x16xf32>, vector<16x512xf32>, vector<8x512xf32> -> vector<8x512xf32>
    %c2_i32_79 = arith.constant 2 : i32
    %111 = vector.broadcast %c2_i32_79 : i32 to vector<8x16xi32>
    %112 = arith.muli %111, %103 : vector<8x16xi32>
    %c1_i32_80 = arith.constant 1 : i32
    %113 = vector.broadcast %c1_i32_80 : i32 to vector<8x16xi32>
    %114 = arith.addi %112, %113 : vector<8x16xi32>
    %115 = arith.cmpi eq, %104, %114 : vector<8x16xi32>
    %116 = arith.extui %115 : vector<8x16xi1> to vector<8x16xi32>
    %117 = arith.sitofp %116 : vector<8x16xi32> to vector<8x16xf32>
    %cst_81 = arith.constant dense<0.000000e+00> : vector<8x512xf32>
    %118 = tpu.matmul %117, %102, %cst_81 {dimension_numbers = #tpu.dot_dimension_numbers<[1], [0], [0], [1], [0, 0, 1, 1], [], []>} : vector<8x16xf32>, vector<16x512xf32>, vector<8x512xf32> -> vector<8x512xf32>
    %119 = arith.maximumf %110, %118 : vector<8x512xf32>
    %120 = vector.extract_strided_slice %119 {offsets = [0, 0], sizes = [8, 256], strides = [1, 1]} : vector<8x512xf32> to vector<8x256xf32>
    %121 = vector.extract_strided_slice %119 {offsets = [0, 256], sizes = [8, 256], strides = [1, 1]} : vector<8x512xf32> to vector<8x256xf32>
    %122 = arith.maximumf %120, %121 : vector<8x256xf32>
    %123 = tpu.iota {dimensions = array<i32: 0>} : vector<2x8xi32>
    %124 = tpu.iota {dimensions = array<i32: 1>} : vector<2x8xi32>
    %cst_82 = arith.constant 0.000000e+00 : f32
    %125 = vector.broadcast %cst_82 : f32 to vector<2x512xf32>
    %c4_i32 = arith.constant 4 : i32
    %126 = vector.broadcast %c4_i32 : i32 to vector<2x8xi32>
    %127 = arith.muli %123, %126 : vector<2x8xi32>
    %c0_i32 = arith.constant 0 : i32
    %128 = vector.broadcast %c0_i32 : i32 to vector<2x8xi32>
    %129 = arith.addi %127, %128 : vector<2x8xi32>
    %130 = arith.cmpi eq, %124, %129 : vector<2x8xi32>
    %131 = arith.extui %130 : vector<2x8xi1> to vector<2x8xi32>
    %132 = arith.sitofp %131 : vector<2x8xi32> to vector<2x8xf32>
    %cst_83 = arith.constant dense<0.000000e+00> : vector<2x256xf32>
    %133 = tpu.matmul %132, %122, %cst_83 {dimension_numbers = #tpu.dot_dimension_numbers<[1], [0], [0], [1], [0, 0, 1, 1], [], []>} : vector<2x8xf32>, vector<8x256xf32>, vector<2x256xf32> -> vector<2x256xf32>
    %c0_84 = arith.constant 0 : index
    %c0_85 = arith.constant 0 : index
    %134 = vector.load %arg5[%c0_84, %c0_85] : memref<1024x512xf32, #tpu.memory_space<vmem>>, vector<256x512xf32>
    %cst_86 = arith.constant dense<0.000000e+00> : vector<2x512xf32>
    %135 = tpu.matmul %133, %134, %cst_86 {dimension_numbers = #tpu.dot_dimension_numbers<[1], [0], [0], [1], [0, 0, 1, 1], [], []>} : vector<2x256xf32>, vector<256x512xf32>, vector<2x512xf32> -> vector<2x512xf32>
    %136 = arith.addf %125, %135 : vector<2x512xf32>
    %c4_i32_87 = arith.constant 4 : i32
    %137 = vector.broadcast %c4_i32_87 : i32 to vector<2x8xi32>
    %138 = arith.muli %123, %137 : vector<2x8xi32>
    %c1_i32_88 = arith.constant 1 : i32
    %139 = vector.broadcast %c1_i32_88 : i32 to vector<2x8xi32>
    %140 = arith.addi %138, %139 : vector<2x8xi32>
    %141 = arith.cmpi eq, %124, %140 : vector<2x8xi32>
    %142 = arith.extui %141 : vector<2x8xi1> to vector<2x8xi32>
    %143 = arith.sitofp %142 : vector<2x8xi32> to vector<2x8xf32>
    %cst_89 = arith.constant dense<0.000000e+00> : vector<2x256xf32>
    %144 = tpu.matmul %143, %122, %cst_89 {dimension_numbers = #tpu.dot_dimension_numbers<[1], [0], [0], [1], [0, 0, 1, 1], [], []>} : vector<2x8xf32>, vector<8x256xf32>, vector<2x256xf32> -> vector<2x256xf32>
    %c256 = arith.constant 256 : index
    %c0_90 = arith.constant 0 : index
    %145 = vector.load %arg5[%c256, %c0_90] : memref<1024x512xf32, #tpu.memory_space<vmem>>, vector<256x512xf32>
    %cst_91 = arith.constant dense<0.000000e+00> : vector<2x512xf32>
    %146 = tpu.matmul %144, %145, %cst_91 {dimension_numbers = #tpu.dot_dimension_numbers<[1], [0], [0], [1], [0, 0, 1, 1], [], []>} : vector<2x256xf32>, vector<256x512xf32>, vector<2x512xf32> -> vector<2x512xf32>
    %147 = arith.addf %136, %146 : vector<2x512xf32>
    %c4_i32_92 = arith.constant 4 : i32
    %148 = vector.broadcast %c4_i32_92 : i32 to vector<2x8xi32>
    %149 = arith.muli %123, %148 : vector<2x8xi32>
    %c2_i32_93 = arith.constant 2 : i32
    %150 = vector.broadcast %c2_i32_93 : i32 to vector<2x8xi32>
    %151 = arith.addi %149, %150 : vector<2x8xi32>
    %152 = arith.cmpi eq, %124, %151 : vector<2x8xi32>
    %153 = arith.extui %152 : vector<2x8xi1> to vector<2x8xi32>
    %154 = arith.sitofp %153 : vector<2x8xi32> to vector<2x8xf32>
    %cst_94 = arith.constant dense<0.000000e+00> : vector<2x256xf32>
    %155 = tpu.matmul %154, %122, %cst_94 {dimension_numbers = #tpu.dot_dimension_numbers<[1], [0], [0], [1], [0, 0, 1, 1], [], []>} : vector<2x8xf32>, vector<8x256xf32>, vector<2x256xf32> -> vector<2x256xf32>
    %c512 = arith.constant 512 : index
    %c0_95 = arith.constant 0 : index
    %156 = vector.load %arg5[%c512, %c0_95] : memref<1024x512xf32, #tpu.memory_space<vmem>>, vector<256x512xf32>
    %cst_96 = arith.constant dense<0.000000e+00> : vector<2x512xf32>
    %157 = tpu.matmul %155, %156, %cst_96 {dimension_numbers = #tpu.dot_dimension_numbers<[1], [0], [0], [1], [0, 0, 1, 1], [], []>} : vector<2x256xf32>, vector<256x512xf32>, vector<2x512xf32> -> vector<2x512xf32>
    %158 = arith.addf %147, %157 : vector<2x512xf32>
    %c4_i32_97 = arith.constant 4 : i32
    %159 = vector.broadcast %c4_i32_97 : i32 to vector<2x8xi32>
    %160 = arith.muli %123, %159 : vector<2x8xi32>
    %c3_i32 = arith.constant 3 : i32
    %161 = vector.broadcast %c3_i32 : i32 to vector<2x8xi32>
    %162 = arith.addi %160, %161 : vector<2x8xi32>
    %163 = arith.cmpi eq, %124, %162 : vector<2x8xi32>
    %164 = arith.extui %163 : vector<2x8xi1> to vector<2x8xi32>
    %165 = arith.sitofp %164 : vector<2x8xi32> to vector<2x8xf32>
    %cst_98 = arith.constant dense<0.000000e+00> : vector<2x256xf32>
    %166 = tpu.matmul %165, %122, %cst_98 {dimension_numbers = #tpu.dot_dimension_numbers<[1], [0], [0], [1], [0, 0, 1, 1], [], []>} : vector<2x8xf32>, vector<8x256xf32>, vector<2x256xf32> -> vector<2x256xf32>
    %c768 = arith.constant 768 : index
    %c0_99 = arith.constant 0 : index
    %167 = vector.load %arg5[%c768, %c0_99] : memref<1024x512xf32, #tpu.memory_space<vmem>>, vector<256x512xf32>
    %cst_100 = arith.constant dense<0.000000e+00> : vector<2x512xf32>
    %168 = tpu.matmul %166, %167, %cst_100 {dimension_numbers = #tpu.dot_dimension_numbers<[1], [0], [0], [1], [0, 0, 1, 1], [], []>} : vector<2x256xf32>, vector<256x512xf32>, vector<2x512xf32> -> vector<2x512xf32>
    %169 = arith.addf %158, %168 : vector<2x512xf32>
    %c0_101 = arith.constant 0 : index
    %c0_102 = arith.constant 0 : index
    %170 = vector.load %arg6[%c0_101, %c0_102] : memref<1x512xf32, #tpu.memory_space<vmem>>, vector<1x512xf32>
    %171 = vector.broadcast %170 : vector<1x512xf32> to vector<2x512xf32>
    %172 = arith.addf %169, %171 : vector<2x512xf32>
    %cst_103 = arith.constant 0.000000e+00 : f32
    %173 = vector.broadcast %cst_103 : f32 to vector<2x512xf32>
    %174 = arith.maximumf %172, %173 : vector<2x512xf32>
    %c0_104 = arith.constant 0 : index
    %c0_105 = arith.constant 0 : index
    %175 = vector.load %arg7[%c0_104, %c0_105] : memref<512x10xf32, #tpu.memory_space<vmem>>, vector<512x10xf32>
    %cst_106 = arith.constant dense<0.000000e+00> : vector<2x10xf32>
    %176 = tpu.matmul %174, %175, %cst_106 {dimension_numbers = #tpu.dot_dimension_numbers<[1], [0], [0], [1], [0, 0, 1, 1], [], []>} : vector<2x512xf32>, vector<512x10xf32>, vector<2x10xf32> -> vector<2x10xf32>
    %c0_107 = arith.constant 0 : index
    %c0_108 = arith.constant 0 : index
    %177 = vector.load %arg8[%c0_107, %c0_108] : memref<1x10xf32, #tpu.memory_space<vmem>>, vector<1x10xf32>
    %178 = vector.broadcast %177 : vector<1x10xf32> to vector<2x10xf32>
    %179 = arith.addf %176, %178 : vector<2x10xf32>
    %c0_109 = arith.constant 0 : index
    %c0_110 = arith.constant 0 : index
    %180 = vector.load %arg9[%c0_109, %c0_110] : memref<2x10xf32, #tpu.memory_space<vmem>>, vector<2x10xf32>
    tpu.vector_store %arg9[%c0_109, %c0_110], %179 {strides = array<i32>} : memref<2x10xf32, #tpu.memory_space<vmem>>, vector<2x10xf32>,
    return
  }
}

</mosaic_0001>

<llo_original>
// kernel: fedavg_cnn_forward.1
$region0: #{fedavg_cnn_forward.1}
  #allocation0 [shape = 'u32[]', space=smem, size = 0x4, offset = 0x4, fixed_abs, tag = 'smem constant byte address 0x4 - core index']
  #allocation1 [shape = 'u32[144,128]{1,0:T(1,128)}', space=vmem, size = 0x12000, scoped, tag = 'internal scratch']
  #allocation2 [shape = 'f32[24,384]{1,0:T(8,128)}', space=vmem, size = 0x9000, scoped, tag = 'scratch operand']
  %s0 = inlined_call_operand.vmem [shape: f32[56,84], index: 0, kind: input, shape index: {}]
  %s1 = inlined_call_operand.hbm [shape: f32[5,84,768], index: 1, kind: input, shape index: {}]
  %s2 = inlined_call_operand.hbm [shape: f32[1,768], index: 2, kind: input, shape index: {}]
  %s3 = inlined_call_operand.hbm [shape: f32[5,384,512], index: 3, kind: input, shape index: {}]
  %s4 = inlined_call_operand.hbm [shape: f32[1,512], index: 4, kind: input, shape index: {}]
  %s5 = inlined_call_operand.hbm [shape: f32[1024,512], index: 5, kind: input, shape index: {}]
  %s6 = inlined_call_operand.hbm [shape: f32[1,512], index: 6, kind: input, shape index: {}]
  %s7 = inlined_call_operand.vmem [shape: f32[512,10], index: 7, kind: input, shape index: {}]
  %s8 = inlined_call_operand.hbm [shape: f32[1,10], index: 8, kind: input, shape index: {}]
  %s9 = inlined_call_operand.hbm [shape: f32[2,10], index: 9, kind: output, shape index: {}]
  %s10 = sld [smem:[#allocation0]]
  $region74: #{fedavg_cnn_forward.1} parent=0
    _
  %s12 = ssub.s32 1, %s10
  %s13 = scalar_select 0, %s12, %s10
  $region1: #{fedavg_cnn_forward.1} parent=0
    #allocation3 [shape = 'u8[1351680]{0}', space=vmem, size = 0x14a000, scoped, tag = 'input window, operand 1, single buffered']
    #allocation4 [shape = 's32[1]{0}', space=sflag, size = 0x4, scoped, tag = 'scoped memory for fedavg_cnn_forward.1']
    #allocation5 [shape = 's32[1]{0}', space=sflag, size = 0x4, scoped, tag = 'scoped memory for fedavg_cnn_forward.1']
    #allocation6 [shape = 'u8[3072]{0}', space=vmem, size = 0xc00, scoped, tag = 'input window, operand 2, single buffered']
    #allocation7 [shape = 's32[1]{0}', space=sflag, size = 0x4, scoped, tag = 'scoped memory for fedavg_cnn_forward.1']
    #allocation8 [shape = 'u8[3932160]{0}', space=vmem, size = 0x3c0000, scoped, tag = 'input window, operand 3, single buffered']
    #allocation9 [shape = 'u8[2048]{0}', space=vmem, size = 0x800, scoped, tag = 'input window, operand 4, single buffered']
    #allocation10 [shape = 's32[1]{0}', space=sflag, size = 0x4, scoped, tag = 'scoped memory for fedavg_cnn_forward.1']
    #allocation11 [shape = 'u8[2097152]{0}', space=vmem, size = 0x200000, scoped, tag = 'input window, operand 5, single buffered']
    #allocation12 [shape = 'u8[2048]{0}', space=vmem, size = 0x800, scoped, tag = 'input window, operand 6, single buffered']
    #allocation13 [shape = 's32[1]{0}', space=sflag, size = 0x4, scoped, tag = 'scoped memory for fedavg_cnn_forward.1']
    #allocation14 [shape = 'u8[512]{0}', space=vmem, size = 0x400, scoped, tag = 'input window, operand 8, single buffered']
    #allocation15 [shape = 'u8[1024]{0}', space=vmem, size = 0x400, scoped, tag = 'output window, operand 0, single buffered']
    %14 = vsyncpa [#allocation4], 0
    %15 = vsyncpa [#allocation7], 0
    %16 = vsyncpa [#allocation10], 0
    %17 = vsyncpa [#allocation13], 0
    %18 = vsyncpa [#allocation5], 0
    // Predicated region
    $region2: #{fedavg_cnn_forward.1} parent=1 // pred_check
      _
    $region3: #{fedavg_cnn_forward.1} parent=1 // pred_check_branch
      %20 = sbr.rel (0) target = $region5
    $region4: #{fedavg_cnn_forward.1} parent=1 // pred_region
      _
    $region5: #{fedavg_cnn_forward.1} parent=1 // pred_fallthru
      _
    // Predicated region
    $region6: #{fedavg_cnn_forward.1} parent=1 // pred_check
      _
    $region7: #{fedavg_cnn_forward.1} parent=1 // pred_check_branch
      %22 = sbr.rel (0) target = $region9
    $region8: #{fedavg_cnn_forward.1} parent=1 // pred_region
      %s24 = ssub.s32 42240, 42240
      %25 = vsyncadd [#allocation4], %s24
      %s26 = sshll.u32 [#allocation3], 4
      %s27 = int_to_ptr.vmem [resolvable:$true] %s26
      %32 = dma.hbm_to_vmem [thread:$0]  %s1, 42240, %s27, [#allocation4], 768, 768, 48
    $region9: #{fedavg_cnn_forward.1} parent=1 // pred_fallthru
      _
    // Predicated region
    $region10: #{fedavg_cnn_forward.1} parent=1 // pred_check
      _
    $region11: #{fedavg_cnn_forward.1} parent=1 // pred_check_branch
      %34 = sbr.rel (0) target = $region13
    $region12: #{fedavg_cnn_forward.1} parent=1 // pred_region
      %s36 = ssub.s32 96, 96
      %37 = vsyncadd [#allocation7], %s36
      %s39 = sshll.u32 [#allocation6], 4
      %s40 = int_to_ptr.vmem [resolvable:$true] %s39
      %42 = dma.hbm_to_vmem [thread:$0]  %s2, 96, %s40, [#allocation7]
    $region13: #{fedavg_cnn_forward.1} parent=1 // pred_fallthru
      _
    // Predicated region
    $region14: #{fedavg_cnn_forward.1} parent=1 // pred_check
      _
    $region15: #{fedavg_cnn_forward.1} parent=1 // pred_check_branch
      %44 = sbr.rel (0) target = $region17
    $region16: #{fedavg_cnn_forward.1} parent=1 // pred_region
      %s46 = ssub.s32 122880, 122880
      %47 = vsyncadd [#allocation7], %s46
      %s48 = sshll.u32 [#allocation8], 4
      %s49 = int_to_ptr.vmem [resolvable:$true] %s48
      %54 = dma.hbm_to_vmem [thread:$0]  %s3, 122880, %s49, [#allocation7], 512, 512, 32
    $region17: #{fedavg_cnn_forward.1} parent=1 // pred_fallthru
      _
    // Predicated region
    $region18: #{fedavg_cnn_forward.1} parent=1 // pred_check
      _
    $region19: #{fedavg_cnn_forward.1} parent=1 // pred_check_branch
      %56 = sbr.rel (0) target = $region21
    $region20: #{fedavg_cnn_forward.1} parent=1 // pred_region
      %s58 = ssub.s32 64, 64
      %59 = vsyncadd [#allocation10], %s58
      %s61 = sshll.u32 [#allocation9], 4
      %s62 = int_to_ptr.vmem [resolvable:$true] %s61
      %64 = dma.hbm_to_vmem [thread:$0]  %s4, 64, %s62, [#allocation10]
    $region21: #{fedavg_cnn_forward.1} parent=1 // pred_fallthru
      _
    // Predicated region
    $region22: #{fedavg_cnn_forward.1} parent=1 // pred_check
      _
    $region23: #{fedavg_cnn_forward.1} parent=1 // pred_check_branch
      %66 = sbr.rel (0) target = $region25
    $region24: #{fedavg_cnn_forward.1} parent=1 // pred_region
      %s68 = ssub.s32 65536, 65536
      %69 = vsyncadd [#allocation10], %s68
      %s70 = sshll.u32 [#allocation11], 4
      %s71 = int_to_ptr.vmem [resolvable:$true] %s70
      %76 = dma.hbm_to_vmem [thread:$0]  %s5, 65536, %s71, [#allocation10], 512, 512, 32
    $region25: #{fedavg_cnn_forward.1} parent=1 // pred_fallthru
      _
    // Predicated region
    $region26: #{fedavg_cnn_forward.1} parent=1 // pred_check
      _
    $region27: #{fedavg_cnn_forward.1} parent=1 // pred_check_branch
      %78 = sbr.rel (0) target = $region29
    $region28: #{fedavg_cnn_forward.1} parent=1 // pred_region
      %s80 = ssub.s32 64, 64
      %81 = vsyncadd [#allocation13], %s80
      %s83 = sshll.u32 [#allocation12], 4
      %s84 = int_to_ptr.vmem [resolvable:$true] %s83
      %86 = dma.hbm_to_vmem [thread:$0]  %s6, 64, %s84, [#allocation13]
    $region29: #{fedavg_cnn_forward.1} parent=1 // pred_fallthru
      _
    // Predicated region
    $region30: #{fedavg_cnn_forward.1} parent=1 // pred_check
      _
    $region31: #{fedavg_cnn_forward.1} parent=1 // pred_check_branch
      %88 = sbr.rel (0) target = $region33
    $region32: #{fedavg_cnn_forward.1} parent=1 // pred_region
      _
    $region33: #{fedavg_cnn_forward.1} parent=1 // pred_fallthru
      _
    // Predicated region
    $region34: #{fedavg_cnn_forward.1} parent=1 // pred_check
      _
    $region35: #{fedavg_cnn_forward.1} parent=1 // pred_check_branch
      %90 = sbr.rel (0) target = $region37
    $region36: #{fedavg_cnn_forward.1} parent=1 // pred_region
      %s92 = ssub.s32 16, 16
      %93 = vsyncadd [#allocation13], %s92
      %s95 = sshll.u32 [#allocation14], 4
      %s96 = int_to_ptr.vmem [resolvable:$true] %s95
      %98 = dma.hbm_to_vmem [thread:$0]  %s8, 16, %s96, [#allocation13]
    $region37: #{fedavg_cnn_forward.1} parent=1 // pred_fallthru
      _
    // Predicated region
    $region38: #{fedavg_cnn_forward.1} parent=1 // pred_check
      _
    $region39: #{fedavg_cnn_forward.1} parent=1 // pred_check_branch
      %100 = sbr.rel (0) target = $region41
    $region40: #{fedavg_cnn_forward.1} parent=1 // pred_region
      %101 = dma.done [#allocation4], 42240
    $region41: #{fedavg_cnn_forward.1} parent=1 // pred_fallthru
      _
    // Predicated region
    $region42: #{fedavg_cnn_forward.1} parent=1 // pred_check
      _
    $region43: #{fedavg_cnn_forward.1} parent=1 // pred_check_branch
      %103 = sbr.rel (0) target = $region45
    $region44: #{fedavg_cnn_forward.1} parent=1 // pred_region
      %104 = dma.done [#allocation7], 96
    $region45: #{fedavg_cnn_forward.1} parent=1 // pred_fallthru
      _
    // Predicated region
    $region46: #{fedavg_cnn_forward.1} parent=1 // pred_check
      _
    $region47: #{fedavg_cnn_forward.1} parent=1 // pred_check_branch
      %106 = sbr.rel (0) target = $region49
    $region48: #{fedavg_cnn_forward.1} parent=1 // pred_region
      %107 = dma.done [#allocation7], 122880
    $region49: #{fedavg_cnn_forward.1} parent=1 // pred_fallthru
      _
    // Predicated region
    $region50: #{fedavg_cnn_forward.1} parent=1 // pred_check
      _
    $region51: #{fedavg_cnn_forward.1} parent=1 // pred_check_branch
      %109 = sbr.rel (0) target = $region53
    $region52: #{fedavg_cnn_forward.1} parent=1 // pred_region
      %110 = dma.done [#allocation10], 64
    $region53: #{fedavg_cnn_forward.1} parent=1 // pred_fallthru
      _
    // Predicated region
    $region54: #{fedavg_cnn_forward.1} parent=1 // pred_check
      _
    $region55: #{fedavg_cnn_forward.1} parent=1 // pred_check_branch
      %112 = sbr.rel (0) target = $region57
    $region56: #{fedavg_cnn_forward.1} parent=1 // pred_region
      %113 = dma.done [#allocation10], 65536
    $region57: #{fedavg_cnn_forward.1} parent=1 // pred_fallthru
      _
    // Predicated region
    $region58: #{fedavg_cnn_forward.1} parent=1 // pred_check
      _
    $region59: #{fedavg_cnn_forward.1} parent=1 // pred_check_branch
      %115 = sbr.rel (0) target = $region61
    $region60: #{fedavg_cnn_forward.1} parent=1 // pred_region
      %116 = dma.done [#allocation13], 64
    $region61: #{fedavg_cnn_forward.1} parent=1 // pred_fallthru
      _
    // Predicated region
    $region62: #{fedavg_cnn_forward.1} parent=1 // pred_check
      _
    $region63: #{fedavg_cnn_forward.1} parent=1 // pred_check_branch
      %118 = sbr.rel (0) target = $region65
    $region64: #{fedavg_cnn_forward.1} parent=1 // pred_region
      %119 = dma.done [#allocation13], 16
    $region65: #{fedavg_cnn_forward.1} parent=1 // pred_fallthru
      _
    %v120 = vld [vmem:[%s0] sm:$0xff]
    %v121 = vld [vmem:[%s0 + $0x8] sm:$0xff]
    %v122 = vld [vmem:[%s0 + $0x10] sm:$0xff]
    %v123 = vld [vmem:[%s0 + $0x1c] sm:$0xff]
    %v124 = vld [vmem:[%s0 + $0x24] sm:$0xff]
    %v125 = vld [vmem:[%s0 + $0x2c] sm:$0xff]
    %v126 = vld [vmem:[#allocation3] sm:$0xff]
    %v127 = vld [vmem:[#allocation3 + $0x8] sm:$0xff]
    %v128 = vld [vmem:[#allocation3 + $0x10] sm:$0xff]
    %v129 = vld [vmem:[#allocation3 + $0x18] sm:$0xff]
    %v130 = vld [vmem:[#allocation3 + $0x20] sm:$0xff]
    %v131 = vld [vmem:[#allocation3 + $0x28] sm:$0xff]
    %v132 = vld [vmem:[#allocation3 + $0x30] sm:$0xff]
    %v133 = vld [vmem:[#allocation3 + $0x38] sm:$0xff]
    %v134 = vld [vmem:[#allocation3 + $0x40] sm:$0xff]
    %v135 = vld [vmem:[#allocation3 + $0x48] sm:$0xff]
    %v136 = vld [vmem:[#allocation3 + $0x50] sm:$0xff]
    %v137 = vld [vmem:[#allocation3 + $0x58] sm:$0xff]
    %v138 = vld [vmem:[#allocation3 + $0x60] sm:$0xff]
    %v139 = vld [vmem:[#allocation3 + $0x68] sm:$0xff]
    %v140 = vld [vmem:[#allocation3 + $0x70] sm:$0xff]
    %v141 = vld [vmem:[#allocation3 + $0x78] sm:$0xff]
    %v142 = vld [vmem:[#allocation3 + $0x80] sm:$0xff]
    %v143 = vld [vmem:[#allocation3 + $0x88] sm:$0xff]
    %v144 = vld [vmem:[#allocation3 + $0x90] sm:$0xff]
    %v145 = vld [vmem:[#allocation3 + $0x98] sm:$0xff]
    %v146 = vld [vmem:[#allocation3 + $0xa0] sm:$0xff]
    %v147 = vld [vmem:[#allocation3 + $0xa8] sm:$0xff]
    %v148 = vld [vmem:[#allocation3 + $0xb0] sm:$0xff]
    %v149 = vld [vmem:[#allocation3 + $0xb8] sm:$0xff]
    %v150 = vld [vmem:[#allocation3 + $0xc0] sm:$0xff]
    %v151 = vld [vmem:[#allocation3 + $0xc8] sm:$0xff]
    %v152 = vld [vmem:[#allocation3 + $0xd0] sm:$0xff]
    %v153 = vld [vmem:[#allocation3 + $0xd8] sm:$0xff]
    %v154 = vld [vmem:[#allocation3 + $0xe0] sm:$0xff]
    %v155 = vld [vmem:[#allocation3 + $0xe8] sm:$0xff]
    %v156 = vld [vmem:[#allocation3 + $0xf0] sm:$0xff]
    %v157 = vld [vmem:[#allocation3 + $0xf8] sm:$0xff]
    %v158 = vld [vmem:[#allocation3 + $0x100] sm:$0xff]
    %v159 = vld [vmem:[#allocation3 + $0x108] sm:$0xff]
    %v160 = vld [vmem:[#allocation3 + $0x110] sm:$0xff]
    %v161 = vld [vmem:[#allocation3 + $0x118] sm:$0xff]
    %v162 = vld [vmem:[#allocation3 + $0x120] sm:$0xff]
    %v163 = vld [vmem:[#allocation3 + $0x128] sm:$0xff]
    %v164 = vld [vmem:[#allocation3 + $0x130] sm:$0xff]
    %v165 = vld [vmem:[#allocation3 + $0x138] sm:$0xff]
    %v166 = vld [vmem:[#allocation3 + $0x140] sm:$0xff]
    %v167 = vld [vmem:[#allocation3 + $0x148] sm:$0xff]
    %v168 = vld [vmem:[#allocation3 + $0x150] sm:$0xff]
    %v169 = vld [vmem:[#allocation3 + $0x158] sm:$0xff]
    %v170 = vld [vmem:[#allocation3 + $0x160] sm:$0xff]
    %v171 = vld [vmem:[#allocation3 + $0x168] sm:$0xff]
    %v172 = vld [vmem:[#allocation3 + $0x170] sm:$0xff]
    %v173 = vld [vmem:[#allocation3 + $0x178] sm:$0xff]
    %v174 = vld [vmem:[#allocation3 + $0x180] sm:$0xff]
    %v175 = vld [vmem:[#allocation3 + $0x188] sm:$0xff]
    %v176 = vld [vmem:[#allocation3 + $0x190] sm:$0xff]
    %v177 = vld [vmem:[#allocation3 + $0x198] sm:$0xff]
    %v178 = vld [vmem:[#allocation3 + $0x1a0] sm:$0xff]
    %v179 = vld [vmem:[#allocation3 + $0x1a8] sm:$0xff]
    %v180 = vld [vmem:[#allocation3 + $0x1b0] sm:$0xff]
    %v181 = vld [vmem:[#allocation3 + $0x1b8] sm:$0xff]
    %v182 = vld [vmem:[#allocation3 + $0x1c0] sm:$0xff]
    %v183 = vld [vmem:[#allocation3 + $0x1c8] sm:$0xff]
    %v184 = vld [vmem:[#allocation3 + $0x1d0] sm:$0xff]
    %v185 = vld [vmem:[#allocation3 + $0x1d8] sm:$0xff]
    %v186 = vld [vmem:[#allocation3 + $0x1e0] sm:$0xf]
    %v187 = vld [vmem:[#allocation3 + $0x1e8] sm:$0xf]
    %v188 = vld [vmem:[#allocation3 + $0x1f0] sm:$0xf]
    %v189 = vld [vmem:[#allocation3 + $0x1f8] sm:$0xf]
    %v190 = vld [vmem:[#allocation3 + $0x200] sm:$0xf]
    %v191 = vld [vmem:[#allocation3 + $0x208] sm:$0xf]
    %v192 = vld [vmem:[%s0 + $0x1] sm:$0xff]
    %v193 = vld [vmem:[%s0 + $0x9] sm:$0xff]
    %v194 = vld [vmem:[%s0 + $0x11] sm:$0xff]
    %v195 = vld [vmem:[%s0 + $0x1d] sm:$0xff]
    %v196 = vld [vmem:[%s0 + $0x25] sm:$0xff]
    %v197 = vld [vmem:[%s0 + $0x2d] sm:$0xff]
    %s198 = scalar_lea.vmem [#allocation3], 528
    %v199 = vld [vmem:[%s198] sm:$0xff]
    %v200 = vld [vmem:[%s198 + $0x8] sm:$0xff]
    %v201 = vld [vmem:[%s198 + $0x10] sm:$0xff]
    %v202 = vld [vmem:[%s198 + $0x18] sm:$0xff]
    %v203 = vld [vmem:[%s198 + $0x20] sm:$0xff]
    %v204 = vld [vmem:[%s198 + $0x28] sm:$0xff]
    %v205 = vld [vmem:[%s198 + $0x30] sm:$0xff]
    %v206 = vld [vmem:[%s198 + $0x38] sm:$0xff]
    %v207 = vld [vmem:[%s198 + $0x40] sm:$0xff]
    %v208 = vld [vmem:[%s198 + $0x48] sm:$0xff]
    %v209 = vld [vmem:[%s198 + $0x50] sm:$0xff]
    %v210 = vld [vmem:[%s198 + $0x58] sm:$0xff]
    %v211 = vld [vmem:[%s198 + $0x60] sm:$0xff]
    %v212 = vld [vmem:[%s198 + $0x68] sm:$0xff]
    %v213 = vld [vmem:[%s198 + $0x70] sm:$0xff]
    %v214 = vld [vmem:[%s198 + $0x78] sm:$0xff]
    %v215 = vld [vmem:[%s198 + $0x80] sm:$0xff]
    %v216 = vld [vmem:[%s198 + $0x88] sm:$0xff]
    %v217 = vld [vmem:[%s198 + $0x90] sm:$0xff]
    %v218 = vld [vmem:[%s198 + $0x98] sm:$0xff]
    %v219 = vld [vmem:[%s198 + $0xa0] sm:$0xff]
    %v220 = vld [vmem:[%s198 + $0xa8] sm:$0xff]
    %v221 = vld [vmem:[%s198 + $0xb0] sm:$0xff]
    %v222 = vld [vmem:[%s198 + $0xb8] sm:$0xff]
    %v223 = vld [vmem:[%s198 + $0xc0] sm:$0xff]
    %v224 = vld [vmem:[%s198 + $0xc8] sm:$0xff]
    %v225 = vld [vmem:[%s198 + $0xd0] sm:$0xff]
    %v226 = vld [vmem:[%s198 + $0xd8] sm:$0xff]
    %v227 = vld [vmem:[%s198 + $0xe0] sm:$0xff]
    %v228 = vld [vmem:[%s198 + $0xe8] sm:$0xff]
    %v229 = vld [vmem:[%s198 + $0xf0] sm:$0xff]
    %v230 = vld [vmem:[%s198 + $0xf8] sm:$0xff]
    %v231 = vld [vmem:[%s198 + $0x100] sm:$0xff]
    %v232 = vld [vmem:[%s198 + $0x108] sm:$0xff]
    %v233 = vld [vmem:[%s198 + $0x110] sm:$0xff]
    %v234 = vld [vmem:[%s198 + $0x118] sm:$0xff]
    %v235 = vld [vmem:[%s198 + $0x120] sm:$0xff]
    %v236 = vld [vmem:[%s198 + $0x128] sm:$0xff]
    %v237 = vld [vmem:[%s198 + $0x130] sm:$0xff]
    %v238 = vld [vmem:[%s198 + $0x138] sm:$0xff]
    %v239 = vld [vmem:[%s198 + $0x140] sm:$0xff]
    %v240 = vld [vmem:[%s198 + $0x148] sm:$0xff]
    %v241 = vld [vmem:[%s198 + $0x150] sm:$0xff]
    %v242 = vld [vmem:[%s198 + $0x158] sm:$0xff]
    %v243 = vld [vmem:[%s198 + $0x160] sm:$0xff]
    %v244 = vld [vmem:[%s198 + $0x168] sm:$0xff]
    %v245 = vld [vmem:[%s198 + $0x170] sm:$0xff]
    %v246 = vld [vmem:[%s198 + $0x178] sm:$0xff]
    %v247 = vld [vmem:[%s198 + $0x180] sm:$0xff]
    %v248 = vld [vmem:[%s198 + $0x188] sm:$0xff]
    %v249 = vld [vmem:[%s198 + $0x190] sm:$0xff]
    %v250 = vld [vmem:[%s198 + $0x198] sm:$0xff]
    %v251 = vld [vmem:[%s198 + $0x1a0] sm:$0xff]
    %v252 = vld [vmem:[%s198 + $0x1a8] sm:$0xff]
    %v253 = vld [vmem:[%s198 + $0x1b0] sm:$0xff]
    %v254 = vld [vmem:[%s198 + $0x1b8] sm:$0xff]
    %v255 = vld [vmem:[%s198 + $0x1c0] sm:$0xff]
    %v256 = vld [vmem:[%s198 + $0x1c8] sm:$0xff]
    %v257 = vld [vmem:[%s198 + $0x1d0] sm:$0xff]
    %v258 = vld [vmem:[%s198 + $0x1d8] sm:$0xff]
    %v259 = vld [vmem:[%s198 + $0x1e0] sm:$0xf]
    %v260 = vld [vmem:[%s198 + $0x1e8] sm:$0xf]
    %v261 = vld [vmem:[%s198 + $0x1f0] sm:$0xf]
    %v262 = vld [vmem:[%s198 + $0x1f8] sm:$0xf]
    %v263 = vld [vmem:[%s198 + $0x200] sm:$0xf]
    %v264 = vld [vmem:[%s198 + $0x208] sm:$0xf]
    %vm265 = vcmask 687104
    %v267 = vsel %vm265, %v192, 0
    %v270 = vsel %vm265, %v193, 0
    %v273 = vsel %vm265, %v194, 0
    %v276 = vsel %vm265, %v195, 0
    %v279 = vsel %vm265, %v196, 0
    %v282 = vsel %vm265, %v197, 0
    %vm284 = vcmask 1043456
    %v286 = vsel %vm284, %v259, 0
    %v289 = vsel %vm284, %v260, 0
    %v292 = vsel %vm284, %v261, 0
    %v295 = vsel %vm284, %v262, 0
    %v298 = vsel %vm284, %v263, 0
    %v301 = vsel %vm284, %v264, 0
    %303 = vmatprep.subr.mxu0 %v200
    %304 = vmatpush1.msra.mxu0 %v199
    %305 = vmatprep.subr.mxu0 %v206
    %306 = vmatpush1.msra.mxu0 %v205
    %307 = vmatprep.subr.mxu0 %v212
    %308 = vmatpush1.msra.mxu0 %v211
    %309 = vmatprep.subr.mxu0 %v218
    %310 = vmatpush1.msra.mxu0 %v217
    %311 = vmatprep.subr.mxu0 %v224
    %312 = vmatpush1.msra.mxu0 %v223
    %313 = vmatprep.subr.mxu0 %v230
    %314 = vmatpush1.msra.mxu0 %v229
    %315 = vmatprep.subr.mxu0 %v236
    %316 = vmatpush1.msra.mxu0 %v235
    %317 = vmatprep.subr.mxu0 %v242
    %318 = vmatpush1.msra.mxu0 %v241
    %319 = vmatprep.subr.mxu0 %v248
    %320 = vmatpush1.msra.mxu0 %v247
    %321 = vmatprep.subr.mxu0 %v254
    %322 = vmatpush1.msra.mxu0 %v253
    %323 = vmatprep.subr.mxu0 %v289
    %324 = vmatpush1.msra.mxu0 %v286
    %325 = vmatprep.subr.mxu0 0.0
    %326 = vmatpush1.msra.mxu0 0.0
    %327 = vmatprep.subr.mxu0 0.0
    %328 = vmatpush1.msra.mxu0 0.0
    %329 = vmatprep.subr.mxu0 0.0
    %330 = vmatpush1.msra.mxu0 0.0
    %331 = vmatprep.subr.mxu0 0.0
    %332 = vmatpush1.msra.mxu0 0.0
    %333 = vmatprep.subr.mxu0 0.0
    %334 = vmatpush1.msra.mxu0 0.0
    %335 = vmatprep.subr.mxu0 0.0
    %336 = vmatpush1.msra.mxu0 0.0
    %337 = vmatprep.subr.mxu0 0.0
    %338 = vmatpush1.msra.mxu0 0.0
    %339 = vmatprep.subr.mxu0 0.0
    %340 = vmatpush1.msra.mxu0 0.0
    %341 = vmatprep.subr.mxu0 0.0
    %342 = vmatpush1.msra.mxu0 0.0
    %343 = vmatprep.subr.mxu0 0.0
    %344 = vmatpush1.msra.mxu0 0.0
    %345 = vmatprep.subr.mxu0 0.0
    %346 = vmatpush1.msra.mxu0 0.0
    %347 = vmatprep.subr.mxu0 0.0
    %348 = vmatpush1.msra.mxu0 0.0
    %349 = vmatprep.subr.mxu0 0.0
    %350 = vmatpush1.msra.mxu0 0.0
    %351 = vmatprep.subr.mxu0 0.0
    %352 = vmatpush1.msra.mxu0 0.0
    %353 = vmatprep.subr.mxu0 0.0
    %354 = vmatpush1.msra.mxu0 0.0
    %355 = vmatprep.subr.mxu0 0.0
    %356 = vmatpush1.msra.mxu0 0.0
    %357 = vmatprep.subr.mxu0 0.0
    %358 = vmatpush1.msra.mxu0 0.0
    %359 = vmatprep.subr.mxu0 0.0
    %360 = vmatpush1.msra.mxu0 0.0
    %361 = vmatprep.subr.mxu0 0.0
    %362 = vmatpush1.msra.mxu0 0.0
    %363 = vmatprep.subr.mxu0 0.0
    %364 = vmatpush1.msra.mxu0 0.0
    %365 = vmatprep.subr.mxu0 0.0
    %366 = vmatpush1.msra.mxu0 0.0
    %367 = vmatprep.mubr.f32.mxu0 0.0
    %368 = vmatmul.mubr.f32.gmra.mrb[0].mxu0 %v267
    %v369 = vpop.f32.mrb[0].mxu0
    %v370 = vadd.f32 0.0, %v369
    %v371 = vpop.f32.mrb[0].mxu0
    %v372 = vadd.f32 0.0, %v371
    %373 = vmatprep.mubr.f32.mxu0 0.0
    %374 = vmatmul.mubr.f32.gmra.mrb[0].mxu0 %v270
    %v375 = vpop.f32.mrb[0].mxu0
    %v376 = vadd.f32 0.0, %v375
    %v377 = vpop.f32.mrb[0].mxu0
    %v378 = vadd.f32 0.0, %v377
    %379 = vmatprep.mubr.f32.mxu0 0.0
    %380 = vmatmul.mubr.f32.gmra.mrb[0].mxu0 %v273
    %v381 = vpop.f32.mrb[0].mxu0
    %v382 = vadd.f32 0.0, %v381
    %v383 = vpop.f32.mrb[0].mxu0
    %v384 = vadd.f32 0.0, %v383
    %385 = vmatprep.mubr.f32.mxu0 0.0
    %386 = vmatmul.mubr.f32.gmra.mrb[0].mxu0 %v276
    %v387 = vpop.f32.mrb[0].mxu0
    %v388 = vadd.f32 0.0, %v387
    %v389 = vpop.f32.mrb[0].mxu0
    %v390 = vadd.f32 0.0, %v389
    %391 = vmatprep.mubr.f32.mxu0 0.0
    %392 = vmatmul.mubr.f32.gmra.mrb[0].mxu0 %v279
    %v393 = vpop.f32.mrb[0].mxu0
    %v394 = vadd.f32 0.0, %v393
    %v395 = vpop.f32.mrb[0].mxu0
    %v396 = vadd.f32 0.0, %v395
    %397 = vmatprep.mubr.f32.mxu0 0.0
    %398 = vmatmul.mubr.f32.gmra.mrb[0].mxu0 %v282
    %v399 = vpop.f32.mrb[0].mxu0
    %v400 = vadd.f32 0.0, %v399
    %v401 = vpop.f32.mrb[0].mxu0
    %v402 = vadd.f32 0.0, %v401
    %403 = vdwg.mxu0
    %404 = vmatprep.subr.mxu0 %v202
    %405 = vmatpush1.msra.mxu0 %v201
    %406 = vmatprep.subr.mxu0 %v208
    %407 = vmatpush1.msra.mxu0 %v207
    %408 = vmatprep.subr.mxu0 %v214
    %409 = vmatpush1.msra.mxu0 %v213
    %410 = vmatprep.subr.mxu0 %v220
    %411 = vmatpush1.msra.mxu0 %v219
    %412 = vmatprep.subr.mxu0 %v226
    %413 = vmatpush1.msra.mxu0 %v225
    %414 = vmatprep.subr.mxu0 %v232
    %415 = vmatpush1.msra.mxu0 %v231
    %416 = vmatprep.subr.mxu0 %v238
    %417 = vmatpush1.msra.mxu0 %v237
    %418 = vmatprep.subr.mxu0 %v244
    %419 = vmatpush1.msra.mxu0 %v243
    %420 = vmatprep.subr.mxu0 %v250
    %421 = vmatpush1.msra.mxu0 %v249
    %422 = vmatprep.subr.mxu0 %v256
    %423 = vmatpush1.msra.mxu0 %v255
    %424 = vmatprep.subr.mxu0 %v295
    %425 = vmatpush1.msra.mxu0 %v292
    %426 = vmatprep.subr.mxu0 0.0
    %427 = vmatpush1.msra.mxu0 0.0
    %428 = vmatprep.subr.mxu0 0.0
    %429 = vmatpush1.msra.mxu0 0.0
    %430 = vmatprep.subr.mxu0 0.0
    %431 = vmatpush1.msra.mxu0 0.0
    %432 = vmatprep.subr.mxu0 0.0
    %433 = vmatpush1.msra.mxu0 0.0
    %434 = vmatprep.subr.mxu0 0.0
    %435 = vmatpush1.msra.mxu0 0.0
    %436 = vmatprep.subr.mxu0 0.0
    %437 = vmatpush1.msra.mxu0 0.0
    %438 = vmatprep.subr.mxu0 0.0
    %439 = vmatpush1.msra.mxu0 0.0
    %440 = vmatprep.subr.mxu0 0.0
    %441 = vmatpush1.msra.mxu0 0.0
    %442 = vmatprep.subr.mxu0 0.0
    %443 = vmatpush1.msra.mxu0 0.0
    %444 = vmatprep.subr.mxu0 0.0
    %445 = vmatpush1.msra.mxu0 0.0
    %446 = vmatprep.subr.mxu0 0.0
    %447 = vmatpush1.msra.mxu0 0.0
    %448 = vmatprep.subr.mxu0 0.0
    %449 = vmatpush1.msra.mxu0 0.0
    %450 = vmatprep.subr.mxu0 0.0
    %451 = vmatpush1.msra.mxu0 0.0
    %452 = vmatprep.subr.mxu0 0.0
    %453 = vmatpush1.msra.mxu0 0.0
    %454 = vmatprep.subr.mxu0 0.0
    %455 = vmatpush1.msra.mxu0 0.0
    %456 = vmatprep.subr.mxu0 0.0
    %457 = vmatpush1.msra.mxu0 0.0
    %458 = vmatprep.subr.mxu0 0.0
    %459 = vmatpush1.msra.mxu0 0.0
    %460 = vmatprep.subr.mxu0 0.0
    %461 = vmatpush1.msra.mxu0 0.0
    %462 = vmatprep.subr.mxu0 0.0
    %463 = vmatpush1.msra.mxu0 0.0
    %464 = vmatprep.subr.mxu0 0.0
    %465 = vmatpush1.msra.mxu0 0.0
    %466 = vmatprep.subr.mxu0 0.0
    %467 = vmatpush1.msra.mxu0 0.0
    %468 = vmatprep.mubr.f32.mxu0 0.0
    %469 = vmatmul.mubr.f32.gmra.mrb[0].mxu0 %v267
    %v470 = vpop.f32.mrb[0].mxu0
    %v471 = vadd.f32 0.0, %v470
    %v472 = vpop.f32.mrb[0].mxu0
    %v473 = vadd.f32 0.0, %v472
    %474 = vmatprep.mubr.f32.mxu0 0.0
    %475 = vmatmul.mubr.f32.gmra.mrb[0].mxu0 %v270
    %v476 = vpop.f32.mrb[0].mxu0
    %v477 = vadd.f32 0.0, %v476
    %v478 = vpop.f32.mrb[0].mxu0
    %v479 = vadd.f32 0.0, %v478
    %480 = vmatprep.mubr.f32.mxu0 0.0
    %481 = vmatmul.mubr.f32.gmra.mrb[0].mxu0 %v273
    %v482 = vpop.f32.mrb[0].mxu0
    %v483 = vadd.f32 0.0, %v482
    %v484 = vpop.f32.mrb[0].mxu0
    %v485 = vadd.f32 0.0, %v484
    %486 = vmatprep.mubr.f32.mxu0 0.0
    %487 = vmatmul.mubr.f32.gmra.mrb[0].mxu0 %v276
    %v488 = vpop.f32.mrb[0].mxu0
    %v489 = vadd.f32 0.0, %v488
    %v490 = vpop.f32.mrb[0].mxu0
    %v491 = vadd.f32 0.0, %v490
    %492 = vmatprep.mubr.f32.mxu0 0.0
    %493 = vmatmul.mubr.f32.gmra.mrb[0].mxu0 %v279
    %v494 = vpop.f32.mrb[0].mxu0
    %v495 = vadd.f32 0.0, %v494
    %v496 = vpop.f32.mrb[0].mxu0
    %v497 = vadd.f32 0.0, %v496
    %498 = vmatprep.mubr.f32.mxu0 0.0
    %499 = vmatmul.mubr.f32.gmra.mrb[0].mxu0 %v282
    %v500 = vpop.f32.mrb[0].mxu0
    %v501 = vadd.f32 0.0, %v500
    %v502 = vpop.f32.mrb[0].mxu0
    %v503 = vadd.f32 0.0, %v502
    %504 = vdwg.mxu0
    %505 = vmatprep.subr.mxu0 %v204
    %506 = vmatpush1.msra.mxu0 %v203
    %507 = vmatprep.subr.mxu0 %v210
    %508 = vmatpush1.msra.mxu0 %v209
    %509 = vmatprep.subr.mxu0 %v216
    %510 = vmatpush1.msra.mxu0 %v215
    %511 = vmatprep.subr.mxu0 %v222
    %512 = vmatpush1.msra.mxu0 %v221
    %513 = vmatprep.subr.mxu0 %v228
    %514 = vmatpush1.msra.mxu0 %v227
    %515 = vmatprep.subr.mxu0 %v234
    %516 = vmatpush1.msra.mxu0 %v233
    %517 = vmatprep.subr.mxu0 %v240
    %518 = vmatpush1.msra.mxu0 %v239
    %519 = vmatprep.subr.mxu0 %v246
    %520 = vmatpush1.msra.mxu0 %v245
    %521 = vmatprep.subr.mxu0 %v252
    %522 = vmatpush1.msra.mxu0 %v251
    %523 = vmatprep.subr.mxu0 %v258
    %524 = vmatpush1.msra.mxu0 %v257
    %525 = vmatprep.subr.mxu0 %v301
    %526 = vmatpush1.msra.mxu0 %v298
    %527 = vmatprep.subr.mxu0 0.0
    %528 = vmatpush1.msra.mxu0 0.0
    %529 = vmatprep.subr.mxu0 0.0
    %530 = vmatpush1.msra.mxu0 0.0
    %531 = vmatprep.subr.mxu0 0.0
    %532 = vmatpush1.msra.mxu0 0.0
    %533 = vmatprep.subr.mxu0 0.0
    %534 = vmatpush1.msra.mxu0 0.0
    %535 = vmatprep.subr.mxu0 0.0
    %536 = vmatpush1.msra.mxu0 0.0
    %537 = vmatprep.subr.mxu0 0.0
    %538 = vmatpush1.msra.mxu0 0.0
    %539 = vmatprep.subr.mxu0 0.0
    %540 = vmatpush1.msra.mxu0 0.0
    %541 = vmatprep.subr.mxu0 0.0
    %542 = vmatpush1.msra.mxu0 0.0
    %543 = vmatprep.subr.mxu0 0.0
    %544 = vmatpush1.msra.mxu0 0.0
    %545 = vmatprep.subr.mxu0 0.0
    %546 = vmatpush1.msra.mxu0 0.0
    %547 = vmatprep.subr.mxu0 0.0
    %548 = vmatpush1.msra.mxu0 0.0
    %549 = vmatprep.subr.mxu0 0.0
    %550 = vmatpush1.msra.mxu0 0.0
    %551 = vmatprep.subr.mxu0 0.0
    %552 = vmatpush1.msra.mxu0 0.0
    %553 = vmatprep.subr.mxu0 0.0
    %554 = vmatpush1.msra.mxu0 0.0
    %555 = vmatprep.subr.mxu0 0.0
    %556 = vmatpush1.msra.mxu0 0.0
    %557 = vmatprep.subr.mxu0 0.0
    %558 = vmatpush1.msra.mxu0 0.0
    %559 = vmatprep.subr.mxu0 0.0
    %560 = vmatpush1.msra.mxu0 0.0
    %561 = vmatprep.subr.mxu0 0.0
    %562 = vmatpush1.msra.mxu0 0.0
    %563 = vmatprep.subr.mxu0 0.0
    %564 = vmatpush1.msra.mxu0 0.0
    %565 = vmatprep.subr.mxu0 0.0
    %566 = vmatpush1.msra.mxu0 0.0
    %567 = vmatprep.subr.mxu0 0.0
    %568 = vmatpush1.msra.mxu0 0.0
    %569 = vmatprep.mubr.f32.mxu0 0.0
    %570 = vmatmul.mubr.f32.gmra.mrb[0].mxu0 %v267
    %v571 = vpop.f32.mrb[0].mxu0
    %v572 = vadd.f32 0.0, %v571
    %v573 = vpop.f32.mrb[0].mxu0
    %v574 = vadd.f32 0.0, %v573
    %575 = vmatprep.mubr.f32.mxu0 0.0
    %576 = vmatmul.mubr.f32.gmra.mrb[0].mxu0 %v270
    %v577 = vpop.f32.mrb[0].mxu0
    %v578 = vadd.f32 0.0, %v577
    %v579 = vpop.f32.mrb[0].mxu0
    %v580 = vadd.f32 0.0, %v579
    %581 = vmatprep.mubr.f32.mxu0 0.0
    %582 = vmatmul.mubr.f32.gmra.mrb[0].mxu0 %v273
    %v583 = vpop.f32.mrb[0].mxu0
    %v584 = vadd.f32 0.0, %v583
    %v585 = vpop.f32.mrb[0].mxu0
    %v586 = vadd.f32 0.0, %v585
    %587 = vmatprep.mubr.f32.mxu0 0.0
    %588 = vmatmul.mubr.f32.gmra.mrb[0].mxu0 %v276
    %v589 = vpop.f32.mrb[0].mxu0
    %v590 = vadd.f32 0.0, %v589
    %v591 = vpop.f32.mrb[0].mxu0
    %v592 = vadd.f32 0.0, %v591
    %593 = vmatprep.mubr.f32.mxu0 0.0
    %594 = vmatmul.mubr.f32.gmra.mrb[0].mxu0 %v279
    %v595 = vpop.f32.mrb[0].mxu0
    %v596 = vadd.f32 0.0, %v595
    %v597 = vpop.f32.mrb[0].mxu0
    %v598 = vadd.f32 0.0, %v597
    %599 = vmatprep.mubr.f32.mxu0 0.0
    %600 = vmatmul.mubr.f32.gmra.mrb[0].mxu0 %v282
    %v601 = vpop.f32.mrb[0].mxu0
    %v602 = vadd.f32 0.0, %v601
    %v603 = vpop.f32.mrb[0].mxu0
    %v604 = vadd.f32 0.0, %v603
    %605 = vdwg.mxu0
    %v607 = vsel %vm265, %v120, 0
    %v610 = vsel %vm265, %v121, 0
    %v613 = vsel %vm265, %v122, 0
    %v616 = vsel %vm265, %v123, 0
    %v619 = vsel %vm265, %v124, 0
    %v622 = vsel %vm265, %v125, 0
    %v625 = vsel %vm284, %v186, 0
    %v628 = vsel %vm284, %v187, 0
    %v631 = vsel %vm284, %v188, 0
    %v634 = vsel %vm284, %v189, 0
    %v637 = vsel %vm284, %v190, 0
    %v640 = vsel %vm284, %v191, 0
    %642 = vmatprep.subr.mxu0 %v127
    %643 = vmatpush1.msra.mxu0 %v126
    %644 = vmatprep.subr.mxu0 %v133
    %645 = vmatpush1.msra.mxu0 %v132
    %646 = vmatprep.subr.mxu0 %v139
    %647 = vmatpush1.msra.mxu0 %v138
    %648 = vmatprep.subr.mxu0 %v145
    %649 = vmatpush1.msra.mxu0 %v144
    %650 = vmatprep.subr.mxu0 %v151
    %651 = vmatpush1.msra.mxu0 %v150
    %652 = vmatprep.subr.mxu0 %v157
    %653 = vmatpush1.msra.mxu0 %v156
    %654 = vmatprep.subr.mxu0 %v163
    %655 = vmatpush1.msra.mxu0 %v162
    %656 = vmatprep.subr.mxu0 %v169
    %657 = vmatpush1.msra.mxu0 %v168
    %658 = vmatprep.subr.mxu0 %v175
    %659 = vmatpush1.msra.mxu0 %v174
    %660 = vmatprep.subr.mxu0 %v181
    %661 = vmatpush1.msra.mxu0 %v180
    %662 = vmatprep.subr.mxu0 %v628
    %663 = vmatpush1.msra.mxu0 %v625
    %664 = vmatprep.subr.mxu0 0.0
    %665 = vmatpush1.msra.mxu0 0.0
    %666 = vmatprep.subr.mxu0 0.0
    %667 = vmatpush1.msra.mxu0 0.0
    %668 = vmatprep.subr.mxu0 0.0
    %669 = vmatpush1.msra.mxu0 0.0
    %670 = vmatprep.subr.mxu0 0.0
    %671 = vmatpush1.msra.mxu0 0.0
    %672 = vmatprep.subr.mxu0 0.0
    %673 = vmatpush1.msra.mxu0 0.0
    %674 = vmatprep.subr.mxu0 0.0
    %675 = vmatpush1.msra.mxu0 0.0
    %676 = vmatprep.subr.mxu0 0.0
    %677 = vmatpush1.msra.mxu0 0.0
    %678 = vmatprep.subr.mxu0 0.0
    %679 = vmatpush1.msra.mxu0 0.0
    %680 = vmatprep.subr.mxu0 0.0
    %681 = vmatpush1.msra.mxu0 0.0
    %682 = vmatprep.subr.mxu0 0.0
    %683 = vmatpush1.msra.mxu0 0.0
    %684 = vmatprep.subr.mxu0 0.0
    %685 = vmatpush1.msra.mxu0 0.0
    %686 = vmatprep.subr.mxu0 0.0
    %687 = vmatpush1.msra.mxu0 0.0
    %688 = vmatprep.subr.mxu0 0.0
    %689 = vmatpush1.msra.mxu0 0.0
    %690 = vmatprep.subr.mxu0 0.0
    %691 = vmatpush1.msra.mxu0 0.0
    %692 = vmatprep.subr.mxu0 0.0
    %693 = vmatpush1.msra.mxu0 0.0
    %694 = vmatprep.subr.mxu0 0.0
    %695 = vmatpush1.msra.mxu0 0.0
    %696 = vmatprep.subr.mxu0 0.0
    %697 = vmatpush1.msra.mxu0 0.0
    %698 = vmatprep.subr.mxu0 0.0
    %699 = vmatpush1.msra.mxu0 0.0
    %700 = vmatprep.subr.mxu0 0.0
    %701 = vmatpush1.msra.mxu0 0.0
    %702 = vmatprep.subr.mxu0 0.0
    %703 = vmatpush1.msra.mxu0 0.0
    %704 = vmatprep.subr.mxu0 0.0
    %705 = vmatpush1.msra.mxu0 0.0
    %706 = vmatprep.mubr.f32.mxu0 0.0
    %707 = vmatmul.mubr.f32.gmra.mrb[0].mxu0 %v607
    %v708 = vpop.f32.mrb[0].mxu0
    %v709 = vadd.f32 %v370, %v708
    %v710 = vpop.f32.mrb[0].mxu0
    %v711 = vadd.f32 %v372, %v710
    %712 = vmatprep.mubr.f32.mxu0 0.0
    %713 = vmatmul.mubr.f32.gmra.mrb[0].mxu0 %v610
    %v714 = vpop.f32.mrb[0].mxu0
    %v715 = vadd.f32 %v376, %v714
    %v716 = vpop.f32.mrb[0].mxu0
    %v717 = vadd.f32 %v378, %v716
    %718 = vmatprep.mubr.f32.mxu0 0.0
    %719 = vmatmul.mubr.f32.gmra.mrb[0].mxu0 %v613
    %v720 = vpop.f32.mrb[0].mxu0
    %v721 = vadd.f32 %v382, %v720
    %v722 = vpop.f32.mrb[0].mxu0
    %v723 = vadd.f32 %v384, %v722
    %724 = vmatprep.mubr.f32.mxu0 0.0
    %725 = vmatmul.mubr.f32.gmra.mrb[0].mxu0 %v616
    %v726 = vpop.f32.mrb[0].mxu0
    %v727 = vadd.f32 %v388, %v726
    %v728 = vpop.f32.mrb[0].mxu0
    %v729 = vadd.f32 %v390, %v728
    %730 = vmatprep.mubr.f32.mxu0 0.0
    %731 = vmatmul.mubr.f32.gmra.mrb[0].mxu0 %v619
    %v732 = vpop.f32.mrb[0].mxu0
    %v733 = vadd.f32 %v394, %v732
    %v734 = vpop.f32.mrb[0].mxu0
    %v735 = vadd.f32 %v396, %v734
    %736 = vmatprep.mubr.f32.mxu0 0.0
    %737 = vmatmul.mubr.f32.gmra.mrb[0].mxu0 %v622
    %v738 = vpop.f32.mrb[0].mxu0
    %v739 = vadd.f32 %v400, %v738
    %v740 = vpop.f32.mrb[0].mxu0
    %v741 = vadd.f32 %v402, %v740
    %742 = vdwg.mxu0
    %743 = vmatprep.subr.mxu0 %v129
    %744 = vmatpush1.msra.mxu0 %v128
    %745 = vmatprep.subr.mxu0 %v135
    %746 = vmatpush1.msra.mxu0 %v134
    %747 = vmatprep.subr.mxu0 %v141
    %748 = vmatpush1.msra.mxu0 %v140
    %749 = vmatprep.subr.mxu0 %v147
    %750 = vmatpush1.msra.mxu0 %v146
    %751 = vmatprep.subr.mxu0 %v153
    %752 = vmatpush1.msra.mxu0 %v152
    %753 = vmatprep.subr.mxu0 %v159
    %754 = vmatpush1.msra.mxu0 %v158
    %755 = vmatprep.subr.mxu0 %v165
    %756 = vmatpush1.msra.mxu0 %v164
    %757 = vmatprep.subr.mxu0 %v171
    %758 = vmatpush1.msra.mxu0 %v170
    %759 = vmatprep.subr.mxu0 %v177
    %760 = vmatpush1.msra.mxu0 %v176
    %761 = vmatprep.subr.mxu0 %v183
    %762 = vmatpush1.msra.mxu0 %v182
    %763 = vmatprep.subr.mxu0 %v634
    %764 = vmatpush1.msra.mxu0 %v631
    %765 = vmatprep.subr.mxu0 0.0
    %766 = vmatpush1.msra.mxu0 0.0
    %767 = vmatprep.subr.mxu0 0.0
    %768 = vmatpush1.msra.mxu0 0.0
    %769 = vmatprep.subr.mxu0 0.0
    %770 = vmatpush1.msra.mxu0 0.0
    %771 = vmatprep.subr.mxu0 0.0
    %772 = vmatpush1.msra.mxu0 0.0
    %773 = vmatprep.subr.mxu0 0.0
    %774 = vmatpush1.msra.mxu0 0.0
    %775 = vmatprep.subr.mxu0 0.0
    %776 = vmatpush1.msra.mxu0 0.0
    %777 = vmatprep.subr.mxu0 0.0
    %778 = vmatpush1.msra.mxu0 0.0
    %779 = vmatprep.subr.mxu0 0.0
    %780 = vmatpush1.msra.mxu0 0.0
    %781 = vmatprep.subr.mxu0 0.0
    %782 = vmatpush1.msra.mxu0 0.0
    %783 = vmatprep.subr.mxu0 0.0
    %784 = vmatpush1.msra.mxu0 0.0
    %785 = vmatprep.subr.mxu0 0.0
    %786 = vmatpush1.msra.mxu0 0.0
    %787 = vmatprep.subr.mxu0 0.0
    %788 = vmatpush1.msra.mxu0 0.0
    %789 = vmatprep.subr.mxu0 0.0
    %790 = vmatpush1.msra.mxu0 0.0
    %791 = vmatprep.subr.mxu0 0.0
    %792 = vmatpush1.msra.mxu0 0.0
    %793 = vmatprep.subr.mxu0 0.0
    %794 = vmatpush1.msra.mxu0 0.0
    %795 = vmatprep.subr.mxu0 0.0
    %796 = vmatpush1.msra.mxu0 0.0
    %797 = vmatprep.subr.mxu0 0.0
    %798 = vmatpush1.msra.mxu0 0.0
    %799 = vmatprep.subr.mxu0 0.0
    %800 = vmatpush1.msra.mxu0 0.0
    %801 = vmatprep.subr.mxu0 0.0
    %802 = vmatpush1.msra.mxu0 0.0
    %803 = vmatprep.subr.mxu0 0.0
    %804 = vmatpush1.msra.mxu0 0.0
    %805 = vmatprep.subr.mxu0 0.0
    %806 = vmatpush1.msra.mxu0 0.0
    %807 = vmatprep.mubr.f32.mxu0 0.0
    %808 = vmatmul.mubr.f32.gmra.mrb[0].mxu0 %v607
    %v809 = vpop.f32.mrb[0].mxu0
    %v810 = vadd.f32 %v471, %v809
    %v811 = vpop.f32.mrb[0].mxu0
    %v812 = vadd.f32 %v473, %v811
    %813 = vmatprep.mubr.f32.mxu0 0.0
    %814 = vmatmul.mubr.f32.gmra.mrb[0].mxu0 %v610
    %v815 = vpop.f32.mrb[0].mxu0
    %v816 = vadd.f32 %v477, %v815
    %v817 = vpop.f32.mrb[0].mxu0
    %v818 = vadd.f32 %v479, %v817
    %819 = vmatprep.mubr.f32.mxu0 0.0
    %820 = vmatmul.mubr.f32.gmra.mrb[0].mxu0 %v613
    %v821 = vpop.f32.mrb[0].mxu0
    %v822 = vadd.f32 %v483, %v821
    %v823 = vpop.f32.mrb[0].mxu0
    %v824 = vadd.f32 %v485, %v823
    %825 = vmatprep.mubr.f32.mxu0 0.0
    %826 = vmatmul.mubr.f32.gmra.mrb[0].mxu0 %v616
    %v827 = vpop.f32.mrb[0].mxu0
    %v828 = vadd.f32 %v489, %v827
    %v829 = vpop.f32.mrb[0].mxu0
    %v830 = vadd.f32 %v491, %v829
    %831 = vmatprep.mubr.f32.mxu0 0.0
    %832 = vmatmul.mubr.f32.gmra.mrb[0].mxu0 %v619
    %v833 = vpop.f32.mrb[0].mxu0
    %v834 = vadd.f32 %v495, %v833
    %v835 = vpop.f32.mrb[0].mxu0
    %v836 = vadd.f32 %v497, %v835
    %837 = vmatprep.mubr.f32.mxu0 0.0
    %838 = vmatmul.mubr.f32.gmra.mrb[0].mxu0 %v622
    %v839 = vpop.f32.mrb[0].mxu0
    %v840 = vadd.f32 %v501, %v839
    %v841 = vpop.f32.mrb[0].mxu0
    %v842 = vadd.f32 %v503, %v841
    %843 = vdwg.mxu0
    %844 = vmatprep.subr.mxu0 %v131
    %845 = vmatpush1.msra.mxu0 %v130
    %846 = vmatprep.subr.mxu0 %v137
    %847 = vmatpush1.msra.mxu0 %v136
    %848 = vmatprep.subr.mxu0 %v143
    %849 = vmatpush1.msra.mxu0 %v142
    %850 = vmatprep.subr.mxu0 %v149
    %851 = vmatpush1.msra.mxu0 %v148
    %852 = vmatprep.subr.mxu0 %v155
    %853 = vmatpush1.msra.mxu0 %v154
    %854 = vmatprep.subr.mxu0 %v161
    %855 = vmatpush1.msra.mxu0 %v160
    %856 = vmatprep.subr.mxu0 %v167
    %857 = vmatpush1.msra.mxu0 %v166
    %858 = vmatprep.subr.mxu0 %v173
    %859 = vmatpush1.msra.mxu0 %v172
    %860 = vmatprep.subr.mxu0 %v179
    %861 = vmatpush1.msra.mxu0 %v178
    %862 = vmatprep.subr.mxu0 %v185
    %863 = vmatpush1.msra.mxu0 %v184
    %864 = vmatprep.subr.mxu0 %v640
    %865 = vmatpush1.msra.mxu0 %v637
    %866 = vmatprep.subr.mxu0 0.0
    %867 = vmatpush1.msra.mxu0 0.0
    %868 = vmatprep.subr.mxu0 0.0
    %869 = vmatpush1.msra.mxu0 0.0
    %870 = vmatprep.subr.mxu0 0.0
    %871 = vmatpush1.msra.mxu0 0.0
    %872 = vmatprep.subr.mxu0 0.0
    %873 = vmatpush1.msra.mxu0 0.0
    %874 = vmatprep.subr.mxu0 0.0
    %875 = vmatpush1.msra.mxu0 0.0
    %876 = vmatprep.subr.mxu0 0.0
    %877 = vmatpush1.msra.mxu0 0.0
    %878 = vmatprep.subr.mxu0 0.0
    %879 = vmatpush1.msra.mxu0 0.0
    %880 = vmatprep.subr.mxu0 0.0
    %881 = vmatpush1.msra.mxu0 0.0
    %882 = vmatprep.subr.mxu0 0.0
    %883 = vmatpush1.msra.mxu0 0.0
    %884 = vmatprep.subr.mxu0 0.0
    %885 = vmatpush1.msra.mxu0 0.0
    %886 = vmatprep.subr.mxu0 0.0
    %887 = vmatpush1.msra.mxu0 0.0
    %888 = vmatprep.subr.mxu0 0.0
    %889 = vmatpush1.msra.mxu0 0.0
    %890 = vmatprep.subr.mxu0 0.0
    %891 = vmatpush1.msra.mxu0 0.0
    %892 = vmatprep.subr.mxu0 0.0
    %893 = vmatpush1.msra.mxu0 0.0
    %894 = vmatprep.subr.mxu0 0.0
    %895 = vmatpush1.msra.mxu0 0.0
    %896 = vmatprep.subr.mxu0 0.0
    %897 = vmatpush1.msra.mxu0 0.0
    %898 = vmatprep.subr.mxu0 0.0
    %899 = vmatpush1.msra.mxu0 0.0
    %900 = vmatprep.subr.mxu0 0.0
    %901 = vmatpush1.msra.mxu0 0.0
    %902 = vmatprep.subr.mxu0 0.0
    %903 = vmatpush1.msra.mxu0 0.0
    %904 = vmatprep.subr.mxu0 0.0
    %905 = vmatpush1.msra.mxu0 0.0
    %906 = vmatprep.subr.mxu0 0.0
    %907 = vmatpush1.msra.mxu0 0.0
    %908 = vmatprep.mubr.f32.mxu0 0.0
    %909 = vmatmul.mubr.f32.gmra.mrb[0].mxu0 %v607
    %v910 = vpop.f32.mrb[0].mxu0
    %v911 = vadd.f32 %v572, %v910
    %v912 = vpop.f32.mrb[0].mxu0
    %v913 = vadd.f32 %v574, %v912
    %914 = vmatprep.mubr.f32.mxu0 0.0
    %915 = vmatmul.mubr.f32.gmra.mrb[0].mxu0 %v610
    %v916 = vpop.f32.mrb[0].mxu0
    %v917 = vadd.f32 %v578, %v916
    %v918 = vpop.f32.mrb[0].mxu0
    %v919 = vadd.f32 %v580, %v918
    %920 = vmatprep.mubr.f32.mxu0 0.0
    %921 = vmatmul.mubr.f32.gmra.mrb[0].mxu0 %v613
    %v922 = vpop.f32.mrb[0].mxu0
    %v923 = vadd.f32 %v584, %v922
    %v924 = vpop.f32.mrb[0].mxu0
    %v925 = vadd.f32 %v586, %v924
    %926 = vmatprep.mubr.f32.mxu0 0.0
    %927 = vmatmul.mubr.f32.gmra.mrb[0].mxu0 %v616
    %v928 = vpop.f32.mrb[0].mxu0
    %v929 = vadd.f32 %v590, %v928
    %v930 = vpop.f32.mrb[0].mxu0
    %v931 = vadd.f32 %v592, %v930
    %932 = vmatprep.mubr.f32.mxu0 0.0
    %933 = vmatmul.mubr.f32.gmra.mrb[0].mxu0 %v619
    %v934 = vpop.f32.mrb[0].mxu0
    %v935 = vadd.f32 %v596, %v934
    %v936 = vpop.f32.mrb[0].mxu0
    %v937 = vadd.f32 %v598, %v936
    %938 = vmatprep.mubr.f32.mxu0 0.0
    %939 = vmatmul.mubr.f32.gmra.mrb[0].mxu0 %v622
    %v940 = vpop.f32.mrb[0].mxu0
    %v941 = vadd.f32 %v602, %v940
    %v942 = vpop.f32.mrb[0].mxu0
    %v943 = vadd.f32 %v604, %v942
    %944 = vdwg.mxu0
    %v945 = vld [vmem:[%s0 + $0x2] sm:$0xff]
    %v946 = vld [vmem:[%s0 + $0xa] sm:$0xff]
    %v947 = vld [vmem:[%s0 + $0x12] sm:$0xff]
    %v948 = vld [vmem:[%s0 + $0x1e] sm:$0xff]
    %v949 = vld [vmem:[%s0 + $0x26] sm:$0xff]
    %v950 = vld [vmem:[%s0 + $0x2e] sm:$0xff]
    %s951 = scalar_lea.vmem [#allocation3], 1056
    %v952 = vld [vmem:[%s951] sm:$0xff]
    %v953 = vld [vmem:[%s951 + $0x8] sm:$0xff]
    %v954 = vld [vmem:[%s951 + $0x10] sm:$0xff]
    %v955 = vld [vmem:[%s951 + $0x18] sm:$0xff]
    %v956 = vld [vmem:[%s951 + $0x20] sm:$0xff]
    %v957 = vld [vmem:[%s951 + $0x28] sm:$0xff]
    %v958 = vld [vmem:[%s951 + $0x30] sm:$0xff]
    %v959 = vld [vmem:[%s951 + $0x38] sm:$0xff]
    %v960 = vld [vmem:[%s951 + $0x40] sm:$0xff]
    %v961 = vld [vmem:[%s951 + $0x48] sm:$0xff]
    %v962 = vld [vmem:[%s951 + $0x50] sm:$0xff]
    %v963 = vld [vmem:[%s951 + $0x58] sm:$0xff]
    %v964 = vld [vmem:[%s951 + $0x60] sm:$0xff]
    %v965 = vld [vmem:[%s951 + $0x68] sm:$0xff]
    %v966 = vld [vmem:[%s951 + $0x70] sm:$0xff]
    %v967 = vld [vmem:[%s951 + $0x78] sm:$0xff]
    %v968 = vld [vmem:[%s951 + $0x80] sm:$0xff]
    %v969 = vld [vmem:[%s951 + $0x88] sm:$0xff]
    %v970 = vld [vmem:[%s951 + $0x90] sm:$0xff]
    %v971 = vld [vmem:[%s951 + $0x98] sm:$0xff]
    %v972 = vld [vmem:[%s951 + $0xa0] sm:$0xff]
    %v973 = vld [vmem:[%s951 + $0xa8] sm:$0xff]
    %v974 = vld [vmem:[%s951 + $0xb0] sm:$0xff]
    %v975 = vld [vmem:[%s951 + $0xb8] sm:$0xff]
    %v976 = vld [vmem:[%s951 + $0xc0] sm:$0xff]
    %v977 = vld [vmem:[%s951 + $0xc8] sm:$0xff]
    %v978 = vld [vmem:[%s951 + $0xd0] sm:$0xff]
    %v979 = vld [vmem:[%s951 + $0xd8] sm:$0xff]
    %v980 = vld [vmem:[%s951 + $0xe0] sm:$0xff]
    %v981 = vld [vmem:[%s951 + $0xe8] sm:$0xff]
    %v982 = vld [vmem:[%s951 + $0xf0] sm:$0xff]
    %v983 = vld [vmem:[%s951 + $0xf8] sm:$0xff]
    %v984 = vld [vmem:[%s951 + $0x100] sm:$0xff]
    %v985 = vld [vmem:[%s951 + $0x108] sm:$0xff]
    %v986 = vld [vmem:[%s951 + $0x110] sm:$0xff]
    %v987 = vld [vmem:[%s951 + $0x118] sm:$0xff]
    %v988 = vld [vmem:[%s951 + $0x120] sm:$0xff]
    %v989 = vld [vmem:[%s951 + $0x128] sm:$0xff]
    %v990 = vld [vmem:[%s951 + $0x130] sm:$0xff]
    %v991 = vld [vmem:[%s951 + $0x138] sm:$0xff]
    %v992 = vld [vmem:[%s951 + $0x140] sm:$0xff]
    %v993 = vld [vmem:[%s951 + $0x148] sm:$0xff]
    %v994 = vld [vmem:[%s951 + $0x150] sm:$0xff]
    %v995 = vld [vmem:[%s951 + $0x158] sm:$0xff]
    %v996 = vld [vmem:[%s951 + $0x160] sm:$0xff]
    %v997 = vld [vmem:[%s951 + $0x168] sm:$0xff]
    %v998 = vld [vmem:[%s951 + $0x170] sm:$0xff]
    %v999 = vld [vmem:[%s951 + $0x178] sm:$0xff]
    %v1000 = vld [vmem:[%s951 + $0x180] sm:$0xff]
    %v1001 = vld [vmem:[%s951 + $0x188] sm:$0xff]
    %v1002 = vld [vmem:[%s951 + $0x190] sm:$0xff]
    %v1003 = vld [vmem:[%s951 + $0x198] sm:$0xff]
    %v1004 = vld [vmem:[%s951 + $0x1a0] sm:$0xff]
    %v1005 = vld [vmem:[%s951 + $0x1a8] sm:$0xff]
    %v1006 = vld [vmem:[%s951 + $0x1b0] sm:$0xff]
    %v1007 = vld [vmem:[%s951 + $0x1b8] sm:$0xff]
    %v1008 = vld [vmem:[%s951 + $0x1c0] sm:$0xff]
    %v1009 = vld [vmem:[%s951 + $0x1c8] sm:$0xff]
    %v1010 = vld [vmem:[%s951 + $0x1d0] sm:$0xff]
    %v1011 = vld [vmem:[%s951 + $0x1d8] sm:$0xff]
    %v1012 = vld [vmem:[%s951 + $0x1e0] sm:$0xf]
    %v1013 = vld [vmem:[%s951 + $0x1e8] sm:$0xf]
    %v1014 = vld [vmem:[%s951 + $0x1f0] sm:$0xf]
    %v1015 = vld [vmem:[%s951 + $0x1f8] sm:$0xf]
    %v1016 = vld [vmem:[%s951 + $0x200] sm:$0xf]
    %v1017 = vld [vmem:[%s951 + $0x208] sm:$0xf]
    %v1019 = vsel %vm265, %v945, 0
    %v1022 = vsel %vm265, %v946, 0
    %v1025 = vsel %vm265, %v947, 0
    %v1028 = vsel %vm265, %v948, 0
    %v1031 = vsel %vm265, %v949, 0
    %v1034 = vsel %vm265, %v950, 0
    %v1037 = vsel %vm284, %v1012, 0
    %v1040 = vsel %vm284, %v1013, 0
    %v1043 = vsel %vm284, %v1014, 0
    %v1046 = vsel %vm284, %v1015, 0
    %v1049 = vsel %vm284, %v1016, 0
    %v1052 = vsel %vm284, %v1017, 0
    %1054 = vmatprep.subr.mxu0 %v953
    %1055 = vmatpush1.msra.mxu0 %v952
    %1056 = vmatprep.subr.mxu0 %v959
    %1057 = vmatpush1.msra.mxu0 %v958
    %1058 = vmatprep.subr.mxu0 %v965
    %1059 = vmatpush1.msra.mxu0 %v964
    %1060 = vmatprep.subr.mxu0 %v971
    %1061 = vmatpush1.msra.mxu0 %v970
    %1062 = vmatprep.subr.mxu0 %v977
    %1063 = vmatpush1.msra.mxu0 %v976
    %1064 = vmatprep.subr.mxu0 %v983
    %1065 = vmatpush1.msra.mxu0 %v982
    %1066 = vmatprep.subr.mxu0 %v989
    %1067 = vmatpush1.msra.mxu0 %v988
    %1068 = vmatprep.subr.mxu0 %v995
    %1069 = vmatpush1.msra.mxu0 %v994
    %1070 = vmatprep.subr.mxu0 %v1001
    %1071 = vmatpush1.msra.mxu0 %v1000
    %1072 = vmatprep.subr.mxu0 %v1007
    %1073 = vmatpush1.msra.mxu0 %v1006
    %1074 = vmatprep.subr.mxu0 %v1040
    %1075 = vmatpush1.msra.mxu0 %v1037
    %1076 = vmatprep.subr.mxu0 0.0
    %1077 = vmatpush1.msra.mxu0 0.0
    %1078 = vmatprep.subr.mxu0 0.0
    %1079 = vmatpush1.msra.mxu0 0.0
    %1080 = vmatprep.subr.mxu0 0.0
    %1081 = vmatpush1.msra.mxu0 0.0
    %1082 = vmatprep.subr.mxu0 0.0
    %1083 = vmatpush1.msra.mxu0 0.0
    %1084 = vmatprep.subr.mxu0 0.0
    %1085 = vmatpush1.msra.mxu0 0.0
    %1086 = vmatprep.subr.mxu0 0.0
    %1087 = vmatpush1.msra.mxu0 0.0
    %1088 = vmatprep.subr.mxu0 0.0
    %1089 = vmatpush1.msra.mxu0 0.0
    %1090 = vmatprep.subr.mxu0 0.0
    %1091 = vmatpush1.msra.mxu0 0.0
    %1092 = vmatprep.subr.mxu0 0.0
    %1093 = vmatpush1.msra.mxu0 0.0
    %1094 = vmatprep.subr.mxu0 0.0
    %1095 = vmatpush1.msra.mxu0 0.0
    %1096 = vmatprep.subr.mxu0 0.0
    %1097 = vmatpush1.msra.mxu0 0.0
    %1098 = vmatprep.subr.mxu0 0.0
    %1099 = vmatpush1.msra.mxu0 0.0
    %1100 = vmatprep.subr.mxu0 0.0
    %1101 = vmatpush1.msra.mxu0 0.0
    %1102 = vmatprep.subr.mxu0 0.0
    %1103 = vmatpush1.msra.mxu0 0.0
    %1104 = vmatprep.subr.mxu0 0.0
    %1105 = vmatpush1.msra.mxu0 0.0
    %1106 = vmatprep.subr.mxu0 0.0
    %1107 = vmatpush1.msra.mxu0 0.0
    %1108 = vmatprep.subr.mxu0 0.0
    %1109 = vmatpush1.msra.mxu0 0.0
    %1110 = vmatprep.subr.mxu0 0.0
    %1111 = vmatpush1.msra.mxu0 0.0
    %1112 = vmatprep.subr.mxu0 0.0
    %1113 = vmatpush1.msra.mxu0 0.0
    %1114 = vmatprep.subr.mxu0 0.0
    %1115 = vmatpush1.msra.mxu0 0.0
    %1116 = vmatprep.subr.mxu0 0.0
    %1117 = vmatpush1.msra.mxu0 0.0
    %1118 = vmatprep.mubr.f32.mxu0 0.0
    %1119 = vmatmul.mubr.f32.gmra.mrb[0].mxu0 %v1019
    %v1120 = vpop.f32.mrb[0].mxu0
    %v1121 = vadd.f32 0.0, %v1120
    %v1122 = vpop.f32.mrb[0].mxu0
    %v1123 = vadd.f32 0.0, %v1122
    %1124 = vmatprep.mubr.f32.mxu0 0.0
    %1125 = vmatmul.mubr.f32.gmra.mrb[0].mxu0 %v1022
    %v1126 = vpop.f32.mrb[0].mxu0
    %v1127 = vadd.f32 0.0, %v1126
    %v1128 = vpop.f32.mrb[0].mxu0
    %v1129 = vadd.f32 0.0, %v1128
    %1130 = vmatprep.mubr.f32.mxu0 0.0
    %1131 = vmatmul.mubr.f32.gmra.mrb[0].mxu0 %v1025
    %v1132 = vpop.f32.mrb[0].mxu0
    %v1133 = vadd.f32 0.0, %v1132
    %v1134 = vpop.f32.mrb[0].mxu0
    %v1135 = vadd.f32 0.0, %v1134
    %1136 = vmatprep.mubr.f32.mxu0 0.0
    %1137 = vmatmul.mubr.f32.gmra.mrb[0].mxu0 %v1028
    %v1138 = vpop.f32.mrb[0].mxu0
    %v1139 = vadd.f32 0.0, %v1138
    %v1140 = vpop.f32.mrb[0].mxu0
    %v1141 = vadd.f32 0.0, %v1140
    %1142 = vmatprep.mubr.f32.mxu0 0.0
    %1143 = vmatmul.mubr.f32.gmra.mrb[0].mxu0 %v1031
    %v1144 = vpop.f32.mrb[0].mxu0
    %v1145 = vadd.f32 0.0, %v1144
    %v1146 = vpop.f32.mrb[0].mxu0
    %v1147 = vadd.f32 0.0, %v1146
    %1148 = vmatprep.mubr.f32.mxu0 0.0
    %1149 = vmatmul.mubr.f32.gmra.mrb[0].mxu0 %v1034
    %v1150 = vpop.f32.mrb[0].mxu0
    %v1151 = vadd.f32 0.0, %v1150
    %v1152 = vpop.f32.mrb[0].mxu0
    %v1153 = vadd.f32 0.0, %v1152
    %1154 = vdwg.mxu0
    %1155 = vmatprep.subr.mxu0 %v955
    %1156 = vmatpush1.msra.mxu0 %v954
    %1157 = vmatprep.subr.mxu0 %v961
    %1158 = vmatpush1.msra.mxu0 %v960
    %1159 = vmatprep.subr.mxu0 %v967
    %1160 = vmatpush1.msra.mxu0 %v966
    %1161 = vmatprep.subr.mxu0 %v973
    %1162 = vmatpush1.msra.mxu0 %v972
    %1163 = vmatprep.subr.mxu0 %v979
    %1164 = vmatpush1.msra.mxu0 %v978
    %1165 = vmatprep.subr.mxu0 %v985
    %1166 = vmatpush1.msra.mxu0 %v984
    %1167 = vmatprep.subr.mxu0 %v991
    %1168 = vmatpush1.msra.mxu0 %v990
    %1169 = vmatprep.subr.mxu0 %v997
    %1170 = vmatpush1.msra.mxu0 %v996
    %1171 = vmatprep.subr.mxu0 %v1003
    %1172 = vmatpush1.msra.mxu0 %v1002
    %1173 = vmatprep.subr.mxu0 %v1009
    %1174 = vmatpush1.msra.mxu0 %v1008
    %1175 = vmatprep.subr.mxu0 %v1046
    %1176 = vmatpush1.msra.mxu0 %v1043
    %1177 = vmatprep.subr.mxu0 0.0
    %1178 = vmatpush1.msra.mxu0 0.0
    %1179 = vmatprep.subr.mxu0 0.0
    %1180 = vmatpush1.msra.mxu0 0.0
    %1181 = vmatprep.subr.mxu0 0.0
    %1182 = vmatpush1.msra.mxu0 0.0
    %1183 = vmatprep.subr.mxu0 0.0
    %1184 = vmatpush1.msra.mxu0 0.0
    %1185 = vmatprep.subr.mxu0 0.0
    %1186 = vmatpush1.msra.mxu0 0.0
    %1187 = vmatprep.subr.mxu0 0.0
    %1188 = vmatpush1.msra.mxu0 0.0
    %1189 = vmatprep.subr.mxu0 0.0
    %1190 = vmatpush1.msra.mxu0 0.0
    %1191 = vmatprep.subr.mxu0 0.0
    %1192 = vmatpush1.msra.mxu0 0.0
    %1193 = vmatprep.subr.mxu0 0.0
    %1194 = vmatpush1.msra.mxu0 0.0
    %1195 = vmatprep.subr.mxu0 0.0
    %1196 = vmatpush1.msra.mxu0 0.0
    %1197 = vmatprep.subr.mxu0 0.0
    %1198 = vmatpush1.msra.mxu0 0.0
    %1199 = vmatprep.subr.mxu0 0.0
    %1200 = vmatpush1.msra.mxu0 0.0
    %1201 = vmatprep.subr.mxu0 0.0
    %1202 = vmatpush1.msra.mxu0 0.0
    %1203 = vmatprep.subr.mxu0 0.0
    %1204 = vmatpush1.msra.mxu0 0.0
    %1205 = vmatprep.subr.mxu0 0.0
    %1206 = vmatpush1.msra.mxu0 0.0
    %1207 = vmatprep.subr.mxu0 0.0
    %1208 = vmatpush1.msra.mxu0 0.0
    %1209 = vmatprep.subr.mxu0 0.0
    %1210 = vmatpush1.msra.mxu0 0.0
    %1211 = vmatprep.subr.mxu0 0.0
    %1212 = vmatpush1.msra.mxu0 0.0
    %1213 = vmatprep.subr.mxu0 0.0
    %1214 = vmatpush1.msra.mxu0 0.0
    %1215 = vmatprep.subr.mxu0 0.0
    %1216 = vmatpush1.msra.mxu0 0.0
    %1217 = vmatprep.subr.mxu0 0.0
    %1218 = vmatpush1.msra.mxu0 0.0
    %1219 = vmatprep.mubr.f32.mxu0 0.0
    %1220 = vmatmul.mubr.f32.gmra.mrb[0].mxu0 %v1019
    %v1221 = vpop.f32.mrb[0].mxu0
    %v1222 = vadd.f32 0.0, %v1221
    %v1223 = vpop.f32.mrb[0].mxu0
    %v1224 = vadd.f32 0.0, %v1223
    %1225 = vmatprep.mubr.f32.mxu0 0.0
    %1226 = vmatmul.mubr.f32.gmra.mrb[0].mxu0 %v1022
    %v1227 = vpop.f32.mrb[0].mxu0
    %v1228 = vadd.f32 0.0, %v1227
    %v1229 = vpop.f32.mrb[0].mxu0
    %v1230 = vadd.f32 0.0, %v1229
    %1231 = vmatprep.mubr.f32.mxu0 0.0
    %1232 = vmatmul.mubr.f32.gmra.mrb[0].mxu0 %v1025
    %v1233 = vpop.f32.mrb[0].mxu0
    %v1234 = vadd.f32 0.0, %v1233
    %v1235 = vpop.f32.mrb[0].mxu0
    %v1236 = vadd.f32 0.0, %v1235
    %1237 = vmatprep.mubr.f32.mxu0 0.0
    %1238 = vmatmul.mubr.f32.gmra.mrb[0].mxu0 %v1028
    %v1239 = vpop.f32.mrb[0].mxu0
    %v1240 = vadd.f32 0.0, %v1239
    %v1241 = vpop.f32.mrb[0].mxu0
    %v1242 = vadd.f32 0.0, %v1241
    %1243 = vmatprep.mubr.f32.mxu0 0.0
    %1244 = vmatmul.mubr.f32.gmra.mrb[0].mxu0 %v1031
    %v1245 = vpop.f32.mrb[0].mxu0
    %v1246 = vadd.f32 0.0, %v1245
    %v1247 = vpop.f32.mrb[0].mxu0
    %v1248 = vadd.f32 0.0, %v1247
    %1249 = vmatprep.mubr.f32.mxu0 0.0
    %1250 = vmatmul.mubr.f32.gmra.mrb[0].mxu0 %v1034
    %v1251 = vpop.f32.mrb[0].mxu0
    %v1252 = vadd.f32 0.0, %v1251
    %v1253 = vpop.f32.mrb[0].mxu0
    %v1254 = vadd.f32 0.0, %v1253
    %1255 = vdwg.mxu0
    %1256 = vmatprep.subr.mxu0 %v957
    %1257 = vmatpush1.msra.mxu0 %v956
    %1258 = vmatprep.subr.mxu0 %v963
    %1259 = vmatpush1.msra.mxu0 %v962
    %1260 = vmatprep.subr.mxu0 %v969
    %1261 = vmatpush1.msra.mxu0 %v968
    %1262 = vmatprep.subr.mxu0 %v975
    %1263 = vmatpush1.msra.mxu0 %v974
    %1264 = vmatprep.subr.mxu0 %v981
    %1265 = vmatpush1.msra.mxu0 %v980
    %1266 = vmatprep.subr.mxu0 %v987
    %1267 = vmatpush1.msra.mxu0 %v986
    %1268 = vmatprep.subr.mxu0 %v993
    %1269 = vmatpush1.msra.mxu0 %v992
    %1270 = vmatprep.subr.mxu0 %v999
    %1271 = vmatpush1.msra.mxu0 %v998
    %1272 = vmatprep.subr.mxu0 %v1005
    %1273 = vmatpush1.msra.mxu0 %v1004
    %1274 = vmatprep.subr.mxu0 %v1011
    %1275 = vmatpush1.msra.mxu0 %v1010
    %1276 = vmatprep.subr.mxu0 %v1052
    %1277 = vmatpush1.msra.mxu0 %v1049
    %1278 = vmatprep.subr.mxu0 0.0
    %1279 = vmatpush1.msra.mxu0 0.0
    %1280 = vmatprep.subr.mxu0 0.0
    %1281 = vmatpush1.msra.mxu0 0.0
    %1282 = vmatprep.subr.mxu0 0.0
    %1283 = vmatpush1.msra.mxu0 0.0
    %1284 = vmatprep.subr.mxu0 0.0
    %1285 = vmatpush1.msra.mxu0 0.0
    %1286 = vmatprep.subr.mxu0 0.0
    %1287 = vmatpush1.msra.mxu0 0.0
    %1288 = vmatprep.subr.mxu0 0.0
    %1289 = vmatpush1.msra.mxu0 0.0
    %1290 = vmatprep.subr.mxu0 0.0
    %1291 = vmatpush1.msra.mxu0 0.0
    %1292 = vmatprep.subr.mxu0 0.0
    %1293 = vmatpush1.msra.mxu0 0.0
    %1294 = vmatprep.subr.mxu0 0.0
    %1295 = vmatpush1.msra.mxu0 0.0
    %1296 = vmatprep.subr.mxu0 0.0
    %1297 = vmatpush1.msra.mxu0 0.0
    %1298 = vmatprep.subr.mxu0 0.0
    %1299 = vmatpush1.msra.mxu0 0.0
    %1300 = vmatprep.subr.mxu0 0.0
    %1301 = vmatpush1.msra.mxu0 0.0
    %1302 = vmatprep.subr.mxu0 0.0
    %1303 = vmatpush1.msra.mxu0 0.0
    %1304 = vmatprep.subr.mxu0 0.0
    %1305 = vmatpush1.msra.mxu0 0.0
    %1306 = vmatprep.subr.mxu0 0.0
    %1307 = vmatpush1.msra.mxu0 0.0
    %1308 = vmatprep.subr.mxu0 0.0
    %1309 = vmatpush1.msra.mxu0 0.0
    %1310 = vmatprep.subr.mxu0 0.0
    %1311 = vmatpush1.msra.mxu0 0.0
    %1312 = vmatprep.subr.mxu0 0.0
    %1313 = vmatpush1.msra.mxu0 0.0
    %1314 = vmatprep.subr.mxu0 0.0
    %1315 = vmatpush1.msra.mxu0 0.0
    %1316 = vmatprep.subr.mxu0 0.0
    %1317 = vmatpush1.msra.mxu0 0.0
    %1318 = vmatprep.subr.mxu0 0.0
    %1319 = vmatpush1.msra.mxu0 0.0
    %1320 = vmatprep.mubr.f32.mxu0 0.0
    %1321 = vmatmul.mubr.f32.gmra.mrb[0].mxu0 %v1019
    %v1322 = vpop.f32.mrb[0].mxu0
    %v1323 = vadd.f32 0.0, %v1322
    %v1324 = vpop.f32.mrb[0].mxu0
    %v1325 = vadd.f32 0.0, %v1324
    %1326 = vmatprep.mubr.f32.mxu0 0.0
    %1327 = vmatmul.mubr.f32.gmra.mrb[0].mxu0 %v1022
    %v1328 = vpop.f32.mrb[0].mxu0
    %v1329 = vadd.f32 0.0, %v1328
    %v1330 = vpop.f32.mrb[0].mxu0
    %v1331 = vadd.f32 0.0, %v1330
    %1332 = vmatprep.mubr.f32.mxu0 0.0
    %1333 = vmatmul.mubr.f32.gmra.mrb[0].mxu0 %v1025
    %v1334 = vpop.f32.mrb[0].mxu0
    %v1335 = vadd.f32 0.0, %v1334
    %v1336 = vpop.f32.mrb[0].mxu0
    %v1337 = vadd.f32 0.0, %v1336
    %1338 = vmatprep.mubr.f32.mxu0 0.0
    %1339 = vmatmul.mubr.f32.gmra.mrb[0].mxu0 %v1028
    %v1340 = vpop.f32.mrb[0].mxu0
    %v1341 = vadd.f32 0.0, %v1340
    %v1342 = vpop.f32.mrb[0].mxu0
    %v1343 = vadd.f32 0.0, %v1342
    %1344 = vmatprep.mubr.f32.mxu0 0.0
    %1345 = vmatmul.mubr.f32.gmra.mrb[0].mxu0 %v1031
    %v1346 = vpop.f32.mrb[0].mxu0
    %v1347 = vadd.f32 0.0, %v1346
    %v1348 = vpop.f32.mrb[0].mxu0
    %v1349 = vadd.f32 0.0, %v1348
    %1350 = vmatprep.mubr.f32.mxu0 0.0
    %1351 = vmatmul.mubr.f32.gmra.mrb[0].mxu0 %v1034
    %v1352 = vpop.f32.mrb[0].mxu0
    %v1353 = vadd.f32 0.0, %v1352
    %v1354 = vpop.f32.mrb[0].mxu0
    %v1355 = vadd.f32 0.0, %v1354
    %1356 = vdwg.mxu0
    %v1357 = vadd.f32 %v709, %v1121
    %v1358 = vadd.f32 %v711, %v1123
    %v1359 = vadd.f32 %v810, %v1222
    %v1360 = vadd.f32 %v812, %v1224
    %v1361 = vadd.f32 %v911, %v1323
    %v1362 = vadd.f32 %v913, %v1325
    %v1363 = vadd.f32 %v715, %v1127
    %v1364 = vadd.f32 %v717, %v1129
    %v1365 = vadd.f32 %v816, %v1228
    %v1366 = vadd.f32 %v818, %v1230
    %v1367 = vadd.f32 %v917, %v1329
    %v1368 = vadd.f32 %v919, %v1331
    %v1369 = vadd.f32 %v721, %v1133
    %v1370 = vadd.f32 %v723, %v1135
    %v1371 = vadd.f32 %v822, %v1234
    %v1372 = vadd.f32 %v824, %v1236
    %v1373 = vadd.f32 %v923, %v1335
    %v1374 = vadd.f32 %v925, %v1337
    %v1375 = vadd.f32 %v727, %v1139
    %v1376 = vadd.f32 %v729, %v1141
    %v1377 = vadd.f32 %v828, %v1240
    %v1378 = vadd.f32 %v830, %v1242
    %v1379 = vadd.f32 %v929, %v1341
    %v1380 = vadd.f32 %v931, %v1343
    %v1381 = vadd.f32 %v733, %v1145
    %v1382 = vadd.f32 %v735, %v1147
    %v1383 = vadd.f32 %v834, %v1246
    %v1384 = vadd.f32 %v836, %v1248
    %v1385 = vadd.f32 %v935, %v1347
    %v1386 = vadd.f32 %v937, %v1349
    %v1387 = vadd.f32 %v739, %v1151
    %v1388 = vadd.f32 %v741, %v1153
    %v1389 = vadd.f32 %v840, %v1252
    %v1390 = vadd.f32 %v842, %v1254
    %v1391 = vadd.f32 %v941, %v1353
    %v1392 = vadd.f32 %v943, %v1355
    %v1393 = vld [vmem:[%s0 + $0x3] sm:$0xff]
    %v1394 = vld [vmem:[%s0 + $0xb] sm:$0xff]
    %v1395 = vld [vmem:[%s0 + $0x13] sm:$0xff]
    %v1396 = vld [vmem:[%s0 + $0x1f] sm:$0xff]
    %v1397 = vld [vmem:[%s0 + $0x27] sm:$0xff]
    %v1398 = vld [vmem:[%s0 + $0x2f] sm:$0xff]
    %s1399 = scalar_lea.vmem [#allocation3], 1584
    %v1400 = vld [vmem:[%s1399] sm:$0xff]
    %v1401 = vld [vmem:[%s1399 + $0x8] sm:$0xff]
    %v1402 = vld [vmem:[%s1399 + $0x10] sm:$0xff]
    %v1403 = vld [vmem:[%s1399 + $0x18] sm:$0xff]
    %v1404 = vld [vmem:[%s1399 + $0x20] sm:$0xff]
    %v1405 = vld [vmem:[%s1399 + $0x28] sm:$0xff]
    %v1406 = vld [vmem:[%s1399 + $0x30] sm:$0xff]
    %v1407 = vld [vmem:[%s1399 + $0x38] sm:$0xff]
    %v1408 = vld [vmem:[%s1399 + $0x40] sm:$0xff]
    %v1409 = vld [vmem:[%s1399 + $0x48] sm:$0xff]
    %v1410 = vld [vmem:[%s1399 + $0x50] sm:$0xff]
    %v1411 = vld [vmem:[%s1399 + $0x58] sm:$0xff]
    %v1412 = vld [vmem:[%s1399 + $0x60] sm:$0xff]
    %v1413 = vld [vmem:[%s1399 + $0x68] sm:$0xff]
    %v1414 = vld [vmem:[%s1399 + $0x70] sm:$0xff]
    %v1415 = vld [vmem:[%s1399 + $0x78] sm:$0xff]
    %v1416 = vld [vmem:[%s1399 + $0x80] sm:$0xff]
    %v1417 = vld [vmem:[%s1399 + $0x88] sm:$0xff]
    %v1418 = vld [vmem:[%s1399 + $0x90] sm:$0xff]
    %v1419 = vld [vmem:[%s1399 + $0x98] sm:$0xff]
    %v1420 = vld [vmem:[%s1399 + $0xa0] sm:$0xff]
    %v1421 = vld [vmem:[%s1399 + $0xa8] sm:$0xff]
    %v1422 = vld [vmem:[%s1399 + $0xb0] sm:$0xff]
    %v1423 = vld [vmem:[%s1399 + $0xb8] sm:$0xff]
    %v1424 = vld [vmem:[%s1399 + $0xc0] sm:$0xff]
    %v1425 = vld [vmem:[%s1399 + $0xc8] sm:$0xff]
    %v1426 = vld [vmem:[%s1399 + $0xd0] sm:$0xff]
    %v1427 = vld [vmem:[%s1399 + $0xd8] sm:$0xff]
    %v1428 = vld [vmem:[%s1399 + $0xe0] sm:$0xff]
    %v1429 = vld [vmem:[%s1399 + $0xe8] sm:$0xff]
    %v1430 = vld [vmem:[%s1399 + $0xf0] sm:$0xff]
    %v1431 = vld [vmem:[%s1399 + $0xf8] sm:$0xff]
    %v1432 = vld [vmem:[%s1399 + $0x100] sm:$0xff]
    %v1433 = vld [vmem:[%s1399 + $0x108] sm:$0xff]
    %v1434 = vld [vmem:[%s1399 + $0x110] sm:$0xff]
    %v1435 = vld [vmem:[%s1399 + $0x118] sm:$0xff]
    %v1436 = vld [vmem:[%s1399 + $0x120] sm:$0xff]
    %v1437 = vld [vmem:[%s1399 + $0x128] sm:$0xff]
    %v1438 = vld [vmem:[%s1399 + $0x130] sm:$0xff]
    %v1439 = vld [vmem:[%s1399 + $0x138] sm:$0xff]
    %v1440 = vld [vmem:[%s1399 + $0x140] sm:$0xff]
    %v1441 = vld [vmem:[%s1399 + $0x148] sm:$0xff]
    %v1442 = vld [vmem:[%s1399 + $0x150] sm:$0xff]
    %v1443 = vld [vmem:[%s1399 + $0x158] sm:$0xff]
    %v1444 = vld [vmem:[%s1399 + $0x160] sm:$0xff]
    %v1445 = vld [vmem:[%s1399 + $0x168] sm:$0xff]
    %v1446 = vld [vmem:[%s1399 + $0x170] sm:$0xff]
    %v1447 = vld [vmem:[%s1399 + $0x178] sm:$0xff]
    %v1448 = vld [vmem:[%s1399 + $0x180] sm:$0xff]
    %v1449 = vld [vmem:[%s1399 + $0x188] sm:$0xff]
    %v1450 = vld [vmem:[%s1399 + $0x190] sm:$0xff]
    %v1451 = vld [vmem:[%s1399 + $0x198] sm:$0xff]
    %v1452 = vld [vmem:[%s1399 + $0x1a0] sm:$0xff]
    %v1453 = vld [vmem:[%s1399 + $0x1a8] sm:$0xff]
    %v1454 = vld [vmem:[%s1399 + $0x1b0] sm:$0xff]
    %v1455 = vld [vmem:[%s1399 + $0x1b8] sm:$0xff]
    %v1456 = vld [vmem:[%s1399 + $0x1c0] sm:$0xff]
    %v1457 = vld [vmem:[%s1399 + $0x1c8] sm:$0xff]
    %v1458 = vld [vmem:[%s1399 + $0x1d0] sm:$0xff]
    %v1459 = vld [vmem:[%s1399 + $0x1d8] sm:$0xff]
    %v1460 = vld [vmem:[%s1399 + $0x1e0] sm:$0xf]
    %v1461 = vld [vmem:[%s1399 + $0x1e8] sm:$0xf]
    %v1462 = vld [vmem:[%s1399 + $0x1f0] sm:$0xf]
    %v1463 = vld [vmem:[%s1399 + $0x1f8] sm:$0xf]
    %v1464 = vld [vmem:[%s1399 + $0x200] sm:$0xf]
    %v1465 = vld [vmem:[%s1399 + $0x208] sm:$0xf]
    %v1467 = vsel %vm265, %v1393, 0
    %v1470 = vsel %vm265, %v1394, 0
    %v1473 = vsel %vm265, %v1395, 0
    %v1476 = vsel %vm265, %v1396, 0
    %v1479 = vsel %vm265, %v1397, 0
    %v1482 = vsel %vm265, %v1398, 0
    %v1485 = vsel %vm284, %v1460, 0
    %v1488 = vsel %vm284, %v1461, 0
    %v1491 = vsel %vm284, %v1462, 0
    %v1494 = vsel %vm284, %v1463, 0
    %v1497 = vsel %vm284, %v1464, 0
    %v1500 = vsel %vm284, %v1465, 0
    %1502 = vmatprep.subr.mxu0 %v1401
    %1503 = vmatpush1.msra.mxu0 %v1400
    %1504 = vmatprep.subr.mxu0 %v1407
    %1505 = vmatpush1.msra.mxu0 %v1406
    %1506 = vmatprep.subr.mxu0 %v1413
    %1507 = vmatpush1.msra.mxu0 %v1412
    %1508 = vmatprep.subr.mxu0 %v1419
    %1509 = vmatpush1.msra.mxu0 %v1418
    %1510 = vmatprep.subr.mxu0 %v1425
    %1511 = vmatpush1.msra.mxu0 %v1424
    %1512 = vmatprep.subr.mxu0 %v1431
    %1513 = vmatpush1.msra.mxu0 %v1430
    %1514 = vmatprep.subr.mxu0 %v1437
    %1515 = vmatpush1.msra.mxu0 %v1436
    %1516 = vmatprep.subr.mxu0 %v1443
    %1517 = vmatpush1.msra.mxu0 %v1442
    %1518 = vmatprep.subr.mxu0 %v1449
    %1519 = vmatpush1.msra.mxu0 %v1448
    %1520 = vmatprep.subr.mxu0 %v1455
    %1521 = vmatpush1.msra.mxu0 %v1454
    %1522 = vmatprep.subr.mxu0 %v1488
    %1523 = vmatpush1.msra.mxu0 %v1485
    %1524 = vmatprep.subr.mxu0 0.0
    %1525 = vmatpush1.msra.mxu0 0.0
    %1526 = vmatprep.subr.mxu0 0.0
    %1527 = vmatpush1.msra.mxu0 0.0
    %1528 = vmatprep.subr.mxu0 0.0
    %1529 = vmatpush1.msra.mxu0 0.0
    %1530 = vmatprep.subr.mxu0 0.0
    %1531 = vmatpush1.msra.mxu0 0.0
    %1532 = vmatprep.subr.mxu0 0.0
    %1533 = vmatpush1.msra.mxu0 0.0
    %1534 = vmatprep.subr.mxu0 0.0
    %1535 = vmatpush1.msra.mxu0 0.0
    %1536 = vmatprep.subr.mxu0 0.0
    %1537 = vmatpush1.msra.mxu0 0.0
    %1538 = vmatprep.subr.mxu0 0.0
    %1539 = vmatpush1.msra.mxu0 0.0
    %1540 = vmatprep.subr.mxu0 0.0
    %1541 = vmatpush1.msra.mxu0 0.0
    %1542 = vmatprep.subr.mxu0 0.0
    %1543 = vmatpush1.msra.mxu0 0.0
    %1544 = vmatprep.subr.mxu0 0.0
    %1545 = vmatpush1.msra.mxu0 0.0
    %1546 = vmatprep.subr.mxu0 0.0
    %1547 = vmatpush1.msra.mxu0 0.0
    %1548 = vmatprep.subr.mxu0 0.0
    %1549 = vmatpush1.msra.mxu0 0.0
    %1550 = vmatprep.subr.mxu0 0.0
    %1551 = vmatpush1.msra.mxu0 0.0
    %1552 = vmatprep.subr.mxu0 0.0
    %1553 = vmatpush1.msra.mxu0 0.0
    %1554 = vmatprep.subr.mxu0 0.0
    %1555 = vmatpush1.msra.mxu0 0.0
    %1556 = vmatprep.subr.mxu0 0.0
    %1557 = vmatpush1.msra.mxu0 0.0
    %1558 = vmatprep.subr.mxu0 0.0
    %1559 = vmatpush1.msra.mxu0 0.0
    %1560 = vmatprep.subr.mxu0 0.0
    %1561 = vmatpush1.msra.mxu0 0.0
    %1562 = vmatprep.subr.mxu0 0.0
    %1563 = vmatpush1.msra.mxu0 0.0
    %1564 = vmatprep.subr.mxu0 0.0
    %1565 = vmatpush1.msra.mxu0 0.0
    %1566 = vmatprep.mubr.f32.mxu0 0.0
    %1567 = vmatmul.mubr.f32.gmra.mrb[0].mxu0 %v1467
    %v1568 = vpop.f32.mrb[0].mxu0
    %v1569 = vadd.f32 0.0, %v1568
    %v1570 = vpop.f32.mrb[0].mxu0
    %v1571 = vadd.f32 0.0, %v1570
    %1572 = vmatprep.mubr.f32.mxu0 0.0
    %1573 = vmatmul.mubr.f32.gmra.mrb[0].mxu0 %v1470
    %v1574 = vpop.f32.mrb[0].mxu0
    %v1575 = vadd.f32 0.0, %v1574
    %v1576 = vpop.f32.mrb[0].mxu0
    %v1577 = vadd.f32 0.0, %v1576
    %1578 = vmatprep.mubr.f32.mxu0 0.0
    %1579 = vmatmul.mubr.f32.gmra.mrb[0].mxu0 %v1473
    %v1580 = vpop.f32.mrb[0].mxu0
    %v1581 = vadd.f32 0.0, %v1580
    %v1582 = vpop.f32.mrb[0].mxu0
    %v1583 = vadd.f32 0.0, %v1582
    %1584 = vmatprep.mubr.f32.mxu0 0.0
    %1585 = vmatmul.mubr.f32.gmra.mrb[0].mxu0 %v1476
    %v1586 = vpop.f32.mrb[0].mxu0
    %v1587 = vadd.f32 0.0, %v1586
    %v1588 = vpop.f32.mrb[0].mxu0
    %v1589 = vadd.f32 0.0, %v1588
    %1590 = vmatprep.mubr.f32.mxu0 0.0
    %1591 = vmatmul.mubr.f32.gmra.mrb[0].mxu0 %v1479
    %v1592 = vpop.f32.mrb[0].mxu0
    %v1593 = vadd.f32 0.0, %v1592
    %v1594 = vpop.f32.mrb[0].mxu0
    %v1595 = vadd.f32 0.0, %v1594
    %1596 = vmatprep.mubr.f32.mxu0 0.0
    %1597 = vmatmul.mubr.f32.gmra.mrb[0].mxu0 %v1482
    %v1598 = vpop.f32.mrb[0].mxu0
    %v1599 = vadd.f32 0.0, %v1598
    %v1600 = vpop.f32.mrb[0].mxu0
    %v1601 = vadd.f32 0.0, %v1600
    %1602 = vdwg.mxu0
    %1603 = vmatprep.subr.mxu0 %v1403
    %1604 = vmatpush1.msra.mxu0 %v1402
    %1605 = vmatprep.subr.mxu0 %v1409
    %1606 = vmatpush1.msra.mxu0 %v1408
    %1607 = vmatprep.subr.mxu0 %v1415
    %1608 = vmatpush1.msra.mxu0 %v1414
    %1609 = vmatprep.subr.mxu0 %v1421
    %1610 = vmatpush1.msra.mxu0 %v1420
    %1611 = vmatprep.subr.mxu0 %v1427
    %1612 = vmatpush1.msra.mxu0 %v1426
    %1613 = vmatprep.subr.mxu0 %v1433
    %1614 = vmatpush1.msra.mxu0 %v1432
    %1615 = vmatprep.subr.mxu0 %v1439
    %1616 = vmatpush1.msra.mxu0 %v1438
    %1617 = vmatprep.subr.mxu0 %v1445
    %1618 = vmatpush1.msra.mxu0 %v1444
    %1619 = vmatprep.subr.mxu0 %v1451
    %1620 = vmatpush1.msra.mxu0 %v1450
    %1621 = vmatprep.subr.mxu0 %v1457
    %1622 = vmatpush1.msra.mxu0 %v1456
    %1623 = vmatprep.subr.mxu0 %v1494
    %1624 = vmatpush1.msra.mxu0 %v1491
    %1625 = vmatprep.subr.mxu0 0.0
    %1626 = vmatpush1.msra.mxu0 0.0
    %1627 = vmatprep.subr.mxu0 0.0
    %1628 = vmatpush1.msra.mxu0 0.0
    %1629 = vmatprep.subr.mxu0 0.0
    %1630 = vmatpush1.msra.mxu0 0.0
    %1631 = vmatprep.subr.mxu0 0.0
    %1632 = vmatpush1.msra.mxu0 0.0
    %1633 = vmatprep.subr.mxu0 0.0
    %1634 = vmatpush1.msra.mxu0 0.0
    %1635 = vmatprep.subr.mxu0 0.0
    %1636 = vmatpush1.msra.mxu0 0.0
    %1637 = vmatprep.subr.mxu0 0.0
    %1638 = vmatpush1.msra.mxu0 0.0
    %1639 = vmatprep.subr.mxu0 0.0
    %1640 = vmatpush1.msra.mxu0 0.0
    %1641 = vmatprep.subr.mxu0 0.0
    %1642 = vmatpush1.msra.mxu0 0.0
    %1643 = vmatprep.subr.mxu0 0.0
    %1644 = vmatpush1.msra.mxu0 0.0
    %1645 = vmatprep.subr.mxu0 0.0
    %1646 = vmatpush1.msra.mxu0 0.0
    %1647 = vmatprep.subr.mxu0 0.0
    %1648 = vmatpush1.msra.mxu0 0.0
    %1649 = vmatprep.subr.mxu0 0.0
    %1650 = vmatpush1.msra.mxu0 0.0
    %1651 = vmatprep.subr.mxu0 0.0
    %1652 = vmatpush1.msra.mxu0 0.0
    %1653 = vmatprep.subr.mxu0 0.0
    %1654 = vmatpush1.msra.mxu0 0.0
    %1655 = vmatprep.subr.mxu0 0.0
    %1656 = vmatpush1.msra.mxu0 0.0
    %1657 = vmatprep.subr.mxu0 0.0
    %1658 = vmatpush1.msra.mxu0 0.0
    %1659 = vmatprep.subr.mxu0 0.0
    %1660 = vmatpush1.msra.mxu0 0.0
    %1661 = vmatprep.subr.mxu0 0.0
    %1662 = vmatpush1.msra.mxu0 0.0
    %1663 = vmatprep.subr.mxu0 0.0
    %1664 = vmatpush1.msra.mxu0 0.0
    %1665 = vmatprep.subr.mxu0 0.0
    %1666 = vmatpush1.msra.mxu0 0.0
    %1667 = vmatprep.mubr.f32.mxu0 0.0
    %1668 = vmatmul.mubr.f32.gmra.mrb[0].mxu0 %v1467
    %v1669 = vpop.f32.mrb[0].mxu0
    %v1670 = vadd.f32 0.0, %v1669
    %v1671 = vpop.f32.mrb[0].mxu0
    %v1672 = vadd.f32 0.0, %v1671
    %1673 = vmatprep.mubr.f32.mxu0 0.0
    %1674 = vmatmul.mubr.f32.gmra.mrb[0].mxu0 %v1470
    %v1675 = vpop.f32.mrb[0].mxu0
    %v1676 = vadd.f32 0.0, %v1675
    %v1677 = vpop.f32.mrb[0].mxu0
    %v1678 = vadd.f32 0.0, %v1677
    %1679 = vmatprep.mubr.f32.mxu0 0.0
    %1680 = vmatmul.mubr.f32.gmra.mrb[0].mxu0 %v1473
    %v1681 = vpop.f32.mrb[0].mxu0
    %v1682 = vadd.f32 0.0, %v1681
    %v1683 = vpop.f32.mrb[0].mxu0
    %v1684 = vadd.f32 0.0, %v1683
    %1685 = vmatprep.mubr.f32.mxu0 0.0
    %1686 = vmatmul.mubr.f32.gmra.mrb[0].mxu0 %v1476
    %v1687 = vpop.f32.mrb[0].mxu0
    %v1688 = vadd.f32 0.0, %v1687
    %v1689 = vpop.f32.mrb[0].mxu0
    %v1690 = vadd.f32 0.0, %v1689
    %1691 = vmatprep.mubr.f32.mxu0 0.0
    %1692 = vmatmul.mubr.f32.gmra.mrb[0].mxu0 %v1479
    %v1693 = vpop.f32.mrb[0].mxu0
    %v1694 = vadd.f32 0.0, %v1693
    %v1695 = vpop.f32.mrb[0].mxu0
    %v1696 = vadd.f32 0.0, %v1695
    %1697 = vmatprep.mubr.f32.mxu0 0.0
    %1698 = vmatmul.mubr.f32.gmra.mrb[0].mxu0 %v1482
    %v1699 = vpop.f32.mrb[0].mxu0
    %v1700 = vadd.f32 0.0, %v1699
    %v1701 = vpop.f32.mrb[0].mxu0
    %v1702 = vadd.f32 0.0, %v1701
    %1703 = vdwg.mxu0
    %1704 = vmatprep.subr.mxu0 %v1405
    %1705 = vmatpush1.msra.mxu0 %v1404
    %1706 = vmatprep.subr.mxu0 %v1411
    %1707 = vmatpush1.msra.mxu0 %v1410
    %1708 = vmatprep.subr.mxu0 %v1417
    %1709 = vmatpush1.msra.mxu0 %v1416
    %1710 = vmatprep.subr.mxu0 %v1423
    %1711 = vmatpush1.msra.mxu0 %v1422
    %1712 = vmatprep.subr.mxu0 %v1429
    %1713 = vmatpush1.msra.mxu0 %v1428
    %1714 = vmatprep.subr.mxu0 %v1435
    %1715 = vmatpush1.msra.mxu0 %v1434
    %1716 = vmatprep.subr.mxu0 %v1441
    %1717 = vmatpush1.msra.mxu0 %v1440
    %1718 = vmatprep.subr.mxu0 %v1447
    %1719 = vmatpush1.msra.mxu0 %v1446
    %1720 = vmatprep.subr.mxu0 %v1453
    %1721 = vmatpush1.msra.mxu0 %v1452
    %1722 = vmatprep.subr.mxu0 %v1459
    %1723 = vmatpush1.msra.mxu0 %v1458
    %1724 = vmatprep.subr.mxu0 %v1500
    %1725 = vmatpush1.msra.mxu0 %v1497
    %1726 = vmatprep.subr.mxu0 0.0
    %1727 = vmatpush1.msra.mxu0 0.0
    %1728 = vmatprep.subr.mxu0 0.0
    %1729 = vmatpush1.msra.mxu0 0.0
    %1730 = vmatprep.subr.mxu0 0.0
    %1731 = vmatpush1.msra.mxu0 0.0
    %1732 = vmatprep.subr.mxu0 0.0
    %1733 = vmatpush1.msra.mxu0 0.0
    %1734 = vmatprep.subr.mxu0 0.0
    %1735 = vmatpush1.msra.mxu0 0.0
    %1736 = vmatprep.subr.mxu0 0.0
    %1737 = vmatpush1.msra.mxu0 0.0
    %1738 = vmatprep.subr.mxu0 0.0
    %1739 = vmatpush1.msra.mxu0 0.0
    %1740 = vmatprep.subr.mxu0 0.0
    %1741 = vmatpush1.msra.mxu0 0.0
    %1742 = vmatprep.subr.mxu0 0.0
    %1743 = vmatpush1.msra.mxu0 0.0
    %1744 = vmatprep.subr.mxu0 0.0
    %1745 = vmatpush1.msra.mxu0 0.0
    %1746 = vmatprep.subr.mxu0 0.0
    %1747 = vmatpush1.msra.mxu0 0.0
    %1748 = vmatprep.subr.mxu0 0.0
    %1749 = vmatpush1.msra.mxu0 0.0
    %1750 = vmatprep.subr.mxu0 0.0
    %1751 = vmatpush1.msra.mxu0 0.0
    %1752 = vmatprep.subr.mxu0 0.0
    %1753 = vmatpush1.msra.mxu0 0.0
    %1754 = vmatprep.subr.mxu0 0.0
    %1755 = vmatpush1.msra.mxu0 0.0
    %1756 = vmatprep.subr.mxu0 0.0
    %1757 = vmatpush1.msra.mxu0 0.0
    %1758 = vmatprep.subr.mxu0 0.0
    %1759 = vmatpush1.msra.mxu0 0.0
    %1760 = vmatprep.subr.mxu0 0.0
    %1761 = vmatpush1.msra.mxu0 0.0
    %1762 = vmatprep.subr.mxu0 0.0
    %1763 = vmatpush1.msra.mxu0 0.0
    %1764 = vmatprep.subr.mxu0 0.0
    %1765 = vmatpush1.msra.mxu0 0.0
    %1766 = vmatprep.subr.mxu0 0.0
    %1767 = vmatpush1.msra.mxu0 0.0
    %1768 = vmatprep.mubr.f32.mxu0 0.0
    %1769 = vmatmul.mubr.f32.gmra.mrb[0].mxu0 %v1467
    %v1770 = vpop.f32.mrb[0].mxu0
    %v1771 = vadd.f32 0.0, %v1770
    %v1772 = vpop.f32.mrb[0].mxu0
    %v1773 = vadd.f32 0.0, %v1772
    %1774 = vmatprep.mubr.f32.mxu0 0.0
    %1775 = vmatmul.mubr.f32.gmra.mrb[0].mxu0 %v1470
    %v1776 = vpop.f32.mrb[0].mxu0
    %v1777 = vadd.f32 0.0, %v1776
    %v1778 = vpop.f32.mrb[0].mxu0
    %v1779 = vadd.f32 0.0, %v1778
    %1780 = vmatprep.mubr.f32.mxu0 0.0
    %1781 = vmatmul.mubr.f32.gmra.mrb[0].mxu0 %v1473
    %v1782 = vpop.f32.mrb[0].mxu0
    %v1783 = vadd.f32 0.0, %v1782
    %v1784 = vpop.f32.mrb[0].mxu0
    %v1785 = vadd.f32 0.0, %v1784
    %1786 = vmatprep.mubr.f32.mxu0 0.0
    %1787 = vmatmul.mubr.f32.gmra.mrb[0].mxu0 %v1476
    %v1788 = vpop.f32.mrb[0].mxu0
    %v1789 = vadd.f32 0.0, %v1788
    %v1790 = vpop.f32.mrb[0].mxu0
    %v1791 = vadd.f32 0.0, %v1790
    %1792 = vmatprep.mubr.f32.mxu0 0.0
    %1793 = vmatmul.mubr.f32.gmra.mrb[0].mxu0 %v1479
    %v1794 = vpop.f32.mrb[0].mxu0
    %v1795 = vadd.f32 0.0, %v1794
    %v1796 = vpop.f32.mrb[0].mxu0
    %v1797 = vadd.f32 0.0, %v1796
    %1798 = vmatprep.mubr.f32.mxu0 0.0
    %1799 = vmatmul.mubr.f32.gmra.mrb[0].mxu0 %v1482
    %v1800 = vpop.f32.mrb[0].mxu0
    %v1801 = vadd.f32 0.0, %v1800
    %v1802 = vpop.f32.mrb[0].mxu0
    %v1803 = vadd.f32 0.0, %v1802
    %1804 = vdwg.mxu0
    %v1805 = vadd.f32 %v1357, %v1569
    %v1806 = vadd.f32 %v1358, %v1571
    %v1807 = vadd.f32 %v1359, %v1670
    %v1808 = vadd.f32 %v1360, %v1672
    %v1809 = vadd.f32 %v1361, %v1771
    %v1810 = vadd.f32 %v1362, %v1773
    %v1811 = vadd.f32 %v1363, %v1575
    %v1812 = vadd.f32 %v1364, %v1577
    %v1813 = vadd.f32 %v1365, %v1676
    %v1814 = vadd.f32 %v1366, %v1678
    %v1815 = vadd.f32 %v1367, %v1777
    %v1816 = vadd.f32 %v1368, %v1779
    %v1817 = vadd.f32 %v1369, %v1581
    %v1818 = vadd.f32 %v1370, %v1583
    %v1819 = vadd.f32 %v1371, %v1682
    %v1820 = vadd.f32 %v1372, %v1684
    %v1821 = vadd.f32 %v1373, %v1783
    %v1822 = vadd.f32 %v1374, %v1785
    %v1823 = vadd.f32 %v1375, %v1587
    %v1824 = vadd.f32 %v1376, %v1589
    %v1825 = vadd.f32 %v1377, %v1688
    %v1826 = vadd.f32 %v1378, %v1690
    %v1827 = vadd.f32 %v1379, %v1789
    %v1828 = vadd.f32 %v1380, %v1791
    %v1829 = vadd.f32 %v1381, %v1593
    %v1830 = vadd.f32 %v1382, %v1595
    %v1831 = vadd.f32 %v1383, %v1694
    %v1832 = vadd.f32 %v1384, %v1696
    %v1833 = vadd.f32 %v1385, %v1795
    %v1834 = vadd.f32 %v1386, %v1797
    %v1835 = vadd.f32 %v1387, %v1599
    %v1836 = vadd.f32 %v1388, %v1601
    %v1837 = vadd.f32 %v1389, %v1700
    %v1838 = vadd.f32 %v1390, %v1702
    %v1839 = vadd.f32 %v1391, %v1801
    %v1840 = vadd.f32 %v1392, %v1803
    %v1841 = vld [vmem:[%s0 + $0x4] sm:$0xff]
    %v1842 = vld [vmem:[%s0 + $0xc] sm:$0xff]
    %v1843 = vld [vmem:[%s0 + $0x14] sm:$0xff]
    %v1844 = vld [vmem:[%s0 + $0x20] sm:$0xff]
    %v1845 = vld [vmem:[%s0 + $0x28] sm:$0xff]
    %v1846 = vld [vmem:[%s0 + $0x30] sm:$0xff]
    %s1847 = scalar_lea.vmem [#allocation3], 2112
    %v1848 = vld [vmem:[%s1847] sm:$0xff]
    %v1849 = vld [vmem:[%s1847 + $0x8] sm:$0xff]
    %v1850 = vld [vmem:[%s1847 + $0x10] sm:$0xff]
    %v1851 = vld [vmem:[%s1847 + $0x18] sm:$0xff]
    %v1852 = vld [vmem:[%s1847 + $0x20] sm:$0xff]
    %v1853 = vld [vmem:[%s1847 + $0x28] sm:$0xff]
    %v1854 = vld [vmem:[%s1847 + $0x30] sm:$0xff]
    %v1855 = vld [vmem:[%s1847 + $0x38] sm:$0xff]
    %v1856 = vld [vmem:[%s1847 + $0x40] sm:$0xff]
    %v1857 = vld [vmem:[%s1847 + $0x48] sm:$0xff]
    %v1858 = vld [vmem:[%s1847 + $0x50] sm:$0xff]
    %v1859 = vld [vmem:[%s1847 + $0x58] sm:$0xff]
    %v1860 = vld [vmem:[%s1847 + $0x60] sm:$0xff]
    %v1861 = vld [vmem:[%s1847 + $0x68] sm:$0xff]
    %v1862 = vld [vmem:[%s1847 + $0x70] sm:$0xff]
    %v1863 = vld [vmem:[%s1847 + $0x78] sm:$0xff]
    %v1864 = vld [vmem:[%s1847 + $0x80] sm:$0xff]
    %v1865 = vld [vmem:[%s1847 + $0x88] sm:$0xff]
    %v1866 = vld [vmem:[%s1847 + $0x90] sm:$0xff]
    %v1867 = vld [vmem:[%s1847 + $0x98] sm:$0xff]
    %v1868 = vld [vmem:[%s1847 + $0xa0] sm:$0xff]
    %v1869 = vld [vmem:[%s1847 + $0xa8] sm:$0xff]
    %v1870 = vld [vmem:[%s1847 + $0xb0] sm:$0xff]
    %v1871 = vld [vmem:[%s1847 + $0xb8] sm:$0xff]
    %v1872 = vld [vmem:[%s1847 + $0xc0] sm:$0xff]
    %v1873 = vld [vmem:[%s1847 + $0xc8] sm:$0xff]
    %v1874 = vld [vmem:[%s1847 + $0xd0] sm:$0xff]
    %v1875 = vld [vmem:[%s1847 + $0xd8] sm:$0xff]
    %v1876 = vld [vmem:[%s1847 + $0xe0] sm:$0xff]
    %v1877 = vld [vmem:[%s1847 + $0xe8] sm:$0xff]
    %v1878 = vld [vmem:[%s1847 + $0xf0] sm:$0xff]
    %v1879 = vld [vmem:[%s1847 + $0xf8] sm:$0xff]
    %v1880 = vld [vmem:[%s1847 + $0x100] sm:$0xff]
    %v1881 = vld [vmem:[%s1847 + $0x108] sm:$0xff]
    %v1882 = vld [vmem:[%s1847 + $0x110] sm:$0xff]
    %v1883 = vld [vmem:[%s1847 + $0x118] sm:$0xff]
    %v1884 = vld [vmem:[%s1847 + $0x120] sm:$0xff]
    %v1885 = vld [vmem:[%s1847 + $0x128] sm:$0xff]
    %v1886 = vld [vmem:[%s1847 + $0x130] sm:$0xff]
    %v1887 = vld [vmem:[%s1847 + $0x138] sm:$0xff]
    %v1888 = vld [vmem:[%s1847 + $0x140] sm:$0xff]
    %v1889 = vld [vmem:[%s1847 + $0x148] sm:$0xff]
    %v1890 = vld [vmem:[%s1847 + $0x150] sm:$0xff]
    %v1891 = vld [vmem:[%s1847 + $0x158] sm:$0xff]
    %v1892 = vld [vmem:[%s1847 + $0x160] sm:$0xff]
    %v1893 = vld [vmem:[%s1847 + $0x168] sm:$0xff]
    %v1894 = vld [vmem:[%s1847 + $0x170] sm:$0xff]
    %v1895 = vld [vmem:[%s1847 + $0x178] sm:$0xff]
    %v1896 = vld [vmem:[%s1847 + $0x180] sm:$0xff]
    %v1897 = vld [vmem:[%s1847 + $0x188] sm:$0xff]
    %v1898 = vld [vmem:[%s1847 + $0x190] sm:$0xff]
    %v1899 = vld [vmem:[%s1847 + $0x198] sm:$0xff]
    %v1900 = vld [vmem:[%s1847 + $0x1a0] sm:$0xff]
    %v1901 = vld [vmem:[%s1847 + $0x1a8] sm:$0xff]
    %v1902 = vld [vmem:[%s1847 + $0x1b0] sm:$0xff]
    %v1903 = vld [vmem:[%s1847 + $0x1b8] sm:$0xff]
    %v1904 = vld [vmem:[%s1847 + $0x1c0] sm:$0xff]
    %v1905 = vld [vmem:[%s1847 + $0x1c8] sm:$0xff]
    %v1906 = vld [vmem:[%s1847 + $0x1d0] sm:$0xff]
    %v1907 = vld [vmem:[%s1847 + $0x1d8] sm:$0xff]
    %v1908 = vld [vmem:[%s1847 + $0x1e0] sm:$0xf]
    %v1909 = vld [vmem:[%s1847 + $0x1e8] sm:$0xf]
    %v1910 = vld [vmem:[%s1847 + $0x1f0] sm:$0xf]
    %v1911 = vld [vmem:[%s1847 + $0x1f8] sm:$0xf]
    %v1912 = vld [vmem:[%s1847 + $0x200] sm:$0xf]
    %v1913 = vld [vmem:[%s1847 + $0x208] sm:$0xf]
    %v1915 = vsel %vm265, %v1841, 0
    %v1918 = vsel %vm265, %v1842, 0
    %v1921 = vsel %vm265, %v1843, 0
    %v1924 = vsel %vm265, %v1844, 0
    %v1927 = vsel %vm265, %v1845, 0
    %v1930 = vsel %vm265, %v1846, 0
    %v1933 = vsel %vm284, %v1908, 0
    %v1936 = vsel %vm284, %v1909, 0
    %v1939 = vsel %vm284, %v1910, 0
    %v1942 = vsel %vm284, %v1911, 0
    %v1945 = vsel %vm284, %v1912, 0
    %v1948 = vsel %vm284, %v1913, 0
    %1950 = vmatprep.subr.mxu0 %v1849
    %1951 = vmatpush1.msra.mxu0 %v1848
    %1952 = vmatprep.subr.mxu0 %v1855
    %1953 = vmatpush1.msra.mxu0 %v1854
    %1954 = vmatprep.subr.mxu0 %v1861
    %1955 = vmatpush1.msra.mxu0 %v1860
    %1956 = vmatprep.subr.mxu0 %v1867
    %1957 = vmatpush1.msra.mxu0 %v1866
    %1958 = vmatprep.subr.mxu0 %v1873
    %1959 = vmatpush1.msra.mxu0 %v1872
    %1960 = vmatprep.subr.mxu0 %v1879
    %1961 = vmatpush1.msra.mxu0 %v1878
    %1962 = vmatprep.subr.mxu0 %v1885
    %1963 = vmatpush1.msra.mxu0 %v1884
    %1964 = vmatprep.subr.mxu0 %v1891
    %1965 = vmatpush1.msra.mxu0 %v1890
    %1966 = vmatprep.subr.mxu0 %v1897
    %1967 = vmatpush1.msra.mxu0 %v1896
    %1968 = vmatprep.subr.mxu0 %v1903
    %1969 = vmatpush1.msra.mxu0 %v1902
    %1970 = vmatprep.subr.mxu0 %v1936
    %1971 = vmatpush1.msra.mxu0 %v1933
    %1972 = vmatprep.subr.mxu0 0.0
    %1973 = vmatpush1.msra.mxu0 0.0
    %1974 = vmatprep.subr.mxu0 0.0
    %1975 = vmatpush1.msra.mxu0 0.0
    %1976 = vmatprep.subr.mxu0 0.0
    %1977 = vmatpush1.msra.mxu0 0.0
    %1978 = vmatprep.subr.mxu0 0.0
    %1979 = vmatpush1.msra.mxu0 0.0
    %1980 = vmatprep.subr.mxu0 0.0
    %1981 = vmatpush1.msra.mxu0 0.0
    %1982 = vmatprep.subr.mxu0 0.0
    %1983 = vmatpush1.msra.mxu0 0.0
    %1984 = vmatprep.subr.mxu0 0.0
    %1985 = vmatpush1.msra.mxu0 0.0
    %1986 = vmatprep.subr.mxu0 0.0
    %1987 = vmatpush1.msra.mxu0 0.0
    %1988 = vmatprep.subr.mxu0 0.0
    %1989 = vmatpush1.msra.mxu0 0.0
    %1990 = vmatprep.subr.mxu0 0.0
    %1991 = vmatpush1.msra.mxu0 0.0
    %1992 = vmatprep.subr.mxu0 0.0
    %1993 = vmatpush1.msra.mxu0 0.0
    %1994 = vmatprep.subr.mxu0 0.0
    %1995 = vmatpush1.msra.mxu0 0.0
    %1996 = vmatprep.subr.mxu0 0.0
    %1997 = vmatpush1.msra.mxu0 0.0
    %1998 = vmatprep.subr.mxu0 0.0
    %1999 = vmatpush1.msra.mxu0 0.0
    %2000 = vmatprep.subr.mxu0 0.0
    %2001 = vmatpush1.msra.mxu0 0.0
    %2002 = vmatprep.subr.mxu0 0.0
    %2003 = vmatpush1.msra.mxu0 0.0
    %2004 = vmatprep.subr.mxu0 0.0
    %2005 = vmatpush1.msra.mxu0 0.0
    %2006 = vmatprep.subr.mxu0 0.0
    %2007 = vmatpush1.msra.mxu0 0.0
    %2008 = vmatprep.subr.mxu0 0.0
    %2009 = vmatpush1.msra.mxu0 0.0
    %2010 = vmatprep.subr.mxu0 0.0
    %2011 = vmatpush1.msra.mxu0 0.0
    %2012 = vmatprep.subr.mxu0 0.0
    %2013 = vmatpush1.msra.mxu0 0.0
    %2014 = vmatprep.mubr.f32.mxu0 0.0
    %2015 = vmatmul.mubr.f32.gmra.mrb[0].mxu0 %v1915
    %v2016 = vpop.f32.mrb[0].mxu0
    %v2017 = vadd.f32 0.0, %v2016
    %v2018 = vpop.f32.mrb[0].mxu0
    %v2019 = vadd.f32 0.0, %v2018
    %2020 = vmatprep.mubr.f32.mxu0 0.0
    %2021 = vmatmul.mubr.f32.gmra.mrb[0].mxu0 %v1918
    %v2022 = vpop.f32.mrb[0].mxu0
    %v2023 = vadd.f32 0.0, %v2022
    %v2024 = vpop.f32.mrb[0].mxu0
    %v2025 = vadd.f32 0.0, %v2024
    %2026 = vmatprep.mubr.f32.mxu0 0.0
    %2027 = vmatmul.mubr.f32.gmra.mrb[0].mxu0 %v1921
    %v2028 = vpop.f32.mrb[0].mxu0
    %v2029 = vadd.f32 0.0, %v2028
    %v2030 = vpop.f32.mrb[0].mxu0
    %v2031 = vadd.f32 0.0, %v2030
    %2032 = vmatprep.mubr.f32.mxu0 0.0
    %2033 = vmatmul.mubr.f32.gmra.mrb[0].mxu0 %v1924
    %v2034 = vpop.f32.mrb[0].mxu0
    %v2035 = vadd.f32 0.0, %v2034
    %v2036 = vpop.f32.mrb[0].mxu0
    %v2037 = vadd.f32 0.0, %v2036
    %2038 = vmatprep.mubr.f32.mxu0 0.0
    %2039 = vmatmul.mubr.f32.gmra.mrb[0].mxu0 %v1927
    %v2040 = vpop.f32.mrb[0].mxu0
    %v2041 = vadd.f32 0.0, %v2040
    %v2042 = vpop.f32.mrb[0].mxu0
    %v2043 = vadd.f32 0.0, %v2042
    %2044 = vmatprep.mubr.f32.mxu0 0.0
    %2045 = vmatmul.mubr.f32.gmra.mrb[0].mxu0 %v1930
    %v2046 = vpop.f32.mrb[0].mxu0
    %v2047 = vadd.f32 0.0, %v2046
    %v2048 = vpop.f32.mrb[0].mxu0
    %v2049 = vadd.f32 0.0, %v2048
    %2050 = vdwg.mxu0
    %2051 = vmatprep.subr.mxu0 %v1851
    %2052 = vmatpush1.msra.mxu0 %v1850
    %2053 = vmatprep.subr.mxu0 %v1857
    %2054 = vmatpush1.msra.mxu0 %v1856
    %2055 = vmatprep.subr.mxu0 %v1863
    %2056 = vmatpush1.msra.mxu0 %v1862
    %2057 = vmatprep.subr.mxu0 %v1869
    %2058 = vmatpush1.msra.mxu0 %v1868
    %2059 = vmatprep.subr.mxu0 %v1875
    %2060 = vmatpush1.msra.mxu0 %v1874
    %2061 = vmatprep.subr.mxu0 %v1881
    %2062 = vmatpush1.msra.mxu0 %v1880
    %2063 = vmatprep.subr.mxu0 %v1887
    %2064 = vmatpush1.msra.mxu0 %v1886
    %2065 = vmatprep.subr.mxu0 %v1893
    %2066 = vmatpush1.msra.mxu0 %v1892
    %2067 = vmatprep.subr.mxu0 %v1899
    %2068 = vmatpush1.msra.mxu0 %v1898
    %2069 = vmatprep.subr.mxu0 %v1905
    %2070 = vmatpush1.msra.mxu0 %v1904
    %2071 = vmatprep.subr.mxu0 %v1942
    %2072 = vmatpush1.msra.mxu0 %v1939
    %2073 = vmatprep.subr.mxu0 0.0
    %2074 = vmatpush1.msra.mxu0 0.0
    %2075 = vmatprep.subr.mxu0 0.0
    %2076 = vmatpush1.msra.mxu0 0.0
    %2077 = vmatprep.subr.mxu0 0.0
    %2078 = vmatpush1.msra.mxu0 0.0
    %2079 = vmatprep.subr.mxu0 0.0
    %2080 = vmatpush1.msra.mxu0 0.0
    %2081 = vmatprep.subr.mxu0 0.0
    %2082 = vmatpush1.msra.mxu0 0.0
    %2083 = vmatprep.subr.mxu0 0.0
    %2084 = vmatpush1.msra.mxu0 0.0
    %2085 = vmatprep.subr.mxu0 0.0
    %2086 = vmatpush1.msra.mxu0 0.0
    %2087 = vmatprep.subr.mxu0 0.0
    %2088 = vmatpush1.msra.mxu0 0.0
    %2089 = vmatprep.subr.mxu0 0.0
    %2090 = vmatpush1.msra.mxu0 0.0
    %2091 = vmatprep.subr.mxu0 0.0
    %2092 = vmatpush1.msra.mxu0 0.0
    %2093 = vmatprep.subr.mxu0 0.0
    %2094 = vmatpush1.msra.mxu0 0.0
    %2095 = vmatprep.subr.mxu0 0.0
    %2096 = vmatpush1.msra.mxu0 0.0
    %2097 = vmatprep.subr.mxu0 0.0
    %2098 = vmatpush1.msra.mxu0 0.0
    %2099 = vmatprep.subr.mxu0 0.0
    %2100 = vmatpush1.msra.mxu0 0.0
    %2101 = vmatprep.subr.mxu0 0.0
    %2102 = vmatpush1.msra.mxu0 0.0
    %2103 = vmatprep.subr.mxu0 0.0
    %2104 = vmatpush1.msra.mxu0 0.0
    %2105 = vmatprep.subr.mxu0 0.0
    %2106 = vmatpush1.msra.mxu0 0.0
    %2107 = vmatprep.subr.mxu0 0.0
    %2108 = vmatpush1.msra.mxu0 0.0
    %2109 = vmatprep.subr.mxu0 0.0
    %2110 = vmatpush1.msra.mxu0 0.0
    %2111 = vmatprep.subr.mxu0 0.0
    %2112 = vmatpush1.msra.mxu0 0.0
    %2113 = vmatprep.subr.mxu0 0.0
    %2114 = vmatpush1.msra.mxu0 0.0
    %2115 = vmatprep.mubr.f32.mxu0 0.0
    %2116 = vmatmul.mubr.f32.gmra.mrb[0].mxu0 %v1915
    %v2117 = vpop.f32.mrb[0].mxu0
    %v2118 = vadd.f32 0.0, %v2117
    %v2119 = vpop.f32.mrb[0].mxu0
    %v2120 = vadd.f32 0.0, %v2119
    %2121 = vmatprep.mubr.f32.mxu0 0.0
    %2122 = vmatmul.mubr.f32.gmra.mrb[0].mxu0 %v1918
    %v2123 = vpop.f32.mrb[0].mxu0
    %v2124 = vadd.f32 0.0, %v2123
    %v2125 = vpop.f32.mrb[0].mxu0
    %v2126 = vadd.f32 0.0, %v2125
    %2127 = vmatprep.mubr.f32.mxu0 0.0
    %2128 = vmatmul.mubr.f32.gmra.mrb[0].mxu0 %v1921
    %v2129 = vpop.f32.mrb[0].mxu0
    %v2130 = vadd.f32 0.0, %v2129
    %v2131 = vpop.f32.mrb[0].mxu0
    %v2132 = vadd.f32 0.0, %v2131
    %2133 = vmatprep.mubr.f32.mxu0 0.0
    %2134 = vmatmul.mubr.f32.gmra.mrb[0].mxu0 %v1924
    %v2135 = vpop.f32.mrb[0].mxu0
    %v2136 = vadd.f32 0.0, %v2135
    %v2137 = vpop.f32.mrb[0].mxu0
    %v2138 = vadd.f32 0.0, %v2137
    %2139 = vmatprep.mubr.f32.mxu0 0.0
    %2140 = vmatmul.mubr.f32.gmra.mrb[0].mxu0 %v1927
    %v2141 = vpop.f32.mrb[0].mxu0
    %v2142 = vadd.f32 0.0, %v2141
    %v2143 = vpop.f32.mrb[0].mxu0
    %v2144 = vadd.f32 0.0, %v2143
    %2145 = vmatprep.mubr.f32.mxu0 0.0
    %2146 = vmatmul.mubr.f32.gmra.mrb[0].mxu0 %v1930
    %v2147 = vpop.f32.mrb[0].mxu0
    %v2148 = vadd.f32 0.0, %v2147
    %v2149 = vpop.f32.mrb[0].mxu0
    %v2150 = vadd.f32 0.0, %v2149
    %2151 = vdwg.mxu0
    %2152 = vmatprep.subr.mxu0 %v1853
    %2153 = vmatpush1.msra.mxu0 %v1852
    %2154 = vmatprep.subr.mxu0 %v1859
    %2155 = vmatpush1.msra.mxu0 %v1858
    %2156 = vmatprep.subr.mxu0 %v1865
    %2157 = vmatpush1.msra.mxu0 %v1864
    %2158 = vmatprep.subr.mxu0 %v1871
    %2159 = vmatpush1.msra.mxu0 %v1870
    %2160 = vmatprep.subr.mxu0 %v1877
    %2161 = vmatpush1.msra.mxu0 %v1876
    %2162 = vmatprep.subr.mxu0 %v1883
    %2163 = vmatpush1.msra.mxu0 %v1882
    %2164 = vmatprep.subr.mxu0 %v1889
    %2165 = vmatpush1.msra.mxu0 %v1888
    %2166 = vmatprep.subr.mxu0 %v1895
    %2167 = vmatpush1.msra.mxu0 %v1894
    %2168 = vmatprep.subr.mxu0 %v1901
    %2169 = vmatpush1.msra.mxu0 %v1900
    %2170 = vmatprep.subr.mxu0 %v1907
    %2171 = vmatpush1.msra.mxu0 %v1906
    %2172 = vmatprep.subr.mxu0 %v1948
    %2173 = vmatpush1.msra.mxu0 %v1945
    %2174 = vmatprep.subr.mxu0 0.0
    %2175 = vmatpush1.msra.mxu0 0.0
    %2176 = vmatprep.subr.mxu0 0.0
    %2177 = vmatpush1.msra.mxu0 0.0
    %2178 = vmatprep.subr.mxu0 0.0
    %2179 = vmatpush1.msra.mxu0 0.0
    %2180 = vmatprep.subr.mxu0 0.0
    %2181 = vmatpush1.msra.mxu0 0.0
    %2182 = vmatprep.subr.mxu0 0.0
    %2183 = vmatpush1.msra.mxu0 0.0
    %2184 = vmatprep.subr.mxu0 0.0
    %2185 = vmatpush1.msra.mxu0 0.0
    %2186 = vmatprep.subr.mxu0 0.0
    %2187 = vmatpush1.msra.mxu0 0.0
    %2188 = vmatprep.subr.mxu0 0.0
    %2189 = vmatpush1.msra.mxu0 0.0
    %2190 = vmatprep.subr.mxu0 0.0
    %2191 = vmatpush1.msra.mxu0 0.0
    %2192 = vmatprep.subr.mxu0 0.0
    %2193 = vmatpush1.msra.mxu0 0.0
    %2194 = vmatprep.subr.mxu0 0.0
    %2195 = vmatpush1.msra.mxu0 0.0
    %2196 = vmatprep.subr.mxu0 0.0
    %2197 = vmatpush1.msra.mxu0 0.0
    %2198 = vmatprep.subr.mxu0 0.0
    %2199 = vmatpush1.msra.mxu0 0.0
    %2200 = vmatprep.subr.mxu0 0.0
    %2201 = vmatpush1.msra.mxu0 0.0
    %2202 = vmatprep.subr.mxu0 0.0
    %2203 = vmatpush1.msra.mxu0 0.0
    %2204 = vmatprep.subr.mxu0 0.0
    %2205 = vmatpush1.msra.mxu0 0.0
    %2206 = vmatprep.subr.mxu0 0.0
    %2207 = vmatpush1.msra.mxu0 0.0
    %2208 = vmatprep.subr.mxu0 0.0
    %2209 = vmatpush1.msra.mxu0 0.0
    %2210 = vmatprep.subr.mxu0 0.0
    %2211 = vmatpush1.msra.mxu0 0.0
    %2212 = vmatprep.subr.mxu0 0.0
    %2213 = vmatpush1.msra.mxu0 0.0
    %2214 = vmatprep.subr.mxu0 0.0
    %2215 = vmatpush1.msra.mxu0 0.0
    %2216 = vmatprep.mubr.f32.mxu0 0.0
    %2217 = vmatmul.mubr.f32.gmra.mrb[0].mxu0 %v1915
    %v2218 = vpop.f32.mrb[0].mxu0
    %v2219 = vadd.f32 0.0, %v2218
    %v2220 = vpop.f32.mrb[0].mxu0
    %v2221 = vadd.f32 0.0, %v2220
    %2222 = vmatprep.mubr.f32.mxu0 0.0
    %2223 = vmatmul.mubr.f32.gmra.mrb[0].mxu0 %v1918
    %v2224 = vpop.f32.mrb[0].mxu0
    %v2225 = vadd.f32 0.0, %v2224
    %v2226 = vpop.f32.mrb[0].mxu0
    %v2227 = vadd.f32 0.0, %v2226
    %2228 = vmatprep.mubr.f32.mxu0 0.0
    %2229 = vmatmul.mubr.f32.gmra.mrb[0].mxu0 %v1921
    %v2230 = vpop.f32.mrb[0].mxu0
    %v2231 = vadd.f32 0.0, %v2230
    %v2232 = vpop.f32.mrb[0].mxu0
    %v2233 = vadd.f32 0.0, %v2232
    %2234 = vmatprep.mubr.f32.mxu0 0.0
    %2235 = vmatmul.mubr.f32.gmra.mrb[0].mxu0 %v1924
    %v2236 = vpop.f32.mrb[0].mxu0
    %v2237 = vadd.f32 0.0, %v2236
    %v2238 = vpop.f32.mrb[0].mxu0
    %v2239 = vadd.f32 0.0, %v2238
    %2240 = vmatprep.mubr.f32.mxu0 0.0
    %2241 = vmatmul.mubr.f32.gmra.mrb[0].mxu0 %v1927
    %v2242 = vpop.f32.mrb[0].mxu0
    %v2243 = vadd.f32 0.0, %v2242
    %v2244 = vpop.f32.mrb[0].mxu0
    %v2245 = vadd.f32 0.0, %v2244
    %2246 = vmatprep.mubr.f32.mxu0 0.0
    %2247 = vmatmul.mubr.f32.gmra.mrb[0].mxu0 %v1930
    %v2248 = vpop.f32.mrb[0].mxu0
    %v2249 = vadd.f32 0.0, %v2248
    %v2250 = vpop.f32.mrb[0].mxu0
    %v2251 = vadd.f32 0.0, %v2250
    %2252 = vdwg.mxu0
    %v2253 = vadd.f32 %v1805, %v2017
    %v2254 = vadd.f32 %v1806, %v2019
    %v2255 = vadd.f32 %v1807, %v2118
    %v2256 = vadd.f32 %v1808, %v2120
    %v2257 = vadd.f32 %v1809, %v2219
    %v2258 = vadd.f32 %v1810, %v2221
    %v2259 = vadd.f32 %v1811, %v2023
    %v2260 = vadd.f32 %v1812, %v2025
    %v2261 = vadd.f32 %v1813, %v2124
    %v2262 = vadd.f32 %v1814, %v2126
    %v2263 = vadd.f32 %v1815, %v2225
    %v2264 = vadd.f32 %v1816, %v2227
    %v2265 = vadd.f32 %v1817, %v2029
    %v2266 = vadd.f32 %v1818, %v2031
    %v2267 = vadd.f32 %v1819, %v2130
    %v2268 = vadd.f32 %v1820, %v2132
    %v2269 = vadd.f32 %v1821, %v2231
    %v2270 = vadd.f32 %v1822, %v2233
    %v2271 = vadd.f32 %v1823, %v2035
    %v2272 = vadd.f32 %v1824, %v2037
    %v2273 = vadd.f32 %v1825, %v2136
    %v2274 = vadd.f32 %v1826, %v2138
    %v2275 = vadd.f32 %v1827, %v2237
    %v2276 = vadd.f32 %v1828, %v2239
    %v2277 = vadd.f32 %v1829, %v2041
    %v2278 = vadd.f32 %v1830, %v2043
    %v2279 = vadd.f32 %v1831, %v2142
    %v2280 = vadd.f32 %v1832, %v2144
    %v2281 = vadd.f32 %v1833, %v2243
    %v2282 = vadd.f32 %v1834, %v2245
    %v2283 = vadd.f32 %v1835, %v2047
    %v2284 = vadd.f32 %v1836, %v2049
    %v2285 = vadd.f32 %v1837, %v2148
    %v2286 = vadd.f32 %v1838, %v2150
    %v2287 = vadd.f32 %v1839, %v2249
    %v2288 = vadd.f32 %v1840, %v2251
    %v2289 = vld [vmem:[#allocation6] sm:$0x3f]
    %v2291 = vlaneseq
    %v2292 = vshrl.u32 %v2291, 7
    %v2293 = vsub.s32 0, %v2292
    %v2294 = vrot.slane %v2289, %v2293
    %v2295 = vlaneseq
    %v2296 = vshrl.u32 %v2295, 7
    %v2297 = vsub.s32 1, %v2296
    %v2298 = vrot.slane %v2289, %v2297
    %v2299 = vlaneseq
    %v2300 = vshrl.u32 %v2299, 7
    %v2301 = vsub.s32 2, %v2300
    %v2302 = vrot.slane %v2289, %v2301
    %v2303 = vlaneseq
    %v2304 = vshrl.u32 %v2303, 7
    %v2305 = vsub.s32 3, %v2304
    %v2306 = vrot.slane %v2289, %v2305
    %v2307 = vlaneseq
    %v2308 = vshrl.u32 %v2307, 7
    %v2309 = vsub.s32 4, %v2308
    %v2310 = vrot.slane %v2289, %v2309
    %v2311 = vlaneseq
    %v2312 = vshrl.u32 %v2311, 7
    %v2313 = vsub.s32 5, %v2312
    %v2314 = vrot.slane %v2289, %v2313
    %v2321 = vadd.f32 %v2253, %v2294
    %v2322 = vadd.f32 %v2254, %v2298
    %v2323 = vadd.f32 %v2255, %v2302
    %v2324 = vadd.f32 %v2256, %v2306
    %v2325 = vadd.f32 %v2257, %v2310
    %v2326 = vadd.f32 %v2258, %v2314
    %v2327 = vadd.f32 %v2259, %v2294
    %v2328 = vadd.f32 %v2260, %v2298
    %v2329 = vadd.f32 %v2261, %v2302
    %v2330 = vadd.f32 %v2262, %v2306
    %v2331 = vadd.f32 %v2263, %v2310
    %v2332 = vadd.f32 %v2264, %v2314
    %v2333 = vadd.f32 %v2265, %v2294
    %v2334 = vadd.f32 %v2266, %v2298
    %v2335 = vadd.f32 %v2267, %v2302
    %v2336 = vadd.f32 %v2268, %v2306
    %v2337 = vadd.f32 %v2269, %v2310
    %v2338 = vadd.f32 %v2270, %v2314
    %v2339 = vadd.f32 %v2271, %v2294
    %v2340 = vadd.f32 %v2272, %v2298
    %v2341 = vadd.f32 %v2273, %v2302
    %v2342 = vadd.f32 %v2274, %v2306
    %v2343 = vadd.f32 %v2275, %v2310
    %v2344 = vadd.f32 %v2276, %v2314
    %v2345 = vadd.f32 %v2277, %v2294
    %v2346 = vadd.f32 %v2278, %v2298
    %v2347 = vadd.f32 %v2279, %v2302
    %v2348 = vadd.f32 %v2280, %v2306
    %v2349 = vadd.f32 %v2281, %v2310
    %v2350 = vadd.f32 %v2282, %v2314
    %v2351 = vadd.f32 %v2283, %v2294
    %v2352 = vadd.f32 %v2284, %v2298
    %v2353 = vadd.f32 %v2285, %v2302
    %v2354 = vadd.f32 %v2286, %v2306
    %v2355 = vadd.f32 %v2287, %v2310
    %v2356 = vadd.f32 %v2288, %v2314
    %v2357 = vmax.f32 %v2321, 0.0
    %v2358 = vmax.f32 %v2322, 0.0
    %v2359 = vmax.f32 %v2323, 0.0
    %v2360 = vmax.f32 %v2324, 0.0
    %v2361 = vmax.f32 %v2325, 0.0
    %v2362 = vmax.f32 %v2326, 0.0
    %v2363 = vmax.f32 %v2327, 0.0
    %v2364 = vmax.f32 %v2328, 0.0
    %v2365 = vmax.f32 %v2329, 0.0
    %v2366 = vmax.f32 %v2330, 0.0
    %v2367 = vmax.f32 %v2331, 0.0
    %v2368 = vmax.f32 %v2332, 0.0
    %v2369 = vmax.f32 %v2333, 0.0
    %v2370 = vmax.f32 %v2334, 0.0
    %v2371 = vmax.f32 %v2335, 0.0
    %v2372 = vmax.f32 %v2336, 0.0
    %v2373 = vmax.f32 %v2337, 0.0
    %v2374 = vmax.f32 %v2338, 0.0
    %v2375 = vmax.f32 %v2339, 0.0
    %v2376 = vmax.f32 %v2340, 0.0
    %v2377 = vmax.f32 %v2341, 0.0
    %v2378 = vmax.f32 %v2342, 0.0
    %v2379 = vmax.f32 %v2343, 0.0
    %v2380 = vmax.f32 %v2344, 0.0
    %v2381 = vmax.f32 %v2345, 0.0
    %v2382 = vmax.f32 %v2346, 0.0
    %v2383 = vmax.f32 %v2347, 0.0
    %v2384 = vmax.f32 %v2348, 0.0
    %v2385 = vmax.f32 %v2349, 0.0
    %v2386 = vmax.f32 %v2350, 0.0
    %v2387 = vmax.f32 %v2351, 0.0
    %v2388 = vmax.f32 %v2352, 0.0
    %v2389 = vmax.f32 %v2353, 0.0
    %v2390 = vmax.f32 %v2354, 0.0
    %v2391 = vmax.f32 %v2355, 0.0
    %v2392 = vmax.f32 %v2356, 0.0
    %v2393 = vlaneseq
    %v2394 = vshrl.u32 %v2393, 7
    %v2395 = vadd.s32 %v2394, 8
    %v2396 = vadd.s32 %v2394, 16
    %v2397 = vlaneseq
    %v2398 = vand.u32 %v2397, 127
    %v2399 = vmul.u32 %v2394, 2
    %v2400 = vmul.u32 %v2395, 2
    %v2401 = vmul.u32 %v2396, 2
    %vm2402 = vcmp.eq.s32.totalorder %v2398, %v2399
    %vm2403 = vcmp.eq.s32.totalorder %v2398, %v2400
    %vm2404 = vcmp.eq.s32.totalorder %v2398, %v2401
    %v2405 = vsel %vm2402, 1, 0
    %v2406 = vsel %vm2403, 1, 0
    %v2407 = vsel %vm2404, 1, 0
    %v2408 = vcvt.s32.f32 %v2405
    %v2409 = vcvt.s32.f32 %v2406
    %v2410 = vcvt.s32.f32 %v2407
    %vm2411 = vcmask 392192
    %v2413 = vsel %vm2411, %v2408, 0
    %v2416 = vsel %vm2411, %v2409, 0
    %v2419 = vsel %vm2411, %v2410, 0
    %2421 = vmatprep.subr.mxu0 %v2358
    %2422 = vmatpush1.msra.mxu0 %v2357
    %2423 = vmatprep.subr.mxu0 %v2364
    %2424 = vmatpush1.msra.mxu0 %v2363
    %2425 = vmatprep.subr.mxu0 %v2370
    %2426 = vmatpush1.msra.mxu0 %v2369
    %2427 = vmatprep.subr.mxu0 %v2376
    %2428 = vmatpush1.msra.mxu0 %v2375
    %2429 = vmatprep.subr.mxu0 %v2382
    %2430 = vmatpush1.msra.mxu0 %v2381
    %2431 = vmatprep.subr.mxu0 %v2388
    %2432 = vmatpush1.msra.mxu0 %v2387
    %2433 = vmatprep.subr.mxu0 0.0
    %2434 = vmatpush1.msra.mxu0 0.0
    %2435 = vmatprep.subr.mxu0 0.0
    %2436 = vmatpush1.msra.mxu0 0.0
    %2437 = vmatprep.subr.mxu0 0.0
    %2438 = vmatpush1.msra.mxu0 0.0
    %2439 = vmatprep.subr.mxu0 0.0
    %2440 = vmatpush1.msra.mxu0 0.0
    %2441 = vmatprep.subr.mxu0 0.0
    %2442 = vmatpush1.msra.mxu0 0.0
    %2443 = vmatprep.subr.mxu0 0.0
    %2444 = vmatpush1.msra.mxu0 0.0
    %2445 = vmatprep.subr.mxu0 0.0
    %2446 = vmatpush1.msra.mxu0 0.0
    %2447 = vmatprep.subr.mxu0 0.0
    %2448 = vmatpush1.msra.mxu0 0.0
    %2449 = vmatprep.subr.mxu0 0.0
    %2450 = vmatpush1.msra.mxu0 0.0
    %2451 = vmatprep.subr.mxu0 0.0
    %2452 = vmatpush1.msra.mxu0 0.0
    %2453 = vmatprep.subr.mxu0 0.0
    %2454 = vmatpush1.msra.mxu0 0.0
    %2455 = vmatprep.subr.mxu0 0.0
    %2456 = vmatpush1.msra.mxu0 0.0
    %2457 = vmatprep.subr.mxu0 0.0
    %2458 = vmatpush1.msra.mxu0 0.0
    %2459 = vmatprep.subr.mxu0 0.0
    %2460 = vmatpush1.msra.mxu0 0.0
    %2461 = vmatprep.subr.mxu0 0.0
    %2462 = vmatpush1.msra.mxu0 0.0
    %2463 = vmatprep.subr.mxu0 0.0
    %2464 = vmatpush1.msra.mxu0 0.0
    %2465 = vmatprep.subr.mxu0 0.0
    %2466 = vmatpush1.msra.mxu0 0.0
    %2467 = vmatprep.subr.mxu0 0.0
    %2468 = vmatpush1.msra.mxu0 0.0
    %2469 = vmatprep.subr.mxu0 0.0
    %2470 = vmatpush1.msra.mxu0 0.0
    %2471 = vmatprep.subr.mxu0 0.0
    %2472 = vmatpush1.msra.mxu0 0.0
    %2473 = vmatprep.subr.mxu0 0.0
    %2474 = vmatpush1.msra.mxu0 0.0
    %2475 = vmatprep.subr.mxu0 0.0
    %2476 = vmatpush1.msra.mxu0 0.0
    %2477 = vmatprep.subr.mxu0 0.0
    %2478 = vmatpush1.msra.mxu0 0.0
    %2479 = vmatprep.subr.mxu0 0.0
    %2480 = vmatpush1.msra.mxu0 0.0
    %2481 = vmatprep.subr.mxu0 0.0
    %2482 = vmatpush1.msra.mxu0 0.0
    %2483 = vmatprep.subr.mxu0 0.0
    %2484 = vmatpush1.msra.mxu0 0.0
    %2485 = vmatprep.mubr.f32.mxu0 0.0
    %2486 = vmatmul.mubr.f32.gmra.mrb[0].mxu0 %v2413
    %v2487 = vpop.f32.mrb[0].mxu0
    %v2488 = vadd.f32 0.0, %v2487
    %v2489 = vpop.f32.mrb[0].mxu0
    %v2490 = vadd.f32 0.0, %v2489
    %2491 = vmatprep.mubr.f32.mxu0 0.0
    %2492 = vmatmul.mubr.f32.gmra.mrb[0].mxu0 %v2416
    %v2493 = vpop.f32.mrb[0].mxu0
    %v2494 = vadd.f32 0.0, %v2493
    %v2495 = vpop.f32.mrb[0].mxu0
    %v2496 = vadd.f32 0.0, %v2495
    %2497 = vmatprep.mubr.f32.mxu0 0.0
    %2498 = vmatmul.mubr.f32.gmra.mrb[0].mxu0 %v2419
    %v2499 = vpop.f32.mrb[0].mxu0
    %v2500 = vadd.f32 0.0, %v2499
    %v2501 = vpop.f32.mrb[0].mxu0
    %v2502 = vadd.f32 0.0, %v2501
    %2503 = vdwg.mxu0
    %2504 = vmatprep.subr.mxu0 %v2360
    %2505 = vmatpush1.msra.mxu0 %v2359
    %2506 = vmatprep.subr.mxu0 %v2366
    %2507 = vmatpush1.msra.mxu0 %v2365
    %2508 = vmatprep.subr.mxu0 %v2372
    %2509 = vmatpush1.msra.mxu0 %v2371
    %2510 = vmatprep.subr.mxu0 %v2378
    %2511 = vmatpush1.msra.mxu0 %v2377
    %2512 = vmatprep.subr.mxu0 %v2384
    %2513 = vmatpush1.msra.mxu0 %v2383
    %2514 = vmatprep.subr.mxu0 %v2390
    %2515 = vmatpush1.msra.mxu0 %v2389
    %2516 = vmatprep.subr.mxu0 0.0
    %2517 = vmatpush1.msra.mxu0 0.0
    %2518 = vmatprep.subr.mxu0 0.0
    %2519 = vmatpush1.msra.mxu0 0.0
    %2520 = vmatprep.subr.mxu0 0.0
    %2521 = vmatpush1.msra.mxu0 0.0
    %2522 = vmatprep.subr.mxu0 0.0
    %2523 = vmatpush1.msra.mxu0 0.0
    %2524 = vmatprep.subr.mxu0 0.0
    %2525 = vmatpush1.msra.mxu0 0.0
    %2526 = vmatprep.subr.mxu0 0.0
    %2527 = vmatpush1.msra.mxu0 0.0
    %2528 = vmatprep.subr.mxu0 0.0
    %2529 = vmatpush1.msra.mxu0 0.0
    %2530 = vmatprep.subr.mxu0 0.0
    %2531 = vmatpush1.msra.mxu0 0.0
    %2532 = vmatprep.subr.mxu0 0.0
    %2533 = vmatpush1.msra.mxu0 0.0
    %2534 = vmatprep.subr.mxu0 0.0
    %2535 = vmatpush1.msra.mxu0 0.0
    %2536 = vmatprep.subr.mxu0 0.0
    %2537 = vmatpush1.msra.mxu0 0.0
    %2538 = vmatprep.subr.mxu0 0.0
    %2539 = vmatpush1.msra.mxu0 0.0
    %2540 = vmatprep.subr.mxu0 0.0
    %2541 = vmatpush1.msra.mxu0 0.0
    %2542 = vmatprep.subr.mxu0 0.0
    %2543 = vmatpush1.msra.mxu0 0.0
    %2544 = vmatprep.subr.mxu0 0.0
    %2545 = vmatpush1.msra.mxu0 0.0
    %2546 = vmatprep.subr.mxu0 0.0
    %2547 = vmatpush1.msra.mxu0 0.0
    %2548 = vmatprep.subr.mxu0 0.0
    %2549 = vmatpush1.msra.mxu0 0.0
    %2550 = vmatprep.subr.mxu0 0.0
    %2551 = vmatpush1.msra.mxu0 0.0
    %2552 = vmatprep.subr.mxu0 0.0
    %2553 = vmatpush1.msra.mxu0 0.0
    %2554 = vmatprep.subr.mxu0 0.0
    %2555 = vmatpush1.msra.mxu0 0.0
    %2556 = vmatprep.subr.mxu0 0.0
    %2557 = vmatpush1.msra.mxu0 0.0
    %2558 = vmatprep.subr.mxu0 0.0
    %2559 = vmatpush1.msra.mxu0 0.0
    %2560 = vmatprep.subr.mxu0 0.0
    %2561 = vmatpush1.msra.mxu0 0.0
    %2562 = vmatprep.subr.mxu0 0.0
    %2563 = vmatpush1.msra.mxu0 0.0
    %2564 = vmatprep.subr.mxu0 0.0
    %2565 = vmatpush1.msra.mxu0 0.0
    %2566 = vmatprep.subr.mxu0 0.0
    %2567 = vmatpush1.msra.mxu0 0.0
    %2568 = vmatprep.mubr.f32.mxu0 0.0
    %2569 = vmatmul.mubr.f32.gmra.mrb[0].mxu0 %v2413
    %v2570 = vpop.f32.mrb[0].mxu0
    %v2571 = vadd.f32 0.0, %v2570
    %v2572 = vpop.f32.mrb[0].mxu0
    %v2573 = vadd.f32 0.0, %v2572
    %2574 = vmatprep.mubr.f32.mxu0 0.0
    %2575 = vmatmul.mubr.f32.gmra.mrb[0].mxu0 %v2416
    %v2576 = vpop.f32.mrb[0].mxu0
    %v2577 = vadd.f32 0.0, %v2576
    %v2578 = vpop.f32.mrb[0].mxu0
    %v2579 = vadd.f32 0.0, %v2578
    %2580 = vmatprep.mubr.f32.mxu0 0.0
    %2581 = vmatmul.mubr.f32.gmra.mrb[0].mxu0 %v2419
    %v2582 = vpop.f32.mrb[0].mxu0
    %v2583 = vadd.f32 0.0, %v2582
    %v2584 = vpop.f32.mrb[0].mxu0
    %v2585 = vadd.f32 0.0, %v2584
    %2586 = vdwg.mxu0
    %2587 = vmatprep.subr.mxu0 %v2362
    %2588 = vmatpush1.msra.mxu0 %v2361
    %2589 = vmatprep.subr.mxu0 %v2368
    %2590 = vmatpush1.msra.mxu0 %v2367
    %2591 = vmatprep.subr.mxu0 %v2374
    %2592 = vmatpush1.msra.mxu0 %v2373
    %2593 = vmatprep.subr.mxu0 %v2380
    %2594 = vmatpush1.msra.mxu0 %v2379
    %2595 = vmatprep.subr.mxu0 %v2386
    %2596 = vmatpush1.msra.mxu0 %v2385
    %2597 = vmatprep.subr.mxu0 %v2392
    %2598 = vmatpush1.msra.mxu0 %v2391
    %2599 = vmatprep.subr.mxu0 0.0
    %2600 = vmatpush1.msra.mxu0 0.0
    %2601 = vmatprep.subr.mxu0 0.0
    %2602 = vmatpush1.msra.mxu0 0.0
    %2603 = vmatprep.subr.mxu0 0.0
    %2604 = vmatpush1.msra.mxu0 0.0
    %2605 = vmatprep.subr.mxu0 0.0
    %2606 = vmatpush1.msra.mxu0 0.0
    %2607 = vmatprep.subr.mxu0 0.0
    %2608 = vmatpush1.msra.mxu0 0.0
    %2609 = vmatprep.subr.mxu0 0.0
    %2610 = vmatpush1.msra.mxu0 0.0
    %2611 = vmatprep.subr.mxu0 0.0
    %2612 = vmatpush1.msra.mxu0 0.0
    %2613 = vmatprep.subr.mxu0 0.0
    %2614 = vmatpush1.msra.mxu0 0.0
    %2615 = vmatprep.subr.mxu0 0.0
    %2616 = vmatpush1.msra.mxu0 0.0
    %2617 = vmatprep.subr.mxu0 0.0
    %2618 = vmatpush1.msra.mxu0 0.0
    %2619 = vmatprep.subr.mxu0 0.0
    %2620 = vmatpush1.msra.mxu0 0.0
    %2621 = vmatprep.subr.mxu0 0.0
    %2622 = vmatpush1.msra.mxu0 0.0
    %2623 = vmatprep.subr.mxu0 0.0
    %2624 = vmatpush1.msra.mxu0 0.0
    %2625 = vmatprep.subr.mxu0 0.0
    %2626 = vmatpush1.msra.mxu0 0.0
    %2627 = vmatprep.subr.mxu0 0.0
    %2628 = vmatpush1.msra.mxu0 0.0
    %2629 = vmatprep.subr.mxu0 0.0
    %2630 = vmatpush1.msra.mxu0 0.0
    %2631 = vmatprep.subr.mxu0 0.0
    %2632 = vmatpush1.msra.mxu0 0.0
    %2633 = vmatprep.subr.mxu0 0.0
    %2634 = vmatpush1.msra.mxu0 0.0
    %2635 = vmatprep.subr.mxu0 0.0
    %2636 = vmatpush1.msra.mxu0 0.0
    %2637 = vmatprep.subr.mxu0 0.0
    %2638 = vmatpush1.msra.mxu0 0.0
    %2639 = vmatprep.subr.mxu0 0.0
    %2640 = vmatpush1.msra.mxu0 0.0
    %2641 = vmatprep.subr.mxu0 0.0
    %2642 = vmatpush1.msra.mxu0 0.0
    %2643 = vmatprep.subr.mxu0 0.0
    %2644 = vmatpush1.msra.mxu0 0.0
    %2645 = vmatprep.subr.mxu0 0.0
    %2646 = vmatpush1.msra.mxu0 0.0
    %2647 = vmatprep.subr.mxu0 0.0
    %2648 = vmatpush1.msra.mxu0 0.0
    %2649 = vmatprep.subr.mxu0 0.0
    %2650 = vmatpush1.msra.mxu0 0.0
    %2651 = vmatprep.mubr.f32.mxu0 0.0
    %2652 = vmatmul.mubr.f32.gmra.mrb[0].mxu0 %v2413
    %v2653 = vpop.f32.mrb[0].mxu0
    %v2654 = vadd.f32 0.0, %v2653
    %v2655 = vpop.f32.mrb[0].mxu0
    %v2656 = vadd.f32 0.0, %v2655
    %2657 = vmatprep.mubr.f32.mxu0 0.0
    %2658 = vmatmul.mubr.f32.gmra.mrb[0].mxu0 %v2416
    %v2659 = vpop.f32.mrb[0].mxu0
    %v2660 = vadd.f32 0.0, %v2659
    %v2661 = vpop.f32.mrb[0].mxu0
    %v2662 = vadd.f32 0.0, %v2661
    %2663 = vmatprep.mubr.f32.mxu0 0.0
    %2664 = vmatmul.mubr.f32.gmra.mrb[0].mxu0 %v2419
    %v2665 = vpop.f32.mrb[0].mxu0
    %v2666 = vadd.f32 0.0, %v2665
    %v2667 = vpop.f32.mrb[0].mxu0
    %v2668 = vadd.f32 0.0, %v2667
    %2669 = vdwg.mxu0
    %v2670 = vadd.s32 %v2399, 1
    %v2671 = vadd.s32 %v2400, 1
    %v2672 = vadd.s32 %v2401, 1
    %vm2673 = vcmp.eq.s32.totalorder %v2398, %v2670
    %vm2674 = vcmp.eq.s32.totalorder %v2398, %v2671
    %vm2675 = vcmp.eq.s32.totalorder %v2398, %v2672
    %v2676 = vsel %vm2673, 1, 0
    %v2677 = vsel %vm2674, 1, 0
    %v2678 = vsel %vm2675, 1, 0
    %v2679 = vcvt.s32.f32 %v2676
    %v2680 = vcvt.s32.f32 %v2677
    %v2681 = vcvt.s32.f32 %v2678
    %v2683 = vsel %vm2411, %v2679, 0
    %v2686 = vsel %vm2411, %v2680, 0
    %v2689 = vsel %vm2411, %v2681, 0
    %2691 = vmatprep.subr.mxu0 %v2358
    %2692 = vmatpush1.msra.mxu0 %v2357
    %2693 = vmatprep.subr.mxu0 %v2364
    %2694 = vmatpush1.msra.mxu0 %v2363
    %2695 = vmatprep.subr.mxu0 %v2370
    %2696 = vmatpush1.msra.mxu0 %v2369
    %2697 = vmatprep.subr.mxu0 %v2376
    %2698 = vmatpush1.msra.mxu0 %v2375
    %2699 = vmatprep.subr.mxu0 %v2382
    %2700 = vmatpush1.msra.mxu0 %v2381
    %2701 = vmatprep.subr.mxu0 %v2388
    %2702 = vmatpush1.msra.mxu0 %v2387
    %2703 = vmatprep.subr.mxu0 0.0
    %2704 = vmatpush1.msra.mxu0 0.0
    %2705 = vmatprep.subr.mxu0 0.0
    %2706 = vmatpush1.msra.mxu0 0.0
    %2707 = vmatprep.subr.mxu0 0.0
    %2708 = vmatpush1.msra.mxu0 0.0
    %2709 = vmatprep.subr.mxu0 0.0
    %2710 = vmatpush1.msra.mxu0 0.0
    %2711 = vmatprep.subr.mxu0 0.0
    %2712 = vmatpush1.msra.mxu0 0.0
    %2713 = vmatprep.subr.mxu0 0.0
    %2714 = vmatpush1.msra.mxu0 0.0
    %2715 = vmatprep.subr.mxu0 0.0
    %2716 = vmatpush1.msra.mxu0 0.0
    %2717 = vmatprep.subr.mxu0 0.0
    %2718 = vmatpush1.msra.mxu0 0.0
    %2719 = vmatprep.subr.mxu0 0.0
    %2720 = vmatpush1.msra.mxu0 0.0
    %2721 = vmatprep.subr.mxu0 0.0
    %2722 = vmatpush1.msra.mxu0 0.0
    %2723 = vmatprep.subr.mxu0 0.0
    %2724 = vmatpush1.msra.mxu0 0.0
    %2725 = vmatprep.subr.mxu0 0.0
    %2726 = vmatpush1.msra.mxu0 0.0
    %2727 = vmatprep.subr.mxu0 0.0
    %2728 = vmatpush1.msra.mxu0 0.0
    %2729 = vmatprep.subr.mxu0 0.0
    %2730 = vmatpush1.msra.mxu0 0.0
    %2731 = vmatprep.subr.mxu0 0.0
    %2732 = vmatpush1.msra.mxu0 0.0
    %2733 = vmatprep.subr.mxu0 0.0
    %2734 = vmatpush1.msra.mxu0 0.0
    %2735 = vmatprep.subr.mxu0 0.0
    %2736 = vmatpush1.msra.mxu0 0.0
    %2737 = vmatprep.subr.mxu0 0.0
    %2738 = vmatpush1.msra.mxu0 0.0
    %2739 = vmatprep.subr.mxu0 0.0
    %2740 = vmatpush1.msra.mxu0 0.0
    %2741 = vmatprep.subr.mxu0 0.0
    %2742 = vmatpush1.msra.mxu0 0.0
    %2743 = vmatprep.subr.mxu0 0.0
    %2744 = vmatpush1.msra.mxu0 0.0
    %2745 = vmatprep.subr.mxu0 0.0
    %2746 = vmatpush1.msra.mxu0 0.0
    %2747 = vmatprep.subr.mxu0 0.0
    %2748 = vmatpush1.msra.mxu0 0.0
    %2749 = vmatprep.subr.mxu0 0.0
    %2750 = vmatpush1.msra.mxu0 0.0
    %2751 = vmatprep.subr.mxu0 0.0
    %2752 = vmatpush1.msra.mxu0 0.0
    %2753 = vmatprep.subr.mxu0 0.0
    %2754 = vmatpush1.msra.mxu0 0.0
    %2755 = vmatprep.mubr.f32.mxu0 0.0
    %2756 = vmatmul.mubr.f32.gmra.mrb[0].mxu0 %v2683
    %v2757 = vpop.f32.mrb[0].mxu0
    %v2758 = vadd.f32 0.0, %v2757
    %v2759 = vpop.f32.mrb[0].mxu0
    %v2760 = vadd.f32 0.0, %v2759
    %2761 = vmatprep.mubr.f32.mxu0 0.0
    %2762 = vmatmul.mubr.f32.gmra.mrb[0].mxu0 %v2686
    %v2763 = vpop.f32.mrb[0].mxu0
    %v2764 = vadd.f32 0.0, %v2763
    %v2765 = vpop.f32.mrb[0].mxu0
    %v2766 = vadd.f32 0.0, %v2765
    %2767 = vmatprep.mubr.f32.mxu0 0.0
    %2768 = vmatmul.mubr.f32.gmra.mrb[0].mxu0 %v2689
    %v2769 = vpop.f32.mrb[0].mxu0
    %v2770 = vadd.f32 0.0, %v2769
    %v2771 = vpop.f32.mrb[0].mxu0
    %v2772 = vadd.f32 0.0, %v2771
    %2773 = vdwg.mxu0
    %2774 = vmatprep.subr.mxu0 %v2360
    %2775 = vmatpush1.msra.mxu0 %v2359
    %2776 = vmatprep.subr.mxu0 %v2366
    %2777 = vmatpush1.msra.mxu0 %v2365
    %2778 = vmatprep.subr.mxu0 %v2372
    %2779 = vmatpush1.msra.mxu0 %v2371
    %2780 = vmatprep.subr.mxu0 %v2378
    %2781 = vmatpush1.msra.mxu0 %v2377
    %2782 = vmatprep.subr.mxu0 %v2384
    %2783 = vmatpush1.msra.mxu0 %v2383
    %2784 = vmatprep.subr.mxu0 %v2390
    %2785 = vmatpush1.msra.mxu0 %v2389
    %2786 = vmatprep.subr.mxu0 0.0
    %2787 = vmatpush1.msra.mxu0 0.0
    %2788 = vmatprep.subr.mxu0 0.0
    %2789 = vmatpush1.msra.mxu0 0.0
    %2790 = vmatprep.subr.mxu0 0.0
    %2791 = vmatpush1.msra.mxu0 0.0
    %2792 = vmatprep.subr.mxu0 0.0
    %2793 = vmatpush1.msra.mxu0 0.0
    %2794 = vmatprep.subr.mxu0 0.0
    %2795 = vmatpush1.msra.mxu0 0.0
    %2796 = vmatprep.subr.mxu0 0.0
    %2797 = vmatpush1.msra.mxu0 0.0
    %2798 = vmatprep.subr.mxu0 0.0
    %2799 = vmatpush1.msra.mxu0 0.0
    %2800 = vmatprep.subr.mxu0 0.0
    %2801 = vmatpush1.msra.mxu0 0.0
    %2802 = vmatprep.subr.mxu0 0.0
    %2803 = vmatpush1.msra.mxu0 0.0
    %2804 = vmatprep.subr.mxu0 0.0
    %2805 = vmatpush1.msra.mxu0 0.0
    %2806 = vmatprep.subr.mxu0 0.0
    %2807 = vmatpush1.msra.mxu0 0.0
    %2808 = vmatprep.subr.mxu0 0.0
    %2809 = vmatpush1.msra.mxu0 0.0
    %2810 = vmatprep.subr.mxu0 0.0
    %2811 = vmatpush1.msra.mxu0 0.0
    %2812 = vmatprep.subr.mxu0 0.0
    %2813 = vmatpush1.msra.mxu0 0.0
    %2814 = vmatprep.subr.mxu0 0.0
    %2815 = vmatpush1.msra.mxu0 0.0
    %2816 = vmatprep.subr.mxu0 0.0
    %2817 = vmatpush1.msra.mxu0 0.0
    %2818 = vmatprep.subr.mxu0 0.0
    %2819 = vmatpush1.msra.mxu0 0.0
    %2820 = vmatprep.subr.mxu0 0.0
    %2821 = vmatpush1.msra.mxu0 0.0
    %2822 = vmatprep.subr.mxu0 0.0
    %2823 = vmatpush1.msra.mxu0 0.0
    %2824 = vmatprep.subr.mxu0 0.0
    %2825 = vmatpush1.msra.mxu0 0.0
    %2826 = vmatprep.subr.mxu0 0.0
    %2827 = vmatpush1.msra.mxu0 0.0
    %2828 = vmatprep.subr.mxu0 0.0
    %2829 = vmatpush1.msra.mxu0 0.0
    %2830 = vmatprep.subr.mxu0 0.0
    %2831 = vmatpush1.msra.mxu0 0.0
    %2832 = vmatprep.subr.mxu0 0.0
    %2833 = vmatpush1.msra.mxu0 0.0
    %2834 = vmatprep.subr.mxu0 0.0
    %2835 = vmatpush1.msra.mxu0 0.0
    %2836 = vmatprep.subr.mxu0 0.0
    %2837 = vmatpush1.msra.mxu0 0.0
    %2838 = vmatprep.mubr.f32.mxu0 0.0
    %2839 = vmatmul.mubr.f32.gmra.mrb[0].mxu0 %v2683
    %v2840 = vpop.f32.mrb[0].mxu0
    %v2841 = vadd.f32 0.0, %v2840
    %v2842 = vpop.f32.mrb[0].mxu0
    %v2843 = vadd.f32 0.0, %v2842
    %2844 = vmatprep.mubr.f32.mxu0 0.0
    %2845 = vmatmul.mubr.f32.gmra.mrb[0].mxu0 %v2686
    %v2846 = vpop.f32.mrb[0].mxu0
    %v2847 = vadd.f32 0.0, %v2846
    %v2848 = vpop.f32.mrb[0].mxu0
    %v2849 = vadd.f32 0.0, %v2848
    %2850 = vmatprep.mubr.f32.mxu0 0.0
    %2851 = vmatmul.mubr.f32.gmra.mrb[0].mxu0 %v2689
    %v2852 = vpop.f32.mrb[0].mxu0
    %v2853 = vadd.f32 0.0, %v2852
    %v2854 = vpop.f32.mrb[0].mxu0
    %v2855 = vadd.f32 0.0, %v2854
    %2856 = vdwg.mxu0
    %2857 = vmatprep.subr.mxu0 %v2362
    %2858 = vmatpush1.msra.mxu0 %v2361
    %2859 = vmatprep.subr.mxu0 %v2368
    %2860 = vmatpush1.msra.mxu0 %v2367
    %2861 = vmatprep.subr.mxu0 %v2374
    %2862 = vmatpush1.msra.mxu0 %v2373
    %2863 = vmatprep.subr.mxu0 %v2380
    %2864 = vmatpush1.msra.mxu0 %v2379
    %2865 = vmatprep.subr.mxu0 %v2386
    %2866 = vmatpush1.msra.mxu0 %v2385
    %2867 = vmatprep.subr.mxu0 %v2392
    %2868 = vmatpush1.msra.mxu0 %v2391
    %2869 = vmatprep.subr.mxu0 0.0
    %2870 = vmatpush1.msra.mxu0 0.0
    %2871 = vmatprep.subr.mxu0 0.0
    %2872 = vmatpush1.msra.mxu0 0.0
    %2873 = vmatprep.subr.mxu0 0.0
    %2874 = vmatpush1.msra.mxu0 0.0
    %2875 = vmatprep.subr.mxu0 0.0
    %2876 = vmatpush1.msra.mxu0 0.0
    %2877 = vmatprep.subr.mxu0 0.0
    %2878 = vmatpush1.msra.mxu0 0.0
    %2879 = vmatprep.subr.mxu0 0.0
    %2880 = vmatpush1.msra.mxu0 0.0
    %2881 = vmatprep.subr.mxu0 0.0
    %2882 = vmatpush1.msra.mxu0 0.0
    %2883 = vmatprep.subr.mxu0 0.0
    %2884 = vmatpush1.msra.mxu0 0.0
    %2885 = vmatprep.subr.mxu0 0.0
    %2886 = vmatpush1.msra.mxu0 0.0
    %2887 = vmatprep.subr.mxu0 0.0
    %2888 = vmatpush1.msra.mxu0 0.0
    %2889 = vmatprep.subr.mxu0 0.0
    %2890 = vmatpush1.msra.mxu0 0.0
    %2891 = vmatprep.subr.mxu0 0.0
    %2892 = vmatpush1.msra.mxu0 0.0
    %2893 = vmatprep.subr.mxu0 0.0
    %2894 = vmatpush1.msra.mxu0 0.0
    %2895 = vmatprep.subr.mxu0 0.0
    %2896 = vmatpush1.msra.mxu0 0.0
    %2897 = vmatprep.subr.mxu0 0.0
    %2898 = vmatpush1.msra.mxu0 0.0
    %2899 = vmatprep.subr.mxu0 0.0
    %2900 = vmatpush1.msra.mxu0 0.0
    %2901 = vmatprep.subr.mxu0 0.0
    %2902 = vmatpush1.msra.mxu0 0.0
    %2903 = vmatprep.subr.mxu0 0.0
    %2904 = vmatpush1.msra.mxu0 0.0
    %2905 = vmatprep.subr.mxu0 0.0
    %2906 = vmatpush1.msra.mxu0 0.0
    %2907 = vmatprep.subr.mxu0 0.0
    %2908 = vmatpush1.msra.mxu0 0.0
    %2909 = vmatprep.subr.mxu0 0.0
    %2910 = vmatpush1.msra.mxu0 0.0
    %2911 = vmatprep.subr.mxu0 0.0
    %2912 = vmatpush1.msra.mxu0 0.0
    %2913 = vmatprep.subr.mxu0 0.0
    %2914 = vmatpush1.msra.mxu0 0.0
    %2915 = vmatprep.subr.mxu0 0.0
    %2916 = vmatpush1.msra.mxu0 0.0
    %2917 = vmatprep.subr.mxu0 0.0
    %2918 = vmatpush1.msra.mxu0 0.0
    %2919 = vmatprep.subr.mxu0 0.0
    %2920 = vmatpush1.msra.mxu0 0.0
    %2921 = vmatprep.mubr.f32.mxu0 0.0
    %2922 = vmatmul.mubr.f32.gmra.mrb[0].mxu0 %v2683
    %v2923 = vpop.f32.mrb[0].mxu0
    %v2924 = vadd.f32 0.0, %v2923
    %v2925 = vpop.f32.mrb[0].mxu0
    %v2926 = vadd.f32 0.0, %v2925
    %2927 = vmatprep.mubr.f32.mxu0 0.0
    %2928 = vmatmul.mubr.f32.gmra.mrb[0].mxu0 %v2686
    %v2929 = vpop.f32.mrb[0].mxu0
    %v2930 = vadd.f32 0.0, %v2929
    %v2931 = vpop.f32.mrb[0].mxu0
    %v2932 = vadd.f32 0.0, %v2931
    %2933 = vmatprep.mubr.f32.mxu0 0.0
    %2934 = vmatmul.mubr.f32.gmra.mrb[0].mxu0 %v2689
    %v2935 = vpop.f32.mrb[0].mxu0
    %v2936 = vadd.f32 0.0, %v2935
    %v2937 = vpop.f32.mrb[0].mxu0
    %v2938 = vadd.f32 0.0, %v2937
    %2939 = vdwg.mxu0
    %v2940 = vmax.f32 %v2488, %v2758
    %v2941 = vmax.f32 %v2490, %v2760
    %v2942 = vmax.f32 %v2571, %v2841
    %v2943 = vmax.f32 %v2573, %v2843
    %v2944 = vmax.f32 %v2654, %v2924
    %v2945 = vmax.f32 %v2656, %v2926
    %v2946 = vmax.f32 %v2494, %v2764
    %v2947 = vmax.f32 %v2496, %v2766
    %v2948 = vmax.f32 %v2577, %v2847
    %v2949 = vmax.f32 %v2579, %v2849
    %v2950 = vmax.f32 %v2660, %v2930
    %v2951 = vmax.f32 %v2662, %v2932
    %v2952 = vmax.f32 %v2500, %v2770
    %v2953 = vmax.f32 %v2502, %v2772
    %v2954 = vmax.f32 %v2583, %v2853
    %v2955 = vmax.f32 %v2585, %v2855
    %v2956 = vmax.f32 %v2666, %v2936
    %v2957 = vmax.f32 %v2668, %v2938
    %v2958 = vmax.f32 %v2940, %v2943
    %v2959 = vmax.f32 %v2941, %v2944
    %v2960 = vmax.f32 %v2942, %v2945
    %v2961 = vmax.f32 %v2946, %v2949
    %v2962 = vmax.f32 %v2947, %v2950
    %v2963 = vmax.f32 %v2948, %v2951
    %v2964 = vmax.f32 %v2952, %v2955
    %v2965 = vmax.f32 %v2953, %v2956
    %v2966 = vmax.f32 %v2954, %v2957
    %2967 = vst [vmem:[#allocation2] sm:$0xff] %v2958
    %2968 = vst [vmem:[#allocation2 + $0x8] sm:$0xff] %v2959
    %2969 = vst [vmem:[#allocation2 + $0x10] sm:$0xff] %v2960
    %2970 = vst [vmem:[#allocation2 + $0x18] sm:$0xff] %v2961
    %2971 = vst [vmem:[#allocation2 + $0x20] sm:$0xff] %v2962
    %2972 = vst [vmem:[#allocation2 + $0x28] sm:$0xff] %v2963
    %2973 = vst [vmem:[#allocation2 + $0x30] sm:$0xff] %v2964
    %2974 = vst [vmem:[#allocation2 + $0x38] sm:$0xff] %v2965
    %2975 = vst [vmem:[#allocation2 + $0x40] sm:$0xff] %v2966
    %v2976 = vld [vmem:[#allocation2] sm:$0xff]
    %v2977 = vld [vmem:[#allocation2 + $0x8] sm:$0xff]
    %v2978 = vld [vmem:[#allocation2 + $0x10] sm:$0xff]
    %v2979 = vld [vmem:[#allocation2 + $0x18] sm:$0xf0]
    %v2980 = vld [vmem:[#allocation2 + $0x20] sm:$0xf0]
    %v2981 = vld [vmem:[#allocation2 + $0x28] sm:$0xf0]
    %v2982 = vld [vmem:[#allocation2 + $0x30] sm:$0xf]
    %v2983 = vld [vmem:[#allocation2 + $0x38] sm:$0xf]
    %v2984 = vld [vmem:[#allocation2 + $0x40] sm:$0xf]
    %v2991 = vrot.slane %v2979, 4
    %v2992 = vrot.slane %v2982, 4
    %v2993 = vsel %vm284, %v2991, %v2992
    %v2994 = vrot.slane %v2980, 4
    %v2995 = vrot.slane %v2983, 4
    %v2996 = vsel %vm284, %v2994, %v2995
    %v2997 = vrot.slane %v2981, 4
    %v2998 = vrot.slane %v2984, 4
    %v2999 = vsel %vm284, %v2997, %v2998
    %v3003 = vld [vmem:[#allocation8] sm:$0xff]
    %v3004 = vld [vmem:[#allocation8 + $0x8] sm:$0xff]
    %v3005 = vld [vmem:[#allocation8 + $0x10] sm:$0xff]
    %v3006 = vld [vmem:[#allocation8 + $0x18] sm:$0xff]
    %v3007 = vld [vmem:[#allocation8 + $0x20] sm:$0xff]
    %v3008 = vld [vmem:[#allocation8 + $0x28] sm:$0xff]
    %v3009 = vld [vmem:[#allocation8 + $0x30] sm:$0xff]
    %v3010 = vld [vmem:[#allocation8 + $0x38] sm:$0xff]
    %v3011 = vld [vmem:[#allocation8 + $0x40] sm:$0xff]
    %v3012 = vld [vmem:[#allocation8 + $0x48] sm:$0xff]
    %v3013 = vld [vmem:[#allocation8 + $0x50] sm:$0xff]
    %v3014 = vld [vmem:[#allocation8 + $0x58] sm:$0xff]
    %v3015 = vld [vmem:[#allocation8 + $0x60] sm:$0xff]
    %v3016 = vld [vmem:[#allocation8 + $0x68] sm:$0xff]
    %v3017 = vld [vmem:[#allocation8 + $0x70] sm:$0xff]
    %v3018 = vld [vmem:[#allocation8 + $0x78] sm:$0xff]
    %v3019 = vld [vmem:[#allocation8 + $0x80] sm:$0xff]
    %v3020 = vld [vmem:[#allocation8 + $0x88] sm:$0xff]
    %v3021 = vld [vmem:[#allocation8 + $0x90] sm:$0xff]
    %v3022 = vld [vmem:[#allocation8 + $0x98] sm:$0xff]
    %v3023 = vld [vmem:[#allocation8 + $0xa0] sm:$0xff]
    %v3024 = vld [vmem:[#allocation8 + $0xa8] sm:$0xff]
    %v3025 = vld [vmem:[#allocation8 + $0xb0] sm:$0xff]
    %v3026 = vld [vmem:[#allocation8 + $0xb8] sm:$0xff]
    %v3027 = vld [vmem:[#allocation8 + $0xc0] sm:$0xff]
    %v3028 = vld [vmem:[#allocation8 + $0xc8] sm:$0xff]
    %v3029 = vld [vmem:[#allocation8 + $0xd0] sm:$0xff]
    %v3030 = vld [vmem:[#allocation8 + $0xd8] sm:$0xff]
    %v3031 = vld [vmem:[#allocation8 + $0xe0] sm:$0xff]
    %v3032 = vld [vmem:[#allocation8 + $0xe8] sm:$0xff]
    %v3033 = vld [vmem:[#allocation8 + $0xf0] sm:$0xff]
    %v3034 = vld [vmem:[#allocation8 + $0xf8] sm:$0xff]
    %v3035 = vld [vmem:[#allocation8 + $0x100] sm:$0xff]
    %v3036 = vld [vmem:[#allocation8 + $0x108] sm:$0xff]
    %v3037 = vld [vmem:[#allocation8 + $0x110] sm:$0xff]
    %v3038 = vld [vmem:[#allocation8 + $0x118] sm:$0xff]
    %v3039 = vld [vmem:[#allocation8 + $0x120] sm:$0xff]
    %v3040 = vld [vmem:[#allocation8 + $0x128] sm:$0xff]
    %v3041 = vld [vmem:[#allocation8 + $0x130] sm:$0xff]
    %v3042 = vld [vmem:[#allocation8 + $0x138] sm:$0xff]
    %v3043 = vld [vmem:[#allocation8 + $0x140] sm:$0xff]
    %v3044 = vld [vmem:[#allocation8 + $0x148] sm:$0xff]
    %v3045 = vld [vmem:[#allocation8 + $0x150] sm:$0xff]
    %v3046 = vld [vmem:[#allocation8 + $0x158] sm:$0xff]
    %v3047 = vld [vmem:[#allocation8 + $0x160] sm:$0xff]
    %v3048 = vld [vmem:[#allocation8 + $0x168] sm:$0xff]
    %v3049 = vld [vmem:[#allocation8 + $0x170] sm:$0xff]
    %v3050 = vld [vmem:[#allocation8 + $0x178] sm:$0xff]
    %v3051 = vld [vmem:[#allocation8 + $0x180] sm:$0xff]
    %v3052 = vld [vmem:[#allocation8 + $0x188] sm:$0xff]
    %v3053 = vld [vmem:[#allocation8 + $0x190] sm:$0xff]
    %v3054 = vld [vmem:[#allocation8 + $0x198] sm:$0xff]
    %v3055 = vld [vmem:[#allocation8 + $0x1a0] sm:$0xff]
    %v3056 = vld [vmem:[#allocation8 + $0x1a8] sm:$0xff]
    %v3057 = vld [vmem:[#allocation8 + $0x1b0] sm:$0xff]
    %v3058 = vld [vmem:[#allocation8 + $0x1b8] sm:$0xff]
    %v3059 = vld [vmem:[#allocation8 + $0x1c0] sm:$0xff]
    %v3060 = vld [vmem:[#allocation8 + $0x1c8] sm:$0xff]
    %v3061 = vld [vmem:[#allocation8 + $0x1d0] sm:$0xff]
    %v3062 = vld [vmem:[#allocation8 + $0x1d8] sm:$0xff]
    %v3063 = vld [vmem:[#allocation8 + $0x1e0] sm:$0xff]
    %v3064 = vld [vmem:[#allocation8 + $0x1e8] sm:$0xff]
    %v3065 = vld [vmem:[#allocation8 + $0x1f0] sm:$0xff]
    %v3066 = vld [vmem:[#allocation8 + $0x1f8] sm:$0xff]
    %v3067 = vld [vmem:[#allocation8 + $0x200] sm:$0xff]
    %v3068 = vld [vmem:[#allocation8 + $0x208] sm:$0xff]
    %v3069 = vld [vmem:[#allocation8 + $0x210] sm:$0xff]
    %v3070 = vld [vmem:[#allocation8 + $0x218] sm:$0xff]
    %v3071 = vld [vmem:[#allocation8 + $0x220] sm:$0xff]
    %v3072 = vld [vmem:[#allocation8 + $0x228] sm:$0xff]
    %v3073 = vld [vmem:[#allocation8 + $0x230] sm:$0xff]
    %v3074 = vld [vmem:[#allocation8 + $0x238] sm:$0xff]
    %v3075 = vld [vmem:[#allocation8 + $0x240] sm:$0xff]
    %v3076 = vld [vmem:[#allocation8 + $0x248] sm:$0xff]
    %v3077 = vld [vmem:[#allocation8 + $0x250] sm:$0xff]
    %v3078 = vld [vmem:[#allocation8 + $0x258] sm:$0xff]
    %v3079 = vld [vmem:[#allocation8 + $0x260] sm:$0xff]
    %v3080 = vld [vmem:[#allocation8 + $0x268] sm:$0xff]
    %v3081 = vld [vmem:[#allocation8 + $0x270] sm:$0xff]
    %v3082 = vld [vmem:[#allocation8 + $0x278] sm:$0xff]
    %v3083 = vld [vmem:[#allocation8 + $0x280] sm:$0xff]
    %v3084 = vld [vmem:[#allocation8 + $0x288] sm:$0xff]
    %v3085 = vld [vmem:[#allocation8 + $0x290] sm:$0xff]
    %v3086 = vld [vmem:[#allocation8 + $0x298] sm:$0xff]
    %v3087 = vld [vmem:[#allocation8 + $0x2a0] sm:$0xff]
    %v3088 = vld [vmem:[#allocation8 + $0x2a8] sm:$0xff]
    %v3089 = vld [vmem:[#allocation8 + $0x2b0] sm:$0xff]
    %v3090 = vld [vmem:[#allocation8 + $0x2b8] sm:$0xff]
    %v3091 = vld [vmem:[#allocation8 + $0x2c0] sm:$0xff]
    %v3092 = vld [vmem:[#allocation8 + $0x2c8] sm:$0xff]
    %v3093 = vld [vmem:[#allocation8 + $0x2d0] sm:$0xff]
    %v3094 = vld [vmem:[#allocation8 + $0x2d8] sm:$0xff]
    %v3095 = vld [vmem:[#allocation8 + $0x2e0] sm:$0xff]
    %v3096 = vld [vmem:[#allocation8 + $0x2e8] sm:$0xff]
    %v3097 = vld [vmem:[#allocation8 + $0x2f0] sm:$0xff]
    %v3098 = vld [vmem:[#allocation8 + $0x2f8] sm:$0xff]
    %v3099 = vld [vmem:[#allocation8 + $0x300] sm:$0xff]
    %v3100 = vld [vmem:[#allocation8 + $0x308] sm:$0xff]
    %v3101 = vld [vmem:[#allocation8 + $0x310] sm:$0xff]
    %v3102 = vld [vmem:[#allocation8 + $0x318] sm:$0xff]
    %v3103 = vld [vmem:[#allocation8 + $0x320] sm:$0xff]
    %v3104 = vld [vmem:[#allocation8 + $0x328] sm:$0xff]
    %v3105 = vld [vmem:[#allocation8 + $0x330] sm:$0xff]
    %v3106 = vld [vmem:[#allocation8 + $0x338] sm:$0xff]
    %v3107 = vld [vmem:[#allocation8 + $0x340] sm:$0xff]
    %v3108 = vld [vmem:[#allocation8 + $0x348] sm:$0xff]
    %v3109 = vld [vmem:[#allocation8 + $0x350] sm:$0xff]
    %v3110 = vld [vmem:[#allocation8 + $0x358] sm:$0xff]
    %v3111 = vld [vmem:[#allocation8 + $0x360] sm:$0xff]
    %v3112 = vld [vmem:[#allocation8 + $0x368] sm:$0xff]
    %v3113 = vld [vmem:[#allocation8 + $0x370] sm:$0xff]
    %v3114 = vld [vmem:[#allocation8 + $0x378] sm:$0xff]
    %v3115 = vld [vmem:[#allocation8 + $0x380] sm:$0xff]
    %v3116 = vld [vmem:[#allocation8 + $0x388] sm:$0xff]
    %v3117 = vld [vmem:[#allocation8 + $0x390] sm:$0xff]
    %v3118 = vld [vmem:[#allocation8 + $0x398] sm:$0xff]
    %v3119 = vld [vmem:[#allocation8 + $0x3a0] sm:$0xff]
    %v3120 = vld [vmem:[#allocation8 + $0x3a8] sm:$0xff]
    %v3121 = vld [vmem:[#allocation8 + $0x3b0] sm:$0xff]
    %v3122 = vld [vmem:[#allocation8 + $0x3b8] sm:$0xff]
    %v3123 = vld [vmem:[#allocation8 + $0x3c0] sm:$0xff]
    %v3124 = vld [vmem:[#allocation8 + $0x3c8] sm:$0xff]
    %v3125 = vld [vmem:[#allocation8 + $0x3d0] sm:$0xff]
    %v3126 = vld [vmem:[#allocation8 + $0x3d8] sm:$0xff]
    %v3127 = vld [vmem:[#allocation8 + $0x3e0] sm:$0xff]
    %v3128 = vld [vmem:[#allocation8 + $0x3e8] sm:$0xff]
    %v3129 = vld [vmem:[#allocation8 + $0x3f0] sm:$0xff]
    %v3130 = vld [vmem:[#allocation8 + $0x3f8] sm:$0xff]
    %v3131 = vld [vmem:[#allocation8 + $0x400] sm:$0xff]
    %v3132 = vld [vmem:[#allocation8 + $0x408] sm:$0xff]
    %v3133 = vld [vmem:[#allocation8 + $0x410] sm:$0xff]
    %v3134 = vld [vmem:[#allocation8 + $0x418] sm:$0xff]
    %v3135 = vld [vmem:[#allocation8 + $0x420] sm:$0xff]
    %v3136 = vld [vmem:[#allocation8 + $0x428] sm:$0xff]
    %v3137 = vld [vmem:[#allocation8 + $0x430] sm:$0xff]
    %v3138 = vld [vmem:[#allocation8 + $0x438] sm:$0xff]
    %v3139 = vld [vmem:[#allocation8 + $0x440] sm:$0xff]
    %v3140 = vld [vmem:[#allocation8 + $0x448] sm:$0xff]
    %v3141 = vld [vmem:[#allocation8 + $0x450] sm:$0xff]
    %v3142 = vld [vmem:[#allocation8 + $0x458] sm:$0xff]
    %v3143 = vld [vmem:[#allocation8 + $0x460] sm:$0xff]
    %v3144 = vld [vmem:[#allocation8 + $0x468] sm:$0xff]
    %v3145 = vld [vmem:[#allocation8 + $0x470] sm:$0xff]
    %v3146 = vld [vmem:[#allocation8 + $0x478] sm:$0xff]
    %v3147 = vld [vmem:[#allocation8 + $0x480] sm:$0xff]
    %v3148 = vld [vmem:[#allocation8 + $0x488] sm:$0xff]
    %v3149 = vld [vmem:[#allocation8 + $0x490] sm:$0xff]
    %v3150 = vld [vmem:[#allocation8 + $0x498] sm:$0xff]
    %v3151 = vld [vmem:[#allocation8 + $0x4a0] sm:$0xff]
    %v3152 = vld [vmem:[#allocation8 + $0x4a8] sm:$0xff]
    %v3153 = vld [vmem:[#allocation8 + $0x4b0] sm:$0xff]
    %v3154 = vld [vmem:[#allocation8 + $0x4b8] sm:$0xff]
    %v3155 = vld [vmem:[#allocation8 + $0x4c0] sm:$0xff]
    %v3156 = vld [vmem:[#allocation8 + $0x4c8] sm:$0xff]
    %v3157 = vld [vmem:[#allocation8 + $0x4d0] sm:$0xff]
    %v3158 = vld [vmem:[#allocation8 + $0x4d8] sm:$0xff]
    %v3159 = vld [vmem:[#allocation8 + $0x4e0] sm:$0xff]
    %v3160 = vld [vmem:[#allocation8 + $0x4e8] sm:$0xff]
    %v3161 = vld [vmem:[#allocation8 + $0x4f0] sm:$0xff]
    %v3162 = vld [vmem:[#allocation8 + $0x4f8] sm:$0xff]
    %v3163 = vld [vmem:[#allocation8 + $0x500] sm:$0xff]
    %v3164 = vld [vmem:[#allocation8 + $0x508] sm:$0xff]
    %v3165 = vld [vmem:[#allocation8 + $0x510] sm:$0xff]
    %v3166 = vld [vmem:[#allocation8 + $0x518] sm:$0xff]
    %v3167 = vld [vmem:[#allocation8 + $0x520] sm:$0xff]
    %v3168 = vld [vmem:[#allocation8 + $0x528] sm:$0xff]
    %v3169 = vld [vmem:[#allocation8 + $0x530] sm:$0xff]
    %v3170 = vld [vmem:[#allocation8 + $0x538] sm:$0xff]
    %v3171 = vld [vmem:[#allocation8 + $0x540] sm:$0xff]
    %v3172 = vld [vmem:[#allocation8 + $0x548] sm:$0xff]
    %v3173 = vld [vmem:[#allocation8 + $0x550] sm:$0xff]
    %v3174 = vld [vmem:[#allocation8 + $0x558] sm:$0xff]
    %v3175 = vld [vmem:[#allocation8 + $0x560] sm:$0xff]
    %v3176 = vld [vmem:[#allocation8 + $0x568] sm:$0xff]
    %v3177 = vld [vmem:[#allocation8 + $0x570] sm:$0xff]
    %v3178 = vld [vmem:[#allocation8 + $0x578] sm:$0xff]
    %v3179 = vld [vmem:[#allocation8 + $0x580] sm:$0xff]
    %v3180 = vld [vmem:[#allocation8 + $0x588] sm:$0xff]
    %v3181 = vld [vmem:[#allocation8 + $0x590] sm:$0xff]
    %v3182 = vld [vmem:[#allocation8 + $0x598] sm:$0xff]
    %v3183 = vld [vmem:[#allocation8 + $0x5a0] sm:$0xff]
    %v3184 = vld [vmem:[#allocation8 + $0x5a8] sm:$0xff]
    %v3185 = vld [vmem:[#allocation8 + $0x5b0] sm:$0xff]
    %v3186 = vld [vmem:[#allocation8 + $0x5b8] sm:$0xff]
    %v3187 = vld [vmem:[#allocation8 + $0x5c0] sm:$0xff]
    %v3188 = vld [vmem:[#allocation8 + $0x5c8] sm:$0xff]
    %v3189 = vld [vmem:[#allocation8 + $0x5d0] sm:$0xff]
    %v3190 = vld [vmem:[#allocation8 + $0x5d8] sm:$0xff]
    %v3191 = vld [vmem:[#allocation8 + $0x5e0] sm:$0xff]
    %v3192 = vld [vmem:[#allocation8 + $0x5e8] sm:$0xff]
    %v3193 = vld [vmem:[#allocation8 + $0x5f0] sm:$0xff]
    %v3194 = vld [vmem:[#allocation8 + $0x5f8] sm:$0xff]
    %v3195 = vld [vmem:[#allocation2] sm:$0xfe]
    %v3196 = vld [vmem:[#allocation2 + $0x8] sm:$0xfe]
    %v3197 = vld [vmem:[#allocation2 + $0x10] sm:$0xfe]
    %v3198 = vld [vmem:[#allocation2 + $0x18] sm:$0x1]
    %v3199 = vld [vmem:[#allocation2 + $0x20] sm:$0x1]
    %v3200 = vld [vmem:[#allocation2 + $0x28] sm:$0x1]
    %v3201 = vld [vmem:[#allocation2 + $0x18] sm:$0xe0]
    %v3202 = vld [vmem:[#allocation2 + $0x20] sm:$0xe0]
    %v3203 = vld [vmem:[#allocation2 + $0x28] sm:$0xe0]
    %v3204 = vld [vmem:[#allocation2 + $0x30] sm:$0x1f]
    %v3205 = vld [vmem:[#allocation2 + $0x38] sm:$0x1f]
    %v3206 = vld [vmem:[#allocation2 + $0x40] sm:$0x1f]
    %vm3213 = vcmask 1046528
    %v3214 = vrot.slane %v3195, 1
    %v3215 = vrot.slane %v3198, 1
    %v3216 = vsel %vm3213, %v3214, %v3215
    %v3217 = vrot.slane %v3196, 1
    %v3218 = vrot.slane %v3199, 1
    %v3219 = vsel %vm3213, %v3217, %v3218
    %v3220 = vrot.slane %v3197, 1
    %v3221 = vrot.slane %v3200, 1
    %v3222 = vsel %vm3213, %v3220, %v3221
    %vm3232 = vcmask 1042432
    %v3233 = vrot.slane %v3201, 5
    %v3234 = vrot.slane %v3204, 5
    %v3235 = vsel %vm3232, %v3233, %v3234
    %v3236 = vrot.slane %v3202, 5
    %v3237 = vrot.slane %v3205, 5
    %v3238 = vsel %vm3232, %v3236, %v3237
    %v3239 = vrot.slane %v3203, 5
    %v3240 = vrot.slane %v3206, 5
    %v3241 = vsel %vm3232, %v3239, %v3240
    %s3245 = scalar_lea.vmem [#allocation8], 1536
    %v3246 = vld [vmem:[%s3245] sm:$0xff]
    %v3247 = vld [vmem:[%s3245 + $0x8] sm:$0xff]
    %v3248 = vld [vmem:[%s3245 + $0x10] sm:$0xff]
    %v3249 = vld [vmem:[%s3245 + $0x18] sm:$0xff]
    %v3250 = vld [vmem:[%s3245 + $0x20] sm:$0xff]
    %v3251 = vld [vmem:[%s3245 + $0x28] sm:$0xff]
    %v3252 = vld [vmem:[%s3245 + $0x30] sm:$0xff]
    %v3253 = vld [vmem:[%s3245 + $0x38] sm:$0xff]
    %v3254 = vld [vmem:[%s3245 + $0x40] sm:$0xff]
    %v3255 = vld [vmem:[%s3245 + $0x48] sm:$0xff]
    %v3256 = vld [vmem:[%s3245 + $0x50] sm:$0xff]
    %v3257 = vld [vmem:[%s3245 + $0x58] sm:$0xff]
    %v3258 = vld [vmem:[%s3245 + $0x60] sm:$0xff]
    %v3259 = vld [vmem:[%s3245 + $0x68] sm:$0xff]
    %v3260 = vld [vmem:[%s3245 + $0x70] sm:$0xff]
    %v3261 = vld [vmem:[%s3245 + $0x78] sm:$0xff]
    %v3262 = vld [vmem:[%s3245 + $0x80] sm:$0xff]
    %v3263 = vld [vmem:[%s3245 + $0x88] sm:$0xff]
    %v3264 = vld [vmem:[%s3245 + $0x90] sm:$0xff]
    %v3265 = vld [vmem:[%s3245 + $0x98] sm:$0xff]
    %v3266 = vld [vmem:[%s3245 + $0xa0] sm:$0xff]
    %v3267 = vld [vmem:[%s3245 + $0xa8] sm:$0xff]
    %v3268 = vld [vmem:[%s3245 + $0xb0] sm:$0xff]
    %v3269 = vld [vmem:[%s3245 + $0xb8] sm:$0xff]
    %v3270 = vld [vmem:[%s3245 + $0xc0] sm:$0xff]
    %v3271 = vld [vmem:[%s3245 + $0xc8] sm:$0xff]
    %v3272 = vld [vmem:[%s3245 + $0xd0] sm:$0xff]
    %v3273 = vld [vmem:[%s3245 + $0xd8] sm:$0xff]
    %v3274 = vld [vmem:[%s3245 + $0xe0] sm:$0xff]
    %v3275 = vld [vmem:[%s3245 + $0xe8] sm:$0xff]
    %v3276 = vld [vmem:[%s3245 + $0xf0] sm:$0xff]
    %v3277 = vld [vmem:[%s3245 + $0xf8] sm:$0xff]
    %v3278 = vld [vmem:[%s3245 + $0x100] sm:$0xff]
    %v3279 = vld [vmem:[%s3245 + $0x108] sm:$0xff]
    %v3280 = vld [vmem:[%s3245 + $0x110] sm:$0xff]
    %v3281 = vld [vmem:[%s3245 + $0x118] sm:$0xff]
    %v3282 = vld [vmem:[%s3245 + $0x120] sm:$0xff]
    %v3283 = vld [vmem:[%s3245 + $0x128] sm:$0xff]
    %v3284 = vld [vmem:[%s3245 + $0x130] sm:$0xff]
    %v3285 = vld [vmem:[%s3245 + $0x138] sm:$0xff]
    %v3286 = vld [vmem:[%s3245 + $0x140] sm:$0xff]
    %v3287 = vld [vmem:[%s3245 + $0x148] sm:$0xff]
    %v3288 = vld [vmem:[%s3245 + $0x150] sm:$0xff]
    %v3289 = vld [vmem:[%s3245 + $0x158] sm:$0xff]
    %v3290 = vld [vmem:[%s3245 + $0x160] sm:$0xff]
    %v3291 = vld [vmem:[%s3245 + $0x168] sm:$0xff]
    %v3292 = vld [vmem:[%s3245 + $0x170] sm:$0xff]
    %v3293 = vld [vmem:[%s3245 + $0x178] sm:$0xff]
    %v3294 = vld [vmem:[%s3245 + $0x180] sm:$0xff]
    %v3295 = vld [vmem:[%s3245 + $0x188] sm:$0xff]
    %v3296 = vld [vmem:[%s3245 + $0x190] sm:$0xff]
    %v3297 = vld [vmem:[%s3245 + $0x198] sm:$0xff]
    %v3298 = vld [vmem:[%s3245 + $0x1a0] sm:$0xff]
    %v3299 = vld [vmem:[%s3245 + $0x1a8] sm:$0xff]
    %v3300 = vld [vmem:[%s3245 + $0x1b0] sm:$0xff]
    %v3301 = vld [vmem:[%s3245 + $0x1b8] sm:$0xff]
    %v3302 = vld [vmem:[%s3245 + $0x1c0] sm:$0xff]
    %v3303 = vld [vmem:[%s3245 + $0x1c8] sm:$0xff]
    %v3304 = vld [vmem:[%s3245 + $0x1d0] sm:$0xff]
    %v3305 = vld [vmem:[%s3245 + $0x1d8] sm:$0xff]
    %v3306 = vld [vmem:[%s3245 + $0x1e0] sm:$0xff]
    %v3307 = vld [vmem:[%s3245 + $0x1e8] sm:$0xff]
    %v3308 = vld [vmem:[%s3245 + $0x1f0] sm:$0xff]
    %v3309 = vld [vmem:[%s3245 + $0x1f8] sm:$0xff]
    %v3310 = vld [vmem:[%s3245 + $0x200] sm:$0xff]
    %v3311 = vld [vmem:[%s3245 + $0x208] sm:$0xff]
    %v3312 = vld [vmem:[%s3245 + $0x210] sm:$0xff]
    %v3313 = vld [vmem:[%s3245 + $0x218] sm:$0xff]
    %v3314 = vld [vmem:[%s3245 + $0x220] sm:$0xff]
    %v3315 = vld [vmem:[%s3245 + $0x228] sm:$0xff]
    %v3316 = vld [vmem:[%s3245 + $0x230] sm:$0xff]
    %v3317 = vld [vmem:[%s3245 + $0x238] sm:$0xff]
    %v3318 = vld [vmem:[%s3245 + $0x240] sm:$0xff]
    %v3319 = vld [vmem:[%s3245 + $0x248] sm:$0xff]
    %v3320 = vld [vmem:[%s3245 + $0x250] sm:$0xff]
    %v3321 = vld [vmem:[%s3245 + $0x258] sm:$0xff]
    %v3322 = vld [vmem:[%s3245 + $0x260] sm:$0xff]
    %v3323 = vld [vmem:[%s3245 + $0x268] sm:$0xff]
    %v3324 = vld [vmem:[%s3245 + $0x270] sm:$0xff]
    %v3325 = vld [vmem:[%s3245 + $0x278] sm:$0xff]
    %v3326 = vld [vmem:[%s3245 + $0x280] sm:$0xff]
    %v3327 = vld [vmem:[%s3245 + $0x288] sm:$0xff]
    %v3328 = vld [vmem:[%s3245 + $0x290] sm:$0xff]
    %v3329 = vld [vmem:[%s3245 + $0x298] sm:$0xff]
    %v3330 = vld [vmem:[%s3245 + $0x2a0] sm:$0xff]
    %v3331 = vld [vmem:[%s3245 + $0x2a8] sm:$0xff]
    %v3332 = vld [vmem:[%s3245 + $0x2b0] sm:$0xff]
    %v3333 = vld [vmem:[%s3245 + $0x2b8] sm:$0xff]
    %v3334 = vld [vmem:[%s3245 + $0x2c0] sm:$0xff]
    %v3335 = vld [vmem:[%s3245 + $0x2c8] sm:$0xff]
    %v3336 = vld [vmem:[%s3245 + $0x2d0] sm:$0xff]
    %v3337 = vld [vmem:[%s3245 + $0x2d8] sm:$0xff]
    %v3338 = vld [vmem:[%s3245 + $0x2e0] sm:$0xff]
    %v3339 = vld [vmem:[%s3245 + $0x2e8] sm:$0xff]
    %v3340 = vld [vmem:[%s3245 + $0x2f0] sm:$0xff]
    %v3341 = vld [vmem:[%s3245 + $0x2f8] sm:$0xff]
    %v3342 = vld [vmem:[%s3245 + $0x300] sm:$0xff]
    %v3343 = vld [vmem:[%s3245 + $0x308] sm:$0xff]
    %v3344 = vld [vmem:[%s3245 + $0x310] sm:$0xff]
    %v3345 = vld [vmem:[%s3245 + $0x318] sm:$0xff]
    %v3346 = vld [vmem:[%s3245 + $0x320] sm:$0xff]
    %v3347 = vld [vmem:[%s3245 + $0x328] sm:$0xff]
    %v3348 = vld [vmem:[%s3245 + $0x330] sm:$0xff]
    %v3349 = vld [vmem:[%s3245 + $0x338] sm:$0xff]
    %v3350 = vld [vmem:[%s3245 + $0x340] sm:$0xff]
    %v3351 = vld [vmem:[%s3245 + $0x348] sm:$0xff]
    %v3352 = vld [vmem:[%s3245 + $0x350] sm:$0xff]
    %v3353 = vld [vmem:[%s3245 + $0x358] sm:$0xff]
    %v3354 = vld [vmem:[%s3245 + $0x360] sm:$0xff]
    %v3355 = vld [vmem:[%s3245 + $0x368] sm:$0xff]
    %v3356 = vld [vmem:[%s3245 + $0x370] sm:$0xff]
    %v3357 = vld [vmem:[%s3245 + $0x378] sm:$0xff]
    %v3358 = vld [vmem:[%s3245 + $0x380] sm:$0xff]
    %v3359 = vld [vmem:[%s3245 + $0x388] sm:$0xff]
    %v3360 = vld [vmem:[%s3245 + $0x390] sm:$0xff]
    %v3361 = vld [vmem:[%s3245 + $0x398] sm:$0xff]
    %v3362 = vld [vmem:[%s3245 + $0x3a0] sm:$0xff]
    %v3363 = vld [vmem:[%s3245 + $0x3a8] sm:$0xff]
    %v3364 = vld [vmem:[%s3245 + $0x3b0] sm:$0xff]
    %v3365 = vld [vmem:[%s3245 + $0x3b8] sm:$0xff]
    %v3366 = vld [vmem:[%s3245 + $0x3c0] sm:$0xff]
    %v3367 = vld [vmem:[%s3245 + $0x3c8] sm:$0xff]
    %v3368 = vld [vmem:[%s3245 + $0x3d0] sm:$0xff]
    %v3369 = vld [vmem:[%s3245 + $0x3d8] sm:$0xff]
    %v3370 = vld [vmem:[%s3245 + $0x3e0] sm:$0xff]
    %v3371 = vld [vmem:[%s3245 + $0x3e8] sm:$0xff]
    %v3372 = vld [vmem:[%s3245 + $0x3f0] sm:$0xff]
    %v3373 = vld [vmem:[%s3245 + $0x3f8] sm:$0xff]
    %v3374 = vld [vmem:[%s3245 + $0x400] sm:$0xff]
    %v3375 = vld [vmem:[%s3245 + $0x408] sm:$0xff]
    %v3376 = vld [vmem:[%s3245 + $0x410] sm:$0xff]
    %v3377 = vld [vmem:[%s3245 + $0x418] sm:$0xff]
    %v3378 = vld [vmem:[%s3245 + $0x420] sm:$0xff]
    %v3379 = vld [vmem:[%s3245 + $0x428] sm:$0xff]
    %v3380 = vld [vmem:[%s3245 + $0x430] sm:$0xff]
    %v3381 = vld [vmem:[%s3245 + $0x438] sm:$0xff]
    %v3382 = vld [vmem:[%s3245 + $0x440] sm:$0xff]
    %v3383 = vld [vmem:[%s3245 + $0x448] sm:$0xff]
    %v3384 = vld [vmem:[%s3245 + $0x450] sm:$0xff]
    %v3385 = vld [vmem:[%s3245 + $0x458] sm:$0xff]
    %v3386 = vld [vmem:[%s3245 + $0x460] sm:$0xff]
    %v3387 = vld [vmem:[%s3245 + $0x468] sm:$0xff]
    %v3388 = vld [vmem:[%s3245 + $0x470] sm:$0xff]
    %v3389 = vld [vmem:[%s3245 + $0x478] sm:$0xff]
    %v3390 = vld [vmem:[%s3245 + $0x480] sm:$0xff]
    %v3391 = vld [vmem:[%s3245 + $0x488] sm:$0xff]
    %v3392 = vld [vmem:[%s3245 + $0x490] sm:$0xff]
    %v3393 = vld [vmem:[%s3245 + $0x498] sm:$0xff]
    %v3394 = vld [vmem:[%s3245 + $0x4a0] sm:$0xff]
    %v3395 = vld [vmem:[%s3245 + $0x4a8] sm:$0xff]
    %v3396 = vld [vmem:[%s3245 + $0x4b0] sm:$0xff]
    %v3397 = vld [vmem:[%s3245 + $0x4b8] sm:$0xff]
    %v3398 = vld [vmem:[%s3245 + $0x4c0] sm:$0xff]
    %v3399 = vld [vmem:[%s3245 + $0x4c8] sm:$0xff]
    %v3400 = vld [vmem:[%s3245 + $0x4d0] sm:$0xff]
    %v3401 = vld [vmem:[%s3245 + $0x4d8] sm:$0xff]
    %v3402 = vld [vmem:[%s3245 + $0x4e0] sm:$0xff]
    %v3403 = vld [vmem:[%s3245 + $0x4e8] sm:$0xff]
    %v3404 = vld [vmem:[%s3245 + $0x4f0] sm:$0xff]
    %v3405 = vld [vmem:[%s3245 + $0x4f8] sm:$0xff]
    %v3406 = vld [vmem:[%s3245 + $0x500] sm:$0xff]
    %v3407 = vld [vmem:[%s3245 + $0x508] sm:$0xff]
    %v3408 = vld [vmem:[%s3245 + $0x510] sm:$0xff]
    %v3409 = vld [vmem:[%s3245 + $0x518] sm:$0xff]
    %v3410 = vld [vmem:[%s3245 + $0x520] sm:$0xff]
    %v3411 = vld [vmem:[%s3245 + $0x528] sm:$0xff]
    %v3412 = vld [vmem:[%s3245 + $0x530] sm:$0xff]
    %v3413 = vld [vmem:[%s3245 + $0x538] sm:$0xff]
    %v3414 = vld [vmem:[%s3245 + $0x540] sm:$0xff]
    %v3415 = vld [vmem:[%s3245 + $0x548] sm:$0xff]
    %v3416 = vld [vmem:[%s3245 + $0x550] sm:$0xff]
    %v3417 = vld [vmem:[%s3245 + $0x558] sm:$0xff]
    %v3418 = vld [vmem:[%s3245 + $0x560] sm:$0xff]
    %v3419 = vld [vmem:[%s3245 + $0x568] sm:$0xff]
    %v3420 = vld [vmem:[%s3245 + $0x570] sm:$0xff]
    %v3421 = vld [vmem:[%s3245 + $0x578] sm:$0xff]
    %v3422 = vld [vmem:[%s3245 + $0x580] sm:$0xff]
    %v3423 = vld [vmem:[%s3245 + $0x588] sm:$0xff]
    %v3424 = vld [vmem:[%s3245 + $0x590] sm:$0xff]
    %v3425 = vld [vmem:[%s3245 + $0x598] sm:$0xff]
    %v3426 = vld [vmem:[%s3245 + $0x5a0] sm:$0xff]
    %v3427 = vld [vmem:[%s3245 + $0x5a8] sm:$0xff]
    %v3428 = vld [vmem:[%s3245 + $0x5b0] sm:$0xff]
    %v3429 = vld [vmem:[%s3245 + $0x5b8] sm:$0xff]
    %v3430 = vld [vmem:[%s3245 + $0x5c0] sm:$0xff]
    %v3431 = vld [vmem:[%s3245 + $0x5c8] sm:$0xff]
    %v3432 = vld [vmem:[%s3245 + $0x5d0] sm:$0xff]
    %v3433 = vld [vmem:[%s3245 + $0x5d8] sm:$0xff]
    %v3434 = vld [vmem:[%s3245 + $0x5e0] sm:$0xff]
    %v3435 = vld [vmem:[%s3245 + $0x5e8] sm:$0xff]
    %v3436 = vld [vmem:[%s3245 + $0x5f0] sm:$0xff]
    %v3437 = vld [vmem:[%s3245 + $0x5f8] sm:$0xff]
    %3438 = vmatprep.subr.mxu0 %v3247
    %3439 = vmatpush1.msra.mxu0 %v3246
    %3440 = vmatprep.subr.mxu0 %v3251
    %3441 = vmatpush1.msra.mxu0 %v3250
    %3442 = vmatprep.subr.mxu0 %v3255
    %3443 = vmatpush1.msra.mxu0 %v3254
    %3444 = vmatprep.subr.mxu0 %v3259
    %3445 = vmatpush1.msra.mxu0 %v3258
    %3446 = vmatprep.subr.mxu0 %v3263
    %3447 = vmatpush1.msra.mxu0 %v3262
    %3448 = vmatprep.subr.mxu0 %v3267
    %3449 = vmatpush1.msra.mxu0 %v3266
    %3450 = vmatprep.subr.mxu0 %v3271
    %3451 = vmatpush1.msra.mxu0 %v3270
    %3452 = vmatprep.subr.mxu0 %v3275
    %3453 = vmatpush1.msra.mxu0 %v3274
    %3454 = vmatprep.subr.mxu0 %v3279
    %3455 = vmatpush1.msra.mxu0 %v3278
    %3456 = vmatprep.subr.mxu0 %v3283
    %3457 = vmatpush1.msra.mxu0 %v3282
    %3458 = vmatprep.subr.mxu0 %v3287
    %3459 = vmatpush1.msra.mxu0 %v3286
    %3460 = vmatprep.subr.mxu0 %v3291
    %3461 = vmatpush1.msra.mxu0 %v3290
    %3462 = vmatprep.subr.mxu0 %v3295
    %3463 = vmatpush1.msra.mxu0 %v3294
    %3464 = vmatprep.subr.mxu0 %v3299
    %3465 = vmatpush1.msra.mxu0 %v3298
    %3466 = vmatprep.subr.mxu0 %v3303
    %3467 = vmatpush1.msra.mxu0 %v3302
    %3468 = vmatprep.subr.mxu0 %v3307
    %3469 = vmatpush1.msra.mxu0 %v3306
    %3470 = vmatprep.subr.mxu0 %v3311
    %3471 = vmatpush1.msra.mxu0 %v3310
    %3472 = vmatprep.subr.mxu0 %v3315
    %3473 = vmatpush1.msra.mxu0 %v3314
    %3474 = vmatprep.subr.mxu0 %v3319
    %3475 = vmatpush1.msra.mxu0 %v3318
    %3476 = vmatprep.subr.mxu0 %v3323
    %3477 = vmatpush1.msra.mxu0 %v3322
    %3478 = vmatprep.subr.mxu0 %v3327
    %3479 = vmatpush1.msra.mxu0 %v3326
    %3480 = vmatprep.subr.mxu0 %v3331
    %3481 = vmatpush1.msra.mxu0 %v3330
    %3482 = vmatprep.subr.mxu0 %v3335
    %3483 = vmatpush1.msra.mxu0 %v3334
    %3484 = vmatprep.subr.mxu0 %v3339
    %3485 = vmatpush1.msra.mxu0 %v3338
    %3486 = vmatprep.subr.mxu0 %v3343
    %3487 = vmatpush1.msra.mxu0 %v3342
    %3488 = vmatprep.subr.mxu0 %v3347
    %3489 = vmatpush1.msra.mxu0 %v3346
    %3490 = vmatprep.subr.mxu0 %v3351
    %3491 = vmatpush1.msra.mxu0 %v3350
    %3492 = vmatprep.subr.mxu0 %v3355
    %3493 = vmatpush1.msra.mxu0 %v3354
    %3494 = vmatprep.subr.mxu0 %v3359
    %3495 = vmatpush1.msra.mxu0 %v3358
    %3496 = vmatprep.subr.mxu0 %v3363
    %3497 = vmatpush1.msra.mxu0 %v3362
    %3498 = vmatprep.subr.mxu0 %v3367
    %3499 = vmatpush1.msra.mxu0 %v3366
    %3500 = vmatprep.subr.mxu0 %v3371
    %3501 = vmatpush1.msra.mxu0 %v3370
    %3502 = vmatprep.mubr.f32.mxu0 %v3219
    %3503 = vmatmul.mubr.f32.gmra.mrb[0].mxu0 %v3216
    %v3504 = vpop.f32.mrb[0].mxu0
    %v3505 = vadd.f32 0.0, %v3504
    %v3506 = vpop.f32.mrb[0].mxu0
    %v3507 = vadd.f32 0.0, %v3506
    %3508 = vmatprep.mubr.f32.mxu0 %v3238
    %3509 = vmatmul.mubr.f32.gmra.mrb[0].mxu0 %v3235
    %v3510 = vpop.f32.mrb[0].mxu0
    %v3511 = vadd.f32 0.0, %v3510
    %v3512 = vpop.f32.mrb[0].mxu0
    %v3513 = vadd.f32 0.0, %v3512
    %3514 = vdwg.mxu0
    %3515 = vmatprep.subr.mxu0 %v3375
    %3516 = vmatpush1.msra.mxu0 %v3374
    %3517 = vmatprep.subr.mxu0 %v3379
    %3518 = vmatpush1.msra.mxu0 %v3378
    %3519 = vmatprep.subr.mxu0 %v3383
    %3520 = vmatpush1.msra.mxu0 %v3382
    %3521 = vmatprep.subr.mxu0 %v3387
    %3522 = vmatpush1.msra.mxu0 %v3386
    %3523 = vmatprep.subr.mxu0 %v3391
    %3524 = vmatpush1.msra.mxu0 %v3390
    %3525 = vmatprep.subr.mxu0 %v3395
    %3526 = vmatpush1.msra.mxu0 %v3394
    %3527 = vmatprep.subr.mxu0 %v3399
    %3528 = vmatpush1.msra.mxu0 %v3398
    %3529 = vmatprep.subr.mxu0 %v3403
    %3530 = vmatpush1.msra.mxu0 %v3402
    %3531 = vmatprep.subr.mxu0 %v3407
    %3532 = vmatpush1.msra.mxu0 %v3406
    %3533 = vmatprep.subr.mxu0 %v3411
    %3534 = vmatpush1.msra.mxu0 %v3410
    %3535 = vmatprep.subr.mxu0 %v3415
    %3536 = vmatpush1.msra.mxu0 %v3414
    %3537 = vmatprep.subr.mxu0 %v3419
    %3538 = vmatpush1.msra.mxu0 %v3418
    %3539 = vmatprep.subr.mxu0 %v3423
    %3540 = vmatpush1.msra.mxu0 %v3422
    %3541 = vmatprep.subr.mxu0 %v3427
    %3542 = vmatpush1.msra.mxu0 %v3426
    %3543 = vmatprep.subr.mxu0 %v3431
    %3544 = vmatpush1.msra.mxu0 %v3430
    %3545 = vmatprep.subr.mxu0 %v3435
    %3546 = vmatpush1.msra.mxu0 %v3434
    %3547 = vmatprep.subr.mxu0 0.0
    %3548 = vmatpush1.msra.mxu0 0.0
    %3549 = vmatprep.subr.mxu0 0.0
    %3550 = vmatpush1.msra.mxu0 0.0
    %3551 = vmatprep.subr.mxu0 0.0
    %3552 = vmatpush1.msra.mxu0 0.0
    %3553 = vmatprep.subr.mxu0 0.0
    %3554 = vmatpush1.msra.mxu0 0.0
    %3555 = vmatprep.subr.mxu0 0.0
    %3556 = vmatpush1.msra.mxu0 0.0
    %3557 = vmatprep.subr.mxu0 0.0
    %3558 = vmatpush1.msra.mxu0 0.0
    %3559 = vmatprep.subr.mxu0 0.0
    %3560 = vmatpush1.msra.mxu0 0.0
    %3561 = vmatprep.subr.mxu0 0.0
    %3562 = vmatpush1.msra.mxu0 0.0
    %3563 = vmatprep.subr.mxu0 0.0
    %3564 = vmatpush1.msra.mxu0 0.0
    %3565 = vmatprep.subr.mxu0 0.0
    %3566 = vmatpush1.msra.mxu0 0.0
    %3567 = vmatprep.subr.mxu0 0.0
    %3568 = vmatpush1.msra.mxu0 0.0
    %3569 = vmatprep.subr.mxu0 0.0
    %3570 = vmatpush1.msra.mxu0 0.0
    %3571 = vmatprep.subr.mxu0 0.0
    %3572 = vmatpush1.msra.mxu0 0.0
    %3573 = vmatprep.subr.mxu0 0.0
    %3574 = vmatpush1.msra.mxu0 0.0
    %3575 = vmatprep.subr.mxu0 0.0
    %3576 = vmatpush1.msra.mxu0 0.0
    %3577 = vmatprep.subr.mxu0 0.0
    %3578 = vmatpush1.msra.mxu0 0.0
    %3579 = vmatprep.mubr.f32.mxu0 0.0
    %3580 = vmatmul.mubr.f32.gmra.mrb[0].mxu0 %v3222
    %v3581 = vpop.f32.mrb[0].mxu0
    %v3582 = vadd.f32 %v3505, %v3581
    %v3583 = vpop.f32.mrb[0].mxu0
    %v3584 = vadd.f32 %v3507, %v3583
    %3585 = vmatprep.mubr.f32.mxu0 0.0
    %3586 = vmatmul.mubr.f32.gmra.mrb[0].mxu0 %v3241
    %v3587 = vpop.f32.mrb[0].mxu0
    %v3588 = vadd.f32 %v3511, %v3587
    %v3589 = vpop.f32.mrb[0].mxu0
    %v3590 = vadd.f32 %v3513, %v3589
    %3591 = vdwg.mxu0
    %3592 = vmatprep.subr.mxu0 %v3249
    %3593 = vmatpush1.msra.mxu0 %v3248
    %3594 = vmatprep.subr.mxu0 %v3253
    %3595 = vmatpush1.msra.mxu0 %v3252
    %3596 = vmatprep.subr.mxu0 %v3257
    %3597 = vmatpush1.msra.mxu0 %v3256
    %3598 = vmatprep.subr.mxu0 %v3261
    %3599 = vmatpush1.msra.mxu0 %v3260
    %3600 = vmatprep.subr.mxu0 %v3265
    %3601 = vmatpush1.msra.mxu0 %v3264
    %3602 = vmatprep.subr.mxu0 %v3269
    %3603 = vmatpush1.msra.mxu0 %v3268
    %3604 = vmatprep.subr.mxu0 %v3273
    %3605 = vmatpush1.msra.mxu0 %v3272
    %3606 = vmatprep.subr.mxu0 %v3277
    %3607 = vmatpush1.msra.mxu0 %v3276
    %3608 = vmatprep.subr.mxu0 %v3281
    %3609 = vmatpush1.msra.mxu0 %v3280
    %3610 = vmatprep.subr.mxu0 %v3285
    %3611 = vmatpush1.msra.mxu0 %v3284
    %3612 = vmatprep.subr.mxu0 %v3289
    %3613 = vmatpush1.msra.mxu0 %v3288
    %3614 = vmatprep.subr.mxu0 %v3293
    %3615 = vmatpush1.msra.mxu0 %v3292
    %3616 = vmatprep.subr.mxu0 %v3297
    %3617 = vmatpush1.msra.mxu0 %v3296
    %3618 = vmatprep.subr.mxu0 %v3301
    %3619 = vmatpush1.msra.mxu0 %v3300
    %3620 = vmatprep.subr.mxu0 %v3305
    %3621 = vmatpush1.msra.mxu0 %v3304
    %3622 = vmatprep.subr.mxu0 %v3309
    %3623 = vmatpush1.msra.mxu0 %v3308
    %3624 = vmatprep.subr.mxu0 %v3313
    %3625 = vmatpush1.msra.mxu0 %v3312
    %3626 = vmatprep.subr.mxu0 %v3317
    %3627 = vmatpush1.msra.mxu0 %v3316
    %3628 = vmatprep.subr.mxu0 %v3321
    %3629 = vmatpush1.msra.mxu0 %v3320
    %3630 = vmatprep.subr.mxu0 %v3325
    %3631 = vmatpush1.msra.mxu0 %v3324
    %3632 = vmatprep.subr.mxu0 %v3329
    %3633 = vmatpush1.msra.mxu0 %v3328
    %3634 = vmatprep.subr.mxu0 %v3333
    %3635 = vmatpush1.msra.mxu0 %v3332
    %3636 = vmatprep.subr.mxu0 %v3337
    %3637 = vmatpush1.msra.mxu0 %v3336
    %3638 = vmatprep.subr.mxu0 %v3341
    %3639 = vmatpush1.msra.mxu0 %v3340
    %3640 = vmatprep.subr.mxu0 %v3345
    %3641 = vmatpush1.msra.mxu0 %v3344
    %3642 = vmatprep.subr.mxu0 %v3349
    %3643 = vmatpush1.msra.mxu0 %v3348
    %3644 = vmatprep.subr.mxu0 %v3353
    %3645 = vmatpush1.msra.mxu0 %v3352
    %3646 = vmatprep.subr.mxu0 %v3357
    %3647 = vmatpush1.msra.mxu0 %v3356
    %3648 = vmatprep.subr.mxu0 %v3361
    %3649 = vmatpush1.msra.mxu0 %v3360
    %3650 = vmatprep.subr.mxu0 %v3365
    %3651 = vmatpush1.msra.mxu0 %v3364
    %3652 = vmatprep.subr.mxu0 %v3369
    %3653 = vmatpush1.msra.mxu0 %v3368
    %3654 = vmatprep.subr.mxu0 %v3373
    %3655 = vmatpush1.msra.mxu0 %v3372
    %3656 = vmatprep.mubr.f32.mxu0 %v3219
    %3657 = vmatmul.mubr.f32.gmra.mrb[0].mxu0 %v3216
    %v3658 = vpop.f32.mrb[0].mxu0
    %v3659 = vadd.f32 0.0, %v3658
    %v3660 = vpop.f32.mrb[0].mxu0
    %v3661 = vadd.f32 0.0, %v3660
    %3662 = vmatprep.mubr.f32.mxu0 %v3238
    %3663 = vmatmul.mubr.f32.gmra.mrb[0].mxu0 %v3235
    %v3664 = vpop.f32.mrb[0].mxu0
    %v3665 = vadd.f32 0.0, %v3664
    %v3666 = vpop.f32.mrb[0].mxu0
    %v3667 = vadd.f32 0.0, %v3666
    %3668 = vdwg.mxu0
    %3669 = vmatprep.subr.mxu0 %v3377
    %3670 = vmatpush1.msra.mxu0 %v3376
    %3671 = vmatprep.subr.mxu0 %v3381
    %3672 = vmatpush1.msra.mxu0 %v3380
    %3673 = vmatprep.subr.mxu0 %v3385
    %3674 = vmatpush1.msra.mxu0 %v3384
    %3675 = vmatprep.subr.mxu0 %v3389
    %3676 = vmatpush1.msra.mxu0 %v3388
    %3677 = vmatprep.subr.mxu0 %v3393
    %3678 = vmatpush1.msra.mxu0 %v3392
    %3679 = vmatprep.subr.mxu0 %v3397
    %3680 = vmatpush1.msra.mxu0 %v3396
    %3681 = vmatprep.subr.mxu0 %v3401
    %3682 = vmatpush1.msra.mxu0 %v3400
    %3683 = vmatprep.subr.mxu0 %v3405
    %3684 = vmatpush1.msra.mxu0 %v3404
    %3685 = vmatprep.subr.mxu0 %v3409
    %3686 = vmatpush1.msra.mxu0 %v3408
    %3687 = vmatprep.subr.mxu0 %v3413
    %3688 = vmatpush1.msra.mxu0 %v3412
    %3689 = vmatprep.subr.mxu0 %v3417
    %3690 = vmatpush1.msra.mxu0 %v3416
    %3691 = vmatprep.subr.mxu0 %v3421
    %3692 = vmatpush1.msra.mxu0 %v3420
    %3693 = vmatprep.subr.mxu0 %v3425
    %3694 = vmatpush1.msra.mxu0 %v3424
    %3695 = vmatprep.subr.mxu0 %v3429
    %3696 = vmatpush1.msra.mxu0 %v3428
    %3697 = vmatprep.subr.mxu0 %v3433
    %3698 = vmatpush1.msra.mxu0 %v3432
    %3699 = vmatprep.subr.mxu0 %v3437
    %3700 = vmatpush1.msra.mxu0 %v3436
    %3701 = vmatprep.subr.mxu0 0.0
    %3702 = vmatpush1.msra.mxu0 0.0
    %3703 = vmatprep.subr.mxu0 0.0
    %3704 = vmatpush1.msra.mxu0 0.0
    %3705 = vmatprep.subr.mxu0 0.0
    %3706 = vmatpush1.msra.mxu0 0.0
    %3707 = vmatprep.subr.mxu0 0.0
    %3708 = vmatpush1.msra.mxu0 0.0
    %3709 = vmatprep.subr.mxu0 0.0
    %3710 = vmatpush1.msra.mxu0 0.0
    %3711 = vmatprep.subr.mxu0 0.0
    %3712 = vmatpush1.msra.mxu0 0.0
    %3713 = vmatprep.subr.mxu0 0.0
    %3714 = vmatpush1.msra.mxu0 0.0
    %3715 = vmatprep.subr.mxu0 0.0
    %3716 = vmatpush1.msra.mxu0 0.0
    %3717 = vmatprep.subr.mxu0 0.0
    %3718 = vmatpush1.msra.mxu0 0.0
    %3719 = vmatprep.subr.mxu0 0.0
    %3720 = vmatpush1.msra.mxu0 0.0
    %3721 = vmatprep.subr.mxu0 0.0
    %3722 = vmatpush1.msra.mxu0 0.0
    %3723 = vmatprep.subr.mxu0 0.0
    %3724 = vmatpush1.msra.mxu0 0.0
    %3725 = vmatprep.subr.mxu0 0.0
    %3726 = vmatpush1.msra.mxu0 0.0
    %3727 = vmatprep.subr.mxu0 0.0
    %3728 = vmatpush1.msra.mxu0 0.0
    %3729 = vmatprep.subr.mxu0 0.0
    %3730 = vmatpush1.msra.mxu0 0.0
    %3731 = vmatprep.subr.mxu0 0.0
    %3732 = vmatpush1.msra.mxu0 0.0
    %3733 = vmatprep.mubr.f32.mxu0 0.0
    %3734 = vmatmul.mubr.f32.gmra.mrb[0].mxu0 %v3222
    %v3735 = vpop.f32.mrb[0].mxu0
    %v3736 = vadd.f32 %v3659, %v3735
    %v3737 = vpop.f32.mrb[0].mxu0
    %v3738 = vadd.f32 %v3661, %v3737
    %3739 = vmatprep.mubr.f32.mxu0 0.0
    %3740 = vmatmul.mubr.f32.gmra.mrb[0].mxu0 %v3241
    %v3741 = vpop.f32.mrb[0].mxu0
    %v3742 = vadd.f32 %v3665, %v3741
    %v3743 = vpop.f32.mrb[0].mxu0
    %v3744 = vadd.f32 %v3667, %v3743
    %3745 = vdwg.mxu0
    %3746 = vmatprep.subr.mxu0 %v3004
    %3747 = vmatpush1.msra.mxu0 %v3003
    %3748 = vmatprep.subr.mxu0 %v3008
    %3749 = vmatpush1.msra.mxu0 %v3007
    %3750 = vmatprep.subr.mxu0 %v3012
    %3751 = vmatpush1.msra.mxu0 %v3011
    %3752 = vmatprep.subr.mxu0 %v3016
    %3753 = vmatpush1.msra.mxu0 %v3015
    %3754 = vmatprep.subr.mxu0 %v3020
    %3755 = vmatpush1.msra.mxu0 %v3019
    %3756 = vmatprep.subr.mxu0 %v3024
    %3757 = vmatpush1.msra.mxu0 %v3023
    %3758 = vmatprep.subr.mxu0 %v3028
    %3759 = vmatpush1.msra.mxu0 %v3027
    %3760 = vmatprep.subr.mxu0 %v3032
    %3761 = vmatpush1.msra.mxu0 %v3031
    %3762 = vmatprep.subr.mxu0 %v3036
    %3763 = vmatpush1.msra.mxu0 %v3035
    %3764 = vmatprep.subr.mxu0 %v3040
    %3765 = vmatpush1.msra.mxu0 %v3039
    %3766 = vmatprep.subr.mxu0 %v3044
    %3767 = vmatpush1.msra.mxu0 %v3043
    %3768 = vmatprep.subr.mxu0 %v3048
    %3769 = vmatpush1.msra.mxu0 %v3047
    %3770 = vmatprep.subr.mxu0 %v3052
    %3771 = vmatpush1.msra.mxu0 %v3051
    %3772 = vmatprep.subr.mxu0 %v3056
    %3773 = vmatpush1.msra.mxu0 %v3055
    %3774 = vmatprep.subr.mxu0 %v3060
    %3775 = vmatpush1.msra.mxu0 %v3059
    %3776 = vmatprep.subr.mxu0 %v3064
    %3777 = vmatpush1.msra.mxu0 %v3063
    %3778 = vmatprep.subr.mxu0 %v3068
    %3779 = vmatpush1.msra.mxu0 %v3067
    %3780 = vmatprep.subr.mxu0 %v3072
    %3781 = vmatpush1.msra.mxu0 %v3071
    %3782 = vmatprep.subr.mxu0 %v3076
    %3783 = vmatpush1.msra.mxu0 %v3075
    %3784 = vmatprep.subr.mxu0 %v3080
    %3785 = vmatpush1.msra.mxu0 %v3079
    %3786 = vmatprep.subr.mxu0 %v3084
    %3787 = vmatpush1.msra.mxu0 %v3083
    %3788 = vmatprep.subr.mxu0 %v3088
    %3789 = vmatpush1.msra.mxu0 %v3087
    %3790 = vmatprep.subr.mxu0 %v3092
    %3791 = vmatpush1.msra.mxu0 %v3091
    %3792 = vmatprep.subr.mxu0 %v3096
    %3793 = vmatpush1.msra.mxu0 %v3095
    %3794 = vmatprep.subr.mxu0 %v3100
    %3795 = vmatpush1.msra.mxu0 %v3099
    %3796 = vmatprep.subr.mxu0 %v3104
    %3797 = vmatpush1.msra.mxu0 %v3103
    %3798 = vmatprep.subr.mxu0 %v3108
    %3799 = vmatpush1.msra.mxu0 %v3107
    %3800 = vmatprep.subr.mxu0 %v3112
    %3801 = vmatpush1.msra.mxu0 %v3111
    %3802 = vmatprep.subr.mxu0 %v3116
    %3803 = vmatpush1.msra.mxu0 %v3115
    %3804 = vmatprep.subr.mxu0 %v3120
    %3805 = vmatpush1.msra.mxu0 %v3119
    %3806 = vmatprep.subr.mxu0 %v3124
    %3807 = vmatpush1.msra.mxu0 %v3123
    %3808 = vmatprep.subr.mxu0 %v3128
    %3809 = vmatpush1.msra.mxu0 %v3127
    %3810 = vmatprep.mubr.f32.mxu0 %v2977
    %3811 = vmatmul.mubr.f32.gmra.mrb[0].mxu0 %v2976
    %v3812 = vpop.f32.mrb[0].mxu0
    %v3813 = vadd.f32 %v3582, %v3812
    %v3814 = vpop.f32.mrb[0].mxu0
    %v3815 = vadd.f32 %v3584, %v3814
    %3816 = vmatprep.mubr.f32.mxu0 %v2996
    %3817 = vmatmul.mubr.f32.gmra.mrb[0].mxu0 %v2993
    %v3818 = vpop.f32.mrb[0].mxu0
    %v3819 = vadd.f32 %v3588, %v3818
    %v3820 = vpop.f32.mrb[0].mxu0
    %v3821 = vadd.f32 %v3590, %v3820
    %3822 = vdwg.mxu0
    %3823 = vmatprep.subr.mxu0 %v3132
    %3824 = vmatpush1.msra.mxu0 %v3131
    %3825 = vmatprep.subr.mxu0 %v3136
    %3826 = vmatpush1.msra.mxu0 %v3135
    %3827 = vmatprep.subr.mxu0 %v3140
    %3828 = vmatpush1.msra.mxu0 %v3139
    %3829 = vmatprep.subr.mxu0 %v3144
    %3830 = vmatpush1.msra.mxu0 %v3143
    %3831 = vmatprep.subr.mxu0 %v3148
    %3832 = vmatpush1.msra.mxu0 %v3147
    %3833 = vmatprep.subr.mxu0 %v3152
    %3834 = vmatpush1.msra.mxu0 %v3151
    %3835 = vmatprep.subr.mxu0 %v3156
    %3836 = vmatpush1.msra.mxu0 %v3155
    %3837 = vmatprep.subr.mxu0 %v3160
    %3838 = vmatpush1.msra.mxu0 %v3159
    %3839 = vmatprep.subr.mxu0 %v3164
    %3840 = vmatpush1.msra.mxu0 %v3163
    %3841 = vmatprep.subr.mxu0 %v3168
    %3842 = vmatpush1.msra.mxu0 %v3167
    %3843 = vmatprep.subr.mxu0 %v3172
    %3844 = vmatpush1.msra.mxu0 %v3171
    %3845 = vmatprep.subr.mxu0 %v3176
    %3846 = vmatpush1.msra.mxu0 %v3175
    %3847 = vmatprep.subr.mxu0 %v3180
    %3848 = vmatpush1.msra.mxu0 %v3179
    %3849 = vmatprep.subr.mxu0 %v3184
    %3850 = vmatpush1.msra.mxu0 %v3183
    %3851 = vmatprep.subr.mxu0 %v3188
    %3852 = vmatpush1.msra.mxu0 %v3187
    %3853 = vmatprep.subr.mxu0 %v3192
    %3854 = vmatpush1.msra.mxu0 %v3191
    %3855 = vmatprep.subr.mxu0 0.0
    %3856 = vmatpush1.msra.mxu0 0.0
    %3857 = vmatprep.subr.mxu0 0.0
    %3858 = vmatpush1.msra.mxu0 0.0
    %3859 = vmatprep.subr.mxu0 0.0
    %3860 = vmatpush1.msra.mxu0 0.0
    %3861 = vmatprep.subr.mxu0 0.0
    %3862 = vmatpush1.msra.mxu0 0.0
    %3863 = vmatprep.subr.mxu0 0.0
    %3864 = vmatpush1.msra.mxu0 0.0
    %3865 = vmatprep.subr.mxu0 0.0
    %3866 = vmatpush1.msra.mxu0 0.0
    %3867 = vmatprep.subr.mxu0 0.0
    %3868 = vmatpush1.msra.mxu0 0.0
    %3869 = vmatprep.subr.mxu0 0.0
    %3870 = vmatpush1.msra.mxu0 0.0
    %3871 = vmatprep.subr.mxu0 0.0
    %3872 = vmatpush1.msra.mxu0 0.0
    %3873 = vmatprep.subr.mxu0 0.0
    %3874 = vmatpush1.msra.mxu0 0.0
    %3875 = vmatprep.subr.mxu0 0.0
    %3876 = vmatpush1.msra.mxu0 0.0
    %3877 = vmatprep.subr.mxu0 0.0
    %3878 = vmatpush1.msra.mxu0 0.0
    %3879 = vmatprep.subr.mxu0 0.0
    %3880 = vmatpush1.msra.mxu0 0.0
    %3881 = vmatprep.subr.mxu0 0.0
    %3882 = vmatpush1.msra.mxu0 0.0
    %3883 = vmatprep.subr.mxu0 0.0
    %3884 = vmatpush1.msra.mxu0 0.0
    %3885 = vmatprep.subr.mxu0 0.0
    %3886 = vmatpush1.msra.mxu0 0.0
    %3887 = vmatprep.mubr.f32.mxu0 0.0
    %3888 = vmatmul.mubr.f32.gmra.mrb[0].mxu0 %v2978
    %v3889 = vpop.f32.mrb[0].mxu0
    %v3890 = vadd.f32 %v3813, %v3889
    %v3891 = vpop.f32.mrb[0].mxu0
    %v3892 = vadd.f32 %v3815, %v3891
    %3893 = vmatprep.mubr.f32.mxu0 0.0
    %3894 = vmatmul.mubr.f32.gmra.mrb[0].mxu0 %v2999
    %v3895 = vpop.f32.mrb[0].mxu0
    %v3896 = vadd.f32 %v3819, %v3895
    %v3897 = vpop.f32.mrb[0].mxu0
    %v3898 = vadd.f32 %v3821, %v3897
    %3899 = vdwg.mxu0
    %3900 = vmatprep.subr.mxu0 %v3006
    %3901 = vmatpush1.msra.mxu0 %v3005
    %3902 = vmatprep.subr.mxu0 %v3010
    %3903 = vmatpush1.msra.mxu0 %v3009
    %3904 = vmatprep.subr.mxu0 %v3014
    %3905 = vmatpush1.msra.mxu0 %v3013
    %3906 = vmatprep.subr.mxu0 %v3018
    %3907 = vmatpush1.msra.mxu0 %v3017
    %3908 = vmatprep.subr.mxu0 %v3022
    %3909 = vmatpush1.msra.mxu0 %v3021
    %3910 = vmatprep.subr.mxu0 %v3026
    %3911 = vmatpush1.msra.mxu0 %v3025
    %3912 = vmatprep.subr.mxu0 %v3030
    %3913 = vmatpush1.msra.mxu0 %v3029
    %3914 = vmatprep.subr.mxu0 %v3034
    %3915 = vmatpush1.msra.mxu0 %v3033
    %3916 = vmatprep.subr.mxu0 %v3038
    %3917 = vmatpush1.msra.mxu0 %v3037
    %3918 = vmatprep.subr.mxu0 %v3042
    %3919 = vmatpush1.msra.mxu0 %v3041
    %3920 = vmatprep.subr.mxu0 %v3046
    %3921 = vmatpush1.msra.mxu0 %v3045
    %3922 = vmatprep.subr.mxu0 %v3050
    %3923 = vmatpush1.msra.mxu0 %v3049
    %3924 = vmatprep.subr.mxu0 %v3054
    %3925 = vmatpush1.msra.mxu0 %v3053
    %3926 = vmatprep.subr.mxu0 %v3058
    %3927 = vmatpush1.msra.mxu0 %v3057
    %3928 = vmatprep.subr.mxu0 %v3062
    %3929 = vmatpush1.msra.mxu0 %v3061
    %3930 = vmatprep.subr.mxu0 %v3066
    %3931 = vmatpush1.msra.mxu0 %v3065
    %3932 = vmatprep.subr.mxu0 %v3070
    %3933 = vmatpush1.msra.mxu0 %v3069
    %3934 = vmatprep.subr.mxu0 %v3074
    %3935 = vmatpush1.msra.mxu0 %v3073
    %3936 = vmatprep.subr.mxu0 %v3078
    %3937 = vmatpush1.msra.mxu0 %v3077
    %3938 = vmatprep.subr.mxu0 %v3082
    %3939 = vmatpush1.msra.mxu0 %v3081
    %3940 = vmatprep.subr.mxu0 %v3086
    %3941 = vmatpush1.msra.mxu0 %v3085
    %3942 = vmatprep.subr.mxu0 %v3090
    %3943 = vmatpush1.msra.mxu0 %v3089
    %3944 = vmatprep.subr.mxu0 %v3094
    %3945 = vmatpush1.msra.mxu0 %v3093
    %3946 = vmatprep.subr.mxu0 %v3098
    %3947 = vmatpush1.msra.mxu0 %v3097
    %3948 = vmatprep.subr.mxu0 %v3102
    %3949 = vmatpush1.msra.mxu0 %v3101
    %3950 = vmatprep.subr.mxu0 %v3106
    %3951 = vmatpush1.msra.mxu0 %v3105
    %3952 = vmatprep.subr.mxu0 %v3110
    %3953 = vmatpush1.msra.mxu0 %v3109
    %3954 = vmatprep.subr.mxu0 %v3114
    %3955 = vmatpush1.msra.mxu0 %v3113
    %3956 = vmatprep.subr.mxu0 %v3118
    %3957 = vmatpush1.msra.mxu0 %v3117
    %3958 = vmatprep.subr.mxu0 %v3122
    %3959 = vmatpush1.msra.mxu0 %v3121
    %3960 = vmatprep.subr.mxu0 %v3126
    %3961 = vmatpush1.msra.mxu0 %v3125
    %3962 = vmatprep.subr.mxu0 %v3130
    %3963 = vmatpush1.msra.mxu0 %v3129
    %3964 = vmatprep.mubr.f32.mxu0 %v2977
    %3965 = vmatmul.mubr.f32.gmra.mrb[0].mxu0 %v2976
    %v3966 = vpop.f32.mrb[0].mxu0
    %v3967 = vadd.f32 %v3736, %v3966
    %v3968 = vpop.f32.mrb[0].mxu0
    %v3969 = vadd.f32 %v3738, %v3968
    %3970 = vmatprep.mubr.f32.mxu0 %v2996
    %3971 = vmatmul.mubr.f32.gmra.mrb[0].mxu0 %v2993
    %v3972 = vpop.f32.mrb[0].mxu0
    %v3973 = vadd.f32 %v3742, %v3972
    %v3974 = vpop.f32.mrb[0].mxu0
    %v3975 = vadd.f32 %v3744, %v3974
    %3976 = vdwg.mxu0
    %3977 = vmatprep.subr.mxu0 %v3134
    %3978 = vmatpush1.msra.mxu0 %v3133
    %3979 = vmatprep.subr.mxu0 %v3138
    %3980 = vmatpush1.msra.mxu0 %v3137
    %3981 = vmatprep.subr.mxu0 %v3142
    %3982 = vmatpush1.msra.mxu0 %v3141
    %3983 = vmatprep.subr.mxu0 %v3146
    %3984 = vmatpush1.msra.mxu0 %v3145
    %3985 = vmatprep.subr.mxu0 %v3150
    %3986 = vmatpush1.msra.mxu0 %v3149
    %3987 = vmatprep.subr.mxu0 %v3154
    %3988 = vmatpush1.msra.mxu0 %v3153
    %3989 = vmatprep.subr.mxu0 %v3158
    %3990 = vmatpush1.msra.mxu0 %v3157
    %3991 = vmatprep.subr.mxu0 %v3162
    %3992 = vmatpush1.msra.mxu0 %v3161
    %3993 = vmatprep.subr.mxu0 %v3166
    %3994 = vmatpush1.msra.mxu0 %v3165
    %3995 = vmatprep.subr.mxu0 %v3170
    %3996 = vmatpush1.msra.mxu0 %v3169
    %3997 = vmatprep.subr.mxu0 %v3174
    %3998 = vmatpush1.msra.mxu0 %v3173
    %3999 = vmatprep.subr.mxu0 %v3178
    %4000 = vmatpush1.msra.mxu0 %v3177
    %4001 = vmatprep.subr.mxu0 %v3182
    %4002 = vmatpush1.msra.mxu0 %v3181
    %4003 = vmatprep.subr.mxu0 %v3186
    %4004 = vmatpush1.msra.mxu0 %v3185
    %4005 = vmatprep.subr.mxu0 %v3190
    %4006 = vmatpush1.msra.mxu0 %v3189
    %4007 = vmatprep.subr.mxu0 %v3194
    %4008 = vmatpush1.msra.mxu0 %v3193
    %4009 = vmatprep.subr.mxu0 0.0
    %4010 = vmatpush1.msra.mxu0 0.0
    %4011 = vmatprep.subr.mxu0 0.0
    %4012 = vmatpush1.msra.mxu0 0.0
    %4013 = vmatprep.subr.mxu0 0.0
    %4014 = vmatpush1.msra.mxu0 0.0
    %4015 = vmatprep.subr.mxu0 0.0
    %4016 = vmatpush1.msra.mxu0 0.0
    %4017 = vmatprep.subr.mxu0 0.0
    %4018 = vmatpush1.msra.mxu0 0.0
    %4019 = vmatprep.subr.mxu0 0.0
    %4020 = vmatpush1.msra.mxu0 0.0
    %4021 = vmatprep.subr.mxu0 0.0
    %4022 = vmatpush1.msra.mxu0 0.0
    %4023 = vmatprep.subr.mxu0 0.0
    %4024 = vmatpush1.msra.mxu0 0.0
    %4025 = vmatprep.subr.mxu0 0.0
    %4026 = vmatpush1.msra.mxu0 0.0
    %4027 = vmatprep.subr.mxu0 0.0
    %4028 = vmatpush1.msra.mxu0 0.0
    %4029 = vmatprep.subr.mxu0 0.0
    %4030 = vmatpush1.msra.mxu0 0.0
    %4031 = vmatprep.subr.mxu0 0.0
    %4032 = vmatpush1.msra.mxu0 0.0
    %4033 = vmatprep.subr.mxu0 0.0
    %4034 = vmatpush1.msra.mxu0 0.0
    %4035 = vmatprep.subr.mxu0 0.0
    %4036 = vmatpush1.msra.mxu0 0.0
    %4037 = vmatprep.subr.mxu0 0.0
    %4038 = vmatpush1.msra.mxu0 0.0
    %4039 = vmatprep.subr.mxu0 0.0
    %4040 = vmatpush1.msra.mxu0 0.0
    %4041 = vmatprep.mubr.f32.mxu0 0.0
    %4042 = vmatmul.mubr.f32.gmra.mrb[0].mxu0 %v2978
    %v4043 = vpop.f32.mrb[0].mxu0
    %v4044 = vadd.f32 %v3967, %v4043
    %v4045 = vpop.f32.mrb[0].mxu0
    %v4046 = vadd.f32 %v3969, %v4045
    %4047 = vmatprep.mubr.f32.mxu0 0.0
    %4048 = vmatmul.mubr.f32.gmra.mrb[0].mxu0 %v2999
    %v4049 = vpop.f32.mrb[0].mxu0
    %v4050 = vadd.f32 %v3973, %v4049
    %v4051 = vpop.f32.mrb[0].mxu0
    %v4052 = vadd.f32 %v3975, %v4051
    %4053 = vdwg.mxu0
    %v4054 = vld [vmem:[#allocation2] sm:$0xfc]
    %v4055 = vld [vmem:[#allocation2 + $0x8] sm:$0xfc]
    %v4056 = vld [vmem:[#allocation2 + $0x10] sm:$0xfc]
    %v4057 = vld [vmem:[#allocation2 + $0x18] sm:$0x3]
    %v4058 = vld [vmem:[#allocation2 + $0x20] sm:$0x3]
    %v4059 = vld [vmem:[#allocation2 + $0x28] sm:$0x3]
    %v4060 = vld [vmem:[#allocation2 + $0x18] sm:$0xc0]
    %v4061 = vld [vmem:[#allocation2 + $0x20] sm:$0xc0]
    %v4062 = vld [vmem:[#allocation2 + $0x28] sm:$0xc0]
    %v4063 = vld [vmem:[#allocation2 + $0x30] sm:$0x3f]
    %v4064 = vld [vmem:[#allocation2 + $0x38] sm:$0x3f]
    %v4065 = vld [vmem:[#allocation2 + $0x40] sm:$0x3f]
    %vm4072 = vcmask 1045504
    %v4073 = vrot.slane %v4054, 2
    %v4074 = vrot.slane %v4057, 2
    %v4075 = vsel %vm4072, %v4073, %v4074
    %v4076 = vrot.slane %v4055, 2
    %v4077 = vrot.slane %v4058, 2
    %v4078 = vsel %vm4072, %v4076, %v4077
    %v4079 = vrot.slane %v4056, 2
    %v4080 = vrot.slane %v4059, 2
    %v4081 = vsel %vm4072, %v4079, %v4080
    %vm4091 = vcmask 1041408
    %v4092 = vrot.slane %v4060, 6
    %v4093 = vrot.slane %v4063, 6
    %v4094 = vsel %vm4091, %v4092, %v4093
    %v4095 = vrot.slane %v4061, 6
    %v4096 = vrot.slane %v4064, 6
    %v4097 = vsel %vm4091, %v4095, %v4096
    %v4098 = vrot.slane %v4062, 6
    %v4099 = vrot.slane %v4065, 6
    %v4100 = vsel %vm4091, %v4098, %v4099
    %s4104 = scalar_lea.vmem [#allocation8], 3072
    %v4105 = vld [vmem:[%s4104] sm:$0xff]
    %v4106 = vld [vmem:[%s4104 + $0x8] sm:$0xff]
    %v4107 = vld [vmem:[%s4104 + $0x10] sm:$0xff]
    %v4108 = vld [vmem:[%s4104 + $0x18] sm:$0xff]
    %v4109 = vld [vmem:[%s4104 + $0x20] sm:$0xff]
    %v4110 = vld [vmem:[%s4104 + $0x28] sm:$0xff]
    %v4111 = vld [vmem:[%s4104 + $0x30] sm:$0xff]
    %v4112 = vld [vmem:[%s4104 + $0x38] sm:$0xff]
    %v4113 = vld [vmem:[%s4104 + $0x40] sm:$0xff]
    %v4114 = vld [vmem:[%s4104 + $0x48] sm:$0xff]
    %v4115 = vld [vmem:[%s4104 + $0x50] sm:$0xff]
    %v4116 = vld [vmem:[%s4104 + $0x58] sm:$0xff]
    %v4117 = vld [vmem:[%s4104 + $0x60] sm:$0xff]
    %v4118 = vld [vmem:[%s4104 + $0x68] sm:$0xff]
    %v4119 = vld [vmem:[%s4104 + $0x70] sm:$0xff]
    %v4120 = vld [vmem:[%s4104 + $0x78] sm:$0xff]
    %v4121 = vld [vmem:[%s4104 + $0x80] sm:$0xff]
    %v4122 = vld [vmem:[%s4104 + $0x88] sm:$0xff]
    %v4123 = vld [vmem:[%s4104 + $0x90] sm:$0xff]
    %v4124 = vld [vmem:[%s4104 + $0x98] sm:$0xff]
    %v4125 = vld [vmem:[%s4104 + $0xa0] sm:$0xff]
    %v4126 = vld [vmem:[%s4104 + $0xa8] sm:$0xff]
    %v4127 = vld [vmem:[%s4104 + $0xb0] sm:$0xff]
    %v4128 = vld [vmem:[%s4104 + $0xb8] sm:$0xff]
    %v4129 = vld [vmem:[%s4104 + $0xc0] sm:$0xff]
    %v4130 = vld [vmem:[%s4104 + $0xc8] sm:$0xff]
    %v4131 = vld [vmem:[%s4104 + $0xd0] sm:$0xff]
    %v4132 = vld [vmem:[%s4104 + $0xd8] sm:$0xff]
    %v4133 = vld [vmem:[%s4104 + $0xe0] sm:$0xff]
    %v4134 = vld [vmem:[%s4104 + $0xe8] sm:$0xff]
    %v4135 = vld [vmem:[%s4104 + $0xf0] sm:$0xff]
    %v4136 = vld [vmem:[%s4104 + $0xf8] sm:$0xff]
    %v4137 = vld [vmem:[%s4104 + $0x100] sm:$0xff]
    %v4138 = vld [vmem:[%s4104 + $0x108] sm:$0xff]
    %v4139 = vld [vmem:[%s4104 + $0x110] sm:$0xff]
    %v4140 = vld [vmem:[%s4104 + $0x118] sm:$0xff]
    %v4141 = vld [vmem:[%s4104 + $0x120] sm:$0xff]
    %v4142 = vld [vmem:[%s4104 + $0x128] sm:$0xff]
    %v4143 = vld [vmem:[%s4104 + $0x130] sm:$0xff]
    %v4144 = vld [vmem:[%s4104 + $0x138] sm:$0xff]
    %v4145 = vld [vmem:[%s4104 + $0x140] sm:$0xff]
    %v4146 = vld [vmem:[%s4104 + $0x148] sm:$0xff]
    %v4147 = vld [vmem:[%s4104 + $0x150] sm:$0xff]
    %v4148 = vld [vmem:[%s4104 + $0x158] sm:$0xff]
    %v4149 = vld [vmem:[%s4104 + $0x160] sm:$0xff]
    %v4150 = vld [vmem:[%s4104 + $0x168] sm:$0xff]
    %v4151 = vld [vmem:[%s4104 + $0x170] sm:$0xff]
    %v4152 = vld [vmem:[%s4104 + $0x178] sm:$0xff]
    %v4153 = vld [vmem:[%s4104 + $0x180] sm:$0xff]
    %v4154 = vld [vmem:[%s4104 + $0x188] sm:$0xff]
    %v4155 = vld [vmem:[%s4104 + $0x190] sm:$0xff]
    %v4156 = vld [vmem:[%s4104 + $0x198] sm:$0xff]
    %v4157 = vld [vmem:[%s4104 + $0x1a0] sm:$0xff]
    %v4158 = vld [vmem:[%s4104 + $0x1a8] sm:$0xff]
    %v4159 = vld [vmem:[%s4104 + $0x1b0] sm:$0xff]
    %v4160 = vld [vmem:[%s4104 + $0x1b8] sm:$0xff]
    %v4161 = vld [vmem:[%s4104 + $0x1c0] sm:$0xff]
    %v4162 = vld [vmem:[%s4104 + $0x1c8] sm:$0xff]
    %v4163 = vld [vmem:[%s4104 + $0x1d0] sm:$0xff]
    %v4164 = vld [vmem:[%s4104 + $0x1d8] sm:$0xff]
    %v4165 = vld [vmem:[%s4104 + $0x1e0] sm:$0xff]
    %v4166 = vld [vmem:[%s4104 + $0x1e8] sm:$0xff]
    %v4167 = vld [vmem:[%s4104 + $0x1f0] sm:$0xff]
    %v4168 = vld [vmem:[%s4104 + $0x1f8] sm:$0xff]
    %v4169 = vld [vmem:[%s4104 + $0x200] sm:$0xff]
    %v4170 = vld [vmem:[%s4104 + $0x208] sm:$0xff]
    %v4171 = vld [vmem:[%s4104 + $0x210] sm:$0xff]
    %v4172 = vld [vmem:[%s4104 + $0x218] sm:$0xff]
    %v4173 = vld [vmem:[%s4104 + $0x220] sm:$0xff]
    %v4174 = vld [vmem:[%s4104 + $0x228] sm:$0xff]
    %v4175 = vld [vmem:[%s4104 + $0x230] sm:$0xff]
    %v4176 = vld [vmem:[%s4104 + $0x238] sm:$0xff]
    %v4177 = vld [vmem:[%s4104 + $0x240] sm:$0xff]
    %v4178 = vld [vmem:[%s4104 + $0x248] sm:$0xff]
    %v4179 = vld [vmem:[%s4104 + $0x250] sm:$0xff]
    %v4180 = vld [vmem:[%s4104 + $0x258] sm:$0xff]
    %v4181 = vld [vmem:[%s4104 + $0x260] sm:$0xff]
    %v4182 = vld [vmem:[%s4104 + $0x268] sm:$0xff]
    %v4183 = vld [vmem:[%s4104 + $0x270] sm:$0xff]
    %v4184 = vld [vmem:[%s4104 + $0x278] sm:$0xff]
    %v4185 = vld [vmem:[%s4104 + $0x280] sm:$0xff]
    %v4186 = vld [vmem:[%s4104 + $0x288] sm:$0xff]
    %v4187 = vld [vmem:[%s4104 + $0x290] sm:$0xff]
    %v4188 = vld [vmem:[%s4104 + $0x298] sm:$0xff]
    %v4189 = vld [vmem:[%s4104 + $0x2a0] sm:$0xff]
    %v4190 = vld [vmem:[%s4104 + $0x2a8] sm:$0xff]
    %v4191 = vld [vmem:[%s4104 + $0x2b0] sm:$0xff]
    %v4192 = vld [vmem:[%s4104 + $0x2b8] sm:$0xff]
    %v4193 = vld [vmem:[%s4104 + $0x2c0] sm:$0xff]
    %v4194 = vld [vmem:[%s4104 + $0x2c8] sm:$0xff]
    %v4195 = vld [vmem:[%s4104 + $0x2d0] sm:$0xff]
    %v4196 = vld [vmem:[%s4104 + $0x2d8] sm:$0xff]
    %v4197 = vld [vmem:[%s4104 + $0x2e0] sm:$0xff]
    %v4198 = vld [vmem:[%s4104 + $0x2e8] sm:$0xff]
    %v4199 = vld [vmem:[%s4104 + $0x2f0] sm:$0xff]
    %v4200 = vld [vmem:[%s4104 + $0x2f8] sm:$0xff]
    %v4201 = vld [vmem:[%s4104 + $0x300] sm:$0xff]
    %v4202 = vld [vmem:[%s4104 + $0x308] sm:$0xff]
    %v4203 = vld [vmem:[%s4104 + $0x310] sm:$0xff]
    %v4204 = vld [vmem:[%s4104 + $0x318] sm:$0xff]
    %v4205 = vld [vmem:[%s4104 + $0x320] sm:$0xff]
    %v4206 = vld [vmem:[%s4104 + $0x328] sm:$0xff]
    %v4207 = vld [vmem:[%s4104 + $0x330] sm:$0xff]
    %v4208 = vld [vmem:[%s4104 + $0x338] sm:$0xff]
    %v4209 = vld [vmem:[%s4104 + $0x340] sm:$0xff]
    %v4210 = vld [vmem:[%s4104 + $0x348] sm:$0xff]
    %v4211 = vld [vmem:[%s4104 + $0x350] sm:$0xff]
    %v4212 = vld [vmem:[%s4104 + $0x358] sm:$0xff]
    %v4213 = vld [vmem:[%s4104 + $0x360] sm:$0xff]
    %v4214 = vld [vmem:[%s4104 + $0x368] sm:$0xff]
    %v4215 = vld [vmem:[%s4104 + $0x370] sm:$0xff]
    %v4216 = vld [vmem:[%s4104 + $0x378] sm:$0xff]
    %v4217 = vld [vmem:[%s4104 + $0x380] sm:$0xff]
    %v4218 = vld [vmem:[%s4104 + $0x388] sm:$0xff]
    %v4219 = vld [vmem:[%s4104 + $0x390] sm:$0xff]
    %v4220 = vld [vmem:[%s4104 + $0x398] sm:$0xff]
    %v4221 = vld [vmem:[%s4104 + $0x3a0] sm:$0xff]
    %v4222 = vld [vmem:[%s4104 + $0x3a8] sm:$0xff]
    %v4223 = vld [vmem:[%s4104 + $0x3b0] sm:$0xff]
    %v4224 = vld [vmem:[%s4104 + $0x3b8] sm:$0xff]
    %v4225 = vld [vmem:[%s4104 + $0x3c0] sm:$0xff]
    %v4226 = vld [vmem:[%s4104 + $0x3c8] sm:$0xff]
    %v4227 = vld [vmem:[%s4104 + $0x3d0] sm:$0xff]
    %v4228 = vld [vmem:[%s4104 + $0x3d8] sm:$0xff]
    %v4229 = vld [vmem:[%s4104 + $0x3e0] sm:$0xff]
    %v4230 = vld [vmem:[%s4104 + $0x3e8] sm:$0xff]
    %v4231 = vld [vmem:[%s4104 + $0x3f0] sm:$0xff]
    %v4232 = vld [vmem:[%s4104 + $0x3f8] sm:$0xff]
    %v4233 = vld [vmem:[%s4104 + $0x400] sm:$0xff]
    %v4234 = vld [vmem:[%s4104 + $0x408] sm:$0xff]
    %v4235 = vld [vmem:[%s4104 + $0x410] sm:$0xff]
    %v4236 = vld [vmem:[%s4104 + $0x418] sm:$0xff]
    %v4237 = vld [vmem:[%s4104 + $0x420] sm:$0xff]
    %v4238 = vld [vmem:[%s4104 + $0x428] sm:$0xff]
    %v4239 = vld [vmem:[%s4104 + $0x430] sm:$0xff]
    %v4240 = vld [vmem:[%s4104 + $0x438] sm:$0xff]
    %v4241 = vld [vmem:[%s4104 + $0x440] sm:$0xff]
    %v4242 = vld [vmem:[%s4104 + $0x448] sm:$0xff]
    %v4243 = vld [vmem:[%s4104 + $0x450] sm:$0xff]
    %v4244 = vld [vmem:[%s4104 + $0x458] sm:$0xff]
    %v4245 = vld [vmem:[%s4104 + $0x460] sm:$0xff]
    %v4246 = vld [vmem:[%s4104 + $0x468] sm:$0xff]
    %v4247 = vld [vmem:[%s4104 + $0x470] sm:$0xff]
    %v4248 = vld [vmem:[%s4104 + $0x478] sm:$0xff]
    %v4249 = vld [vmem:[%s4104 + $0x480] sm:$0xff]
    %v4250 = vld [vmem:[%s4104 + $0x488] sm:$0xff]
    %v4251 = vld [vmem:[%s4104 + $0x490] sm:$0xff]
    %v4252 = vld [vmem:[%s4104 + $0x498] sm:$0xff]
    %v4253 = vld [vmem:[%s4104 + $0x4a0] sm:$0xff]
    %v4254 = vld [vmem:[%s4104 + $0x4a8] sm:$0xff]
    %v4255 = vld [vmem:[%s4104 + $0x4b0] sm:$0xff]
    %v4256 = vld [vmem:[%s4104 + $0x4b8] sm:$0xff]
    %v4257 = vld [vmem:[%s4104 + $0x4c0] sm:$0xff]
    %v4258 = vld [vmem:[%s4104 + $0x4c8] sm:$0xff]
    %v4259 = vld [vmem:[%s4104 + $0x4d0] sm:$0xff]
    %v4260 = vld [vmem:[%s4104 + $0x4d8] sm:$0xff]
    %v4261 = vld [vmem:[%s4104 + $0x4e0] sm:$0xff]
    %v4262 = vld [vmem:[%s4104 + $0x4e8] sm:$0xff]
    %v4263 = vld [vmem:[%s4104 + $0x4f0] sm:$0xff]
    %v4264 = vld [vmem:[%s4104 + $0x4f8] sm:$0xff]
    %v4265 = vld [vmem:[%s4104 + $0x500] sm:$0xff]
    %v4266 = vld [vmem:[%s4104 + $0x508] sm:$0xff]
    %v4267 = vld [vmem:[%s4104 + $0x510] sm:$0xff]
    %v4268 = vld [vmem:[%s4104 + $0x518] sm:$0xff]
    %v4269 = vld [vmem:[%s4104 + $0x520] sm:$0xff]
    %v4270 = vld [vmem:[%s4104 + $0x528] sm:$0xff]
    %v4271 = vld [vmem:[%s4104 + $0x530] sm:$0xff]
    %v4272 = vld [vmem:[%s4104 + $0x538] sm:$0xff]
    %v4273 = vld [vmem:[%s4104 + $0x540] sm:$0xff]
    %v4274 = vld [vmem:[%s4104 + $0x548] sm:$0xff]
    %v4275 = vld [vmem:[%s4104 + $0x550] sm:$0xff]
    %v4276 = vld [vmem:[%s4104 + $0x558] sm:$0xff]
    %v4277 = vld [vmem:[%s4104 + $0x560] sm:$0xff]
    %v4278 = vld [vmem:[%s4104 + $0x568] sm:$0xff]
    %v4279 = vld [vmem:[%s4104 + $0x570] sm:$0xff]
    %v4280 = vld [vmem:[%s4104 + $0x578] sm:$0xff]
    %v4281 = vld [vmem:[%s4104 + $0x580] sm:$0xff]
    %v4282 = vld [vmem:[%s4104 + $0x588] sm:$0xff]
    %v4283 = vld [vmem:[%s4104 + $0x590] sm:$0xff]
    %v4284 = vld [vmem:[%s4104 + $0x598] sm:$0xff]
    %v4285 = vld [vmem:[%s4104 + $0x5a0] sm:$0xff]
    %v4286 = vld [vmem:[%s4104 + $0x5a8] sm:$0xff]
    %v4287 = vld [vmem:[%s4104 + $0x5b0] sm:$0xff]
    %v4288 = vld [vmem:[%s4104 + $0x5b8] sm:$0xff]
    %v4289 = vld [vmem:[%s4104 + $0x5c0] sm:$0xff]
    %v4290 = vld [vmem:[%s4104 + $0x5c8] sm:$0xff]
    %v4291 = vld [vmem:[%s4104 + $0x5d0] sm:$0xff]
    %v4292 = vld [vmem:[%s4104 + $0x5d8] sm:$0xff]
    %v4293 = vld [vmem:[%s4104 + $0x5e0] sm:$0xff]
    %v4294 = vld [vmem:[%s4104 + $0x5e8] sm:$0xff]
    %v4295 = vld [vmem:[%s4104 + $0x5f0] sm:$0xff]
    %v4296 = vld [vmem:[%s4104 + $0x5f8] sm:$0xff]
    %4297 = vmatprep.subr.mxu0 %v4106
    %4298 = vmatpush1.msra.mxu0 %v4105
    %4299 = vmatprep.subr.mxu0 %v4110
    %4300 = vmatpush1.msra.mxu0 %v4109
    %4301 = vmatprep.subr.mxu0 %v4114
    %4302 = vmatpush1.msra.mxu0 %v4113
    %4303 = vmatprep.subr.mxu0 %v4118
    %4304 = vmatpush1.msra.mxu0 %v4117
    %4305 = vmatprep.subr.mxu0 %v4122
    %4306 = vmatpush1.msra.mxu0 %v4121
    %4307 = vmatprep.subr.mxu0 %v4126
    %4308 = vmatpush1.msra.mxu0 %v4125
    %4309 = vmatprep.subr.mxu0 %v4130
    %4310 = vmatpush1.msra.mxu0 %v4129
    %4311 = vmatprep.subr.mxu0 %v4134
    %4312 = vmatpush1.msra.mxu0 %v4133
    %4313 = vmatprep.subr.mxu0 %v4138
    %4314 = vmatpush1.msra.mxu0 %v4137
    %4315 = vmatprep.subr.mxu0 %v4142
    %4316 = vmatpush1.msra.mxu0 %v4141
    %4317 = vmatprep.subr.mxu0 %v4146
    %4318 = vmatpush1.msra.mxu0 %v4145
    %4319 = vmatprep.subr.mxu0 %v4150
    %4320 = vmatpush1.msra.mxu0 %v4149
    %4321 = vmatprep.subr.mxu0 %v4154
    %4322 = vmatpush1.msra.mxu0 %v4153
    %4323 = vmatprep.subr.mxu0 %v4158
    %4324 = vmatpush1.msra.mxu0 %v4157
    %4325 = vmatprep.subr.mxu0 %v4162
    %4326 = vmatpush1.msra.mxu0 %v4161
    %4327 = vmatprep.subr.mxu0 %v4166
    %4328 = vmatpush1.msra.mxu0 %v4165
    %4329 = vmatprep.subr.mxu0 %v4170
    %4330 = vmatpush1.msra.mxu0 %v4169
    %4331 = vmatprep.subr.mxu0 %v4174
    %4332 = vmatpush1.msra.mxu0 %v4173
    %4333 = vmatprep.subr.mxu0 %v4178
    %4334 = vmatpush1.msra.mxu0 %v4177
    %4335 = vmatprep.subr.mxu0 %v4182
    %4336 = vmatpush1.msra.mxu0 %v4181
    %4337 = vmatprep.subr.mxu0 %v4186
    %4338 = vmatpush1.msra.mxu0 %v4185
    %4339 = vmatprep.subr.mxu0 %v4190
    %4340 = vmatpush1.msra.mxu0 %v4189
    %4341 = vmatprep.subr.mxu0 %v4194
    %4342 = vmatpush1.msra.mxu0 %v4193
    %4343 = vmatprep.subr.mxu0 %v4198
    %4344 = vmatpush1.msra.mxu0 %v4197
    %4345 = vmatprep.subr.mxu0 %v4202
    %4346 = vmatpush1.msra.mxu0 %v4201
    %4347 = vmatprep.subr.mxu0 %v4206
    %4348 = vmatpush1.msra.mxu0 %v4205
    %4349 = vmatprep.subr.mxu0 %v4210
    %4350 = vmatpush1.msra.mxu0 %v4209
    %4351 = vmatprep.subr.mxu0 %v4214
    %4352 = vmatpush1.msra.mxu0 %v4213
    %4353 = vmatprep.subr.mxu0 %v4218
    %4354 = vmatpush1.msra.mxu0 %v4217
    %4355 = vmatprep.subr.mxu0 %v4222
    %4356 = vmatpush1.msra.mxu0 %v4221
    %4357 = vmatprep.subr.mxu0 %v4226
    %4358 = vmatpush1.msra.mxu0 %v4225
    %4359 = vmatprep.subr.mxu0 %v4230
    %4360 = vmatpush1.msra.mxu0 %v4229
    %4361 = vmatprep.mubr.f32.mxu0 %v4078
    %4362 = vmatmul.mubr.f32.gmra.mrb[0].mxu0 %v4075
    %v4363 = vpop.f32.mrb[0].mxu0
    %v4364 = vadd.f32 0.0, %v4363
    %v4365 = vpop.f32.mrb[0].mxu0
    %v4366 = vadd.f32 0.0, %v4365
    %4367 = vmatprep.mubr.f32.mxu0 %v4097
    %4368 = vmatmul.mubr.f32.gmra.mrb[0].mxu0 %v4094
    %v4369 = vpop.f32.mrb[0].mxu0
    %v4370 = vadd.f32 0.0, %v4369
    %v4371 = vpop.f32.mrb[0].mxu0
    %v4372 = vadd.f32 0.0, %v4371
    %4373 = vdwg.mxu0
    %4374 = vmatprep.subr.mxu0 %v4234
    %4375 = vmatpush1.msra.mxu0 %v4233
    %4376 = vmatprep.subr.mxu0 %v4238
    %4377 = vmatpush1.msra.mxu0 %v4237
    %4378 = vmatprep.subr.mxu0 %v4242
    %4379 = vmatpush1.msra.mxu0 %v4241
    %4380 = vmatprep.subr.mxu0 %v4246
    %4381 = vmatpush1.msra.mxu0 %v4245
    %4382 = vmatprep.subr.mxu0 %v4250
    %4383 = vmatpush1.msra.mxu0 %v4249
    %4384 = vmatprep.subr.mxu0 %v4254
    %4385 = vmatpush1.msra.mxu0 %v4253
    %4386 = vmatprep.subr.mxu0 %v4258
    %4387 = vmatpush1.msra.mxu0 %v4257
    %4388 = vmatprep.subr.mxu0 %v4262
    %4389 = vmatpush1.msra.mxu0 %v4261
    %4390 = vmatprep.subr.mxu0 %v4266
    %4391 = vmatpush1.msra.mxu0 %v4265
    %4392 = vmatprep.subr.mxu0 %v4270
    %4393 = vmatpush1.msra.mxu0 %v4269
    %4394 = vmatprep.subr.mxu0 %v4274
    %4395 = vmatpush1.msra.mxu0 %v4273
    %4396 = vmatprep.subr.mxu0 %v4278
    %4397 = vmatpush1.msra.mxu0 %v4277
    %4398 = vmatprep.subr.mxu0 %v4282
    %4399 = vmatpush1.msra.mxu0 %v4281
    %4400 = vmatprep.subr.mxu0 %v4286
    %4401 = vmatpush1.msra.mxu0 %v4285
    %4402 = vmatprep.subr.mxu0 %v4290
    %4403 = vmatpush1.msra.mxu0 %v4289
    %4404 = vmatprep.subr.mxu0 %v4294
    %4405 = vmatpush1.msra.mxu0 %v4293
    %4406 = vmatprep.subr.mxu0 0.0
    %4407 = vmatpush1.msra.mxu0 0.0
    %4408 = vmatprep.subr.mxu0 0.0
    %4409 = vmatpush1.msra.mxu0 0.0
    %4410 = vmatprep.subr.mxu0 0.0
    %4411 = vmatpush1.msra.mxu0 0.0
    %4412 = vmatprep.subr.mxu0 0.0
    %4413 = vmatpush1.msra.mxu0 0.0
    %4414 = vmatprep.subr.mxu0 0.0
    %4415 = vmatpush1.msra.mxu0 0.0
    %4416 = vmatprep.subr.mxu0 0.0
    %4417 = vmatpush1.msra.mxu0 0.0
    %4418 = vmatprep.subr.mxu0 0.0
    %4419 = vmatpush1.msra.mxu0 0.0
    %4420 = vmatprep.subr.mxu0 0.0
    %4421 = vmatpush1.msra.mxu0 0.0
    %4422 = vmatprep.subr.mxu0 0.0
    %4423 = vmatpush1.msra.mxu0 0.0
    %4424 = vmatprep.subr.mxu0 0.0
    %4425 = vmatpush1.msra.mxu0 0.0
    %4426 = vmatprep.subr.mxu0 0.0
    %4427 = vmatpush1.msra.mxu0 0.0
    %4428 = vmatprep.subr.mxu0 0.0
    %4429 = vmatpush1.msra.mxu0 0.0
    %4430 = vmatprep.subr.mxu0 0.0
    %4431 = vmatpush1.msra.mxu0 0.0
    %4432 = vmatprep.subr.mxu0 0.0
    %4433 = vmatpush1.msra.mxu0 0.0
    %4434 = vmatprep.subr.mxu0 0.0
    %4435 = vmatpush1.msra.mxu0 0.0
    %4436 = vmatprep.subr.mxu0 0.0
    %4437 = vmatpush1.msra.mxu0 0.0
    %4438 = vmatprep.mubr.f32.mxu0 0.0
    %4439 = vmatmul.mubr.f32.gmra.mrb[0].mxu0 %v4081
    %v4440 = vpop.f32.mrb[0].mxu0
    %v4441 = vadd.f32 %v4364, %v4440
    %v4442 = vpop.f32.mrb[0].mxu0
    %v4443 = vadd.f32 %v4366, %v4442
    %4444 = vmatprep.mubr.f32.mxu0 0.0
    %4445 = vmatmul.mubr.f32.gmra.mrb[0].mxu0 %v4100
    %v4446 = vpop.f32.mrb[0].mxu0
    %v4447 = vadd.f32 %v4370, %v4446
    %v4448 = vpop.f32.mrb[0].mxu0
    %v4449 = vadd.f32 %v4372, %v4448
    %4450 = vdwg.mxu0
    %4451 = vmatprep.subr.mxu0 %v4108
    %4452 = vmatpush1.msra.mxu0 %v4107
    %4453 = vmatprep.subr.mxu0 %v4112
    %4454 = vmatpush1.msra.mxu0 %v4111
    %4455 = vmatprep.subr.mxu0 %v4116
    %4456 = vmatpush1.msra.mxu0 %v4115
    %4457 = vmatprep.subr.mxu0 %v4120
    %4458 = vmatpush1.msra.mxu0 %v4119
    %4459 = vmatprep.subr.mxu0 %v4124
    %4460 = vmatpush1.msra.mxu0 %v4123
    %4461 = vmatprep.subr.mxu0 %v4128
    %4462 = vmatpush1.msra.mxu0 %v4127
    %4463 = vmatprep.subr.mxu0 %v4132
    %4464 = vmatpush1.msra.mxu0 %v4131
    %4465 = vmatprep.subr.mxu0 %v4136
    %4466 = vmatpush1.msra.mxu0 %v4135
    %4467 = vmatprep.subr.mxu0 %v4140
    %4468 = vmatpush1.msra.mxu0 %v4139
    %4469 = vmatprep.subr.mxu0 %v4144
    %4470 = vmatpush1.msra.mxu0 %v4143
    %4471 = vmatprep.subr.mxu0 %v4148
    %4472 = vmatpush1.msra.mxu0 %v4147
    %4473 = vmatprep.subr.mxu0 %v4152
    %4474 = vmatpush1.msra.mxu0 %v4151
    %4475 = vmatprep.subr.mxu0 %v4156
    %4476 = vmatpush1.msra.mxu0 %v4155
    %4477 = vmatprep.subr.mxu0 %v4160
    %4478 = vmatpush1.msra.mxu0 %v4159
    %4479 = vmatprep.subr.mxu0 %v4164
    %4480 = vmatpush1.msra.mxu0 %v4163
    %4481 = vmatprep.subr.mxu0 %v4168
    %4482 = vmatpush1.msra.mxu0 %v4167
    %4483 = vmatprep.subr.mxu0 %v4172
    %4484 = vmatpush1.msra.mxu0 %v4171
    %4485 = vmatprep.subr.mxu0 %v4176
    %4486 = vmatpush1.msra.mxu0 %v4175
    %4487 = vmatprep.subr.mxu0 %v4180
    %4488 = vmatpush1.msra.mxu0 %v4179
    %4489 = vmatprep.subr.mxu0 %v4184
    %4490 = vmatpush1.msra.mxu0 %v4183
    %4491 = vmatprep.subr.mxu0 %v4188
    %4492 = vmatpush1.msra.mxu0 %v4187
    %4493 = vmatprep.subr.mxu0 %v4192
    %4494 = vmatpush1.msra.mxu0 %v4191
    %4495 = vmatprep.subr.mxu0 %v4196
    %4496 = vmatpush1.msra.mxu0 %v4195
    %4497 = vmatprep.subr.mxu0 %v4200
    %4498 = vmatpush1.msra.mxu0 %v4199
    %4499 = vmatprep.subr.mxu0 %v4204
    %4500 = vmatpush1.msra.mxu0 %v4203
    %4501 = vmatprep.subr.mxu0 %v4208
    %4502 = vmatpush1.msra.mxu0 %v4207
    %4503 = vmatprep.subr.mxu0 %v4212
    %4504 = vmatpush1.msra.mxu0 %v4211
    %4505 = vmatprep.subr.mxu0 %v4216
    %4506 = vmatpush1.msra.mxu0 %v4215
    %4507 = vmatprep.subr.mxu0 %v4220
    %4508 = vmatpush1.msra.mxu0 %v4219
    %4509 = vmatprep.subr.mxu0 %v4224
    %4510 = vmatpush1.msra.mxu0 %v4223
    %4511 = vmatprep.subr.mxu0 %v4228
    %4512 = vmatpush1.msra.mxu0 %v4227
    %4513 = vmatprep.subr.mxu0 %v4232
    %4514 = vmatpush1.msra.mxu0 %v4231
    %4515 = vmatprep.mubr.f32.mxu0 %v4078
    %4516 = vmatmul.mubr.f32.gmra.mrb[0].mxu0 %v4075
    %v4517 = vpop.f32.mrb[0].mxu0
    %v4518 = vadd.f32 0.0, %v4517
    %v4519 = vpop.f32.mrb[0].mxu0
    %v4520 = vadd.f32 0.0, %v4519
    %4521 = vmatprep.mubr.f32.mxu0 %v4097
    %4522 = vmatmul.mubr.f32.gmra.mrb[0].mxu0 %v4094
    %v4523 = vpop.f32.mrb[0].mxu0
    %v4524 = vadd.f32 0.0, %v4523
    %v4525 = vpop.f32.mrb[0].mxu0
    %v4526 = vadd.f32 0.0, %v4525
    %4527 = vdwg.mxu0
    %4528 = vmatprep.subr.mxu0 %v4236
    %4529 = vmatpush1.msra.mxu0 %v4235
    %4530 = vmatprep.subr.mxu0 %v4240
    %4531 = vmatpush1.msra.mxu0 %v4239
    %4532 = vmatprep.subr.mxu0 %v4244
    %4533 = vmatpush1.msra.mxu0 %v4243
    %4534 = vmatprep.subr.mxu0 %v4248
    %4535 = vmatpush1.msra.mxu0 %v4247
    %4536 = vmatprep.subr.mxu0 %v4252
    %4537 = vmatpush1.msra.mxu0 %v4251
    %4538 = vmatprep.subr.mxu0 %v4256
    %4539 = vmatpush1.msra.mxu0 %v4255
    %4540 = vmatprep.subr.mxu0 %v4260
    %4541 = vmatpush1.msra.mxu0 %v4259
    %4542 = vmatprep.subr.mxu0 %v4264
    %4543 = vmatpush1.msra.mxu0 %v4263
    %4544 = vmatprep.subr.mxu0 %v4268
    %4545 = vmatpush1.msra.mxu0 %v4267
    %4546 = vmatprep.subr.mxu0 %v4272
    %4547 = vmatpush1.msra.mxu0 %v4271
    %4548 = vmatprep.subr.mxu0 %v4276
    %4549 = vmatpush1.msra.mxu0 %v4275
    %4550 = vmatprep.subr.mxu0 %v4280
    %4551 = vmatpush1.msra.mxu0 %v4279
    %4552 = vmatprep.subr.mxu0 %v4284
    %4553 = vmatpush1.msra.mxu0 %v4283
    %4554 = vmatprep.subr.mxu0 %v4288
    %4555 = vmatpush1.msra.mxu0 %v4287
    %4556 = vmatprep.subr.mxu0 %v4292
    %4557 = vmatpush1.msra.mxu0 %v4291
    %4558 = vmatprep.subr.mxu0 %v4296
    %4559 = vmatpush1.msra.mxu0 %v4295
    %4560 = vmatprep.subr.mxu0 0.0
    %4561 = vmatpush1.msra.mxu0 0.0
    %4562 = vmatprep.subr.mxu0 0.0
    %4563 = vmatpush1.msra.mxu0 0.0
    %4564 = vmatprep.subr.mxu0 0.0
    %4565 = vmatpush1.msra.mxu0 0.0
    %4566 = vmatprep.subr.mxu0 0.0
    %4567 = vmatpush1.msra.mxu0 0.0
    %4568 = vmatprep.subr.mxu0 0.0
    %4569 = vmatpush1.msra.mxu0 0.0
    %4570 = vmatprep.subr.mxu0 0.0
    %4571 = vmatpush1.msra.mxu0 0.0
    %4572 = vmatprep.subr.mxu0 0.0
    %4573 = vmatpush1.msra.mxu0 0.0
    %4574 = vmatprep.subr.mxu0 0.0
    %4575 = vmatpush1.msra.mxu0 0.0
    %4576 = vmatprep.subr.mxu0 0.0
    %4577 = vmatpush1.msra.mxu0 0.0
    %4578 = vmatprep.subr.mxu0 0.0
    %4579 = vmatpush1.msra.mxu0 0.0
    %4580 = vmatprep.subr.mxu0 0.0
    %4581 = vmatpush1.msra.mxu0 0.0
    %4582 = vmatprep.subr.mxu0 0.0
    %4583 = vmatpush1.msra.mxu0 0.0
    %4584 = vmatprep.subr.mxu0 0.0
    %4585 = vmatpush1.msra.mxu0 0.0
    %4586 = vmatprep.subr.mxu0 0.0
    %4587 = vmatpush1.msra.mxu0 0.0
    %4588 = vmatprep.subr.mxu0 0.0
    %4589 = vmatpush1.msra.mxu0 0.0
    %4590 = vmatprep.subr.mxu0 0.0
    %4591 = vmatpush1.msra.mxu0 0.0
    %4592 = vmatprep.mubr.f32.mxu0 0.0
    %4593 = vmatmul.mubr.f32.gmra.mrb[0].mxu0 %v4081
    %v4594 = vpop.f32.mrb[0].mxu0
    %v4595 = vadd.f32 %v4518, %v4594
    %v4596 = vpop.f32.mrb[0].mxu0
    %v4597 = vadd.f32 %v4520, %v4596
    %4598 = vmatprep.mubr.f32.mxu0 0.0
    %4599 = vmatmul.mubr.f32.gmra.mrb[0].mxu0 %v4100
    %v4600 = vpop.f32.mrb[0].mxu0
    %v4601 = vadd.f32 %v4524, %v4600
    %v4602 = vpop.f32.mrb[0].mxu0
    %v4603 = vadd.f32 %v4526, %v4602
    %4604 = vdwg.mxu0
    %v4605 = vadd.f32 %v3890, %v4441
    %v4606 = vadd.f32 %v3892, %v4443
    %v4607 = vadd.f32 %v4044, %v4595
    %v4608 = vadd.f32 %v4046, %v4597
    %v4609 = vadd.f32 %v3896, %v4447
    %v4610 = vadd.f32 %v3898, %v4449
    %v4611 = vadd.f32 %v4050, %v4601
    %v4612 = vadd.f32 %v4052, %v4603
    %v4613 = vld [vmem:[#allocation2] sm:$0xf8]
    %v4614 = vld [vmem:[#allocation2 + $0x8] sm:$0xf8]
    %v4615 = vld [vmem:[#allocation2 + $0x10] sm:$0xf8]
    %v4616 = vld [vmem:[#allocation2 + $0x18] sm:$0x7]
    %v4617 = vld [vmem:[#allocation2 + $0x20] sm:$0x7]
    %v4618 = vld [vmem:[#allocation2 + $0x28] sm:$0x7]
    %v4619 = vld [vmem:[#allocation2 + $0x18] sm:$0x80]
    %v4620 = vld [vmem:[#allocation2 + $0x20] sm:$0x80]
    %v4621 = vld [vmem:[#allocation2 + $0x28] sm:$0x80]
    %v4622 = vld [vmem:[#allocation2 + $0x30] sm:$0x7f]
    %v4623 = vld [vmem:[#allocation2 + $0x38] sm:$0x7f]
    %v4624 = vld [vmem:[#allocation2 + $0x40] sm:$0x7f]
    %vm4631 = vcmask 1044480
    %v4632 = vrot.slane %v4613, 3
    %v4633 = vrot.slane %v4616, 3
    %v4634 = vsel %vm4631, %v4632, %v4633
    %v4635 = vrot.slane %v4614, 3
    %v4636 = vrot.slane %v4617, 3
    %v4637 = vsel %vm4631, %v4635, %v4636
    %v4638 = vrot.slane %v4615, 3
    %v4639 = vrot.slane %v4618, 3
    %v4640 = vsel %vm4631, %v4638, %v4639
    %vm4650 = vcmask 1040384
    %v4651 = vrot.slane %v4619, 7
    %v4652 = vrot.slane %v4622, 7
    %v4653 = vsel %vm4650, %v4651, %v4652
    %v4654 = vrot.slane %v4620, 7
    %v4655 = vrot.slane %v4623, 7
    %v4656 = vsel %vm4650, %v4654, %v4655
    %v4657 = vrot.slane %v4621, 7
    %v4658 = vrot.slane %v4624, 7
    %v4659 = vsel %vm4650, %v4657, %v4658
    %s4663 = scalar_lea.vmem [#allocation8], 4608
    %v4664 = vld [vmem:[%s4663] sm:$0xff]
    %v4665 = vld [vmem:[%s4663 + $0x8] sm:$0xff]
    %v4666 = vld [vmem:[%s4663 + $0x10] sm:$0xff]
    %v4667 = vld [vmem:[%s4663 + $0x18] sm:$0xff]
    %v4668 = vld [vmem:[%s4663 + $0x20] sm:$0xff]
    %v4669 = vld [vmem:[%s4663 + $0x28] sm:$0xff]
    %v4670 = vld [vmem:[%s4663 + $0x30] sm:$0xff]
    %v4671 = vld [vmem:[%s4663 + $0x38] sm:$0xff]
    %v4672 = vld [vmem:[%s4663 + $0x40] sm:$0xff]
    %v4673 = vld [vmem:[%s4663 + $0x48] sm:$0xff]
    %v4674 = vld [vmem:[%s4663 + $0x50] sm:$0xff]
    %v4675 = vld [vmem:[%s4663 + $0x58] sm:$0xff]
    %v4676 = vld [vmem:[%s4663 + $0x60] sm:$0xff]
    %v4677 = vld [vmem:[%s4663 + $0x68] sm:$0xff]
    %v4678 = vld [vmem:[%s4663 + $0x70] sm:$0xff]
    %v4679 = vld [vmem:[%s4663 + $0x78] sm:$0xff]
    %v4680 = vld [vmem:[%s4663 + $0x80] sm:$0xff]
    %v4681 = vld [vmem:[%s4663 + $0x88] sm:$0xff]
    %v4682 = vld [vmem:[%s4663 + $0x90] sm:$0xff]
    %v4683 = vld [vmem:[%s4663 + $0x98] sm:$0xff]
    %v4684 = vld [vmem:[%s4663 + $0xa0] sm:$0xff]
    %v4685 = vld [vmem:[%s4663 + $0xa8] sm:$0xff]
    %v4686 = vld [vmem:[%s4663 + $0xb0] sm:$0xff]
    %v4687 = vld [vmem:[%s4663 + $0xb8] sm:$0xff]
    %v4688 = vld [vmem:[%s4663 + $0xc0] sm:$0xff]
    %v4689 = vld [vmem:[%s4663 + $0xc8] sm:$0xff]
    %v4690 = vld [vmem:[%s4663 + $0xd0] sm:$0xff]
    %v4691 = vld [vmem:[%s4663 + $0xd8] sm:$0xff]
    %v4692 = vld [vmem:[%s4663 + $0xe0] sm:$0xff]
    %v4693 = vld [vmem:[%s4663 + $0xe8] sm:$0xff]
    %v4694 = vld [vmem:[%s4663 + $0xf0] sm:$0xff]
    %v4695 = vld [vmem:[%s4663 + $0xf8] sm:$0xff]
    %v4696 = vld [vmem:[%s4663 + $0x100] sm:$0xff]
    %v4697 = vld [vmem:[%s4663 + $0x108] sm:$0xff]
    %v4698 = vld [vmem:[%s4663 + $0x110] sm:$0xff]
    %v4699 = vld [vmem:[%s4663 + $0x118] sm:$0xff]
    %v4700 = vld [vmem:[%s4663 + $0x120] sm:$0xff]
    %v4701 = vld [vmem:[%s4663 + $0x128] sm:$0xff]
    %v4702 = vld [vmem:[%s4663 + $0x130] sm:$0xff]
    %v4703 = vld [vmem:[%s4663 + $0x138] sm:$0xff]
    %v4704 = vld [vmem:[%s4663 + $0x140] sm:$0xff]
    %v4705 = vld [vmem:[%s4663 + $0x148] sm:$0xff]
    %v4706 = vld [vmem:[%s4663 + $0x150] sm:$0xff]
    %v4707 = vld [vmem:[%s4663 + $0x158] sm:$0xff]
    %v4708 = vld [vmem:[%s4663 + $0x160] sm:$0xff]
    %v4709 = vld [vmem:[%s4663 + $0x168] sm:$0xff]
    %v4710 = vld [vmem:[%s4663 + $0x170] sm:$0xff]
    %v4711 = vld [vmem:[%s4663 + $0x178] sm:$0xff]
    %v4712 = vld [vmem:[%s4663 + $0x180] sm:$0xff]
    %v4713 = vld [vmem:[%s4663 + $0x188] sm:$0xff]
    %v4714 = vld [vmem:[%s4663 + $0x190] sm:$0xff]
    %v4715 = vld [vmem:[%s4663 + $0x198] sm:$0xff]
    %v4716 = vld [vmem:[%s4663 + $0x1a0] sm:$0xff]
    %v4717 = vld [vmem:[%s4663 + $0x1a8] sm:$0xff]
    %v4718 = vld [vmem:[%s4663 + $0x1b0] sm:$0xff]
    %v4719 = vld [vmem:[%s4663 + $0x1b8] sm:$0xff]
    %v4720 = vld [vmem:[%s4663 + $0x1c0] sm:$0xff]
    %v4721 = vld [vmem:[%s4663 + $0x1c8] sm:$0xff]
    %v4722 = vld [vmem:[%s4663 + $0x1d0] sm:$0xff]
    %v4723 = vld [vmem:[%s4663 + $0x1d8] sm:$0xff]
    %v4724 = vld [vmem:[%s4663 + $0x1e0] sm:$0xff]
    %v4725 = vld [vmem:[%s4663 + $0x1e8] sm:$0xff]
    %v4726 = vld [vmem:[%s4663 + $0x1f0] sm:$0xff]
    %v4727 = vld [vmem:[%s4663 + $0x1f8] sm:$0xff]
    %v4728 = vld [vmem:[%s4663 + $0x200] sm:$0xff]
    %v4729 = vld [vmem:[%s4663 + $0x208] sm:$0xff]
    %v4730 = vld [vmem:[%s4663 + $0x210] sm:$0xff]
    %v4731 = vld [vmem:[%s4663 + $0x218] sm:$0xff]
    %v4732 = vld [vmem:[%s4663 + $0x220] sm:$0xff]
    %v4733 = vld [vmem:[%s4663 + $0x228] sm:$0xff]
    %v4734 = vld [vmem:[%s4663 + $0x230] sm:$0xff]
    %v4735 = vld [vmem:[%s4663 + $0x238] sm:$0xff]
    %v4736 = vld [vmem:[%s4663 + $0x240] sm:$0xff]
    %v4737 = vld [vmem:[%s4663 + $0x248] sm:$0xff]
    %v4738 = vld [vmem:[%s4663 + $0x250] sm:$0xff]
    %v4739 = vld [vmem:[%s4663 + $0x258] sm:$0xff]
    %v4740 = vld [vmem:[%s4663 + $0x260] sm:$0xff]
    %v4741 = vld [vmem:[%s4663 + $0x268] sm:$0xff]
    %v4742 = vld [vmem:[%s4663 + $0x270] sm:$0xff]
    %v4743 = vld [vmem:[%s4663 + $0x278] sm:$0xff]
    %v4744 = vld [vmem:[%s4663 + $0x280] sm:$0xff]
    %v4745 = vld [vmem:[%s4663 + $0x288] sm:$0xff]
    %v4746 = vld [vmem:[%s4663 + $0x290] sm:$0xff]
    %v4747 = vld [vmem:[%s4663 + $0x298] sm:$0xff]
    %v4748 = vld [vmem:[%s4663 + $0x2a0] sm:$0xff]
    %v4749 = vld [vmem:[%s4663 + $0x2a8] sm:$0xff]
    %v4750 = vld [vmem:[%s4663 + $0x2b0] sm:$0xff]
    %v4751 = vld [vmem:[%s4663 + $0x2b8] sm:$0xff]
    %v4752 = vld [vmem:[%s4663 + $0x2c0] sm:$0xff]
    %v4753 = vld [vmem:[%s4663 + $0x2c8] sm:$0xff]
    %v4754 = vld [vmem:[%s4663 + $0x2d0] sm:$0xff]
    %v4755 = vld [vmem:[%s4663 + $0x2d8] sm:$0xff]
    %v4756 = vld [vmem:[%s4663 + $0x2e0] sm:$0xff]
    %v4757 = vld [vmem:[%s4663 + $0x2e8] sm:$0xff]
    %v4758 = vld [vmem:[%s4663 + $0x2f0] sm:$0xff]
    %v4759 = vld [vmem:[%s4663 + $0x2f8] sm:$0xff]
    %v4760 = vld [vmem:[%s4663 + $0x300] sm:$0xff]
    %v4761 = vld [vmem:[%s4663 + $0x308] sm:$0xff]
    %v4762 = vld [vmem:[%s4663 + $0x310] sm:$0xff]
    %v4763 = vld [vmem:[%s4663 + $0x318] sm:$0xff]
    %v4764 = vld [vmem:[%s4663 + $0x320] sm:$0xff]
    %v4765 = vld [vmem:[%s4663 + $0x328] sm:$0xff]
    %v4766 = vld [vmem:[%s4663 + $0x330] sm:$0xff]
    %v4767 = vld [vmem:[%s4663 + $0x338] sm:$0xff]
    %v4768 = vld [vmem:[%s4663 + $0x340] sm:$0xff]
    %v4769 = vld [vmem:[%s4663 + $0x348] sm:$0xff]
    %v4770 = vld [vmem:[%s4663 + $0x350] sm:$0xff]
    %v4771 = vld [vmem:[%s4663 + $0x358] sm:$0xff]
    %v4772 = vld [vmem:[%s4663 + $0x360] sm:$0xff]
    %v4773 = vld [vmem:[%s4663 + $0x368] sm:$0xff]
    %v4774 = vld [vmem:[%s4663 + $0x370] sm:$0xff]
    %v4775 = vld [vmem:[%s4663 + $0x378] sm:$0xff]
    %v4776 = vld [vmem:[%s4663 + $0x380] sm:$0xff]
    %v4777 = vld [vmem:[%s4663 + $0x388] sm:$0xff]
    %v4778 = vld [vmem:[%s4663 + $0x390] sm:$0xff]
    %v4779 = vld [vmem:[%s4663 + $0x398] sm:$0xff]
    %v4780 = vld [vmem:[%s4663 + $0x3a0] sm:$0xff]
    %v4781 = vld [vmem:[%s4663 + $0x3a8] sm:$0xff]
    %v4782 = vld [vmem:[%s4663 + $0x3b0] sm:$0xff]
    %v4783 = vld [vmem:[%s4663 + $0x3b8] sm:$0xff]
    %v4784 = vld [vmem:[%s4663 + $0x3c0] sm:$0xff]
    %v4785 = vld [vmem:[%s4663 + $0x3c8] sm:$0xff]
    %v4786 = vld [vmem:[%s4663 + $0x3d0] sm:$0xff]
    %v4787 = vld [vmem:[%s4663 + $0x3d8] sm:$0xff]
    %v4788 = vld [vmem:[%s4663 + $0x3e0] sm:$0xff]
    %v4789 = vld [vmem:[%s4663 + $0x3e8] sm:$0xff]
    %v4790 = vld [vmem:[%s4663 + $0x3f0] sm:$0xff]
    %v4791 = vld [vmem:[%s4663 + $0x3f8] sm:$0xff]
    %v4792 = vld [vmem:[%s4663 + $0x400] sm:$0xff]
    %v4793 = vld [vmem:[%s4663 + $0x408] sm:$0xff]
    %v4794 = vld [vmem:[%s4663 + $0x410] sm:$0xff]
    %v4795 = vld [vmem:[%s4663 + $0x418] sm:$0xff]
    %v4796 = vld [vmem:[%s4663 + $0x420] sm:$0xff]
    %v4797 = vld [vmem:[%s4663 + $0x428] sm:$0xff]
    %v4798 = vld [vmem:[%s4663 + $0x430] sm:$0xff]
    %v4799 = vld [vmem:[%s4663 + $0x438] sm:$0xff]
    %v4800 = vld [vmem:[%s4663 + $0x440] sm:$0xff]
    %v4801 = vld [vmem:[%s4663 + $0x448] sm:$0xff]
    %v4802 = vld [vmem:[%s4663 + $0x450] sm:$0xff]
    %v4803 = vld [vmem:[%s4663 + $0x458] sm:$0xff]
    %v4804 = vld [vmem:[%s4663 + $0x460] sm:$0xff]
    %v4805 = vld [vmem:[%s4663 + $0x468] sm:$0xff]
    %v4806 = vld [vmem:[%s4663 + $0x470] sm:$0xff]
    %v4807 = vld [vmem:[%s4663 + $0x478] sm:$0xff]
    %v4808 = vld [vmem:[%s4663 + $0x480] sm:$0xff]
    %v4809 = vld [vmem:[%s4663 + $0x488] sm:$0xff]
    %v4810 = vld [vmem:[%s4663 + $0x490] sm:$0xff]
    %v4811 = vld [vmem:[%s4663 + $0x498] sm:$0xff]
    %v4812 = vld [vmem:[%s4663 + $0x4a0] sm:$0xff]
    %v4813 = vld [vmem:[%s4663 + $0x4a8] sm:$0xff]
    %v4814 = vld [vmem:[%s4663 + $0x4b0] sm:$0xff]
    %v4815 = vld [vmem:[%s4663 + $0x4b8] sm:$0xff]
    %v4816 = vld [vmem:[%s4663 + $0x4c0] sm:$0xff]
    %v4817 = vld [vmem:[%s4663 + $0x4c8] sm:$0xff]
    %v4818 = vld [vmem:[%s4663 + $0x4d0] sm:$0xff]
    %v4819 = vld [vmem:[%s4663 + $0x4d8] sm:$0xff]
    %v4820 = vld [vmem:[%s4663 + $0x4e0] sm:$0xff]
    %v4821 = vld [vmem:[%s4663 + $0x4e8] sm:$0xff]
    %v4822 = vld [vmem:[%s4663 + $0x4f0] sm:$0xff]
    %v4823 = vld [vmem:[%s4663 + $0x4f8] sm:$0xff]
    %v4824 = vld [vmem:[%s4663 + $0x500] sm:$0xff]
    %v4825 = vld [vmem:[%s4663 + $0x508] sm:$0xff]
    %v4826 = vld [vmem:[%s4663 + $0x510] sm:$0xff]
    %v4827 = vld [vmem:[%s4663 + $0x518] sm:$0xff]
    %v4828 = vld [vmem:[%s4663 + $0x520] sm:$0xff]
    %v4829 = vld [vmem:[%s4663 + $0x528] sm:$0xff]
    %v4830 = vld [vmem:[%s4663 + $0x530] sm:$0xff]
    %v4831 = vld [vmem:[%s4663 + $0x538] sm:$0xff]
    %v4832 = vld [vmem:[%s4663 + $0x540] sm:$0xff]
    %v4833 = vld [vmem:[%s4663 + $0x548] sm:$0xff]
    %v4834 = vld [vmem:[%s4663 + $0x550] sm:$0xff]
    %v4835 = vld [vmem:[%s4663 + $0x558] sm:$0xff]
    %v4836 = vld [vmem:[%s4663 + $0x560] sm:$0xff]
    %v4837 = vld [vmem:[%s4663 + $0x568] sm:$0xff]
    %v4838 = vld [vmem:[%s4663 + $0x570] sm:$0xff]
    %v4839 = vld [vmem:[%s4663 + $0x578] sm:$0xff]
    %v4840 = vld [vmem:[%s4663 + $0x580] sm:$0xff]
    %v4841 = vld [vmem:[%s4663 + $0x588] sm:$0xff]
    %v4842 = vld [vmem:[%s4663 + $0x590] sm:$0xff]
    %v4843 = vld [vmem:[%s4663 + $0x598] sm:$0xff]
    %v4844 = vld [vmem:[%s4663 + $0x5a0] sm:$0xff]
    %v4845 = vld [vmem:[%s4663 + $0x5a8] sm:$0xff]
    %v4846 = vld [vmem:[%s4663 + $0x5b0] sm:$0xff]
    %v4847 = vld [vmem:[%s4663 + $0x5b8] sm:$0xff]
    %v4848 = vld [vmem:[%s4663 + $0x5c0] sm:$0xff]
    %v4849 = vld [vmem:[%s4663 + $0x5c8] sm:$0xff]
    %v4850 = vld [vmem:[%s4663 + $0x5d0] sm:$0xff]
    %v4851 = vld [vmem:[%s4663 + $0x5d8] sm:$0xff]
    %v4852 = vld [vmem:[%s4663 + $0x5e0] sm:$0xff]
    %v4853 = vld [vmem:[%s4663 + $0x5e8] sm:$0xff]
    %v4854 = vld [vmem:[%s4663 + $0x5f0] sm:$0xff]
    %v4855 = vld [vmem:[%s4663 + $0x5f8] sm:$0xff]
    %4856 = vmatprep.subr.mxu0 %v4665
    %4857 = vmatpush1.msra.mxu0 %v4664
    %4858 = vmatprep.subr.mxu0 %v4669
    %4859 = vmatpush1.msra.mxu0 %v4668
    %4860 = vmatprep.subr.mxu0 %v4673
    %4861 = vmatpush1.msra.mxu0 %v4672
    %4862 = vmatprep.subr.mxu0 %v4677
    %4863 = vmatpush1.msra.mxu0 %v4676
    %4864 = vmatprep.subr.mxu0 %v4681
    %4865 = vmatpush1.msra.mxu0 %v4680
    %4866 = vmatprep.subr.mxu0 %v4685
    %4867 = vmatpush1.msra.mxu0 %v4684
    %4868 = vmatprep.subr.mxu0 %v4689
    %4869 = vmatpush1.msra.mxu0 %v4688
    %4870 = vmatprep.subr.mxu0 %v4693
    %4871 = vmatpush1.msra.mxu0 %v4692
    %4872 = vmatprep.subr.mxu0 %v4697
    %4873 = vmatpush1.msra.mxu0 %v4696
    %4874 = vmatprep.subr.mxu0 %v4701
    %4875 = vmatpush1.msra.mxu0 %v4700
    %4876 = vmatprep.subr.mxu0 %v4705
    %4877 = vmatpush1.msra.mxu0 %v4704
    %4878 = vmatprep.subr.mxu0 %v4709
    %4879 = vmatpush1.msra.mxu0 %v4708
    %4880 = vmatprep.subr.mxu0 %v4713
    %4881 = vmatpush1.msra.mxu0 %v4712
    %4882 = vmatprep.subr.mxu0 %v4717
    %4883 = vmatpush1.msra.mxu0 %v4716
    %4884 = vmatprep.subr.mxu0 %v4721
    %4885 = vmatpush1.msra.mxu0 %v4720
    %4886 = vmatprep.subr.mxu0 %v4725
    %4887 = vmatpush1.msra.mxu0 %v4724
    %4888 = vmatprep.subr.mxu0 %v4729
    %4889 = vmatpush1.msra.mxu0 %v4728
    %4890 = vmatprep.subr.mxu0 %v4733
    %4891 = vmatpush1.msra.mxu0 %v4732
    %4892 = vmatprep.subr.mxu0 %v4737
    %4893 = vmatpush1.msra.mxu0 %v4736
    %4894 = vmatprep.subr.mxu0 %v4741
    %4895 = vmatpush1.msra.mxu0 %v4740
    %4896 = vmatprep.subr.mxu0 %v4745
    %4897 = vmatpush1.msra.mxu0 %v4744
    %4898 = vmatprep.subr.mxu0 %v4749
    %4899 = vmatpush1.msra.mxu0 %v4748
    %4900 = vmatprep.subr.mxu0 %v4753
    %4901 = vmatpush1.msra.mxu0 %v4752
    %4902 = vmatprep.subr.mxu0 %v4757
    %4903 = vmatpush1.msra.mxu0 %v4756
    %4904 = vmatprep.subr.mxu0 %v4761
    %4905 = vmatpush1.msra.mxu0 %v4760
    %4906 = vmatprep.subr.mxu0 %v4765
    %4907 = vmatpush1.msra.mxu0 %v4764
    %4908 = vmatprep.subr.mxu0 %v4769
    %4909 = vmatpush1.msra.mxu0 %v4768
    %4910 = vmatprep.subr.mxu0 %v4773
    %4911 = vmatpush1.msra.mxu0 %v4772
    %4912 = vmatprep.subr.mxu0 %v4777
    %4913 = vmatpush1.msra.mxu0 %v4776
    %4914 = vmatprep.subr.mxu0 %v4781
    %4915 = vmatpush1.msra.mxu0 %v4780
    %4916 = vmatprep.subr.mxu0 %v4785
    %4917 = vmatpush1.msra.mxu0 %v4784
    %4918 = vmatprep.subr.mxu0 %v4789
    %4919 = vmatpush1.msra.mxu0 %v4788
    %4920 = vmatprep.mubr.f32.mxu0 %v4637
    %4921 = vmatmul.mubr.f32.gmra.mrb[0].mxu0 %v4634
    %v4922 = vpop.f32.mrb[0].mxu0
    %v4923 = vadd.f32 0.0, %v4922
    %v4924 = vpop.f32.mrb[0].mxu0
    %v4925 = vadd.f32 0.0, %v4924
    %4926 = vmatprep.mubr.f32.mxu0 %v4656
    %4927 = vmatmul.mubr.f32.gmra.mrb[0].mxu0 %v4653
    %v4928 = vpop.f32.mrb[0].mxu0
    %v4929 = vadd.f32 0.0, %v4928
    %v4930 = vpop.f32.mrb[0].mxu0
    %v4931 = vadd.f32 0.0, %v4930
    %4932 = vdwg.mxu0
    %4933 = vmatprep.subr.mxu0 %v4793
    %4934 = vmatpush1.msra.mxu0 %v4792
    %4935 = vmatprep.subr.mxu0 %v4797
    %4936 = vmatpush1.msra.mxu0 %v4796
    %4937 = vmatprep.subr.mxu0 %v4801
    %4938 = vmatpush1.msra.mxu0 %v4800
    %4939 = vmatprep.subr.mxu0 %v4805
    %4940 = vmatpush1.msra.mxu0 %v4804
    %4941 = vmatprep.subr.mxu0 %v4809
    %4942 = vmatpush1.msra.mxu0 %v4808
    %4943 = vmatprep.subr.mxu0 %v4813
    %4944 = vmatpush1.msra.mxu0 %v4812
    %4945 = vmatprep.subr.mxu0 %v4817
    %4946 = vmatpush1.msra.mxu0 %v4816
    %4947 = vmatprep.subr.mxu0 %v4821
    %4948 = vmatpush1.msra.mxu0 %v4820
    %4949 = vmatprep.subr.mxu0 %v4825
    %4950 = vmatpush1.msra.mxu0 %v4824
    %4951 = vmatprep.subr.mxu0 %v4829
    %4952 = vmatpush1.msra.mxu0 %v4828
    %4953 = vmatprep.subr.mxu0 %v4833
    %4954 = vmatpush1.msra.mxu0 %v4832
    %4955 = vmatprep.subr.mxu0 %v4837
    %4956 = vmatpush1.msra.mxu0 %v4836
    %4957 = vmatprep.subr.mxu0 %v4841
    %4958 = vmatpush1.msra.mxu0 %v4840
    %4959 = vmatprep.subr.mxu0 %v4845
    %4960 = vmatpush1.msra.mxu0 %v4844
    %4961 = vmatprep.subr.mxu0 %v4849
    %4962 = vmatpush1.msra.mxu0 %v4848
    %4963 = vmatprep.subr.mxu0 %v4853
    %4964 = vmatpush1.msra.mxu0 %v4852
    %4965 = vmatprep.subr.mxu0 0.0
    %4966 = vmatpush1.msra.mxu0 0.0
    %4967 = vmatprep.subr.mxu0 0.0
    %4968 = vmatpush1.msra.mxu0 0.0
    %4969 = vmatprep.subr.mxu0 0.0
    %4970 = vmatpush1.msra.mxu0 0.0
    %4971 = vmatprep.subr.mxu0 0.0
    %4972 = vmatpush1.msra.mxu0 0.0
    %4973 = vmatprep.subr.mxu0 0.0
    %4974 = vmatpush1.msra.mxu0 0.0
    %4975 = vmatprep.subr.mxu0 0.0
    %4976 = vmatpush1.msra.mxu0 0.0
    %4977 = vmatprep.subr.mxu0 0.0
    %4978 = vmatpush1.msra.mxu0 0.0
    %4979 = vmatprep.subr.mxu0 0.0
    %4980 = vmatpush1.msra.mxu0 0.0
    %4981 = vmatprep.subr.mxu0 0.0
    %4982 = vmatpush1.msra.mxu0 0.0
    %4983 = vmatprep.subr.mxu0 0.0
    %4984 = vmatpush1.msra.mxu0 0.0
    %4985 = vmatprep.subr.mxu0 0.0
    %4986 = vmatpush1.msra.mxu0 0.0
    %4987 = vmatprep.subr.mxu0 0.0
    %4988 = vmatpush1.msra.mxu0 0.0
    %4989 = vmatprep.subr.mxu0 0.0
    %4990 = vmatpush1.msra.mxu0 0.0
    %4991 = vmatprep.subr.mxu0 0.0
    %4992 = vmatpush1.msra.mxu0 0.0
    %4993 = vmatprep.subr.mxu0 0.0
    %4994 = vmatpush1.msra.mxu0 0.0
    %4995 = vmatprep.subr.mxu0 0.0
    %4996 = vmatpush1.msra.mxu0 0.0
    %4997 = vmatprep.mubr.f32.mxu0 0.0
    %4998 = vmatmul.mubr.f32.gmra.mrb[0].mxu0 %v4640
    %v4999 = vpop.f32.mrb[0].mxu0
    %v5000 = vadd.f32 %v4923, %v4999
    %v5001 = vpop.f32.mrb[0].mxu0
    %v5002 = vadd.f32 %v4925, %v5001
    %5003 = vmatprep.mubr.f32.mxu0 0.0
    %5004 = vmatmul.mubr.f32.gmra.mrb[0].mxu0 %v4659
    %v5005 = vpop.f32.mrb[0].mxu0
    %v5006 = vadd.f32 %v4929, %v5005
    %v5007 = vpop.f32.mrb[0].mxu0
    %v5008 = vadd.f32 %v4931, %v5007
    %5009 = vdwg.mxu0
    %5010 = vmatprep.subr.mxu0 %v4667
    %5011 = vmatpush1.msra.mxu0 %v4666
    %5012 = vmatprep.subr.mxu0 %v4671
    %5013 = vmatpush1.msra.mxu0 %v4670
    %5014 = vmatprep.subr.mxu0 %v4675
    %5015 = vmatpush1.msra.mxu0 %v4674
    %5016 = vmatprep.subr.mxu0 %v4679
    %5017 = vmatpush1.msra.mxu0 %v4678
    %5018 = vmatprep.subr.mxu0 %v4683
    %5019 = vmatpush1.msra.mxu0 %v4682
    %5020 = vmatprep.subr.mxu0 %v4687
    %5021 = vmatpush1.msra.mxu0 %v4686
    %5022 = vmatprep.subr.mxu0 %v4691
    %5023 = vmatpush1.msra.mxu0 %v4690
    %5024 = vmatprep.subr.mxu0 %v4695
    %5025 = vmatpush1.msra.mxu0 %v4694
    %5026 = vmatprep.subr.mxu0 %v4699
    %5027 = vmatpush1.msra.mxu0 %v4698
    %5028 = vmatprep.subr.mxu0 %v4703
    %5029 = vmatpush1.msra.mxu0 %v4702
    %5030 = vmatprep.subr.mxu0 %v4707
    %5031 = vmatpush1.msra.mxu0 %v4706
    %5032 = vmatprep.subr.mxu0 %v4711
    %5033 = vmatpush1.msra.mxu0 %v4710
    %5034 = vmatprep.subr.mxu0 %v4715
    %5035 = vmatpush1.msra.mxu0 %v4714
    %5036 = vmatprep.subr.mxu0 %v4719
    %5037 = vmatpush1.msra.mxu0 %v4718
    %5038 = vmatprep.subr.mxu0 %v4723
    %5039 = vmatpush1.msra.mxu0 %v4722
    %5040 = vmatprep.subr.mxu0 %v4727
    %5041 = vmatpush1.msra.mxu0 %v4726
    %5042 = vmatprep.subr.mxu0 %v4731
    %5043 = vmatpush1.msra.mxu0 %v4730
    %5044 = vmatprep.subr.mxu0 %v4735
    %5045 = vmatpush1.msra.mxu0 %v4734
    %5046 = vmatprep.subr.mxu0 %v4739
    %5047 = vmatpush1.msra.mxu0 %v4738
    %5048 = vmatprep.subr.mxu0 %v4743
    %5049 = vmatpush1.msra.mxu0 %v4742
    %5050 = vmatprep.subr.mxu0 %v4747
    %5051 = vmatpush1.msra.mxu0 %v4746
    %5052 = vmatprep.subr.mxu0 %v4751
    %5053 = vmatpush1.msra.mxu0 %v4750
    %5054 = vmatprep.subr.mxu0 %v4755
    %5055 = vmatpush1.msra.mxu0 %v4754
    %5056 = vmatprep.subr.mxu0 %v4759
    %5057 = vmatpush1.msra.mxu0 %v4758
    %5058 = vmatprep.subr.mxu0 %v4763
    %5059 = vmatpush1.msra.mxu0 %v4762
    %5060 = vmatprep.subr.mxu0 %v4767
    %5061 = vmatpush1.msra.mxu0 %v4766
    %5062 = vmatprep.subr.mxu0 %v4771
    %5063 = vmatpush1.msra.mxu0 %v4770
    %5064 = vmatprep.subr.mxu0 %v4775
    %5065 = vmatpush1.msra.mxu0 %v4774
    %5066 = vmatprep.subr.mxu0 %v4779
    %5067 = vmatpush1.msra.mxu0 %v4778
    %5068 = vmatprep.subr.mxu0 %v4783
    %5069 = vmatpush1.msra.mxu0 %v4782
    %5070 = vmatprep.subr.mxu0 %v4787
    %5071 = vmatpush1.msra.mxu0 %v4786
    %5072 = vmatprep.subr.mxu0 %v4791
    %5073 = vmatpush1.msra.mxu0 %v4790
    %5074 = vmatprep.mubr.f32.mxu0 %v4637
    %5075 = vmatmul.mubr.f32.gmra.mrb[0].mxu0 %v4634
    %v5076 = vpop.f32.mrb[0].mxu0
    %v5077 = vadd.f32 0.0, %v5076
    %v5078 = vpop.f32.mrb[0].mxu0
    %v5079 = vadd.f32 0.0, %v5078
    %5080 = vmatprep.mubr.f32.mxu0 %v4656
    %5081 = vmatmul.mubr.f32.gmra.mrb[0].mxu0 %v4653
    %v5082 = vpop.f32.mrb[0].mxu0
    %v5083 = vadd.f32 0.0, %v5082
    %v5084 = vpop.f32.mrb[0].mxu0
    %v5085 = vadd.f32 0.0, %v5084
    %5086 = vdwg.mxu0
    %5087 = vmatprep.subr.mxu0 %v4795
    %5088 = vmatpush1.msra.mxu0 %v4794
    %5089 = vmatprep.subr.mxu0 %v4799
    %5090 = vmatpush1.msra.mxu0 %v4798
    %5091 = vmatprep.subr.mxu0 %v4803
    %5092 = vmatpush1.msra.mxu0 %v4802
    %5093 = vmatprep.subr.mxu0 %v4807
    %5094 = vmatpush1.msra.mxu0 %v4806
    %5095 = vmatprep.subr.mxu0 %v4811
    %5096 = vmatpush1.msra.mxu0 %v4810
    %5097 = vmatprep.subr.mxu0 %v4815
    %5098 = vmatpush1.msra.mxu0 %v4814
    %5099 = vmatprep.subr.mxu0 %v4819
    %5100 = vmatpush1.msra.mxu0 %v4818
    %5101 = vmatprep.subr.mxu0 %v4823
    %5102 = vmatpush1.msra.mxu0 %v4822
    %5103 = vmatprep.subr.mxu0 %v4827
    %5104 = vmatpush1.msra.mxu0 %v4826
    %5105 = vmatprep.subr.mxu0 %v4831
    %5106 = vmatpush1.msra.mxu0 %v4830
    %5107 = vmatprep.subr.mxu0 %v4835
    %5108 = vmatpush1.msra.mxu0 %v4834
    %5109 = vmatprep.subr.mxu0 %v4839
    %5110 = vmatpush1.msra.mxu0 %v4838
    %5111 = vmatprep.subr.mxu0 %v4843
    %5112 = vmatpush1.msra.mxu0 %v4842
    %5113 = vmatprep.subr.mxu0 %v4847
    %5114 = vmatpush1.msra.mxu0 %v4846
    %5115 = vmatprep.subr.mxu0 %v4851
    %5116 = vmatpush1.msra.mxu0 %v4850
    %5117 = vmatprep.subr.mxu0 %v4855
    %5118 = vmatpush1.msra.mxu0 %v4854
    %5119 = vmatprep.subr.mxu0 0.0
    %5120 = vmatpush1.msra.mxu0 0.0
    %5121 = vmatprep.subr.mxu0 0.0
    %5122 = vmatpush1.msra.mxu0 0.0
    %5123 = vmatprep.subr.mxu0 0.0
    %5124 = vmatpush1.msra.mxu0 0.0
    %5125 = vmatprep.subr.mxu0 0.0
    %5126 = vmatpush1.msra.mxu0 0.0
    %5127 = vmatprep.subr.mxu0 0.0
    %5128 = vmatpush1.msra.mxu0 0.0
    %5129 = vmatprep.subr.mxu0 0.0
    %5130 = vmatpush1.msra.mxu0 0.0
    %5131 = vmatprep.subr.mxu0 0.0
    %5132 = vmatpush1.msra.mxu0 0.0
    %5133 = vmatprep.subr.mxu0 0.0
    %5134 = vmatpush1.msra.mxu0 0.0
    %5135 = vmatprep.subr.mxu0 0.0
    %5136 = vmatpush1.msra.mxu0 0.0
    %5137 = vmatprep.subr.mxu0 0.0
    %5138 = vmatpush1.msra.mxu0 0.0
    %5139 = vmatprep.subr.mxu0 0.0
    %5140 = vmatpush1.msra.mxu0 0.0
    %5141 = vmatprep.subr.mxu0 0.0
    %5142 = vmatpush1.msra.mxu0 0.0
    %5143 = vmatprep.subr.mxu0 0.0
    %5144 = vmatpush1.msra.mxu0 0.0
    %5145 = vmatprep.subr.mxu0 0.0
    %5146 = vmatpush1.msra.mxu0 0.0
    %5147 = vmatprep.subr.mxu0 0.0
    %5148 = vmatpush1.msra.mxu0 0.0
    %5149 = vmatprep.subr.mxu0 0.0
    %5150 = vmatpush1.msra.mxu0 0.0
    %5151 = vmatprep.mubr.f32.mxu0 0.0
    %5152 = vmatmul.mubr.f32.gmra.mrb[0].mxu0 %v4640
    %v5153 = vpop.f32.mrb[0].mxu0
    %v5154 = vadd.f32 %v5077, %v5153
    %v5155 = vpop.f32.mrb[0].mxu0
    %v5156 = vadd.f32 %v5079, %v5155
    %5157 = vmatprep.mubr.f32.mxu0 0.0
    %5158 = vmatmul.mubr.f32.gmra.mrb[0].mxu0 %v4659
    %v5159 = vpop.f32.mrb[0].mxu0
    %v5160 = vadd.f32 %v5083, %v5159
    %v5161 = vpop.f32.mrb[0].mxu0
    %v5162 = vadd.f32 %v5085, %v5161
    %5163 = vdwg.mxu0
    %v5164 = vadd.f32 %v4605, %v5000
    %v5165 = vadd.f32 %v4606, %v5002
    %v5166 = vadd.f32 %v4607, %v5154
    %v5167 = vadd.f32 %v4608, %v5156
    %v5168 = vadd.f32 %v4609, %v5006
    %v5169 = vadd.f32 %v4610, %v5008
    %v5170 = vadd.f32 %v4611, %v5160
    %v5171 = vadd.f32 %v4612, %v5162
    %v5172 = vld [vmem:[#allocation2] sm:$0xf0]
    %v5173 = vld [vmem:[#allocation2 + $0x8] sm:$0xf0]
    %v5174 = vld [vmem:[#allocation2 + $0x10] sm:$0xf0]
    %v5175 = vld [vmem:[#allocation2 + $0x18] sm:$0xf]
    %v5176 = vld [vmem:[#allocation2 + $0x20] sm:$0xf]
    %v5177 = vld [vmem:[#allocation2 + $0x28] sm:$0xf]
    %v5178 = vld [vmem:[#allocation2 + $0x30] sm:$0xff]
    %v5179 = vld [vmem:[#allocation2 + $0x38] sm:$0xff]
    %v5180 = vld [vmem:[#allocation2 + $0x40] sm:$0xff]
    %v5187 = vrot.slane %v5172, 4
    %v5188 = vrot.slane %v5175, 4
    %v5189 = vsel %vm284, %v5187, %v5188
    %v5190 = vrot.slane %v5173, 4
    %v5191 = vrot.slane %v5176, 4
    %v5192 = vsel %vm284, %v5190, %v5191
    %v5193 = vrot.slane %v5174, 4
    %v5194 = vrot.slane %v5177, 4
    %v5195 = vsel %vm284, %v5193, %v5194
    %s5199 = scalar_lea.vmem [#allocation8], 6144
    %v5200 = vld [vmem:[%s5199] sm:$0xff]
    %v5201 = vld [vmem:[%s5199 + $0x8] sm:$0xff]
    %v5202 = vld [vmem:[%s5199 + $0x10] sm:$0xff]
    %v5203 = vld [vmem:[%s5199 + $0x18] sm:$0xff]
    %v5204 = vld [vmem:[%s5199 + $0x20] sm:$0xff]
    %v5205 = vld [vmem:[%s5199 + $0x28] sm:$0xff]
    %v5206 = vld [vmem:[%s5199 + $0x30] sm:$0xff]
    %v5207 = vld [vmem:[%s5199 + $0x38] sm:$0xff]
    %v5208 = vld [vmem:[%s5199 + $0x40] sm:$0xff]
    %v5209 = vld [vmem:[%s5199 + $0x48] sm:$0xff]
    %v5210 = vld [vmem:[%s5199 + $0x50] sm:$0xff]
    %v5211 = vld [vmem:[%s5199 + $0x58] sm:$0xff]
    %v5212 = vld [vmem:[%s5199 + $0x60] sm:$0xff]
    %v5213 = vld [vmem:[%s5199 + $0x68] sm:$0xff]
    %v5214 = vld [vmem:[%s5199 + $0x70] sm:$0xff]
    %v5215 = vld [vmem:[%s5199 + $0x78] sm:$0xff]
    %v5216 = vld [vmem:[%s5199 + $0x80] sm:$0xff]
    %v5217 = vld [vmem:[%s5199 + $0x88] sm:$0xff]
    %v5218 = vld [vmem:[%s5199 + $0x90] sm:$0xff]
    %v5219 = vld [vmem:[%s5199 + $0x98] sm:$0xff]
    %v5220 = vld [vmem:[%s5199 + $0xa0] sm:$0xff]
    %v5221 = vld [vmem:[%s5199 + $0xa8] sm:$0xff]
    %v5222 = vld [vmem:[%s5199 + $0xb0] sm:$0xff]
    %v5223 = vld [vmem:[%s5199 + $0xb8] sm:$0xff]
    %v5224 = vld [vmem:[%s5199 + $0xc0] sm:$0xff]
    %v5225 = vld [vmem:[%s5199 + $0xc8] sm:$0xff]
    %v5226 = vld [vmem:[%s5199 + $0xd0] sm:$0xff]
    %v5227 = vld [vmem:[%s5199 + $0xd8] sm:$0xff]
    %v5228 = vld [vmem:[%s5199 + $0xe0] sm:$0xff]
    %v5229 = vld [vmem:[%s5199 + $0xe8] sm:$0xff]
    %v5230 = vld [vmem:[%s5199 + $0xf0] sm:$0xff]
    %v5231 = vld [vmem:[%s5199 + $0xf8] sm:$0xff]
    %v5232 = vld [vmem:[%s5199 + $0x100] sm:$0xff]
    %v5233 = vld [vmem:[%s5199 + $0x108] sm:$0xff]
    %v5234 = vld [vmem:[%s5199 + $0x110] sm:$0xff]
    %v5235 = vld [vmem:[%s5199 + $0x118] sm:$0xff]
    %v5236 = vld [vmem:[%s5199 + $0x120] sm:$0xff]
    %v5237 = vld [vmem:[%s5199 + $0x128] sm:$0xff]
    %v5238 = vld [vmem:[%s5199 + $0x130] sm:$0xff]
    %v5239 = vld [vmem:[%s5199 + $0x138] sm:$0xff]
    %v5240 = vld [vmem:[%s5199 + $0x140] sm:$0xff]
    %v5241 = vld [vmem:[%s5199 + $0x148] sm:$0xff]
    %v5242 = vld [vmem:[%s5199 + $0x150] sm:$0xff]
    %v5243 = vld [vmem:[%s5199 + $0x158] sm:$0xff]
    %v5244 = vld [vmem:[%s5199 + $0x160] sm:$0xff]
    %v5245 = vld [vmem:[%s5199 + $0x168] sm:$0xff]
    %v5246 = vld [vmem:[%s5199 + $0x170] sm:$0xff]
    %v5247 = vld [vmem:[%s5199 + $0x178] sm:$0xff]
    %v5248 = vld [vmem:[%s5199 + $0x180] sm:$0xff]
    %v5249 = vld [vmem:[%s5199 + $0x188] sm:$0xff]
    %v5250 = vld [vmem:[%s5199 + $0x190] sm:$0xff]
    %v5251 = vld [vmem:[%s5199 + $0x198] sm:$0xff]
    %v5252 = vld [vmem:[%s5199 + $0x1a0] sm:$0xff]
    %v5253 = vld [vmem:[%s5199 + $0x1a8] sm:$0xff]
    %v5254 = vld [vmem:[%s5199 + $0x1b0] sm:$0xff]
    %v5255 = vld [vmem:[%s5199 + $0x1b8] sm:$0xff]
    %v5256 = vld [vmem:[%s5199 + $0x1c0] sm:$0xff]
    %v5257 = vld [vmem:[%s5199 + $0x1c8] sm:$0xff]
    %v5258 = vld [vmem:[%s5199 + $0x1d0] sm:$0xff]
    %v5259 = vld [vmem:[%s5199 + $0x1d8] sm:$0xff]
    %v5260 = vld [vmem:[%s5199 + $0x1e0] sm:$0xff]
    %v5261 = vld [vmem:[%s5199 + $0x1e8] sm:$0xff]
    %v5262 = vld [vmem:[%s5199 + $0x1f0] sm:$0xff]
    %v5263 = vld [vmem:[%s5199 + $0x1f8] sm:$0xff]
    %v5264 = vld [vmem:[%s5199 + $0x200] sm:$0xff]
    %v5265 = vld [vmem:[%s5199 + $0x208] sm:$0xff]
    %v5266 = vld [vmem:[%s5199 + $0x210] sm:$0xff]
    %v5267 = vld [vmem:[%s5199 + $0x218] sm:$0xff]
    %v5268 = vld [vmem:[%s5199 + $0x220] sm:$0xff]
    %v5269 = vld [vmem:[%s5199 + $0x228] sm:$0xff]
    %v5270 = vld [vmem:[%s5199 + $0x230] sm:$0xff]
    %v5271 = vld [vmem:[%s5199 + $0x238] sm:$0xff]
    %v5272 = vld [vmem:[%s5199 + $0x240] sm:$0xff]
    %v5273 = vld [vmem:[%s5199 + $0x248] sm:$0xff]
    %v5274 = vld [vmem:[%s5199 + $0x250] sm:$0xff]
    %v5275 = vld [vmem:[%s5199 + $0x258] sm:$0xff]
    %v5276 = vld [vmem:[%s5199 + $0x260] sm:$0xff]
    %v5277 = vld [vmem:[%s5199 + $0x268] sm:$0xff]
    %v5278 = vld [vmem:[%s5199 + $0x270] sm:$0xff]
    %v5279 = vld [vmem:[%s5199 + $0x278] sm:$0xff]
    %v5280 = vld [vmem:[%s5199 + $0x280] sm:$0xff]
    %v5281 = vld [vmem:[%s5199 + $0x288] sm:$0xff]
    %v5282 = vld [vmem:[%s5199 + $0x290] sm:$0xff]
    %v5283 = vld [vmem:[%s5199 + $0x298] sm:$0xff]
    %v5284 = vld [vmem:[%s5199 + $0x2a0] sm:$0xff]
    %v5285 = vld [vmem:[%s5199 + $0x2a8] sm:$0xff]
    %v5286 = vld [vmem:[%s5199 + $0x2b0] sm:$0xff]
    %v5287 = vld [vmem:[%s5199 + $0x2b8] sm:$0xff]
    %v5288 = vld [vmem:[%s5199 + $0x2c0] sm:$0xff]
    %v5289 = vld [vmem:[%s5199 + $0x2c8] sm:$0xff]
    %v5290 = vld [vmem:[%s5199 + $0x2d0] sm:$0xff]
    %v5291 = vld [vmem:[%s5199 + $0x2d8] sm:$0xff]
    %v5292 = vld [vmem:[%s5199 + $0x2e0] sm:$0xff]
    %v5293 = vld [vmem:[%s5199 + $0x2e8] sm:$0xff]
    %v5294 = vld [vmem:[%s5199 + $0x2f0] sm:$0xff]
    %v5295 = vld [vmem:[%s5199 + $0x2f8] sm:$0xff]
    %v5296 = vld [vmem:[%s5199 + $0x300] sm:$0xff]
    %v5297 = vld [vmem:[%s5199 + $0x308] sm:$0xff]
    %v5298 = vld [vmem:[%s5199 + $0x310] sm:$0xff]
    %v5299 = vld [vmem:[%s5199 + $0x318] sm:$0xff]
    %v5300 = vld [vmem:[%s5199 + $0x320] sm:$0xff]
    %v5301 = vld [vmem:[%s5199 + $0x328] sm:$0xff]
    %v5302 = vld [vmem:[%s5199 + $0x330] sm:$0xff]
    %v5303 = vld [vmem:[%s5199 + $0x338] sm:$0xff]
    %v5304 = vld [vmem:[%s5199 + $0x340] sm:$0xff]
    %v5305 = vld [vmem:[%s5199 + $0x348] sm:$0xff]
    %v5306 = vld [vmem:[%s5199 + $0x350] sm:$0xff]
    %v5307 = vld [vmem:[%s5199 + $0x358] sm:$0xff]
    %v5308 = vld [vmem:[%s5199 + $0x360] sm:$0xff]
    %v5309 = vld [vmem:[%s5199 + $0x368] sm:$0xff]
    %v5310 = vld [vmem:[%s5199 + $0x370] sm:$0xff]
    %v5311 = vld [vmem:[%s5199 + $0x378] sm:$0xff]
    %v5312 = vld [vmem:[%s5199 + $0x380] sm:$0xff]
    %v5313 = vld [vmem:[%s5199 + $0x388] sm:$0xff]
    %v5314 = vld [vmem:[%s5199 + $0x390] sm:$0xff]
    %v5315 = vld [vmem:[%s5199 + $0x398] sm:$0xff]
    %v5316 = vld [vmem:[%s5199 + $0x3a0] sm:$0xff]
    %v5317 = vld [vmem:[%s5199 + $0x3a8] sm:$0xff]
    %v5318 = vld [vmem:[%s5199 + $0x3b0] sm:$0xff]
    %v5319 = vld [vmem:[%s5199 + $0x3b8] sm:$0xff]
    %v5320 = vld [vmem:[%s5199 + $0x3c0] sm:$0xff]
    %v5321 = vld [vmem:[%s5199 + $0x3c8] sm:$0xff]
    %v5322 = vld [vmem:[%s5199 + $0x3d0] sm:$0xff]
    %v5323 = vld [vmem:[%s5199 + $0x3d8] sm:$0xff]
    %v5324 = vld [vmem:[%s5199 + $0x3e0] sm:$0xff]
    %v5325 = vld [vmem:[%s5199 + $0x3e8] sm:$0xff]
    %v5326 = vld [vmem:[%s5199 + $0x3f0] sm:$0xff]
    %v5327 = vld [vmem:[%s5199 + $0x3f8] sm:$0xff]
    %v5328 = vld [vmem:[%s5199 + $0x400] sm:$0xff]
    %v5329 = vld [vmem:[%s5199 + $0x408] sm:$0xff]
    %v5330 = vld [vmem:[%s5199 + $0x410] sm:$0xff]
    %v5331 = vld [vmem:[%s5199 + $0x418] sm:$0xff]
    %v5332 = vld [vmem:[%s5199 + $0x420] sm:$0xff]
    %v5333 = vld [vmem:[%s5199 + $0x428] sm:$0xff]
    %v5334 = vld [vmem:[%s5199 + $0x430] sm:$0xff]
    %v5335 = vld [vmem:[%s5199 + $0x438] sm:$0xff]
    %v5336 = vld [vmem:[%s5199 + $0x440] sm:$0xff]
    %v5337 = vld [vmem:[%s5199 + $0x448] sm:$0xff]
    %v5338 = vld [vmem:[%s5199 + $0x450] sm:$0xff]
    %v5339 = vld [vmem:[%s5199 + $0x458] sm:$0xff]
    %v5340 = vld [vmem:[%s5199 + $0x460] sm:$0xff]
    %v5341 = vld [vmem:[%s5199 + $0x468] sm:$0xff]
    %v5342 = vld [vmem:[%s5199 + $0x470] sm:$0xff]
    %v5343 = vld [vmem:[%s5199 + $0x478] sm:$0xff]
    %v5344 = vld [vmem:[%s5199 + $0x480] sm:$0xff]
    %v5345 = vld [vmem:[%s5199 + $0x488] sm:$0xff]
    %v5346 = vld [vmem:[%s5199 + $0x490] sm:$0xff]
    %v5347 = vld [vmem:[%s5199 + $0x498] sm:$0xff]
    %v5348 = vld [vmem:[%s5199 + $0x4a0] sm:$0xff]
    %v5349 = vld [vmem:[%s5199 + $0x4a8] sm:$0xff]
    %v5350 = vld [vmem:[%s5199 + $0x4b0] sm:$0xff]
    %v5351 = vld [vmem:[%s5199 + $0x4b8] sm:$0xff]
    %v5352 = vld [vmem:[%s5199 + $0x4c0] sm:$0xff]
    %v5353 = vld [vmem:[%s5199 + $0x4c8] sm:$0xff]
    %v5354 = vld [vmem:[%s5199 + $0x4d0] sm:$0xff]
    %v5355 = vld [vmem:[%s5199 + $0x4d8] sm:$0xff]
    %v5356 = vld [vmem:[%s5199 + $0x4e0] sm:$0xff]
    %v5357 = vld [vmem:[%s5199 + $0x4e8] sm:$0xff]
    %v5358 = vld [vmem:[%s5199 + $0x4f0] sm:$0xff]
    %v5359 = vld [vmem:[%s5199 + $0x4f8] sm:$0xff]
    %v5360 = vld [vmem:[%s5199 + $0x500] sm:$0xff]
    %v5361 = vld [vmem:[%s5199 + $0x508] sm:$0xff]
    %v5362 = vld [vmem:[%s5199 + $0x510] sm:$0xff]
    %v5363 = vld [vmem:[%s5199 + $0x518] sm:$0xff]
    %v5364 = vld [vmem:[%s5199 + $0x520] sm:$0xff]
    %v5365 = vld [vmem:[%s5199 + $0x528] sm:$0xff]
    %v5366 = vld [vmem:[%s5199 + $0x530] sm:$0xff]
    %v5367 = vld [vmem:[%s5199 + $0x538] sm:$0xff]
    %v5368 = vld [vmem:[%s5199 + $0x540] sm:$0xff]
    %v5369 = vld [vmem:[%s5199 + $0x548] sm:$0xff]
    %v5370 = vld [vmem:[%s5199 + $0x550] sm:$0xff]
    %v5371 = vld [vmem:[%s5199 + $0x558] sm:$0xff]
    %v5372 = vld [vmem:[%s5199 + $0x560] sm:$0xff]
    %v5373 = vld [vmem:[%s5199 + $0x568] sm:$0xff]
    %v5374 = vld [vmem:[%s5199 + $0x570] sm:$0xff]
    %v5375 = vld [vmem:[%s5199 + $0x578] sm:$0xff]
    %v5376 = vld [vmem:[%s5199 + $0x580] sm:$0xff]
    %v5377 = vld [vmem:[%s5199 + $0x588] sm:$0xff]
    %v5378 = vld [vmem:[%s5199 + $0x590] sm:$0xff]
    %v5379 = vld [vmem:[%s5199 + $0x598] sm:$0xff]
    %v5380 = vld [vmem:[%s5199 + $0x5a0] sm:$0xff]
    %v5381 = vld [vmem:[%s5199 + $0x5a8] sm:$0xff]
    %v5382 = vld [vmem:[%s5199 + $0x5b0] sm:$0xff]
    %v5383 = vld [vmem:[%s5199 + $0x5b8] sm:$0xff]
    %v5384 = vld [vmem:[%s5199 + $0x5c0] sm:$0xff]
    %v5385 = vld [vmem:[%s5199 + $0x5c8] sm:$0xff]
    %v5386 = vld [vmem:[%s5199 + $0x5d0] sm:$0xff]
    %v5387 = vld [vmem:[%s5199 + $0x5d8] sm:$0xff]
    %v5388 = vld [vmem:[%s5199 + $0x5e0] sm:$0xff]
    %v5389 = vld [vmem:[%s5199 + $0x5e8] sm:$0xff]
    %v5390 = vld [vmem:[%s5199 + $0x5f0] sm:$0xff]
    %v5391 = vld [vmem:[%s5199 + $0x5f8] sm:$0xff]
    %5392 = vmatprep.subr.mxu0 %v5201
    %5393 = vmatpush1.msra.mxu0 %v5200
    %5394 = vmatprep.subr.mxu0 %v5205
    %5395 = vmatpush1.msra.mxu0 %v5204
    %5396 = vmatprep.subr.mxu0 %v5209
    %5397 = vmatpush1.msra.mxu0 %v5208
    %5398 = vmatprep.subr.mxu0 %v5213
    %5399 = vmatpush1.msra.mxu0 %v5212
    %5400 = vmatprep.subr.mxu0 %v5217
    %5401 = vmatpush1.msra.mxu0 %v5216
    %5402 = vmatprep.subr.mxu0 %v5221
    %5403 = vmatpush1.msra.mxu0 %v5220
    %5404 = vmatprep.subr.mxu0 %v5225
    %5405 = vmatpush1.msra.mxu0 %v5224
    %5406 = vmatprep.subr.mxu0 %v5229
    %5407 = vmatpush1.msra.mxu0 %v5228
    %5408 = vmatprep.subr.mxu0 %v5233
    %5409 = vmatpush1.msra.mxu0 %v5232
    %5410 = vmatprep.subr.mxu0 %v5237
    %5411 = vmatpush1.msra.mxu0 %v5236
    %5412 = vmatprep.subr.mxu0 %v5241
    %5413 = vmatpush1.msra.mxu0 %v5240
    %5414 = vmatprep.subr.mxu0 %v5245
    %5415 = vmatpush1.msra.mxu0 %v5244
    %5416 = vmatprep.subr.mxu0 %v5249
    %5417 = vmatpush1.msra.mxu0 %v5248
    %5418 = vmatprep.subr.mxu0 %v5253
    %5419 = vmatpush1.msra.mxu0 %v5252
    %5420 = vmatprep.subr.mxu0 %v5257
    %5421 = vmatpush1.msra.mxu0 %v5256
    %5422 = vmatprep.subr.mxu0 %v5261
    %5423 = vmatpush1.msra.mxu0 %v5260
    %5424 = vmatprep.subr.mxu0 %v5265
    %5425 = vmatpush1.msra.mxu0 %v5264
    %5426 = vmatprep.subr.mxu0 %v5269
    %5427 = vmatpush1.msra.mxu0 %v5268
    %5428 = vmatprep.subr.mxu0 %v5273
    %5429 = vmatpush1.msra.mxu0 %v5272
    %5430 = vmatprep.subr.mxu0 %v5277
    %5431 = vmatpush1.msra.mxu0 %v5276
    %5432 = vmatprep.subr.mxu0 %v5281
    %5433 = vmatpush1.msra.mxu0 %v5280
    %5434 = vmatprep.subr.mxu0 %v5285
    %5435 = vmatpush1.msra.mxu0 %v5284
    %5436 = vmatprep.subr.mxu0 %v5289
    %5437 = vmatpush1.msra.mxu0 %v5288
    %5438 = vmatprep.subr.mxu0 %v5293
    %5439 = vmatpush1.msra.mxu0 %v5292
    %5440 = vmatprep.subr.mxu0 %v5297
    %5441 = vmatpush1.msra.mxu0 %v5296
    %5442 = vmatprep.subr.mxu0 %v5301
    %5443 = vmatpush1.msra.mxu0 %v5300
    %5444 = vmatprep.subr.mxu0 %v5305
    %5445 = vmatpush1.msra.mxu0 %v5304
    %5446 = vmatprep.subr.mxu0 %v5309
    %5447 = vmatpush1.msra.mxu0 %v5308
    %5448 = vmatprep.subr.mxu0 %v5313
    %5449 = vmatpush1.msra.mxu0 %v5312
    %5450 = vmatprep.subr.mxu0 %v5317
    %5451 = vmatpush1.msra.mxu0 %v5316
    %5452 = vmatprep.subr.mxu0 %v5321
    %5453 = vmatpush1.msra.mxu0 %v5320
    %5454 = vmatprep.subr.mxu0 %v5325
    %5455 = vmatpush1.msra.mxu0 %v5324
    %5456 = vmatprep.mubr.f32.mxu0 %v5192
    %5457 = vmatmul.mubr.f32.gmra.mrb[0].mxu0 %v5189
    %v5458 = vpop.f32.mrb[0].mxu0
    %v5459 = vadd.f32 0.0, %v5458
    %v5460 = vpop.f32.mrb[0].mxu0
    %v5461 = vadd.f32 0.0, %v5460
    %5462 = vmatprep.mubr.f32.mxu0 %v5179
    %5463 = vmatmul.mubr.f32.gmra.mrb[0].mxu0 %v5178
    %v5464 = vpop.f32.mrb[0].mxu0
    %v5465 = vadd.f32 0.0, %v5464
    %v5466 = vpop.f32.mrb[0].mxu0
    %v5467 = vadd.f32 0.0, %v5466
    %5468 = vdwg.mxu0
    %5469 = vmatprep.subr.mxu0 %v5329
    %5470 = vmatpush1.msra.mxu0 %v5328
    %5471 = vmatprep.subr.mxu0 %v5333
    %5472 = vmatpush1.msra.mxu0 %v5332
    %5473 = vmatprep.subr.mxu0 %v5337
    %5474 = vmatpush1.msra.mxu0 %v5336
    %5475 = vmatprep.subr.mxu0 %v5341
    %5476 = vmatpush1.msra.mxu0 %v5340
    %5477 = vmatprep.subr.mxu0 %v5345
    %5478 = vmatpush1.msra.mxu0 %v5344
    %5479 = vmatprep.subr.mxu0 %v5349
    %5480 = vmatpush1.msra.mxu0 %v5348
    %5481 = vmatprep.subr.mxu0 %v5353
    %5482 = vmatpush1.msra.mxu0 %v5352
    %5483 = vmatprep.subr.mxu0 %v5357
    %5484 = vmatpush1.msra.mxu0 %v5356
    %5485 = vmatprep.subr.mxu0 %v5361
    %5486 = vmatpush1.msra.mxu0 %v5360
    %5487 = vmatprep.subr.mxu0 %v5365
    %5488 = vmatpush1.msra.mxu0 %v5364
    %5489 = vmatprep.subr.mxu0 %v5369
    %5490 = vmatpush1.msra.mxu0 %v5368
    %5491 = vmatprep.subr.mxu0 %v5373
    %5492 = vmatpush1.msra.mxu0 %v5372
    %5493 = vmatprep.subr.mxu0 %v5377
    %5494 = vmatpush1.msra.mxu0 %v5376
    %5495 = vmatprep.subr.mxu0 %v5381
    %5496 = vmatpush1.msra.mxu0 %v5380
    %5497 = vmatprep.subr.mxu0 %v5385
    %5498 = vmatpush1.msra.mxu0 %v5384
    %5499 = vmatprep.subr.mxu0 %v5389
    %5500 = vmatpush1.msra.mxu0 %v5388
    %5501 = vmatprep.subr.mxu0 0.0
    %5502 = vmatpush1.msra.mxu0 0.0
    %5503 = vmatprep.subr.mxu0 0.0
    %5504 = vmatpush1.msra.mxu0 0.0
    %5505 = vmatprep.subr.mxu0 0.0
    %5506 = vmatpush1.msra.mxu0 0.0
    %5507 = vmatprep.subr.mxu0 0.0
    %5508 = vmatpush1.msra.mxu0 0.0
    %5509 = vmatprep.subr.mxu0 0.0
    %5510 = vmatpush1.msra.mxu0 0.0
    %5511 = vmatprep.subr.mxu0 0.0
    %5512 = vmatpush1.msra.mxu0 0.0
    %5513 = vmatprep.subr.mxu0 0.0
    %5514 = vmatpush1.msra.mxu0 0.0
    %5515 = vmatprep.subr.mxu0 0.0
    %5516 = vmatpush1.msra.mxu0 0.0
    %5517 = vmatprep.subr.mxu0 0.0
    %5518 = vmatpush1.msra.mxu0 0.0
    %5519 = vmatprep.subr.mxu0 0.0
    %5520 = vmatpush1.msra.mxu0 0.0
    %5521 = vmatprep.subr.mxu0 0.0
    %5522 = vmatpush1.msra.mxu0 0.0
    %5523 = vmatprep.subr.mxu0 0.0
    %5524 = vmatpush1.msra.mxu0 0.0
    %5525 = vmatprep.subr.mxu0 0.0
    %5526 = vmatpush1.msra.mxu0 0.0
    %5527 = vmatprep.subr.mxu0 0.0
    %5528 = vmatpush1.msra.mxu0 0.0
    %5529 = vmatprep.subr.mxu0 0.0
    %5530 = vmatpush1.msra.mxu0 0.0
    %5531 = vmatprep.subr.mxu0 0.0
    %5532 = vmatpush1.msra.mxu0 0.0
    %5533 = vmatprep.mubr.f32.mxu0 0.0
    %5534 = vmatmul.mubr.f32.gmra.mrb[0].mxu0 %v5195
    %v5535 = vpop.f32.mrb[0].mxu0
    %v5536 = vadd.f32 %v5459, %v5535
    %v5537 = vpop.f32.mrb[0].mxu0
    %v5538 = vadd.f32 %v5461, %v5537
    %5539 = vmatprep.mubr.f32.mxu0 0.0
    %5540 = vmatmul.mubr.f32.gmra.mrb[0].mxu0 %v5180
    %v5541 = vpop.f32.mrb[0].mxu0
    %v5542 = vadd.f32 %v5465, %v5541
    %v5543 = vpop.f32.mrb[0].mxu0
    %v5544 = vadd.f32 %v5467, %v5543
    %5545 = vdwg.mxu0
    %5546 = vmatprep.subr.mxu0 %v5203
    %5547 = vmatpush1.msra.mxu0 %v5202
    %5548 = vmatprep.subr.mxu0 %v5207
    %5549 = vmatpush1.msra.mxu0 %v5206
    %5550 = vmatprep.subr.mxu0 %v5211
    %5551 = vmatpush1.msra.mxu0 %v5210
    %5552 = vmatprep.subr.mxu0 %v5215
    %5553 = vmatpush1.msra.mxu0 %v5214
    %5554 = vmatprep.subr.mxu0 %v5219
    %5555 = vmatpush1.msra.mxu0 %v5218
    %5556 = vmatprep.subr.mxu0 %v5223
    %5557 = vmatpush1.msra.mxu0 %v5222
    %5558 = vmatprep.subr.mxu0 %v5227
    %5559 = vmatpush1.msra.mxu0 %v5226
    %5560 = vmatprep.subr.mxu0 %v5231
    %5561 = vmatpush1.msra.mxu0 %v5230
    %5562 = vmatprep.subr.mxu0 %v5235
    %5563 = vmatpush1.msra.mxu0 %v5234
    %5564 = vmatprep.subr.mxu0 %v5239
    %5565 = vmatpush1.msra.mxu0 %v5238
    %5566 = vmatprep.subr.mxu0 %v5243
    %5567 = vmatpush1.msra.mxu0 %v5242
    %5568 = vmatprep.subr.mxu0 %v5247
    %5569 = vmatpush1.msra.mxu0 %v5246
    %5570 = vmatprep.subr.mxu0 %v5251
    %5571 = vmatpush1.msra.mxu0 %v5250
    %5572 = vmatprep.subr.mxu0 %v5255
    %5573 = vmatpush1.msra.mxu0 %v5254
    %5574 = vmatprep.subr.mxu0 %v5259
    %5575 = vmatpush1.msra.mxu0 %v5258
    %5576 = vmatprep.subr.mxu0 %v5263
    %5577 = vmatpush1.msra.mxu0 %v5262
    %5578 = vmatprep.subr.mxu0 %v5267
    %5579 = vmatpush1.msra.mxu0 %v5266
    %5580 = vmatprep.subr.mxu0 %v5271
    %5581 = vmatpush1.msra.mxu0 %v5270
    %5582 = vmatprep.subr.mxu0 %v5275
    %5583 = vmatpush1.msra.mxu0 %v5274
    %5584 = vmatprep.subr.mxu0 %v5279
    %5585 = vmatpush1.msra.mxu0 %v5278
    %5586 = vmatprep.subr.mxu0 %v5283
    %5587 = vmatpush1.msra.mxu0 %v5282
    %5588 = vmatprep.subr.mxu0 %v5287
    %5589 = vmatpush1.msra.mxu0 %v5286
    %5590 = vmatprep.subr.mxu0 %v5291
    %5591 = vmatpush1.msra.mxu0 %v5290
    %5592 = vmatprep.subr.mxu0 %v5295
    %5593 = vmatpush1.msra.mxu0 %v5294
    %5594 = vmatprep.subr.mxu0 %v5299
    %5595 = vmatpush1.msra.mxu0 %v5298
    %5596 = vmatprep.subr.mxu0 %v5303
    %5597 = vmatpush1.msra.mxu0 %v5302
    %5598 = vmatprep.subr.mxu0 %v5307
    %5599 = vmatpush1.msra.mxu0 %v5306
    %5600 = vmatprep.subr.mxu0 %v5311
    %5601 = vmatpush1.msra.mxu0 %v5310
    %5602 = vmatprep.subr.mxu0 %v5315
    %5603 = vmatpush1.msra.mxu0 %v5314
    %5604 = vmatprep.subr.mxu0 %v5319
    %5605 = vmatpush1.msra.mxu0 %v5318
    %5606 = vmatprep.subr.mxu0 %v5323
    %5607 = vmatpush1.msra.mxu0 %v5322
    %5608 = vmatprep.subr.mxu0 %v5327
    %5609 = vmatpush1.msra.mxu0 %v5326
    %5610 = vmatprep.mubr.f32.mxu0 %v5192
    %5611 = vmatmul.mubr.f32.gmra.mrb[0].mxu0 %v5189
    %v5612 = vpop.f32.mrb[0].mxu0
    %v5613 = vadd.f32 0.0, %v5612
    %v5614 = vpop.f32.mrb[0].mxu0
    %v5615 = vadd.f32 0.0, %v5614
    %5616 = vmatprep.mubr.f32.mxu0 %v5179
    %5617 = vmatmul.mubr.f32.gmra.mrb[0].mxu0 %v5178
    %v5618 = vpop.f32.mrb[0].mxu0
    %v5619 = vadd.f32 0.0, %v5618
    %v5620 = vpop.f32.mrb[0].mxu0
    %v5621 = vadd.f32 0.0, %v5620
    %5622 = vdwg.mxu0
    %5623 = vmatprep.subr.mxu0 %v5331
    %5624 = vmatpush1.msra.mxu0 %v5330
    %5625 = vmatprep.subr.mxu0 %v5335
    %5626 = vmatpush1.msra.mxu0 %v5334
    %5627 = vmatprep.subr.mxu0 %v5339
    %5628 = vmatpush1.msra.mxu0 %v5338
    %5629 = vmatprep.subr.mxu0 %v5343
    %5630 = vmatpush1.msra.mxu0 %v5342
    %5631 = vmatprep.subr.mxu0 %v5347
    %5632 = vmatpush1.msra.mxu0 %v5346
    %5633 = vmatprep.subr.mxu0 %v5351
    %5634 = vmatpush1.msra.mxu0 %v5350
    %5635 = vmatprep.subr.mxu0 %v5355
    %5636 = vmatpush1.msra.mxu0 %v5354
    %5637 = vmatprep.subr.mxu0 %v5359
    %5638 = vmatpush1.msra.mxu0 %v5358
    %5639 = vmatprep.subr.mxu0 %v5363
    %5640 = vmatpush1.msra.mxu0 %v5362
    %5641 = vmatprep.subr.mxu0 %v5367
    %5642 = vmatpush1.msra.mxu0 %v5366
    %5643 = vmatprep.subr.mxu0 %v5371
    %5644 = vmatpush1.msra.mxu0 %v5370
    %5645 = vmatprep.subr.mxu0 %v5375
    %5646 = vmatpush1.msra.mxu0 %v5374
    %5647 = vmatprep.subr.mxu0 %v5379
    %5648 = vmatpush1.msra.mxu0 %v5378
    %5649 = vmatprep.subr.mxu0 %v5383
    %5650 = vmatpush1.msra.mxu0 %v5382
    %5651 = vmatprep.subr.mxu0 %v5387
    %5652 = vmatpush1.msra.mxu0 %v5386
    %5653 = vmatprep.subr.mxu0 %v5391
    %5654 = vmatpush1.msra.mxu0 %v5390
    %5655 = vmatprep.subr.mxu0 0.0
    %5656 = vmatpush1.msra.mxu0 0.0
    %5657 = vmatprep.subr.mxu0 0.0
    %5658 = vmatpush1.msra.mxu0 0.0
    %5659 = vmatprep.subr.mxu0 0.0
    %5660 = vmatpush1.msra.mxu0 0.0
    %5661 = vmatprep.subr.mxu0 0.0
    %5662 = vmatpush1.msra.mxu0 0.0
    %5663 = vmatprep.subr.mxu0 0.0
    %5664 = vmatpush1.msra.mxu0 0.0
    %5665 = vmatprep.subr.mxu0 0.0
    %5666 = vmatpush1.msra.mxu0 0.0
    %5667 = vmatprep.subr.mxu0 0.0
    %5668 = vmatpush1.msra.mxu0 0.0
    %5669 = vmatprep.subr.mxu0 0.0
    %5670 = vmatpush1.msra.mxu0 0.0
    %5671 = vmatprep.subr.mxu0 0.0
    %5672 = vmatpush1.msra.mxu0 0.0
    %5673 = vmatprep.subr.mxu0 0.0
    %5674 = vmatpush1.msra.mxu0 0.0
    %5675 = vmatprep.subr.mxu0 0.0
    %5676 = vmatpush1.msra.mxu0 0.0
    %5677 = vmatprep.subr.mxu0 0.0
    %5678 = vmatpush1.msra.mxu0 0.0
    %5679 = vmatprep.subr.mxu0 0.0
    %5680 = vmatpush1.msra.mxu0 0.0
    %5681 = vmatprep.subr.mxu0 0.0
    %5682 = vmatpush1.msra.mxu0 0.0
    %5683 = vmatprep.subr.mxu0 0.0
    %5684 = vmatpush1.msra.mxu0 0.0
    %5685 = vmatprep.subr.mxu0 0.0
    %5686 = vmatpush1.msra.mxu0 0.0
    %5687 = vmatprep.mubr.f32.mxu0 0.0
    %5688 = vmatmul.mubr.f32.gmra.mrb[0].mxu0 %v5195
    %v5689 = vpop.f32.mrb[0].mxu0
    %v5690 = vadd.f32 %v5613, %v5689
    %v5691 = vpop.f32.mrb[0].mxu0
    %v5692 = vadd.f32 %v5615, %v5691
    %5693 = vmatprep.mubr.f32.mxu0 0.0
    %5694 = vmatmul.mubr.f32.gmra.mrb[0].mxu0 %v5180
    %v5695 = vpop.f32.mrb[0].mxu0
    %v5696 = vadd.f32 %v5619, %v5695
    %v5697 = vpop.f32.mrb[0].mxu0
    %v5698 = vadd.f32 %v5621, %v5697
    %5699 = vdwg.mxu0
    %v5700 = vadd.f32 %v5164, %v5536
    %v5701 = vadd.f32 %v5165, %v5538
    %v5702 = vadd.f32 %v5166, %v5690
    %v5703 = vadd.f32 %v5167, %v5692
    %v5704 = vadd.f32 %v5168, %v5542
    %v5705 = vadd.f32 %v5169, %v5544
    %v5706 = vadd.f32 %v5170, %v5696
    %v5707 = vadd.f32 %v5171, %v5698
    %v5708 = vld [vmem:[#allocation9] sm:$0xf]
    %v5710 = vlaneseq
    %v5711 = vshrl.u32 %v5710, 7
    %v5712 = vsub.s32 0, %v5711
    %v5713 = vrot.slane %v5708, %v5712
    %v5714 = vlaneseq
    %v5715 = vshrl.u32 %v5714, 7
    %v5716 = vsub.s32 1, %v5715
    %v5717 = vrot.slane %v5708, %v5716
    %v5718 = vlaneseq
    %v5719 = vshrl.u32 %v5718, 7
    %v5720 = vsub.s32 2, %v5719
    %v5721 = vrot.slane %v5708, %v5720
    %v5722 = vlaneseq
    %v5723 = vshrl.u32 %v5722, 7
    %v5724 = vsub.s32 3, %v5723
    %v5725 = vrot.slane %v5708, %v5724
    %v5730 = vadd.f32 %v5700, %v5713
    %v5731 = vadd.f32 %v5701, %v5717
    %v5732 = vadd.f32 %v5702, %v5721
    %v5733 = vadd.f32 %v5703, %v5725
    %v5734 = vadd.f32 %v5704, %v5713
    %v5735 = vadd.f32 %v5705, %v5717
    %v5736 = vadd.f32 %v5706, %v5721
    %v5737 = vadd.f32 %v5707, %v5725
    %v5738 = vmax.f32 %v5730, 0.0
    %v5739 = vmax.f32 %v5731, 0.0
    %v5740 = vmax.f32 %v5732, 0.0
    %v5741 = vmax.f32 %v5733, 0.0
    %v5742 = vmax.f32 %v5734, 0.0
    %v5743 = vmax.f32 %v5735, 0.0
    %v5744 = vmax.f32 %v5736, 0.0
    %v5745 = vmax.f32 %v5737, 0.0
    %vm5746 = vcmask 130048
    %v5747 = vsel %vm5746, %v2408, 0
    %5749 = vmatprep.subr.mxu0 %v5739
    %5750 = vmatpush1.msra.mxu0 %v5738
    %5751 = vmatprep.subr.mxu0 %v5743
    %5752 = vmatpush1.msra.mxu0 %v5742
    %5753 = vmatprep.subr.mxu0 0.0
    %5754 = vmatpush1.msra.mxu0 0.0
    %5755 = vmatprep.subr.mxu0 0.0
    %5756 = vmatpush1.msra.mxu0 0.0
    %5757 = vmatprep.subr.mxu0 0.0
    %5758 = vmatpush1.msra.mxu0 0.0
    %5759 = vmatprep.subr.mxu0 0.0
    %5760 = vmatpush1.msra.mxu0 0.0
    %5761 = vmatprep.subr.mxu0 0.0
    %5762 = vmatpush1.msra.mxu0 0.0
    %5763 = vmatprep.subr.mxu0 0.0
    %5764 = vmatpush1.msra.mxu0 0.0
    %5765 = vmatprep.subr.mxu0 0.0
    %5766 = vmatpush1.msra.mxu0 0.0
    %5767 = vmatprep.subr.mxu0 0.0
    %5768 = vmatpush1.msra.mxu0 0.0
    %5769 = vmatprep.subr.mxu0 0.0
    %5770 = vmatpush1.msra.mxu0 0.0
    %5771 = vmatprep.subr.mxu0 0.0
    %5772 = vmatpush1.msra.mxu0 0.0
    %5773 = vmatprep.subr.mxu0 0.0
    %5774 = vmatpush1.msra.mxu0 0.0
    %5775 = vmatprep.subr.mxu0 0.0
    %5776 = vmatpush1.msra.mxu0 0.0
    %5777 = vmatprep.subr.mxu0 0.0
    %5778 = vmatpush1.msra.mxu0 0.0
    %5779 = vmatprep.subr.mxu0 0.0
    %5780 = vmatpush1.msra.mxu0 0.0
    %5781 = vmatprep.subr.mxu0 0.0
    %5782 = vmatpush1.msra.mxu0 0.0
    %5783 = vmatprep.subr.mxu0 0.0
    %5784 = vmatpush1.msra.mxu0 0.0
    %5785 = vmatprep.subr.mxu0 0.0
    %5786 = vmatpush1.msra.mxu0 0.0
    %5787 = vmatprep.subr.mxu0 0.0
    %5788 = vmatpush1.msra.mxu0 0.0
    %5789 = vmatprep.subr.mxu0 0.0
    %5790 = vmatpush1.msra.mxu0 0.0
    %5791 = vmatprep.subr.mxu0 0.0
    %5792 = vmatpush1.msra.mxu0 0.0
    %5793 = vmatprep.subr.mxu0 0.0
    %5794 = vmatpush1.msra.mxu0 0.0
    %5795 = vmatprep.subr.mxu0 0.0
    %5796 = vmatpush1.msra.mxu0 0.0
    %5797 = vmatprep.subr.mxu0 0.0
    %5798 = vmatpush1.msra.mxu0 0.0
    %5799 = vmatprep.subr.mxu0 0.0
    %5800 = vmatpush1.msra.mxu0 0.0
    %5801 = vmatprep.subr.mxu0 0.0
    %5802 = vmatpush1.msra.mxu0 0.0
    %5803 = vmatprep.subr.mxu0 0.0
    %5804 = vmatpush1.msra.mxu0 0.0
    %5805 = vmatprep.subr.mxu0 0.0
    %5806 = vmatpush1.msra.mxu0 0.0
    %5807 = vmatprep.subr.mxu0 0.0
    %5808 = vmatpush1.msra.mxu0 0.0
    %5809 = vmatprep.subr.mxu0 0.0
    %5810 = vmatpush1.msra.mxu0 0.0
    %5811 = vmatprep.subr.mxu0 0.0
    %5812 = vmatpush1.msra.mxu0 0.0
    %5813 = vmatprep.mubr.f32.mxu0 0.0
    %5814 = vmatmul.mubr.f32.gmra.mrb[0].mxu0 %v5747
    %v5815 = vpop.f32.mrb[0].mxu0
    %v5816 = vadd.f32 0.0, %v5815
    %v5817 = vpop.f32.mrb[0].mxu0
    %v5818 = vadd.f32 0.0, %v5817
    %5819 = vdwg.mxu0
    %5820 = vmatprep.subr.mxu0 %v5741
    %5821 = vmatpush1.msra.mxu0 %v5740
    %5822 = vmatprep.subr.mxu0 %v5745
    %5823 = vmatpush1.msra.mxu0 %v5744
    %5824 = vmatprep.subr.mxu0 0.0
    %5825 = vmatpush1.msra.mxu0 0.0
    %5826 = vmatprep.subr.mxu0 0.0
    %5827 = vmatpush1.msra.mxu0 0.0
    %5828 = vmatprep.subr.mxu0 0.0
    %5829 = vmatpush1.msra.mxu0 0.0
    %5830 = vmatprep.subr.mxu0 0.0
    %5831 = vmatpush1.msra.mxu0 0.0
    %5832 = vmatprep.subr.mxu0 0.0
    %5833 = vmatpush1.msra.mxu0 0.0
    %5834 = vmatprep.subr.mxu0 0.0
    %5835 = vmatpush1.msra.mxu0 0.0
    %5836 = vmatprep.subr.mxu0 0.0
    %5837 = vmatpush1.msra.mxu0 0.0
    %5838 = vmatprep.subr.mxu0 0.0
    %5839 = vmatpush1.msra.mxu0 0.0
    %5840 = vmatprep.subr.mxu0 0.0
    %5841 = vmatpush1.msra.mxu0 0.0
    %5842 = vmatprep.subr.mxu0 0.0
    %5843 = vmatpush1.msra.mxu0 0.0
    %5844 = vmatprep.subr.mxu0 0.0
    %5845 = vmatpush1.msra.mxu0 0.0
    %5846 = vmatprep.subr.mxu0 0.0
    %5847 = vmatpush1.msra.mxu0 0.0
    %5848 = vmatprep.subr.mxu0 0.0
    %5849 = vmatpush1.msra.mxu0 0.0
    %5850 = vmatprep.subr.mxu0 0.0
    %5851 = vmatpush1.msra.mxu0 0.0
    %5852 = vmatprep.subr.mxu0 0.0
    %5853 = vmatpush1.msra.mxu0 0.0
    %5854 = vmatprep.subr.mxu0 0.0
    %5855 = vmatpush1.msra.mxu0 0.0
    %5856 = vmatprep.subr.mxu0 0.0
    %5857 = vmatpush1.msra.mxu0 0.0
    %5858 = vmatprep.subr.mxu0 0.0
    %5859 = vmatpush1.msra.mxu0 0.0
    %5860 = vmatprep.subr.mxu0 0.0
    %5861 = vmatpush1.msra.mxu0 0.0
    %5862 = vmatprep.subr.mxu0 0.0
    %5863 = vmatpush1.msra.mxu0 0.0
    %5864 = vmatprep.subr.mxu0 0.0
    %5865 = vmatpush1.msra.mxu0 0.0
    %5866 = vmatprep.subr.mxu0 0.0
    %5867 = vmatpush1.msra.mxu0 0.0
    %5868 = vmatprep.subr.mxu0 0.0
    %5869 = vmatpush1.msra.mxu0 0.0
    %5870 = vmatprep.subr.mxu0 0.0
    %5871 = vmatpush1.msra.mxu0 0.0
    %5872 = vmatprep.subr.mxu0 0.0
    %5873 = vmatpush1.msra.mxu0 0.0
    %5874 = vmatprep.subr.mxu0 0.0
    %5875 = vmatpush1.msra.mxu0 0.0
    %5876 = vmatprep.subr.mxu0 0.0
    %5877 = vmatpush1.msra.mxu0 0.0
    %5878 = vmatprep.subr.mxu0 0.0
    %5879 = vmatpush1.msra.mxu0 0.0
    %5880 = vmatprep.subr.mxu0 0.0
    %5881 = vmatpush1.msra.mxu0 0.0
    %5882 = vmatprep.subr.mxu0 0.0
    %5883 = vmatpush1.msra.mxu0 0.0
    %5884 = vmatprep.mubr.f32.mxu0 0.0
    %5885 = vmatmul.mubr.f32.gmra.mrb[0].mxu0 %v5747
    %v5886 = vpop.f32.mrb[0].mxu0
    %v5887 = vadd.f32 0.0, %v5886
    %v5888 = vpop.f32.mrb[0].mxu0
    %v5889 = vadd.f32 0.0, %v5888
    %5890 = vdwg.mxu0
    %v5891 = vsel %vm5746, %v2679, 0
    %5893 = vmatprep.subr.mxu0 %v5739
    %5894 = vmatpush1.msra.mxu0 %v5738
    %5895 = vmatprep.subr.mxu0 %v5743
    %5896 = vmatpush1.msra.mxu0 %v5742
    %5897 = vmatprep.subr.mxu0 0.0
    %5898 = vmatpush1.msra.mxu0 0.0
    %5899 = vmatprep.subr.mxu0 0.0
    %5900 = vmatpush1.msra.mxu0 0.0
    %5901 = vmatprep.subr.mxu0 0.0
    %5902 = vmatpush1.msra.mxu0 0.0
    %5903 = vmatprep.subr.mxu0 0.0
    %5904 = vmatpush1.msra.mxu0 0.0
    %5905 = vmatprep.subr.mxu0 0.0
    %5906 = vmatpush1.msra.mxu0 0.0
    %5907 = vmatprep.subr.mxu0 0.0
    %5908 = vmatpush1.msra.mxu0 0.0
    %5909 = vmatprep.subr.mxu0 0.0
    %5910 = vmatpush1.msra.mxu0 0.0
    %5911 = vmatprep.subr.mxu0 0.0
    %5912 = vmatpush1.msra.mxu0 0.0
    %5913 = vmatprep.subr.mxu0 0.0
    %5914 = vmatpush1.msra.mxu0 0.0
    %5915 = vmatprep.subr.mxu0 0.0
    %5916 = vmatpush1.msra.mxu0 0.0
    %5917 = vmatprep.subr.mxu0 0.0
    %5918 = vmatpush1.msra.mxu0 0.0
    %5919 = vmatprep.subr.mxu0 0.0
    %5920 = vmatpush1.msra.mxu0 0.0
    %5921 = vmatprep.subr.mxu0 0.0
    %5922 = vmatpush1.msra.mxu0 0.0
    %5923 = vmatprep.subr.mxu0 0.0
    %5924 = vmatpush1.msra.mxu0 0.0
    %5925 = vmatprep.subr.mxu0 0.0
    %5926 = vmatpush1.msra.mxu0 0.0
    %5927 = vmatprep.subr.mxu0 0.0
    %5928 = vmatpush1.msra.mxu0 0.0
    %5929 = vmatprep.subr.mxu0 0.0
    %5930 = vmatpush1.msra.mxu0 0.0
    %5931 = vmatprep.subr.mxu0 0.0
    %5932 = vmatpush1.msra.mxu0 0.0
    %5933 = vmatprep.subr.mxu0 0.0
    %5934 = vmatpush1.msra.mxu0 0.0
    %5935 = vmatprep.subr.mxu0 0.0
    %5936 = vmatpush1.msra.mxu0 0.0
    %5937 = vmatprep.subr.mxu0 0.0
    %5938 = vmatpush1.msra.mxu0 0.0
    %5939 = vmatprep.subr.mxu0 0.0
    %5940 = vmatpush1.msra.mxu0 0.0
    %5941 = vmatprep.subr.mxu0 0.0
    %5942 = vmatpush1.msra.mxu0 0.0
    %5943 = vmatprep.subr.mxu0 0.0
    %5944 = vmatpush1.msra.mxu0 0.0
    %5945 = vmatprep.subr.mxu0 0.0
    %5946 = vmatpush1.msra.mxu0 0.0
    %5947 = vmatprep.subr.mxu0 0.0
    %5948 = vmatpush1.msra.mxu0 0.0
    %5949 = vmatprep.subr.mxu0 0.0
    %5950 = vmatpush1.msra.mxu0 0.0
    %5951 = vmatprep.subr.mxu0 0.0
    %5952 = vmatpush1.msra.mxu0 0.0
    %5953 = vmatprep.subr.mxu0 0.0
    %5954 = vmatpush1.msra.mxu0 0.0
    %5955 = vmatprep.subr.mxu0 0.0
    %5956 = vmatpush1.msra.mxu0 0.0
    %5957 = vmatprep.mubr.f32.mxu0 0.0
    %5958 = vmatmul.mubr.f32.gmra.mrb[0].mxu0 %v5891
    %v5959 = vpop.f32.mrb[0].mxu0
    %v5960 = vadd.f32 0.0, %v5959
    %v5961 = vpop.f32.mrb[0].mxu0
    %v5962 = vadd.f32 0.0, %v5961
    %5963 = vdwg.mxu0
    %5964 = vmatprep.subr.mxu0 %v5741
    %5965 = vmatpush1.msra.mxu0 %v5740
    %5966 = vmatprep.subr.mxu0 %v5745
    %5967 = vmatpush1.msra.mxu0 %v5744
    %5968 = vmatprep.subr.mxu0 0.0
    %5969 = vmatpush1.msra.mxu0 0.0
    %5970 = vmatprep.subr.mxu0 0.0
    %5971 = vmatpush1.msra.mxu0 0.0
    %5972 = vmatprep.subr.mxu0 0.0
    %5973 = vmatpush1.msra.mxu0 0.0
    %5974 = vmatprep.subr.mxu0 0.0
    %5975 = vmatpush1.msra.mxu0 0.0
    %5976 = vmatprep.subr.mxu0 0.0
    %5977 = vmatpush1.msra.mxu0 0.0
    %5978 = vmatprep.subr.mxu0 0.0
    %5979 = vmatpush1.msra.mxu0 0.0
    %5980 = vmatprep.subr.mxu0 0.0
    %5981 = vmatpush1.msra.mxu0 0.0
    %5982 = vmatprep.subr.mxu0 0.0
    %5983 = vmatpush1.msra.mxu0 0.0
    %5984 = vmatprep.subr.mxu0 0.0
    %5985 = vmatpush1.msra.mxu0 0.0
    %5986 = vmatprep.subr.mxu0 0.0
    %5987 = vmatpush1.msra.mxu0 0.0
    %5988 = vmatprep.subr.mxu0 0.0
    %5989 = vmatpush1.msra.mxu0 0.0
    %5990 = vmatprep.subr.mxu0 0.0
    %5991 = vmatpush1.msra.mxu0 0.0
    %5992 = vmatprep.subr.mxu0 0.0
    %5993 = vmatpush1.msra.mxu0 0.0
    %5994 = vmatprep.subr.mxu0 0.0
    %5995 = vmatpush1.msra.mxu0 0.0
    %5996 = vmatprep.subr.mxu0 0.0
    %5997 = vmatpush1.msra.mxu0 0.0
    %5998 = vmatprep.subr.mxu0 0.0
    %5999 = vmatpush1.msra.mxu0 0.0
    %6000 = vmatprep.subr.mxu0 0.0
    %6001 = vmatpush1.msra.mxu0 0.0
    %6002 = vmatprep.subr.mxu0 0.0
    %6003 = vmatpush1.msra.mxu0 0.0
    %6004 = vmatprep.subr.mxu0 0.0
    %6005 = vmatpush1.msra.mxu0 0.0
    %6006 = vmatprep.subr.mxu0 0.0
    %6007 = vmatpush1.msra.mxu0 0.0
    %6008 = vmatprep.subr.mxu0 0.0
    %6009 = vmatpush1.msra.mxu0 0.0
    %6010 = vmatprep.subr.mxu0 0.0
    %6011 = vmatpush1.msra.mxu0 0.0
    %6012 = vmatprep.subr.mxu0 0.0
    %6013 = vmatpush1.msra.mxu0 0.0
    %6014 = vmatprep.subr.mxu0 0.0
    %6015 = vmatpush1.msra.mxu0 0.0
    %6016 = vmatprep.subr.mxu0 0.0
    %6017 = vmatpush1.msra.mxu0 0.0
    %6018 = vmatprep.subr.mxu0 0.0
    %6019 = vmatpush1.msra.mxu0 0.0
    %6020 = vmatprep.subr.mxu0 0.0
    %6021 = vmatpush1.msra.mxu0 0.0
    %6022 = vmatprep.subr.mxu0 0.0
    %6023 = vmatpush1.msra.mxu0 0.0
    %6024 = vmatprep.subr.mxu0 0.0
    %6025 = vmatpush1.msra.mxu0 0.0
    %6026 = vmatprep.subr.mxu0 0.0
    %6027 = vmatpush1.msra.mxu0 0.0
    %6028 = vmatprep.mubr.f32.mxu0 0.0
    %6029 = vmatmul.mubr.f32.gmra.mrb[0].mxu0 %v5891
    %v6030 = vpop.f32.mrb[0].mxu0
    %v6031 = vadd.f32 0.0, %v6030
    %v6032 = vpop.f32.mrb[0].mxu0
    %v6033 = vadd.f32 0.0, %v6032
    %6034 = vdwg.mxu0
    %v6035 = vmax.f32 %v5816, %v5960
    %v6036 = vmax.f32 %v5818, %v5962
    %v6037 = vmax.f32 %v5887, %v6031
    %v6038 = vmax.f32 %v5889, %v6033
    %v6039 = vmax.f32 %v6035, %v6037
    %v6040 = vmax.f32 %v6036, %v6038
    %v6041 = vmul.u32 %v2394, 4
    %vm6042 = vcmp.eq.s32.totalorder %v2398, %v6041
    %v6043 = vsel %vm6042, 1, 0
    %v6044 = vcvt.s32.f32 %v6043
    %vm6045 = vcmask 64512
    %v6047 = vsel %vm6045, %v6044, 0
    %6049 = vmatprep.subr.mxu0 %v6040
    %6050 = vmatpush1.msra.mxu0 %v6039
    %6051 = vmatprep.subr.mxu0 0.0
    %6052 = vmatpush1.msra.mxu0 0.0
    %6053 = vmatprep.subr.mxu0 0.0
    %6054 = vmatpush1.msra.mxu0 0.0
    %6055 = vmatprep.subr.mxu0 0.0
    %6056 = vmatpush1.msra.mxu0 0.0
    %6057 = vmatprep.subr.mxu0 0.0
    %6058 = vmatpush1.msra.mxu0 0.0
    %6059 = vmatprep.subr.mxu0 0.0
    %6060 = vmatpush1.msra.mxu0 0.0
    %6061 = vmatprep.subr.mxu0 0.0
    %6062 = vmatpush1.msra.mxu0 0.0
    %6063 = vmatprep.subr.mxu0 0.0
    %6064 = vmatpush1.msra.mxu0 0.0
    %6065 = vmatprep.subr.mxu0 0.0
    %6066 = vmatpush1.msra.mxu0 0.0
    %6067 = vmatprep.subr.mxu0 0.0
    %6068 = vmatpush1.msra.mxu0 0.0
    %6069 = vmatprep.subr.mxu0 0.0
    %6070 = vmatpush1.msra.mxu0 0.0
    %6071 = vmatprep.subr.mxu0 0.0
    %6072 = vmatpush1.msra.mxu0 0.0
    %6073 = vmatprep.subr.mxu0 0.0
    %6074 = vmatpush1.msra.mxu0 0.0
    %6075 = vmatprep.subr.mxu0 0.0
    %6076 = vmatpush1.msra.mxu0 0.0
    %6077 = vmatprep.subr.mxu0 0.0
    %6078 = vmatpush1.msra.mxu0 0.0
    %6079 = vmatprep.subr.mxu0 0.0
    %6080 = vmatpush1.msra.mxu0 0.0
    %6081 = vmatprep.subr.mxu0 0.0
    %6082 = vmatpush1.msra.mxu0 0.0
    %6083 = vmatprep.subr.mxu0 0.0
    %6084 = vmatpush1.msra.mxu0 0.0
    %6085 = vmatprep.subr.mxu0 0.0
    %6086 = vmatpush1.msra.mxu0 0.0
    %6087 = vmatprep.subr.mxu0 0.0
    %6088 = vmatpush1.msra.mxu0 0.0
    %6089 = vmatprep.subr.mxu0 0.0
    %6090 = vmatpush1.msra.mxu0 0.0
    %6091 = vmatprep.subr.mxu0 0.0
    %6092 = vmatpush1.msra.mxu0 0.0
    %6093 = vmatprep.subr.mxu0 0.0
    %6094 = vmatpush1.msra.mxu0 0.0
    %6095 = vmatprep.subr.mxu0 0.0
    %6096 = vmatpush1.msra.mxu0 0.0
    %6097 = vmatprep.subr.mxu0 0.0
    %6098 = vmatpush1.msra.mxu0 0.0
    %6099 = vmatprep.subr.mxu0 0.0
    %6100 = vmatpush1.msra.mxu0 0.0
    %6101 = vmatprep.subr.mxu0 0.0
    %6102 = vmatpush1.msra.mxu0 0.0
    %6103 = vmatprep.subr.mxu0 0.0
    %6104 = vmatpush1.msra.mxu0 0.0
    %6105 = vmatprep.subr.mxu0 0.0
    %6106 = vmatpush1.msra.mxu0 0.0
    %6107 = vmatprep.subr.mxu0 0.0
    %6108 = vmatpush1.msra.mxu0 0.0
    %6109 = vmatprep.subr.mxu0 0.0
    %6110 = vmatpush1.msra.mxu0 0.0
    %6111 = vmatprep.subr.mxu0 0.0
    %6112 = vmatpush1.msra.mxu0 0.0
    %6113 = vmatprep.mubr.f32.mxu0 0.0
    %6114 = vmatmul.mubr.f32.gmra.mrb[0].mxu0 %v6047
    %v6115 = vpop.f32.mrb[0].mxu0
    %v6116 = vadd.f32 0.0, %v6115
    %v6117 = vpop.f32.mrb[0].mxu0
    %v6118 = vadd.f32 0.0, %v6117
    %6119 = vdwg.mxu0
    %v6120 = vld [vmem:[#allocation11] sm:$0xff]
    %v6121 = vld [vmem:[#allocation11 + $0x8] sm:$0xff]
    %v6122 = vld [vmem:[#allocation11 + $0x10] sm:$0xff]
    %v6123 = vld [vmem:[#allocation11 + $0x18] sm:$0xff]
    %v6124 = vld [vmem:[#allocation11 + $0x20] sm:$0xff]
    %v6125 = vld [vmem:[#allocation11 + $0x28] sm:$0xff]
    %v6126 = vld [vmem:[#allocation11 + $0x30] sm:$0xff]
    %v6127 = vld [vmem:[#allocation11 + $0x38] sm:$0xff]
    %v6128 = vld [vmem:[#allocation11 + $0x40] sm:$0xff]
    %v6129 = vld [vmem:[#allocation11 + $0x48] sm:$0xff]
    %v6130 = vld [vmem:[#allocation11 + $0x50] sm:$0xff]
    %v6131 = vld [vmem:[#allocation11 + $0x58] sm:$0xff]
    %v6132 = vld [vmem:[#allocation11 + $0x60] sm:$0xff]
    %v6133 = vld [vmem:[#allocation11 + $0x68] sm:$0xff]
    %v6134 = vld [vmem:[#allocation11 + $0x70] sm:$0xff]
    %v6135 = vld [vmem:[#allocation11 + $0x78] sm:$0xff]
    %v6136 = vld [vmem:[#allocation11 + $0x80] sm:$0xff]
    %v6137 = vld [vmem:[#allocation11 + $0x88] sm:$0xff]
    %v6138 = vld [vmem:[#allocation11 + $0x90] sm:$0xff]
    %v6139 = vld [vmem:[#allocation11 + $0x98] sm:$0xff]
    %v6140 = vld [vmem:[#allocation11 + $0xa0] sm:$0xff]
    %v6141 = vld [vmem:[#allocation11 + $0xa8] sm:$0xff]
    %v6142 = vld [vmem:[#allocation11 + $0xb0] sm:$0xff]
    %v6143 = vld [vmem:[#allocation11 + $0xb8] sm:$0xff]
    %v6144 = vld [vmem:[#allocation11 + $0xc0] sm:$0xff]
    %v6145 = vld [vmem:[#allocation11 + $0xc8] sm:$0xff]
    %v6146 = vld [vmem:[#allocation11 + $0xd0] sm:$0xff]
    %v6147 = vld [vmem:[#allocation11 + $0xd8] sm:$0xff]
    %v6148 = vld [vmem:[#allocation11 + $0xe0] sm:$0xff]
    %v6149 = vld [vmem:[#allocation11 + $0xe8] sm:$0xff]
    %v6150 = vld [vmem:[#allocation11 + $0xf0] sm:$0xff]
    %v6151 = vld [vmem:[#allocation11 + $0xf8] sm:$0xff]
    %v6152 = vld [vmem:[#allocation11 + $0x100] sm:$0xff]
    %v6153 = vld [vmem:[#allocation11 + $0x108] sm:$0xff]
    %v6154 = vld [vmem:[#allocation11 + $0x110] sm:$0xff]
    %v6155 = vld [vmem:[#allocation11 + $0x118] sm:$0xff]
    %v6156 = vld [vmem:[#allocation11 + $0x120] sm:$0xff]
    %v6157 = vld [vmem:[#allocation11 + $0x128] sm:$0xff]
    %v6158 = vld [vmem:[#allocation11 + $0x130] sm:$0xff]
    %v6159 = vld [vmem:[#allocation11 + $0x138] sm:$0xff]
    %v6160 = vld [vmem:[#allocation11 + $0x140] sm:$0xff]
    %v6161 = vld [vmem:[#allocation11 + $0x148] sm:$0xff]
    %v6162 = vld [vmem:[#allocation11 + $0x150] sm:$0xff]
    %v6163 = vld [vmem:[#allocation11 + $0x158] sm:$0xff]
    %v6164 = vld [vmem:[#allocation11 + $0x160] sm:$0xff]
    %v6165 = vld [vmem:[#allocation11 + $0x168] sm:$0xff]
    %v6166 = vld [vmem:[#allocation11 + $0x170] sm:$0xff]
    %v6167 = vld [vmem:[#allocation11 + $0x178] sm:$0xff]
    %v6168 = vld [vmem:[#allocation11 + $0x180] sm:$0xff]
    %v6169 = vld [vmem:[#allocation11 + $0x188] sm:$0xff]
    %v6170 = vld [vmem:[#allocation11 + $0x190] sm:$0xff]
    %v6171 = vld [vmem:[#allocation11 + $0x198] sm:$0xff]
    %v6172 = vld [vmem:[#allocation11 + $0x1a0] sm:$0xff]
    %v6173 = vld [vmem:[#allocation11 + $0x1a8] sm:$0xff]
    %v6174 = vld [vmem:[#allocation11 + $0x1b0] sm:$0xff]
    %v6175 = vld [vmem:[#allocation11 + $0x1b8] sm:$0xff]
    %v6176 = vld [vmem:[#allocation11 + $0x1c0] sm:$0xff]
    %v6177 = vld [vmem:[#allocation11 + $0x1c8] sm:$0xff]
    %v6178 = vld [vmem:[#allocation11 + $0x1d0] sm:$0xff]
    %v6179 = vld [vmem:[#allocation11 + $0x1d8] sm:$0xff]
    %v6180 = vld [vmem:[#allocation11 + $0x1e0] sm:$0xff]
    %v6181 = vld [vmem:[#allocation11 + $0x1e8] sm:$0xff]
    %v6182 = vld [vmem:[#allocation11 + $0x1f0] sm:$0xff]
    %v6183 = vld [vmem:[#allocation11 + $0x1f8] sm:$0xff]
    %v6184 = vld [vmem:[#allocation11 + $0x200] sm:$0xff]
    %v6185 = vld [vmem:[#allocation11 + $0x208] sm:$0xff]
    %v6186 = vld [vmem:[#allocation11 + $0x210] sm:$0xff]
    %v6187 = vld [vmem:[#allocation11 + $0x218] sm:$0xff]
    %v6188 = vld [vmem:[#allocation11 + $0x220] sm:$0xff]
    %v6189 = vld [vmem:[#allocation11 + $0x228] sm:$0xff]
    %v6190 = vld [vmem:[#allocation11 + $0x230] sm:$0xff]
    %v6191 = vld [vmem:[#allocation11 + $0x238] sm:$0xff]
    %v6192 = vld [vmem:[#allocation11 + $0x240] sm:$0xff]
    %v6193 = vld [vmem:[#allocation11 + $0x248] sm:$0xff]
    %v6194 = vld [vmem:[#allocation11 + $0x250] sm:$0xff]
    %v6195 = vld [vmem:[#allocation11 + $0x258] sm:$0xff]
    %v6196 = vld [vmem:[#allocation11 + $0x260] sm:$0xff]
    %v6197 = vld [vmem:[#allocation11 + $0x268] sm:$0xff]
    %v6198 = vld [vmem:[#allocation11 + $0x270] sm:$0xff]
    %v6199 = vld [vmem:[#allocation11 + $0x278] sm:$0xff]
    %v6200 = vld [vmem:[#allocation11 + $0x280] sm:$0xff]
    %v6201 = vld [vmem:[#allocation11 + $0x288] sm:$0xff]
    %v6202 = vld [vmem:[#allocation11 + $0x290] sm:$0xff]
    %v6203 = vld [vmem:[#allocation11 + $0x298] sm:$0xff]
    %v6204 = vld [vmem:[#allocation11 + $0x2a0] sm:$0xff]
    %v6205 = vld [vmem:[#allocation11 + $0x2a8] sm:$0xff]
    %v6206 = vld [vmem:[#allocation11 + $0x2b0] sm:$0xff]
    %v6207 = vld [vmem:[#allocation11 + $0x2b8] sm:$0xff]
    %v6208 = vld [vmem:[#allocation11 + $0x2c0] sm:$0xff]
    %v6209 = vld [vmem:[#allocation11 + $0x2c8] sm:$0xff]
    %v6210 = vld [vmem:[#allocation11 + $0x2d0] sm:$0xff]
    %v6211 = vld [vmem:[#allocation11 + $0x2d8] sm:$0xff]
    %v6212 = vld [vmem:[#allocation11 + $0x2e0] sm:$0xff]
    %v6213 = vld [vmem:[#allocation11 + $0x2e8] sm:$0xff]
    %v6214 = vld [vmem:[#allocation11 + $0x2f0] sm:$0xff]
    %v6215 = vld [vmem:[#allocation11 + $0x2f8] sm:$0xff]
    %v6216 = vld [vmem:[#allocation11 + $0x300] sm:$0xff]
    %v6217 = vld [vmem:[#allocation11 + $0x308] sm:$0xff]
    %v6218 = vld [vmem:[#allocation11 + $0x310] sm:$0xff]
    %v6219 = vld [vmem:[#allocation11 + $0x318] sm:$0xff]
    %v6220 = vld [vmem:[#allocation11 + $0x320] sm:$0xff]
    %v6221 = vld [vmem:[#allocation11 + $0x328] sm:$0xff]
    %v6222 = vld [vmem:[#allocation11 + $0x330] sm:$0xff]
    %v6223 = vld [vmem:[#allocation11 + $0x338] sm:$0xff]
    %v6224 = vld [vmem:[#allocation11 + $0x340] sm:$0xff]
    %v6225 = vld [vmem:[#allocation11 + $0x348] sm:$0xff]
    %v6226 = vld [vmem:[#allocation11 + $0x350] sm:$0xff]
    %v6227 = vld [vmem:[#allocation11 + $0x358] sm:$0xff]
    %v6228 = vld [vmem:[#allocation11 + $0x360] sm:$0xff]
    %v6229 = vld [vmem:[#allocation11 + $0x368] sm:$0xff]
    %v6230 = vld [vmem:[#allocation11 + $0x370] sm:$0xff]
    %v6231 = vld [vmem:[#allocation11 + $0x378] sm:$0xff]
    %v6232 = vld [vmem:[#allocation11 + $0x380] sm:$0xff]
    %v6233 = vld [vmem:[#allocation11 + $0x388] sm:$0xff]
    %v6234 = vld [vmem:[#allocation11 + $0x390] sm:$0xff]
    %v6235 = vld [vmem:[#allocation11 + $0x398] sm:$0xff]
    %v6236 = vld [vmem:[#allocation11 + $0x3a0] sm:$0xff]
    %v6237 = vld [vmem:[#allocation11 + $0x3a8] sm:$0xff]
    %v6238 = vld [vmem:[#allocation11 + $0x3b0] sm:$0xff]
    %v6239 = vld [vmem:[#allocation11 + $0x3b8] sm:$0xff]
    %v6240 = vld [vmem:[#allocation11 + $0x3c0] sm:$0xff]
    %v6241 = vld [vmem:[#allocation11 + $0x3c8] sm:$0xff]
    %v6242 = vld [vmem:[#allocation11 + $0x3d0] sm:$0xff]
    %v6243 = vld [vmem:[#allocation11 + $0x3d8] sm:$0xff]
    %v6244 = vld [vmem:[#allocation11 + $0x3e0] sm:$0xff]
    %v6245 = vld [vmem:[#allocation11 + $0x3e8] sm:$0xff]
    %v6246 = vld [vmem:[#allocation11 + $0x3f0] sm:$0xff]
    %v6247 = vld [vmem:[#allocation11 + $0x3f8] sm:$0xff]
    %v6248 = vadd.s32 %v6041, 1
    %vm6249 = vcmp.eq.s32.totalorder %v2398, %v6248
    %v6250 = vsel %vm6249, 1, 0
    %v6251 = vcvt.s32.f32 %v6250
    %v6253 = vsel %vm6045, %v6251, 0
    %6255 = vmatprep.subr.mxu0 %v6040
    %6256 = vmatpush1.msra.mxu0 %v6039
    %6257 = vmatprep.subr.mxu0 0.0
    %6258 = vmatpush1.msra.mxu0 0.0
    %6259 = vmatprep.subr.mxu0 0.0
    %6260 = vmatpush1.msra.mxu0 0.0
    %6261 = vmatprep.subr.mxu0 0.0
    %6262 = vmatpush1.msra.mxu0 0.0
    %6263 = vmatprep.subr.mxu0 0.0
    %6264 = vmatpush1.msra.mxu0 0.0
    %6265 = vmatprep.subr.mxu0 0.0
    %6266 = vmatpush1.msra.mxu0 0.0
    %6267 = vmatprep.subr.mxu0 0.0
    %6268 = vmatpush1.msra.mxu0 0.0
    %6269 = vmatprep.subr.mxu0 0.0
    %6270 = vmatpush1.msra.mxu0 0.0
    %6271 = vmatprep.subr.mxu0 0.0
    %6272 = vmatpush1.msra.mxu0 0.0
    %6273 = vmatprep.subr.mxu0 0.0
    %6274 = vmatpush1.msra.mxu0 0.0
    %6275 = vmatprep.subr.mxu0 0.0
    %6276 = vmatpush1.msra.mxu0 0.0
    %6277 = vmatprep.subr.mxu0 0.0
    %6278 = vmatpush1.msra.mxu0 0.0
    %6279 = vmatprep.subr.mxu0 0.0
    %6280 = vmatpush1.msra.mxu0 0.0
    %6281 = vmatprep.subr.mxu0 0.0
    %6282 = vmatpush1.msra.mxu0 0.0
    %6283 = vmatprep.subr.mxu0 0.0
    %6284 = vmatpush1.msra.mxu0 0.0
    %6285 = vmatprep.subr.mxu0 0.0
    %6286 = vmatpush1.msra.mxu0 0.0
    %6287 = vmatprep.subr.mxu0 0.0
    %6288 = vmatpush1.msra.mxu0 0.0
    %6289 = vmatprep.subr.mxu0 0.0
    %6290 = vmatpush1.msra.mxu0 0.0
    %6291 = vmatprep.subr.mxu0 0.0
    %6292 = vmatpush1.msra.mxu0 0.0
    %6293 = vmatprep.subr.mxu0 0.0
    %6294 = vmatpush1.msra.mxu0 0.0
    %6295 = vmatprep.subr.mxu0 0.0
    %6296 = vmatpush1.msra.mxu0 0.0
    %6297 = vmatprep.subr.mxu0 0.0
    %6298 = vmatpush1.msra.mxu0 0.0
    %6299 = vmatprep.subr.mxu0 0.0
    %6300 = vmatpush1.msra.mxu0 0.0
    %6301 = vmatprep.subr.mxu0 0.0
    %6302 = vmatpush1.msra.mxu0 0.0
    %6303 = vmatprep.subr.mxu0 0.0
    %6304 = vmatpush1.msra.mxu0 0.0
    %6305 = vmatprep.subr.mxu0 0.0
    %6306 = vmatpush1.msra.mxu0 0.0
    %6307 = vmatprep.subr.mxu0 0.0
    %6308 = vmatpush1.msra.mxu0 0.0
    %6309 = vmatprep.subr.mxu0 0.0
    %6310 = vmatpush1.msra.mxu0 0.0
    %6311 = vmatprep.subr.mxu0 0.0
    %6312 = vmatpush1.msra.mxu0 0.0
    %6313 = vmatprep.subr.mxu0 0.0
    %6314 = vmatpush1.msra.mxu0 0.0
    %6315 = vmatprep.subr.mxu0 0.0
    %6316 = vmatpush1.msra.mxu0 0.0
    %6317 = vmatprep.subr.mxu0 0.0
    %6318 = vmatpush1.msra.mxu0 0.0
    %6319 = vmatprep.mubr.f32.mxu0 0.0
    %6320 = vmatmul.mubr.f32.gmra.mrb[0].mxu0 %v6253
    %v6321 = vpop.f32.mrb[0].mxu0
    %v6322 = vadd.f32 0.0, %v6321
    %v6323 = vpop.f32.mrb[0].mxu0
    %v6324 = vadd.f32 0.0, %v6323
    %6325 = vdwg.mxu0
    %v6326 = vld [vmem:[#allocation11 + $0x400] sm:$0xff]
    %v6327 = vld [vmem:[#allocation11 + $0x408] sm:$0xff]
    %v6328 = vld [vmem:[#allocation11 + $0x410] sm:$0xff]
    %v6329 = vld [vmem:[#allocation11 + $0x418] sm:$0xff]
    %v6330 = vld [vmem:[#allocation11 + $0x420] sm:$0xff]
    %v6331 = vld [vmem:[#allocation11 + $0x428] sm:$0xff]
    %v6332 = vld [vmem:[#allocation11 + $0x430] sm:$0xff]
    %v6333 = vld [vmem:[#allocation11 + $0x438] sm:$0xff]
    %v6334 = vld [vmem:[#allocation11 + $0x440] sm:$0xff]
    %v6335 = vld [vmem:[#allocation11 + $0x448] sm:$0xff]
    %v6336 = vld [vmem:[#allocation11 + $0x450] sm:$0xff]
    %v6337 = vld [vmem:[#allocation11 + $0x458] sm:$0xff]
    %v6338 = vld [vmem:[#allocation11 + $0x460] sm:$0xff]
    %v6339 = vld [vmem:[#allocation11 + $0x468] sm:$0xff]
    %v6340 = vld [vmem:[#allocation11 + $0x470] sm:$0xff]
    %v6341 = vld [vmem:[#allocation11 + $0x478] sm:$0xff]
    %v6342 = vld [vmem:[#allocation11 + $0x480] sm:$0xff]
    %v6343 = vld [vmem:[#allocation11 + $0x488] sm:$0xff]
    %v6344 = vld [vmem:[#allocation11 + $0x490] sm:$0xff]
    %v6345 = vld [vmem:[#allocation11 + $0x498] sm:$0xff]
    %v6346 = vld [vmem:[#allocation11 + $0x4a0] sm:$0xff]
    %v6347 = vld [vmem:[#allocation11 + $0x4a8] sm:$0xff]
    %v6348 = vld [vmem:[#allocation11 + $0x4b0] sm:$0xff]
    %v6349 = vld [vmem:[#allocation11 + $0x4b8] sm:$0xff]
    %v6350 = vld [vmem:[#allocation11 + $0x4c0] sm:$0xff]
    %v6351 = vld [vmem:[#allocation11 + $0x4c8] sm:$0xff]
    %v6352 = vld [vmem:[#allocation11 + $0x4d0] sm:$0xff]
    %v6353 = vld [vmem:[#allocation11 + $0x4d8] sm:$0xff]
    %v6354 = vld [vmem:[#allocation11 + $0x4e0] sm:$0xff]
    %v6355 = vld [vmem:[#allocation11 + $0x4e8] sm:$0xff]
    %v6356 = vld [vmem:[#allocation11 + $0x4f0] sm:$0xff]
    %v6357 = vld [vmem:[#allocation11 + $0x4f8] sm:$0xff]
    %v6358 = vld [vmem:[#allocation11 + $0x500] sm:$0xff]
    %v6359 = vld [vmem:[#allocation11 + $0x508] sm:$0xff]
    %v6360 = vld [vmem:[#allocation11 + $0x510] sm:$0xff]
    %v6361 = vld [vmem:[#allocation11 + $0x518] sm:$0xff]
    %v6362 = vld [vmem:[#allocation11 + $0x520] sm:$0xff]
    %v6363 = vld [vmem:[#allocation11 + $0x528] sm:$0xff]
    %v6364 = vld [vmem:[#allocation11 + $0x530] sm:$0xff]
    %v6365 = vld [vmem:[#allocation11 + $0x538] sm:$0xff]
    %v6366 = vld [vmem:[#allocation11 + $0x540] sm:$0xff]
    %v6367 = vld [vmem:[#allocation11 + $0x548] sm:$0xff]
    %v6368 = vld [vmem:[#allocation11 + $0x550] sm:$0xff]
    %v6369 = vld [vmem:[#allocation11 + $0x558] sm:$0xff]
    %v6370 = vld [vmem:[#allocation11 + $0x560] sm:$0xff]
    %v6371 = vld [vmem:[#allocation11 + $0x568] sm:$0xff]
    %v6372 = vld [vmem:[#allocation11 + $0x570] sm:$0xff]
    %v6373 = vld [vmem:[#allocation11 + $0x578] sm:$0xff]
    %v6374 = vld [vmem:[#allocation11 + $0x580] sm:$0xff]
    %v6375 = vld [vmem:[#allocation11 + $0x588] sm:$0xff]
    %v6376 = vld [vmem:[#allocation11 + $0x590] sm:$0xff]
    %v6377 = vld [vmem:[#allocation11 + $0x598] sm:$0xff]
    %v6378 = vld [vmem:[#allocation11 + $0x5a0] sm:$0xff]
    %v6379 = vld [vmem:[#allocation11 + $0x5a8] sm:$0xff]
    %v6380 = vld [vmem:[#allocation11 + $0x5b0] sm:$0xff]
    %v6381 = vld [vmem:[#allocation11 + $0x5b8] sm:$0xff]
    %v6382 = vld [vmem:[#allocation11 + $0x5c0] sm:$0xff]
    %v6383 = vld [vmem:[#allocation11 + $0x5c8] sm:$0xff]
    %v6384 = vld [vmem:[#allocation11 + $0x5d0] sm:$0xff]
    %v6385 = vld [vmem:[#allocation11 + $0x5d8] sm:$0xff]
    %v6386 = vld [vmem:[#allocation11 + $0x5e0] sm:$0xff]
    %v6387 = vld [vmem:[#allocation11 + $0x5e8] sm:$0xff]
    %v6388 = vld [vmem:[#allocation11 + $0x5f0] sm:$0xff]
    %v6389 = vld [vmem:[#allocation11 + $0x5f8] sm:$0xff]
    %v6390 = vld [vmem:[#allocation11 + $0x600] sm:$0xff]
    %v6391 = vld [vmem:[#allocation11 + $0x608] sm:$0xff]
    %v6392 = vld [vmem:[#allocation11 + $0x610] sm:$0xff]
    %v6393 = vld [vmem:[#allocation11 + $0x618] sm:$0xff]
    %v6394 = vld [vmem:[#allocation11 + $0x620] sm:$0xff]
    %v6395 = vld [vmem:[#allocation11 + $0x628] sm:$0xff]
    %v6396 = vld [vmem:[#allocation11 + $0x630] sm:$0xff]
    %v6397 = vld [vmem:[#allocation11 + $0x638] sm:$0xff]
    %v6398 = vld [vmem:[#allocation11 + $0x640] sm:$0xff]
    %v6399 = vld [vmem:[#allocation11 + $0x648] sm:$0xff]
    %v6400 = vld [vmem:[#allocation11 + $0x650] sm:$0xff]
    %v6401 = vld [vmem:[#allocation11 + $0x658] sm:$0xff]
    %v6402 = vld [vmem:[#allocation11 + $0x660] sm:$0xff]
    %v6403 = vld [vmem:[#allocation11 + $0x668] sm:$0xff]
    %v6404 = vld [vmem:[#allocation11 + $0x670] sm:$0xff]
    %v6405 = vld [vmem:[#allocation11 + $0x678] sm:$0xff]
    %v6406 = vld [vmem:[#allocation11 + $0x680] sm:$0xff]
    %v6407 = vld [vmem:[#allocation11 + $0x688] sm:$0xff]
    %v6408 = vld [vmem:[#allocation11 + $0x690] sm:$0xff]
    %v6409 = vld [vmem:[#allocation11 + $0x698] sm:$0xff]
    %v6410 = vld [vmem:[#allocation11 + $0x6a0] sm:$0xff]
    %v6411 = vld [vmem:[#allocation11 + $0x6a8] sm:$0xff]
    %v6412 = vld [vmem:[#allocation11 + $0x6b0] sm:$0xff]
    %v6413 = vld [vmem:[#allocation11 + $0x6b8] sm:$0xff]
    %v6414 = vld [vmem:[#allocation11 + $0x6c0] sm:$0xff]
    %v6415 = vld [vmem:[#allocation11 + $0x6c8] sm:$0xff]
    %v6416 = vld [vmem:[#allocation11 + $0x6d0] sm:$0xff]
    %v6417 = vld [vmem:[#allocation11 + $0x6d8] sm:$0xff]
    %v6418 = vld [vmem:[#allocation11 + $0x6e0] sm:$0xff]
    %v6419 = vld [vmem:[#allocation11 + $0x6e8] sm:$0xff]
    %v6420 = vld [vmem:[#allocation11 + $0x6f0] sm:$0xff]
    %v6421 = vld [vmem:[#allocation11 + $0x6f8] sm:$0xff]
    %v6422 = vld [vmem:[#allocation11 + $0x700] sm:$0xff]
    %v6423 = vld [vmem:[#allocation11 + $0x708] sm:$0xff]
    %v6424 = vld [vmem:[#allocation11 + $0x710] sm:$0xff]
    %v6425 = vld [vmem:[#allocation11 + $0x718] sm:$0xff]
    %v6426 = vld [vmem:[#allocation11 + $0x720] sm:$0xff]
    %v6427 = vld [vmem:[#allocation11 + $0x728] sm:$0xff]
    %v6428 = vld [vmem:[#allocation11 + $0x730] sm:$0xff]
    %v6429 = vld [vmem:[#allocation11 + $0x738] sm:$0xff]
    %v6430 = vld [vmem:[#allocation11 + $0x740] sm:$0xff]
    %v6431 = vld [vmem:[#allocation11 + $0x748] sm:$0xff]
    %v6432 = vld [vmem:[#allocation11 + $0x750] sm:$0xff]
    %v6433 = vld [vmem:[#allocation11 + $0x758] sm:$0xff]
    %v6434 = vld [vmem:[#allocation11 + $0x760] sm:$0xff]
    %v6435 = vld [vmem:[#allocation11 + $0x768] sm:$0xff]
    %v6436 = vld [vmem:[#allocation11 + $0x770] sm:$0xff]
    %v6437 = vld [vmem:[#allocation11 + $0x778] sm:$0xff]
    %v6438 = vld [vmem:[#allocation11 + $0x780] sm:$0xff]
    %v6439 = vld [vmem:[#allocation11 + $0x788] sm:$0xff]
    %v6440 = vld [vmem:[#allocation11 + $0x790] sm:$0xff]
    %v6441 = vld [vmem:[#allocation11 + $0x798] sm:$0xff]
    %v6442 = vld [vmem:[#allocation11 + $0x7a0] sm:$0xff]
    %v6443 = vld [vmem:[#allocation11 + $0x7a8] sm:$0xff]
    %v6444 = vld [vmem:[#allocation11 + $0x7b0] sm:$0xff]
    %v6445 = vld [vmem:[#allocation11 + $0x7b8] sm:$0xff]
    %v6446 = vld [vmem:[#allocation11 + $0x7c0] sm:$0xff]
    %v6447 = vld [vmem:[#allocation11 + $0x7c8] sm:$0xff]
    %v6448 = vld [vmem:[#allocation11 + $0x7d0] sm:$0xff]
    %v6449 = vld [vmem:[#allocation11 + $0x7d8] sm:$0xff]
    %v6450 = vld [vmem:[#allocation11 + $0x7e0] sm:$0xff]
    %v6451 = vld [vmem:[#allocation11 + $0x7e8] sm:$0xff]
    %v6452 = vld [vmem:[#allocation11 + $0x7f0] sm:$0xff]
    %v6453 = vld [vmem:[#allocation11 + $0x7f8] sm:$0xff]
    %6454 = vmatprep.subr.mxu0 %v6327
    %6455 = vmatpush1.msra.mxu0 %v6326
    %6456 = vmatprep.subr.mxu0 %v6331
    %6457 = vmatpush1.msra.mxu0 %v6330
    %6458 = vmatprep.subr.mxu0 %v6335
    %6459 = vmatpush1.msra.mxu0 %v6334
    %6460 = vmatprep.subr.mxu0 %v6339
    %6461 = vmatpush1.msra.mxu0 %v6338
    %6462 = vmatprep.subr.mxu0 %v6343
    %6463 = vmatpush1.msra.mxu0 %v6342
    %6464 = vmatprep.subr.mxu0 %v6347
    %6465 = vmatpush1.msra.mxu0 %v6346
    %6466 = vmatprep.subr.mxu0 %v6351
    %6467 = vmatpush1.msra.mxu0 %v6350
    %6468 = vmatprep.subr.mxu0 %v6355
    %6469 = vmatpush1.msra.mxu0 %v6354
    %6470 = vmatprep.subr.mxu0 %v6359
    %6471 = vmatpush1.msra.mxu0 %v6358
    %6472 = vmatprep.subr.mxu0 %v6363
    %6473 = vmatpush1.msra.mxu0 %v6362
    %6474 = vmatprep.subr.mxu0 %v6367
    %6475 = vmatpush1.msra.mxu0 %v6366
    %6476 = vmatprep.subr.mxu0 %v6371
    %6477 = vmatpush1.msra.mxu0 %v6370
    %6478 = vmatprep.subr.mxu0 %v6375
    %6479 = vmatpush1.msra.mxu0 %v6374
    %6480 = vmatprep.subr.mxu0 %v6379
    %6481 = vmatpush1.msra.mxu0 %v6378
    %6482 = vmatprep.subr.mxu0 %v6383
    %6483 = vmatpush1.msra.mxu0 %v6382
    %6484 = vmatprep.subr.mxu0 %v6387
    %6485 = vmatpush1.msra.mxu0 %v6386
    %6486 = vmatprep.subr.mxu0 %v6391
    %6487 = vmatpush1.msra.mxu0 %v6390
    %6488 = vmatprep.subr.mxu0 %v6395
    %6489 = vmatpush1.msra.mxu0 %v6394
    %6490 = vmatprep.subr.mxu0 %v6399
    %6491 = vmatpush1.msra.mxu0 %v6398
    %6492 = vmatprep.subr.mxu0 %v6403
    %6493 = vmatpush1.msra.mxu0 %v6402
    %6494 = vmatprep.subr.mxu0 %v6407
    %6495 = vmatpush1.msra.mxu0 %v6406
    %6496 = vmatprep.subr.mxu0 %v6411
    %6497 = vmatpush1.msra.mxu0 %v6410
    %6498 = vmatprep.subr.mxu0 %v6415
    %6499 = vmatpush1.msra.mxu0 %v6414
    %6500 = vmatprep.subr.mxu0 %v6419
    %6501 = vmatpush1.msra.mxu0 %v6418
    %6502 = vmatprep.subr.mxu0 %v6423
    %6503 = vmatpush1.msra.mxu0 %v6422
    %6504 = vmatprep.subr.mxu0 %v6427
    %6505 = vmatpush1.msra.mxu0 %v6426
    %6506 = vmatprep.subr.mxu0 %v6431
    %6507 = vmatpush1.msra.mxu0 %v6430
    %6508 = vmatprep.subr.mxu0 %v6435
    %6509 = vmatpush1.msra.mxu0 %v6434
    %6510 = vmatprep.subr.mxu0 %v6439
    %6511 = vmatpush1.msra.mxu0 %v6438
    %6512 = vmatprep.subr.mxu0 %v6443
    %6513 = vmatpush1.msra.mxu0 %v6442
    %6514 = vmatprep.subr.mxu0 %v6447
    %6515 = vmatpush1.msra.mxu0 %v6446
    %6516 = vmatprep.subr.mxu0 %v6451
    %6517 = vmatpush1.msra.mxu0 %v6450
    %6518 = vmatprep.mubr.f32.mxu0 %v6324
    %6519 = vmatmul.mubr.f32.gmra.mrb[0].mxu0 %v6322
    %v6520 = vpop.f32.mrb[0].mxu0
    %v6521 = vadd.f32 0.0, %v6520
    %v6522 = vpop.f32.mrb[0].mxu0
    %v6523 = vadd.f32 0.0, %v6522
    %6524 = vdwg.mxu0
    %6525 = vmatprep.subr.mxu0 %v6329
    %6526 = vmatpush1.msra.mxu0 %v6328
    %6527 = vmatprep.subr.mxu0 %v6333
    %6528 = vmatpush1.msra.mxu0 %v6332
    %6529 = vmatprep.subr.mxu0 %v6337
    %6530 = vmatpush1.msra.mxu0 %v6336
    %6531 = vmatprep.subr.mxu0 %v6341
    %6532 = vmatpush1.msra.mxu0 %v6340
    %6533 = vmatprep.subr.mxu0 %v6345
    %6534 = vmatpush1.msra.mxu0 %v6344
    %6535 = vmatprep.subr.mxu0 %v6349
    %6536 = vmatpush1.msra.mxu0 %v6348
    %6537 = vmatprep.subr.mxu0 %v6353
    %6538 = vmatpush1.msra.mxu0 %v6352
    %6539 = vmatprep.subr.mxu0 %v6357
    %6540 = vmatpush1.msra.mxu0 %v6356
    %6541 = vmatprep.subr.mxu0 %v6361
    %6542 = vmatpush1.msra.mxu0 %v6360
    %6543 = vmatprep.subr.mxu0 %v6365
    %6544 = vmatpush1.msra.mxu0 %v6364
    %6545 = vmatprep.subr.mxu0 %v6369
    %6546 = vmatpush1.msra.mxu0 %v6368
    %6547 = vmatprep.subr.mxu0 %v6373
    %6548 = vmatpush1.msra.mxu0 %v6372
    %6549 = vmatprep.subr.mxu0 %v6377
    %6550 = vmatpush1.msra.mxu0 %v6376
    %6551 = vmatprep.subr.mxu0 %v6381
    %6552 = vmatpush1.msra.mxu0 %v6380
    %6553 = vmatprep.subr.mxu0 %v6385
    %6554 = vmatpush1.msra.mxu0 %v6384
    %6555 = vmatprep.subr.mxu0 %v6389
    %6556 = vmatpush1.msra.mxu0 %v6388
    %6557 = vmatprep.subr.mxu0 %v6393
    %6558 = vmatpush1.msra.mxu0 %v6392
    %6559 = vmatprep.subr.mxu0 %v6397
    %6560 = vmatpush1.msra.mxu0 %v6396
    %6561 = vmatprep.subr.mxu0 %v6401
    %6562 = vmatpush1.msra.mxu0 %v6400
    %6563 = vmatprep.subr.mxu0 %v6405
    %6564 = vmatpush1.msra.mxu0 %v6404
    %6565 = vmatprep.subr.mxu0 %v6409
    %6566 = vmatpush1.msra.mxu0 %v6408
    %6567 = vmatprep.subr.mxu0 %v6413
    %6568 = vmatpush1.msra.mxu0 %v6412
    %6569 = vmatprep.subr.mxu0 %v6417
    %6570 = vmatpush1.msra.mxu0 %v6416
    %6571 = vmatprep.subr.mxu0 %v6421
    %6572 = vmatpush1.msra.mxu0 %v6420
    %6573 = vmatprep.subr.mxu0 %v6425
    %6574 = vmatpush1.msra.mxu0 %v6424
    %6575 = vmatprep.subr.mxu0 %v6429
    %6576 = vmatpush1.msra.mxu0 %v6428
    %6577 = vmatprep.subr.mxu0 %v6433
    %6578 = vmatpush1.msra.mxu0 %v6432
    %6579 = vmatprep.subr.mxu0 %v6437
    %6580 = vmatpush1.msra.mxu0 %v6436
    %6581 = vmatprep.subr.mxu0 %v6441
    %6582 = vmatpush1.msra.mxu0 %v6440
    %6583 = vmatprep.subr.mxu0 %v6445
    %6584 = vmatpush1.msra.mxu0 %v6444
    %6585 = vmatprep.subr.mxu0 %v6449
    %6586 = vmatpush1.msra.mxu0 %v6448
    %6587 = vmatprep.subr.mxu0 %v6453
    %6588 = vmatpush1.msra.mxu0 %v6452
    %6589 = vmatprep.mubr.f32.mxu0 %v6324
    %6590 = vmatmul.mubr.f32.gmra.mrb[0].mxu0 %v6322
    %v6591 = vpop.f32.mrb[0].mxu0
    %v6592 = vadd.f32 0.0, %v6591
    %v6593 = vpop.f32.mrb[0].mxu0
    %v6594 = vadd.f32 0.0, %v6593
    %6595 = vdwg.mxu0
    %6596 = vmatprep.subr.mxu0 %v6121
    %6597 = vmatpush1.msra.mxu0 %v6120
    %6598 = vmatprep.subr.mxu0 %v6125
    %6599 = vmatpush1.msra.mxu0 %v6124
    %6600 = vmatprep.subr.mxu0 %v6129
    %6601 = vmatpush1.msra.mxu0 %v6128
    %6602 = vmatprep.subr.mxu0 %v6133
    %6603 = vmatpush1.msra.mxu0 %v6132
    %6604 = vmatprep.subr.mxu0 %v6137
    %6605 = vmatpush1.msra.mxu0 %v6136
    %6606 = vmatprep.subr.mxu0 %v6141
    %6607 = vmatpush1.msra.mxu0 %v6140
    %6608 = vmatprep.subr.mxu0 %v6145
    %6609 = vmatpush1.msra.mxu0 %v6144
    %6610 = vmatprep.subr.mxu0 %v6149
    %6611 = vmatpush1.msra.mxu0 %v6148
    %6612 = vmatprep.subr.mxu0 %v6153
    %6613 = vmatpush1.msra.mxu0 %v6152
    %6614 = vmatprep.subr.mxu0 %v6157
    %6615 = vmatpush1.msra.mxu0 %v6156
    %6616 = vmatprep.subr.mxu0 %v6161
    %6617 = vmatpush1.msra.mxu0 %v6160
    %6618 = vmatprep.subr.mxu0 %v6165
    %6619 = vmatpush1.msra.mxu0 %v6164
    %6620 = vmatprep.subr.mxu0 %v6169
    %6621 = vmatpush1.msra.mxu0 %v6168
    %6622 = vmatprep.subr.mxu0 %v6173
    %6623 = vmatpush1.msra.mxu0 %v6172
    %6624 = vmatprep.subr.mxu0 %v6177
    %6625 = vmatpush1.msra.mxu0 %v6176
    %6626 = vmatprep.subr.mxu0 %v6181
    %6627 = vmatpush1.msra.mxu0 %v6180
    %6628 = vmatprep.subr.mxu0 %v6185
    %6629 = vmatpush1.msra.mxu0 %v6184
    %6630 = vmatprep.subr.mxu0 %v6189
    %6631 = vmatpush1.msra.mxu0 %v6188
    %6632 = vmatprep.subr.mxu0 %v6193
    %6633 = vmatpush1.msra.mxu0 %v6192
    %6634 = vmatprep.subr.mxu0 %v6197
    %6635 = vmatpush1.msra.mxu0 %v6196
    %6636 = vmatprep.subr.mxu0 %v6201
    %6637 = vmatpush1.msra.mxu0 %v6200
    %6638 = vmatprep.subr.mxu0 %v6205
    %6639 = vmatpush1.msra.mxu0 %v6204
    %6640 = vmatprep.subr.mxu0 %v6209
    %6641 = vmatpush1.msra.mxu0 %v6208
    %6642 = vmatprep.subr.mxu0 %v6213
    %6643 = vmatpush1.msra.mxu0 %v6212
    %6644 = vmatprep.subr.mxu0 %v6217
    %6645 = vmatpush1.msra.mxu0 %v6216
    %6646 = vmatprep.subr.mxu0 %v6221
    %6647 = vmatpush1.msra.mxu0 %v6220
    %6648 = vmatprep.subr.mxu0 %v6225
    %6649 = vmatpush1.msra.mxu0 %v6224
    %6650 = vmatprep.subr.mxu0 %v6229
    %6651 = vmatpush1.msra.mxu0 %v6228
    %6652 = vmatprep.subr.mxu0 %v6233
    %6653 = vmatpush1.msra.mxu0 %v6232
    %6654 = vmatprep.subr.mxu0 %v6237
    %6655 = vmatpush1.msra.mxu0 %v6236
    %6656 = vmatprep.subr.mxu0 %v6241
    %6657 = vmatpush1.msra.mxu0 %v6240
    %6658 = vmatprep.subr.mxu0 %v6245
    %6659 = vmatpush1.msra.mxu0 %v6244
    %6660 = vmatprep.mubr.f32.mxu0 %v6118
    %6661 = vmatmul.mubr.f32.gmra.mrb[0].mxu0 %v6116
    %v6662 = vpop.f32.mrb[0].mxu0
    %v6663 = vadd.f32 %v6521, %v6662
    %v6664 = vpop.f32.mrb[0].mxu0
    %v6665 = vadd.f32 %v6523, %v6664
    %6666 = vdwg.mxu0
    %6667 = vmatprep.subr.mxu0 %v6123
    %6668 = vmatpush1.msra.mxu0 %v6122
    %6669 = vmatprep.subr.mxu0 %v6127
    %6670 = vmatpush1.msra.mxu0 %v6126
    %6671 = vmatprep.subr.mxu0 %v6131
    %6672 = vmatpush1.msra.mxu0 %v6130
    %6673 = vmatprep.subr.mxu0 %v6135
    %6674 = vmatpush1.msra.mxu0 %v6134
    %6675 = vmatprep.subr.mxu0 %v6139
    %6676 = vmatpush1.msra.mxu0 %v6138
    %6677 = vmatprep.subr.mxu0 %v6143
    %6678 = vmatpush1.msra.mxu0 %v6142
    %6679 = vmatprep.subr.mxu0 %v6147
    %6680 = vmatpush1.msra.mxu0 %v6146
    %6681 = vmatprep.subr.mxu0 %v6151
    %6682 = vmatpush1.msra.mxu0 %v6150
    %6683 = vmatprep.subr.mxu0 %v6155
    %6684 = vmatpush1.msra.mxu0 %v6154
    %6685 = vmatprep.subr.mxu0 %v6159
    %6686 = vmatpush1.msra.mxu0 %v6158
    %6687 = vmatprep.subr.mxu0 %v6163
    %6688 = vmatpush1.msra.mxu0 %v6162
    %6689 = vmatprep.subr.mxu0 %v6167
    %6690 = vmatpush1.msra.mxu0 %v6166
    %6691 = vmatprep.subr.mxu0 %v6171
    %6692 = vmatpush1.msra.mxu0 %v6170
    %6693 = vmatprep.subr.mxu0 %v6175
    %6694 = vmatpush1.msra.mxu0 %v6174
    %6695 = vmatprep.subr.mxu0 %v6179
    %6696 = vmatpush1.msra.mxu0 %v6178
    %6697 = vmatprep.subr.mxu0 %v6183
    %6698 = vmatpush1.msra.mxu0 %v6182
    %6699 = vmatprep.subr.mxu0 %v6187
    %6700 = vmatpush1.msra.mxu0 %v6186
    %6701 = vmatprep.subr.mxu0 %v6191
    %6702 = vmatpush1.msra.mxu0 %v6190
    %6703 = vmatprep.subr.mxu0 %v6195
    %6704 = vmatpush1.msra.mxu0 %v6194
    %6705 = vmatprep.subr.mxu0 %v6199
    %6706 = vmatpush1.msra.mxu0 %v6198
    %6707 = vmatprep.subr.mxu0 %v6203
    %6708 = vmatpush1.msra.mxu0 %v6202
    %6709 = vmatprep.subr.mxu0 %v6207
    %6710 = vmatpush1.msra.mxu0 %v6206
    %6711 = vmatprep.subr.mxu0 %v6211
    %6712 = vmatpush1.msra.mxu0 %v6210
    %6713 = vmatprep.subr.mxu0 %v6215
    %6714 = vmatpush1.msra.mxu0 %v6214
    %6715 = vmatprep.subr.mxu0 %v6219
    %6716 = vmatpush1.msra.mxu0 %v6218
    %6717 = vmatprep.subr.mxu0 %v6223
    %6718 = vmatpush1.msra.mxu0 %v6222
    %6719 = vmatprep.subr.mxu0 %v6227
    %6720 = vmatpush1.msra.mxu0 %v6226
    %6721 = vmatprep.subr.mxu0 %v6231
    %6722 = vmatpush1.msra.mxu0 %v6230
    %6723 = vmatprep.subr.mxu0 %v6235
    %6724 = vmatpush1.msra.mxu0 %v6234
    %6725 = vmatprep.subr.mxu0 %v6239
    %6726 = vmatpush1.msra.mxu0 %v6238
    %6727 = vmatprep.subr.mxu0 %v6243
    %6728 = vmatpush1.msra.mxu0 %v6242
    %6729 = vmatprep.subr.mxu0 %v6247
    %6730 = vmatpush1.msra.mxu0 %v6246
    %6731 = vmatprep.mubr.f32.mxu0 %v6118
    %6732 = vmatmul.mubr.f32.gmra.mrb[0].mxu0 %v6116
    %v6733 = vpop.f32.mrb[0].mxu0
    %v6734 = vadd.f32 %v6592, %v6733
    %v6735 = vpop.f32.mrb[0].mxu0
    %v6736 = vadd.f32 %v6594, %v6735
    %6737 = vdwg.mxu0
    %v6738 = vadd.s32 %v6041, 2
    %vm6739 = vcmp.eq.s32.totalorder %v2398, %v6738
    %v6740 = vsel %vm6739, 1, 0
    %v6741 = vcvt.s32.f32 %v6740
    %v6743 = vsel %vm6045, %v6741, 0
    %6745 = vmatprep.subr.mxu0 %v6040
    %6746 = vmatpush1.msra.mxu0 %v6039
    %6747 = vmatprep.subr.mxu0 0.0
    %6748 = vmatpush1.msra.mxu0 0.0
    %6749 = vmatprep.subr.mxu0 0.0
    %6750 = vmatpush1.msra.mxu0 0.0
    %6751 = vmatprep.subr.mxu0 0.0
    %6752 = vmatpush1.msra.mxu0 0.0
    %6753 = vmatprep.subr.mxu0 0.0
    %6754 = vmatpush1.msra.mxu0 0.0
    %6755 = vmatprep.subr.mxu0 0.0
    %6756 = vmatpush1.msra.mxu0 0.0
    %6757 = vmatprep.subr.mxu0 0.0
    %6758 = vmatpush1.msra.mxu0 0.0
    %6759 = vmatprep.subr.mxu0 0.0
    %6760 = vmatpush1.msra.mxu0 0.0
    %6761 = vmatprep.subr.mxu0 0.0
    %6762 = vmatpush1.msra.mxu0 0.0
    %6763 = vmatprep.subr.mxu0 0.0
    %6764 = vmatpush1.msra.mxu0 0.0
    %6765 = vmatprep.subr.mxu0 0.0
    %6766 = vmatpush1.msra.mxu0 0.0
    %6767 = vmatprep.subr.mxu0 0.0
    %6768 = vmatpush1.msra.mxu0 0.0
    %6769 = vmatprep.subr.mxu0 0.0
    %6770 = vmatpush1.msra.mxu0 0.0
    %6771 = vmatprep.subr.mxu0 0.0
    %6772 = vmatpush1.msra.mxu0 0.0
    %6773 = vmatprep.subr.mxu0 0.0
    %6774 = vmatpush1.msra.mxu0 0.0
    %6775 = vmatprep.subr.mxu0 0.0
    %6776 = vmatpush1.msra.mxu0 0.0
    %6777 = vmatprep.subr.mxu0 0.0
    %6778 = vmatpush1.msra.mxu0 0.0
    %6779 = vmatprep.subr.mxu0 0.0
    %6780 = vmatpush1.msra.mxu0 0.0
    %6781 = vmatprep.subr.mxu0 0.0
    %6782 = vmatpush1.msra.mxu0 0.0
    %6783 = vmatprep.subr.mxu0 0.0
    %6784 = vmatpush1.msra.mxu0 0.0
    %6785 = vmatprep.subr.mxu0 0.0
    %6786 = vmatpush1.msra.mxu0 0.0
    %6787 = vmatprep.subr.mxu0 0.0
    %6788 = vmatpush1.msra.mxu0 0.0
    %6789 = vmatprep.subr.mxu0 0.0
    %6790 = vmatpush1.msra.mxu0 0.0
    %6791 = vmatprep.subr.mxu0 0.0
    %6792 = vmatpush1.msra.mxu0 0.0
    %6793 = vmatprep.subr.mxu0 0.0
    %6794 = vmatpush1.msra.mxu0 0.0
    %6795 = vmatprep.subr.mxu0 0.0
    %6796 = vmatpush1.msra.mxu0 0.0
    %6797 = vmatprep.subr.mxu0 0.0
    %6798 = vmatpush1.msra.mxu0 0.0
    %6799 = vmatprep.subr.mxu0 0.0
    %6800 = vmatpush1.msra.mxu0 0.0
    %6801 = vmatprep.subr.mxu0 0.0
    %6802 = vmatpush1.msra.mxu0 0.0
    %6803 = vmatprep.subr.mxu0 0.0
    %6804 = vmatpush1.msra.mxu0 0.0
    %6805 = vmatprep.subr.mxu0 0.0
    %6806 = vmatpush1.msra.mxu0 0.0
    %6807 = vmatprep.subr.mxu0 0.0
    %6808 = vmatpush1.msra.mxu0 0.0
    %6809 = vmatprep.mubr.f32.mxu0 0.0
    %6810 = vmatmul.mubr.f32.gmra.mrb[0].mxu0 %v6743
    %v6811 = vpop.f32.mrb[0].mxu0
    %v6812 = vadd.f32 0.0, %v6811
    %v6813 = vpop.f32.mrb[0].mxu0
    %v6814 = vadd.f32 0.0, %v6813
    %6815 = vdwg.mxu0
    %v6816 = vld [vmem:[#allocation11 + $0x800] sm:$0xff]
    %v6817 = vld [vmem:[#allocation11 + $0x808] sm:$0xff]
    %v6818 = vld [vmem:[#allocation11 + $0x810] sm:$0xff]
    %v6819 = vld [vmem:[#allocation11 + $0x818] sm:$0xff]
    %v6820 = vld [vmem:[#allocation11 + $0x820] sm:$0xff]
    %v6821 = vld [vmem:[#allocation11 + $0x828] sm:$0xff]
    %v6822 = vld [vmem:[#allocation11 + $0x830] sm:$0xff]
    %v6823 = vld [vmem:[#allocation11 + $0x838] sm:$0xff]
    %v6824 = vld [vmem:[#allocation11 + $0x840] sm:$0xff]
    %v6825 = vld [vmem:[#allocation11 + $0x848] sm:$0xff]
    %v6826 = vld [vmem:[#allocation11 + $0x850] sm:$0xff]
    %v6827 = vld [vmem:[#allocation11 + $0x858] sm:$0xff]
    %v6828 = vld [vmem:[#allocation11 + $0x860] sm:$0xff]
    %v6829 = vld [vmem:[#allocation11 + $0x868] sm:$0xff]
    %v6830 = vld [vmem:[#allocation11 + $0x870] sm:$0xff]
    %v6831 = vld [vmem:[#allocation11 + $0x878] sm:$0xff]
    %v6832 = vld [vmem:[#allocation11 + $0x880] sm:$0xff]
    %v6833 = vld [vmem:[#allocation11 + $0x888] sm:$0xff]
    %v6834 = vld [vmem:[#allocation11 + $0x890] sm:$0xff]
    %v6835 = vld [vmem:[#allocation11 + $0x898] sm:$0xff]
    %v6836 = vld [vmem:[#allocation11 + $0x8a0] sm:$0xff]
    %v6837 = vld [vmem:[#allocation11 + $0x8a8] sm:$0xff]
    %v6838 = vld [vmem:[#allocation11 + $0x8b0] sm:$0xff]
    %v6839 = vld [vmem:[#allocation11 + $0x8b8] sm:$0xff]
    %v6840 = vld [vmem:[#allocation11 + $0x8c0] sm:$0xff]
    %v6841 = vld [vmem:[#allocation11 + $0x8c8] sm:$0xff]
    %v6842 = vld [vmem:[#allocation11 + $0x8d0] sm:$0xff]
    %v6843 = vld [vmem:[#allocation11 + $0x8d8] sm:$0xff]
    %v6844 = vld [vmem:[#allocation11 + $0x8e0] sm:$0xff]
    %v6845 = vld [vmem:[#allocation11 + $0x8e8] sm:$0xff]
    %v6846 = vld [vmem:[#allocation11 + $0x8f0] sm:$0xff]
    %v6847 = vld [vmem:[#allocation11 + $0x8f8] sm:$0xff]
    %v6848 = vld [vmem:[#allocation11 + $0x900] sm:$0xff]
    %v6849 = vld [vmem:[#allocation11 + $0x908] sm:$0xff]
    %v6850 = vld [vmem:[#allocation11 + $0x910] sm:$0xff]
    %v6851 = vld [vmem:[#allocation11 + $0x918] sm:$0xff]
    %v6852 = vld [vmem:[#allocation11 + $0x920] sm:$0xff]
    %v6853 = vld [vmem:[#allocation11 + $0x928] sm:$0xff]
    %v6854 = vld [vmem:[#allocation11 + $0x930] sm:$0xff]
    %v6855 = vld [vmem:[#allocation11 + $0x938] sm:$0xff]
    %v6856 = vld [vmem:[#allocation11 + $0x940] sm:$0xff]
    %v6857 = vld [vmem:[#allocation11 + $0x948] sm:$0xff]
    %v6858 = vld [vmem:[#allocation11 + $0x950] sm:$0xff]
    %v6859 = vld [vmem:[#allocation11 + $0x958] sm:$0xff]
    %v6860 = vld [vmem:[#allocation11 + $0x960] sm:$0xff]
    %v6861 = vld [vmem:[#allocation11 + $0x968] sm:$0xff]
    %v6862 = vld [vmem:[#allocation11 + $0x970] sm:$0xff]
    %v6863 = vld [vmem:[#allocation11 + $0x978] sm:$0xff]
    %v6864 = vld [vmem:[#allocation11 + $0x980] sm:$0xff]
    %v6865 = vld [vmem:[#allocation11 + $0x988] sm:$0xff]
    %v6866 = vld [vmem:[#allocation11 + $0x990] sm:$0xff]
    %v6867 = vld [vmem:[#allocation11 + $0x998] sm:$0xff]
    %v6868 = vld [vmem:[#allocation11 + $0x9a0] sm:$0xff]
    %v6869 = vld [vmem:[#allocation11 + $0x9a8] sm:$0xff]
    %v6870 = vld [vmem:[#allocation11 + $0x9b0] sm:$0xff]
    %v6871 = vld [vmem:[#allocation11 + $0x9b8] sm:$0xff]
    %v6872 = vld [vmem:[#allocation11 + $0x9c0] sm:$0xff]
    %v6873 = vld [vmem:[#allocation11 + $0x9c8] sm:$0xff]
    %v6874 = vld [vmem:[#allocation11 + $0x9d0] sm:$0xff]
    %v6875 = vld [vmem:[#allocation11 + $0x9d8] sm:$0xff]
    %v6876 = vld [vmem:[#allocation11 + $0x9e0] sm:$0xff]
    %v6877 = vld [vmem:[#allocation11 + $0x9e8] sm:$0xff]
    %v6878 = vld [vmem:[#allocation11 + $0x9f0] sm:$0xff]
    %v6879 = vld [vmem:[#allocation11 + $0x9f8] sm:$0xff]
    %v6880 = vld [vmem:[#allocation11 + $0xa00] sm:$0xff]
    %v6881 = vld [vmem:[#allocation11 + $0xa08] sm:$0xff]
    %v6882 = vld [vmem:[#allocation11 + $0xa10] sm:$0xff]
    %v6883 = vld [vmem:[#allocation11 + $0xa18] sm:$0xff]
    %v6884 = vld [vmem:[#allocation11 + $0xa20] sm:$0xff]
    %v6885 = vld [vmem:[#allocation11 + $0xa28] sm:$0xff]
    %v6886 = vld [vmem:[#allocation11 + $0xa30] sm:$0xff]
    %v6887 = vld [vmem:[#allocation11 + $0xa38] sm:$0xff]
    %v6888 = vld [vmem:[#allocation11 + $0xa40] sm:$0xff]
    %v6889 = vld [vmem:[#allocation11 + $0xa48] sm:$0xff]
    %v6890 = vld [vmem:[#allocation11 + $0xa50] sm:$0xff]
    %v6891 = vld [vmem:[#allocation11 + $0xa58] sm:$0xff]
    %v6892 = vld [vmem:[#allocation11 + $0xa60] sm:$0xff]
    %v6893 = vld [vmem:[#allocation11 + $0xa68] sm:$0xff]
    %v6894 = vld [vmem:[#allocation11 + $0xa70] sm:$0xff]
    %v6895 = vld [vmem:[#allocation11 + $0xa78] sm:$0xff]
    %v6896 = vld [vmem:[#allocation11 + $0xa80] sm:$0xff]
    %v6897 = vld [vmem:[#allocation11 + $0xa88] sm:$0xff]
    %v6898 = vld [vmem:[#allocation11 + $0xa90] sm:$0xff]
    %v6899 = vld [vmem:[#allocation11 + $0xa98] sm:$0xff]
    %v6900 = vld [vmem:[#allocation11 + $0xaa0] sm:$0xff]
    %v6901 = vld [vmem:[#allocation11 + $0xaa8] sm:$0xff]
    %v6902 = vld [vmem:[#allocation11 + $0xab0] sm:$0xff]
    %v6903 = vld [vmem:[#allocation11 + $0xab8] sm:$0xff]
    %v6904 = vld [vmem:[#allocation11 + $0xac0] sm:$0xff]
    %v6905 = vld [vmem:[#allocation11 + $0xac8] sm:$0xff]
    %v6906 = vld [vmem:[#allocation11 + $0xad0] sm:$0xff]
    %v6907 = vld [vmem:[#allocation11 + $0xad8] sm:$0xff]
    %v6908 = vld [vmem:[#allocation11 + $0xae0] sm:$0xff]
    %v6909 = vld [vmem:[#allocation11 + $0xae8] sm:$0xff]
    %v6910 = vld [vmem:[#allocation11 + $0xaf0] sm:$0xff]
    %v6911 = vld [vmem:[#allocation11 + $0xaf8] sm:$0xff]
    %v6912 = vld [vmem:[#allocation11 + $0xb00] sm:$0xff]
    %v6913 = vld [vmem:[#allocation11 + $0xb08] sm:$0xff]
    %v6914 = vld [vmem:[#allocation11 + $0xb10] sm:$0xff]
    %v6915 = vld [vmem:[#allocation11 + $0xb18] sm:$0xff]
    %v6916 = vld [vmem:[#allocation11 + $0xb20] sm:$0xff]
    %v6917 = vld [vmem:[#allocation11 + $0xb28] sm:$0xff]
    %v6918 = vld [vmem:[#allocation11 + $0xb30] sm:$0xff]
    %v6919 = vld [vmem:[#allocation11 + $0xb38] sm:$0xff]
    %v6920 = vld [vmem:[#allocation11 + $0xb40] sm:$0xff]
    %v6921 = vld [vmem:[#allocation11 + $0xb48] sm:$0xff]
    %v6922 = vld [vmem:[#allocation11 + $0xb50] sm:$0xff]
    %v6923 = vld [vmem:[#allocation11 + $0xb58] sm:$0xff]
    %v6924 = vld [vmem:[#allocation11 + $0xb60] sm:$0xff]
    %v6925 = vld [vmem:[#allocation11 + $0xb68] sm:$0xff]
    %v6926 = vld [vmem:[#allocation11 + $0xb70] sm:$0xff]
    %v6927 = vld [vmem:[#allocation11 + $0xb78] sm:$0xff]
    %v6928 = vld [vmem:[#allocation11 + $0xb80] sm:$0xff]
    %v6929 = vld [vmem:[#allocation11 + $0xb88] sm:$0xff]
    %v6930 = vld [vmem:[#allocation11 + $0xb90] sm:$0xff]
    %v6931 = vld [vmem:[#allocation11 + $0xb98] sm:$0xff]
    %v6932 = vld [vmem:[#allocation11 + $0xba0] sm:$0xff]
    %v6933 = vld [vmem:[#allocation11 + $0xba8] sm:$0xff]
    %v6934 = vld [vmem:[#allocation11 + $0xbb0] sm:$0xff]
    %v6935 = vld [vmem:[#allocation11 + $0xbb8] sm:$0xff]
    %v6936 = vld [vmem:[#allocation11 + $0xbc0] sm:$0xff]
    %v6937 = vld [vmem:[#allocation11 + $0xbc8] sm:$0xff]
    %v6938 = vld [vmem:[#allocation11 + $0xbd0] sm:$0xff]
    %v6939 = vld [vmem:[#allocation11 + $0xbd8] sm:$0xff]
    %v6940 = vld [vmem:[#allocation11 + $0xbe0] sm:$0xff]
    %v6941 = vld [vmem:[#allocation11 + $0xbe8] sm:$0xff]
    %v6942 = vld [vmem:[#allocation11 + $0xbf0] sm:$0xff]
    %v6943 = vld [vmem:[#allocation11 + $0xbf8] sm:$0xff]
    %6944 = vmatprep.subr.mxu0 %v6817
    %6945 = vmatpush1.msra.mxu0 %v6816
    %6946 = vmatprep.subr.mxu0 %v6821
    %6947 = vmatpush1.msra.mxu0 %v6820
    %6948 = vmatprep.subr.mxu0 %v6825
    %6949 = vmatpush1.msra.mxu0 %v6824
    %6950 = vmatprep.subr.mxu0 %v6829
    %6951 = vmatpush1.msra.mxu0 %v6828
    %6952 = vmatprep.subr.mxu0 %v6833
    %6953 = vmatpush1.msra.mxu0 %v6832
    %6954 = vmatprep.subr.mxu0 %v6837
    %6955 = vmatpush1.msra.mxu0 %v6836
    %6956 = vmatprep.subr.mxu0 %v6841
    %6957 = vmatpush1.msra.mxu0 %v6840
    %6958 = vmatprep.subr.mxu0 %v6845
    %6959 = vmatpush1.msra.mxu0 %v6844
    %6960 = vmatprep.subr.mxu0 %v6849
    %6961 = vmatpush1.msra.mxu0 %v6848
    %6962 = vmatprep.subr.mxu0 %v6853
    %6963 = vmatpush1.msra.mxu0 %v6852
    %6964 = vmatprep.subr.mxu0 %v6857
    %6965 = vmatpush1.msra.mxu0 %v6856
    %6966 = vmatprep.subr.mxu0 %v6861
    %6967 = vmatpush1.msra.mxu0 %v6860
    %6968 = vmatprep.subr.mxu0 %v6865
    %6969 = vmatpush1.msra.mxu0 %v6864
    %6970 = vmatprep.subr.mxu0 %v6869
    %6971 = vmatpush1.msra.mxu0 %v6868
    %6972 = vmatprep.subr.mxu0 %v6873
    %6973 = vmatpush1.msra.mxu0 %v6872
    %6974 = vmatprep.subr.mxu0 %v6877
    %6975 = vmatpush1.msra.mxu0 %v6876
    %6976 = vmatprep.subr.mxu0 %v6881
    %6977 = vmatpush1.msra.mxu0 %v6880
    %6978 = vmatprep.subr.mxu0 %v6885
    %6979 = vmatpush1.msra.mxu0 %v6884
    %6980 = vmatprep.subr.mxu0 %v6889
    %6981 = vmatpush1.msra.mxu0 %v6888
    %6982 = vmatprep.subr.mxu0 %v6893
    %6983 = vmatpush1.msra.mxu0 %v6892
    %6984 = vmatprep.subr.mxu0 %v6897
    %6985 = vmatpush1.msra.mxu0 %v6896
    %6986 = vmatprep.subr.mxu0 %v6901
    %6987 = vmatpush1.msra.mxu0 %v6900
    %6988 = vmatprep.subr.mxu0 %v6905
    %6989 = vmatpush1.msra.mxu0 %v6904
    %6990 = vmatprep.subr.mxu0 %v6909
    %6991 = vmatpush1.msra.mxu0 %v6908
    %6992 = vmatprep.subr.mxu0 %v6913
    %6993 = vmatpush1.msra.mxu0 %v6912
    %6994 = vmatprep.subr.mxu0 %v6917
    %6995 = vmatpush1.msra.mxu0 %v6916
    %6996 = vmatprep.subr.mxu0 %v6921
    %6997 = vmatpush1.msra.mxu0 %v6920
    %6998 = vmatprep.subr.mxu0 %v6925
    %6999 = vmatpush1.msra.mxu0 %v6924
    %7000 = vmatprep.subr.mxu0 %v6929
    %7001 = vmatpush1.msra.mxu0 %v6928
    %7002 = vmatprep.subr.mxu0 %v6933
    %7003 = vmatpush1.msra.mxu0 %v6932
    %7004 = vmatprep.subr.mxu0 %v6937
    %7005 = vmatpush1.msra.mxu0 %v6936
    %7006 = vmatprep.subr.mxu0 %v6941
    %7007 = vmatpush1.msra.mxu0 %v6940
    %7008 = vmatprep.mubr.f32.mxu0 %v6814
    %7009 = vmatmul.mubr.f32.gmra.mrb[0].mxu0 %v6812
    %v7010 = vpop.f32.mrb[0].mxu0
    %v7011 = vadd.f32 0.0, %v7010
    %v7012 = vpop.f32.mrb[0].mxu0
    %v7013 = vadd.f32 0.0, %v7012
    %7014 = vdwg.mxu0
    %7015 = vmatprep.subr.mxu0 %v6819
    %7016 = vmatpush1.msra.mxu0 %v6818
    %7017 = vmatprep.subr.mxu0 %v6823
    %7018 = vmatpush1.msra.mxu0 %v6822
    %7019 = vmatprep.subr.mxu0 %v6827
    %7020 = vmatpush1.msra.mxu0 %v6826
    %7021 = vmatprep.subr.mxu0 %v6831
    %7022 = vmatpush1.msra.mxu0 %v6830
    %7023 = vmatprep.subr.mxu0 %v6835
    %7024 = vmatpush1.msra.mxu0 %v6834
    %7025 = vmatprep.subr.mxu0 %v6839
    %7026 = vmatpush1.msra.mxu0 %v6838
    %7027 = vmatprep.subr.mxu0 %v6843
    %7028 = vmatpush1.msra.mxu0 %v6842
    %7029 = vmatprep.subr.mxu0 %v6847
    %7030 = vmatpush1.msra.mxu0 %v6846
    %7031 = vmatprep.subr.mxu0 %v6851
    %7032 = vmatpush1.msra.mxu0 %v6850
    %7033 = vmatprep.subr.mxu0 %v6855
    %7034 = vmatpush1.msra.mxu0 %v6854
    %7035 = vmatprep.subr.mxu0 %v6859
    %7036 = vmatpush1.msra.mxu0 %v6858
    %7037 = vmatprep.subr.mxu0 %v6863
    %7038 = vmatpush1.msra.mxu0 %v6862
    %7039 = vmatprep.subr.mxu0 %v6867
    %7040 = vmatpush1.msra.mxu0 %v6866
    %7041 = vmatprep.subr.mxu0 %v6871
    %7042 = vmatpush1.msra.mxu0 %v6870
    %7043 = vmatprep.subr.mxu0 %v6875
    %7044 = vmatpush1.msra.mxu0 %v6874
    %7045 = vmatprep.subr.mxu0 %v6879
    %7046 = vmatpush1.msra.mxu0 %v6878
    %7047 = vmatprep.subr.mxu0 %v6883
    %7048 = vmatpush1.msra.mxu0 %v6882
    %7049 = vmatprep.subr.mxu0 %v6887
    %7050 = vmatpush1.msra.mxu0 %v6886
    %7051 = vmatprep.subr.mxu0 %v6891
    %7052 = vmatpush1.msra.mxu0 %v6890
    %7053 = vmatprep.subr.mxu0 %v6895
    %7054 = vmatpush1.msra.mxu0 %v6894
    %7055 = vmatprep.subr.mxu0 %v6899
    %7056 = vmatpush1.msra.mxu0 %v6898
    %7057 = vmatprep.subr.mxu0 %v6903
    %7058 = vmatpush1.msra.mxu0 %v6902
    %7059 = vmatprep.subr.mxu0 %v6907
    %7060 = vmatpush1.msra.mxu0 %v6906
    %7061 = vmatprep.subr.mxu0 %v6911
    %7062 = vmatpush1.msra.mxu0 %v6910
    %7063 = vmatprep.subr.mxu0 %v6915
    %7064 = vmatpush1.msra.mxu0 %v6914
    %7065 = vmatprep.subr.mxu0 %v6919
    %7066 = vmatpush1.msra.mxu0 %v6918
    %7067 = vmatprep.subr.mxu0 %v6923
    %7068 = vmatpush1.msra.mxu0 %v6922
    %7069 = vmatprep.subr.mxu0 %v6927
    %7070 = vmatpush1.msra.mxu0 %v6926
    %7071 = vmatprep.subr.mxu0 %v6931
    %7072 = vmatpush1.msra.mxu0 %v6930
    %7073 = vmatprep.subr.mxu0 %v6935
    %7074 = vmatpush1.msra.mxu0 %v6934
    %7075 = vmatprep.subr.mxu0 %v6939
    %7076 = vmatpush1.msra.mxu0 %v6938
    %7077 = vmatprep.subr.mxu0 %v6943
    %7078 = vmatpush1.msra.mxu0 %v6942
    %7079 = vmatprep.mubr.f32.mxu0 %v6814
    %7080 = vmatmul.mubr.f32.gmra.mrb[0].mxu0 %v6812
    %v7081 = vpop.f32.mrb[0].mxu0
    %v7082 = vadd.f32 0.0, %v7081
    %v7083 = vpop.f32.mrb[0].mxu0
    %v7084 = vadd.f32 0.0, %v7083
    %7085 = vdwg.mxu0
    %v7086 = vadd.f32 %v6663, %v7011
    %v7087 = vadd.f32 %v6665, %v7013
    %v7088 = vadd.f32 %v6734, %v7082
    %v7089 = vadd.f32 %v6736, %v7084
    %v7090 = vadd.s32 %v6041, 3
    %vm7091 = vcmp.eq.s32.totalorder %v2398, %v7090
    %v7092 = vsel %vm7091, 1, 0
    %v7093 = vcvt.s32.f32 %v7092
    %v7095 = vsel %vm6045, %v7093, 0
    %7097 = vmatprep.subr.mxu0 %v6040
    %7098 = vmatpush1.msra.mxu0 %v6039
    %7099 = vmatprep.subr.mxu0 0.0
    %7100 = vmatpush1.msra.mxu0 0.0
    %7101 = vmatprep.subr.mxu0 0.0
    %7102 = vmatpush1.msra.mxu0 0.0
    %7103 = vmatprep.subr.mxu0 0.0
    %7104 = vmatpush1.msra.mxu0 0.0
    %7105 = vmatprep.subr.mxu0 0.0
    %7106 = vmatpush1.msra.mxu0 0.0
    %7107 = vmatprep.subr.mxu0 0.0
    %7108 = vmatpush1.msra.mxu0 0.0
    %7109 = vmatprep.subr.mxu0 0.0
    %7110 = vmatpush1.msra.mxu0 0.0
    %7111 = vmatprep.subr.mxu0 0.0
    %7112 = vmatpush1.msra.mxu0 0.0
    %7113 = vmatprep.subr.mxu0 0.0
    %7114 = vmatpush1.msra.mxu0 0.0
    %7115 = vmatprep.subr.mxu0 0.0
    %7116 = vmatpush1.msra.mxu0 0.0
    %7117 = vmatprep.subr.mxu0 0.0
    %7118 = vmatpush1.msra.mxu0 0.0
    %7119 = vmatprep.subr.mxu0 0.0
    %7120 = vmatpush1.msra.mxu0 0.0
    %7121 = vmatprep.subr.mxu0 0.0
    %7122 = vmatpush1.msra.mxu0 0.0
    %7123 = vmatprep.subr.mxu0 0.0
    %7124 = vmatpush1.msra.mxu0 0.0
    %7125 = vmatprep.subr.mxu0 0.0
    %7126 = vmatpush1.msra.mxu0 0.0
    %7127 = vmatprep.subr.mxu0 0.0
    %7128 = vmatpush1.msra.mxu0 0.0
    %7129 = vmatprep.subr.mxu0 0.0
    %7130 = vmatpush1.msra.mxu0 0.0
    %7131 = vmatprep.subr.mxu0 0.0
    %7132 = vmatpush1.msra.mxu0 0.0
    %7133 = vmatprep.subr.mxu0 0.0
    %7134 = vmatpush1.msra.mxu0 0.0
    %7135 = vmatprep.subr.mxu0 0.0
    %7136 = vmatpush1.msra.mxu0 0.0
    %7137 = vmatprep.subr.mxu0 0.0
    %7138 = vmatpush1.msra.mxu0 0.0
    %7139 = vmatprep.subr.mxu0 0.0
    %7140 = vmatpush1.msra.mxu0 0.0
    %7141 = vmatprep.subr.mxu0 0.0
    %7142 = vmatpush1.msra.mxu0 0.0
    %7143 = vmatprep.subr.mxu0 0.0
    %7144 = vmatpush1.msra.mxu0 0.0
    %7145 = vmatprep.subr.mxu0 0.0
    %7146 = vmatpush1.msra.mxu0 0.0
    %7147 = vmatprep.subr.mxu0 0.0
    %7148 = vmatpush1.msra.mxu0 0.0
    %7149 = vmatprep.subr.mxu0 0.0
    %7150 = vmatpush1.msra.mxu0 0.0
    %7151 = vmatprep.subr.mxu0 0.0
    %7152 = vmatpush1.msra.mxu0 0.0
    %7153 = vmatprep.subr.mxu0 0.0
    %7154 = vmatpush1.msra.mxu0 0.0
    %7155 = vmatprep.subr.mxu0 0.0
    %7156 = vmatpush1.msra.mxu0 0.0
    %7157 = vmatprep.subr.mxu0 0.0
    %7158 = vmatpush1.msra.mxu0 0.0
    %7159 = vmatprep.subr.mxu0 0.0
    %7160 = vmatpush1.msra.mxu0 0.0
    %7161 = vmatprep.mubr.f32.mxu0 0.0
    %7162 = vmatmul.mubr.f32.gmra.mrb[0].mxu0 %v7095
    %v7163 = vpop.f32.mrb[0].mxu0
    %v7164 = vadd.f32 0.0, %v7163
    %v7165 = vpop.f32.mrb[0].mxu0
    %v7166 = vadd.f32 0.0, %v7165
    %7167 = vdwg.mxu0
    %v7168 = vld [vmem:[#allocation11 + $0xc00] sm:$0xff]
    %v7169 = vld [vmem:[#allocation11 + $0xc08] sm:$0xff]
    %v7170 = vld [vmem:[#allocation11 + $0xc10] sm:$0xff]
    %v7171 = vld [vmem:[#allocation11 + $0xc18] sm:$0xff]
    %v7172 = vld [vmem:[#allocation11 + $0xc20] sm:$0xff]
    %v7173 = vld [vmem:[#allocation11 + $0xc28] sm:$0xff]
    %v7174 = vld [vmem:[#allocation11 + $0xc30] sm:$0xff]
    %v7175 = vld [vmem:[#allocation11 + $0xc38] sm:$0xff]
    %v7176 = vld [vmem:[#allocation11 + $0xc40] sm:$0xff]
    %v7177 = vld [vmem:[#allocation11 + $0xc48] sm:$0xff]
    %v7178 = vld [vmem:[#allocation11 + $0xc50] sm:$0xff]
    %v7179 = vld [vmem:[#allocation11 + $0xc58] sm:$0xff]
    %v7180 = vld [vmem:[#allocation11 + $0xc60] sm:$0xff]
    %v7181 = vld [vmem:[#allocation11 + $0xc68] sm:$0xff]
    %v7182 = vld [vmem:[#allocation11 + $0xc70] sm:$0xff]
    %v7183 = vld [vmem:[#allocation11 + $0xc78] sm:$0xff]
    %v7184 = vld [vmem:[#allocation11 + $0xc80] sm:$0xff]
    %v7185 = vld [vmem:[#allocation11 + $0xc88] sm:$0xff]
    %v7186 = vld [vmem:[#allocation11 + $0xc90] sm:$0xff]
    %v7187 = vld [vmem:[#allocation11 + $0xc98] sm:$0xff]
    %v7188 = vld [vmem:[#allocation11 + $0xca0] sm:$0xff]
    %v7189 = vld [vmem:[#allocation11 + $0xca8] sm:$0xff]
    %v7190 = vld [vmem:[#allocation11 + $0xcb0] sm:$0xff]
    %v7191 = vld [vmem:[#allocation11 + $0xcb8] sm:$0xff]
    %v7192 = vld [vmem:[#allocation11 + $0xcc0] sm:$0xff]
    %v7193 = vld [vmem:[#allocation11 + $0xcc8] sm:$0xff]
    %v7194 = vld [vmem:[#allocation11 + $0xcd0] sm:$0xff]
    %v7195 = vld [vmem:[#allocation11 + $0xcd8] sm:$0xff]
    %v7196 = vld [vmem:[#allocation11 + $0xce0] sm:$0xff]
    %v7197 = vld [vmem:[#allocation11 + $0xce8] sm:$0xff]
    %v7198 = vld [vmem:[#allocation11 + $0xcf0] sm:$0xff]
    %v7199 = vld [vmem:[#allocation11 + $0xcf8] sm:$0xff]
    %v7200 = vld [vmem:[#allocation11 + $0xd00] sm:$0xff]
    %v7201 = vld [vmem:[#allocation11 + $0xd08] sm:$0xff]
    %v7202 = vld [vmem:[#allocation11 + $0xd10] sm:$0xff]
    %v7203 = vld [vmem:[#allocation11 + $0xd18] sm:$0xff]
    %v7204 = vld [vmem:[#allocation11 + $0xd20] sm:$0xff]
    %v7205 = vld [vmem:[#allocation11 + $0xd28] sm:$0xff]
    %v7206 = vld [vmem:[#allocation11 + $0xd30] sm:$0xff]
    %v7207 = vld [vmem:[#allocation11 + $0xd38] sm:$0xff]
    %v7208 = vld [vmem:[#allocation11 + $0xd40] sm:$0xff]
    %v7209 = vld [vmem:[#allocation11 + $0xd48] sm:$0xff]
    %v7210 = vld [vmem:[#allocation11 + $0xd50] sm:$0xff]
    %v7211 = vld [vmem:[#allocation11 + $0xd58] sm:$0xff]
    %v7212 = vld [vmem:[#allocation11 + $0xd60] sm:$0xff]
    %v7213 = vld [vmem:[#allocation11 + $0xd68] sm:$0xff]
    %v7214 = vld [vmem:[#allocation11 + $0xd70] sm:$0xff]
    %v7215 = vld [vmem:[#allocation11 + $0xd78] sm:$0xff]
    %v7216 = vld [vmem:[#allocation11 + $0xd80] sm:$0xff]
    %v7217 = vld [vmem:[#allocation11 + $0xd88] sm:$0xff]
    %v7218 = vld [vmem:[#allocation11 + $0xd90] sm:$0xff]
    %v7219 = vld [vmem:[#allocation11 + $0xd98] sm:$0xff]
    %v7220 = vld [vmem:[#allocation11 + $0xda0] sm:$0xff]
    %v7221 = vld [vmem:[#allocation11 + $0xda8] sm:$0xff]
    %v7222 = vld [vmem:[#allocation11 + $0xdb0] sm:$0xff]
    %v7223 = vld [vmem:[#allocation11 + $0xdb8] sm:$0xff]
    %v7224 = vld [vmem:[#allocation11 + $0xdc0] sm:$0xff]
    %v7225 = vld [vmem:[#allocation11 + $0xdc8] sm:$0xff]
    %v7226 = vld [vmem:[#allocation11 + $0xdd0] sm:$0xff]
    %v7227 = vld [vmem:[#allocation11 + $0xdd8] sm:$0xff]
    %v7228 = vld [vmem:[#allocation11 + $0xde0] sm:$0xff]
    %v7229 = vld [vmem:[#allocation11 + $0xde8] sm:$0xff]
    %v7230 = vld [vmem:[#allocation11 + $0xdf0] sm:$0xff]
    %v7231 = vld [vmem:[#allocation11 + $0xdf8] sm:$0xff]
    %v7232 = vld [vmem:[#allocation11 + $0xe00] sm:$0xff]
    %v7233 = vld [vmem:[#allocation11 + $0xe08] sm:$0xff]
    %v7234 = vld [vmem:[#allocation11 + $0xe10] sm:$0xff]
    %v7235 = vld [vmem:[#allocation11 + $0xe18] sm:$0xff]
    %v7236 = vld [vmem:[#allocation11 + $0xe20] sm:$0xff]
    %v7237 = vld [vmem:[#allocation11 + $0xe28] sm:$0xff]
    %v7238 = vld [vmem:[#allocation11 + $0xe30] sm:$0xff]
    %v7239 = vld [vmem:[#allocation11 + $0xe38] sm:$0xff]
    %v7240 = vld [vmem:[#allocation11 + $0xe40] sm:$0xff]
    %v7241 = vld [vmem:[#allocation11 + $0xe48] sm:$0xff]
    %v7242 = vld [vmem:[#allocation11 + $0xe50] sm:$0xff]
    %v7243 = vld [vmem:[#allocation11 + $0xe58] sm:$0xff]
    %v7244 = vld [vmem:[#allocation11 + $0xe60] sm:$0xff]
    %v7245 = vld [vmem:[#allocation11 + $0xe68] sm:$0xff]
    %v7246 = vld [vmem:[#allocation11 + $0xe70] sm:$0xff]
    %v7247 = vld [vmem:[#allocation11 + $0xe78] sm:$0xff]
    %v7248 = vld [vmem:[#allocation11 + $0xe80] sm:$0xff]
    %v7249 = vld [vmem:[#allocation11 + $0xe88] sm:$0xff]
    %v7250 = vld [vmem:[#allocation11 + $0xe90] sm:$0xff]
    %v7251 = vld [vmem:[#allocation11 + $0xe98] sm:$0xff]
    %v7252 = vld [vmem:[#allocation11 + $0xea0] sm:$0xff]
    %v7253 = vld [vmem:[#allocation11 + $0xea8] sm:$0xff]
    %v7254 = vld [vmem:[#allocation11 + $0xeb0] sm:$0xff]
    %v7255 = vld [vmem:[#allocation11 + $0xeb8] sm:$0xff]
    %v7256 = vld [vmem:[#allocation11 + $0xec0] sm:$0xff]
    %v7257 = vld [vmem:[#allocation11 + $0xec8] sm:$0xff]
    %v7258 = vld [vmem:[#allocation11 + $0xed0] sm:$0xff]
    %v7259 = vld [vmem:[#allocation11 + $0xed8] sm:$0xff]
    %v7260 = vld [vmem:[#allocation11 + $0xee0] sm:$0xff]
    %v7261 = vld [vmem:[#allocation11 + $0xee8] sm:$0xff]
    %v7262 = vld [vmem:[#allocation11 + $0xef0] sm:$0xff]
    %v7263 = vld [vmem:[#allocation11 + $0xef8] sm:$0xff]
    %v7264 = vld [vmem:[#allocation11 + $0xf00] sm:$0xff]
    %v7265 = vld [vmem:[#allocation11 + $0xf08] sm:$0xff]
    %v7266 = vld [vmem:[#allocation11 + $0xf10] sm:$0xff]
    %v7267 = vld [vmem:[#allocation11 + $0xf18] sm:$0xff]
    %v7268 = vld [vmem:[#allocation11 + $0xf20] sm:$0xff]
    %v7269 = vld [vmem:[#allocation11 + $0xf28] sm:$0xff]
    %v7270 = vld [vmem:[#allocation11 + $0xf30] sm:$0xff]
    %v7271 = vld [vmem:[#allocation11 + $0xf38] sm:$0xff]
    %v7272 = vld [vmem:[#allocation11 + $0xf40] sm:$0xff]
    %v7273 = vld [vmem:[#allocation11 + $0xf48] sm:$0xff]
    %v7274 = vld [vmem:[#allocation11 + $0xf50] sm:$0xff]
    %v7275 = vld [vmem:[#allocation11 + $0xf58] sm:$0xff]
    %v7276 = vld [vmem:[#allocation11 + $0xf60] sm:$0xff]
    %v7277 = vld [vmem:[#allocation11 + $0xf68] sm:$0xff]
    %v7278 = vld [vmem:[#allocation11 + $0xf70] sm:$0xff]
    %v7279 = vld [vmem:[#allocation11 + $0xf78] sm:$0xff]
    %v7280 = vld [vmem:[#allocation11 + $0xf80] sm:$0xff]
    %v7281 = vld [vmem:[#allocation11 + $0xf88] sm:$0xff]
    %v7282 = vld [vmem:[#allocation11 + $0xf90] sm:$0xff]
    %v7283 = vld [vmem:[#allocation11 + $0xf98] sm:$0xff]
    %v7284 = vld [vmem:[#allocation11 + $0xfa0] sm:$0xff]
    %v7285 = vld [vmem:[#allocation11 + $0xfa8] sm:$0xff]
    %v7286 = vld [vmem:[#allocation11 + $0xfb0] sm:$0xff]
    %v7287 = vld [vmem:[#allocation11 + $0xfb8] sm:$0xff]
    %v7288 = vld [vmem:[#allocation11 + $0xfc0] sm:$0xff]
    %v7289 = vld [vmem:[#allocation11 + $0xfc8] sm:$0xff]
    %v7290 = vld [vmem:[#allocation11 + $0xfd0] sm:$0xff]
    %v7291 = vld [vmem:[#allocation11 + $0xfd8] sm:$0xff]
    %v7292 = vld [vmem:[#allocation11 + $0xfe0] sm:$0xff]
    %v7293 = vld [vmem:[#allocation11 + $0xfe8] sm:$0xff]
    %v7294 = vld [vmem:[#allocation11 + $0xff0] sm:$0xff]
    %v7295 = vld [vmem:[#allocation11 + $0xff8] sm:$0xff]
    %7296 = vmatprep.subr.mxu0 %v7169
    %7297 = vmatpush1.msra.mxu0 %v7168
    %7298 = vmatprep.subr.mxu0 %v7173
    %7299 = vmatpush1.msra.mxu0 %v7172
    %7300 = vmatprep.subr.mxu0 %v7177
    %7301 = vmatpush1.msra.mxu0 %v7176
    %7302 = vmatprep.subr.mxu0 %v7181
    %7303 = vmatpush1.msra.mxu0 %v7180
    %7304 = vmatprep.subr.mxu0 %v7185
    %7305 = vmatpush1.msra.mxu0 %v7184
    %7306 = vmatprep.subr.mxu0 %v7189
    %7307 = vmatpush1.msra.mxu0 %v7188
    %7308 = vmatprep.subr.mxu0 %v7193
    %7309 = vmatpush1.msra.mxu0 %v7192
    %7310 = vmatprep.subr.mxu0 %v7197
    %7311 = vmatpush1.msra.mxu0 %v7196
    %7312 = vmatprep.subr.mxu0 %v7201
    %7313 = vmatpush1.msra.mxu0 %v7200
    %7314 = vmatprep.subr.mxu0 %v7205
    %7315 = vmatpush1.msra.mxu0 %v7204
    %7316 = vmatprep.subr.mxu0 %v7209
    %7317 = vmatpush1.msra.mxu0 %v7208
    %7318 = vmatprep.subr.mxu0 %v7213
    %7319 = vmatpush1.msra.mxu0 %v7212
    %7320 = vmatprep.subr.mxu0 %v7217
    %7321 = vmatpush1.msra.mxu0 %v7216
    %7322 = vmatprep.subr.mxu0 %v7221
    %7323 = vmatpush1.msra.mxu0 %v7220
    %7324 = vmatprep.subr.mxu0 %v7225
    %7325 = vmatpush1.msra.mxu0 %v7224
    %7326 = vmatprep.subr.mxu0 %v7229
    %7327 = vmatpush1.msra.mxu0 %v7228
    %7328 = vmatprep.subr.mxu0 %v7233
    %7329 = vmatpush1.msra.mxu0 %v7232
    %7330 = vmatprep.subr.mxu0 %v7237
    %7331 = vmatpush1.msra.mxu0 %v7236
    %7332 = vmatprep.subr.mxu0 %v7241
    %7333 = vmatpush1.msra.mxu0 %v7240
    %7334 = vmatprep.subr.mxu0 %v7245
    %7335 = vmatpush1.msra.mxu0 %v7244
    %7336 = vmatprep.subr.mxu0 %v7249
    %7337 = vmatpush1.msra.mxu0 %v7248
    %7338 = vmatprep.subr.mxu0 %v7253
    %7339 = vmatpush1.msra.mxu0 %v7252
    %7340 = vmatprep.subr.mxu0 %v7257
    %7341 = vmatpush1.msra.mxu0 %v7256
    %7342 = vmatprep.subr.mxu0 %v7261
    %7343 = vmatpush1.msra.mxu0 %v7260
    %7344 = vmatprep.subr.mxu0 %v7265
    %7345 = vmatpush1.msra.mxu0 %v7264
    %7346 = vmatprep.subr.mxu0 %v7269
    %7347 = vmatpush1.msra.mxu0 %v7268
    %7348 = vmatprep.subr.mxu0 %v7273
    %7349 = vmatpush1.msra.mxu0 %v7272
    %7350 = vmatprep.subr.mxu0 %v7277
    %7351 = vmatpush1.msra.mxu0 %v7276
    %7352 = vmatprep.subr.mxu0 %v7281
    %7353 = vmatpush1.msra.mxu0 %v7280
    %7354 = vmatprep.subr.mxu0 %v7285
    %7355 = vmatpush1.msra.mxu0 %v7284
    %7356 = vmatprep.subr.mxu0 %v7289
    %7357 = vmatpush1.msra.mxu0 %v7288
    %7358 = vmatprep.subr.mxu0 %v7293
    %7359 = vmatpush1.msra.mxu0 %v7292
    %7360 = vmatprep.mubr.f32.mxu0 %v7166
    %7361 = vmatmul.mubr.f32.gmra.mrb[0].mxu0 %v7164
    %v7362 = vpop.f32.mrb[0].mxu0
    %v7363 = vadd.f32 0.0, %v7362
    %v7364 = vpop.f32.mrb[0].mxu0
    %v7365 = vadd.f32 0.0, %v7364
    %7366 = vdwg.mxu0
    %7367 = vmatprep.subr.mxu0 %v7171
    %7368 = vmatpush1.msra.mxu0 %v7170
    %7369 = vmatprep.subr.mxu0 %v7175
    %7370 = vmatpush1.msra.mxu0 %v7174
    %7371 = vmatprep.subr.mxu0 %v7179
    %7372 = vmatpush1.msra.mxu0 %v7178
    %7373 = vmatprep.subr.mxu0 %v7183
    %7374 = vmatpush1.msra.mxu0 %v7182
    %7375 = vmatprep.subr.mxu0 %v7187
    %7376 = vmatpush1.msra.mxu0 %v7186
    %7377 = vmatprep.subr.mxu0 %v7191
    %7378 = vmatpush1.msra.mxu0 %v7190
    %7379 = vmatprep.subr.mxu0 %v7195
    %7380 = vmatpush1.msra.mxu0 %v7194
    %7381 = vmatprep.subr.mxu0 %v7199
    %7382 = vmatpush1.msra.mxu0 %v7198
    %7383 = vmatprep.subr.mxu0 %v7203
    %7384 = vmatpush1.msra.mxu0 %v7202
    %7385 = vmatprep.subr.mxu0 %v7207
    %7386 = vmatpush1.msra.mxu0 %v7206
    %7387 = vmatprep.subr.mxu0 %v7211
    %7388 = vmatpush1.msra.mxu0 %v7210
    %7389 = vmatprep.subr.mxu0 %v7215
    %7390 = vmatpush1.msra.mxu0 %v7214
    %7391 = vmatprep.subr.mxu0 %v7219
    %7392 = vmatpush1.msra.mxu0 %v7218
    %7393 = vmatprep.subr.mxu0 %v7223
    %7394 = vmatpush1.msra.mxu0 %v7222
    %7395 = vmatprep.subr.mxu0 %v7227
    %7396 = vmatpush1.msra.mxu0 %v7226
    %7397 = vmatprep.subr.mxu0 %v7231
    %7398 = vmatpush1.msra.mxu0 %v7230
    %7399 = vmatprep.subr.mxu0 %v7235
    %7400 = vmatpush1.msra.mxu0 %v7234
    %7401 = vmatprep.subr.mxu0 %v7239
    %7402 = vmatpush1.msra.mxu0 %v7238
    %7403 = vmatprep.subr.mxu0 %v7243
    %7404 = vmatpush1.msra.mxu0 %v7242
    %7405 = vmatprep.subr.mxu0 %v7247
    %7406 = vmatpush1.msra.mxu0 %v7246
    %7407 = vmatprep.subr.mxu0 %v7251
    %7408 = vmatpush1.msra.mxu0 %v7250
    %7409 = vmatprep.subr.mxu0 %v7255
    %7410 = vmatpush1.msra.mxu0 %v7254
    %7411 = vmatprep.subr.mxu0 %v7259
    %7412 = vmatpush1.msra.mxu0 %v7258
    %7413 = vmatprep.subr.mxu0 %v7263
    %7414 = vmatpush1.msra.mxu0 %v7262
    %7415 = vmatprep.subr.mxu0 %v7267
    %7416 = vmatpush1.msra.mxu0 %v7266
    %7417 = vmatprep.subr.mxu0 %v7271
    %7418 = vmatpush1.msra.mxu0 %v7270
    %7419 = vmatprep.subr.mxu0 %v7275
    %7420 = vmatpush1.msra.mxu0 %v7274
    %7421 = vmatprep.subr.mxu0 %v7279
    %7422 = vmatpush1.msra.mxu0 %v7278
    %7423 = vmatprep.subr.mxu0 %v7283
    %7424 = vmatpush1.msra.mxu0 %v7282
    %7425 = vmatprep.subr.mxu0 %v7287
    %7426 = vmatpush1.msra.mxu0 %v7286
    %7427 = vmatprep.subr.mxu0 %v7291
    %7428 = vmatpush1.msra.mxu0 %v7290
    %7429 = vmatprep.subr.mxu0 %v7295
    %7430 = vmatpush1.msra.mxu0 %v7294
    %7431 = vmatprep.mubr.f32.mxu0 %v7166
    %7432 = vmatmul.mubr.f32.gmra.mrb[0].mxu0 %v7164
    %v7433 = vpop.f32.mrb[0].mxu0
    %v7434 = vadd.f32 0.0, %v7433
    %v7435 = vpop.f32.mrb[0].mxu0
    %v7436 = vadd.f32 0.0, %v7435
    %7437 = vdwg.mxu0
    %v7438 = vadd.f32 %v7086, %v7363
    %v7439 = vadd.f32 %v7087, %v7365
    %v7440 = vadd.f32 %v7088, %v7434
    %v7441 = vadd.f32 %v7089, %v7436
    %v7442 = vld [vmem:[#allocation12] sm:$0xf]
    %v7444 = vlaneseq
    %v7445 = vshrl.u32 %v7444, 7
    %v7446 = vsub.s32 0, %v7445
    %v7447 = vrot.slane %v7442, %v7446
    %v7448 = vlaneseq
    %v7449 = vshrl.u32 %v7448, 7
    %v7450 = vsub.s32 1, %v7449
    %v7451 = vrot.slane %v7442, %v7450
    %v7452 = vlaneseq
    %v7453 = vshrl.u32 %v7452, 7
    %v7454 = vsub.s32 2, %v7453
    %v7455 = vrot.slane %v7442, %v7454
    %v7456 = vlaneseq
    %v7457 = vshrl.u32 %v7456, 7
    %v7458 = vsub.s32 3, %v7457
    %v7459 = vrot.slane %v7442, %v7458
    %v7464 = vadd.f32 %v7438, %v7447
    %v7465 = vadd.f32 %v7439, %v7451
    %v7466 = vadd.f32 %v7440, %v7455
    %v7467 = vadd.f32 %v7441, %v7459
    %v7468 = vmax.f32 %v7464, 0.0
    %v7469 = vmax.f32 %v7465, 0.0
    %v7470 = vmax.f32 %v7466, 0.0
    %v7471 = vmax.f32 %v7467, 0.0
    %v7472 = vld [vmem:[%s7] sm:$0xff]
    %v7473 = vld [vmem:[%s7 + $0x8] sm:$0xff]
    %v7474 = vld [vmem:[%s7 + $0x10] sm:$0xff]
    %v7475 = vld [vmem:[%s7 + $0x18] sm:$0xff]
    %v7476 = vld [vmem:[%s7 + $0x20] sm:$0xff]
    %v7477 = vld [vmem:[%s7 + $0x28] sm:$0xff]
    %v7478 = vld [vmem:[%s7 + $0x30] sm:$0xff]
    %v7479 = vld [vmem:[%s7 + $0x38] sm:$0xff]
    %v7480 = vld [vmem:[%s7 + $0x40] sm:$0xff]
    %v7481 = vld [vmem:[%s7 + $0x48] sm:$0xff]
    %v7482 = vld [vmem:[%s7 + $0x50] sm:$0xff]
    %v7483 = vld [vmem:[%s7 + $0x58] sm:$0xff]
    %v7484 = vld [vmem:[%s7 + $0x60] sm:$0xff]
    %v7485 = vld [vmem:[%s7 + $0x68] sm:$0xff]
    %v7486 = vld [vmem:[%s7 + $0x70] sm:$0xff]
    %v7487 = vld [vmem:[%s7 + $0x78] sm:$0xff]
    %v7488 = vld [vmem:[%s7 + $0x80] sm:$0xff]
    %v7489 = vld [vmem:[%s7 + $0x88] sm:$0xff]
    %v7490 = vld [vmem:[%s7 + $0x90] sm:$0xff]
    %v7491 = vld [vmem:[%s7 + $0x98] sm:$0xff]
    %v7492 = vld [vmem:[%s7 + $0xa0] sm:$0xff]
    %v7493 = vld [vmem:[%s7 + $0xa8] sm:$0xff]
    %v7494 = vld [vmem:[%s7 + $0xb0] sm:$0xff]
    %v7495 = vld [vmem:[%s7 + $0xb8] sm:$0xff]
    %v7496 = vld [vmem:[%s7 + $0xc0] sm:$0xff]
    %v7497 = vld [vmem:[%s7 + $0xc8] sm:$0xff]
    %v7498 = vld [vmem:[%s7 + $0xd0] sm:$0xff]
    %v7499 = vld [vmem:[%s7 + $0xd8] sm:$0xff]
    %v7500 = vld [vmem:[%s7 + $0xe0] sm:$0xff]
    %v7501 = vld [vmem:[%s7 + $0xe8] sm:$0xff]
    %v7502 = vld [vmem:[%s7 + $0xf0] sm:$0xff]
    %v7503 = vld [vmem:[%s7 + $0xf8] sm:$0xff]
    %v7504 = vld [vmem:[%s7 + $0x100] sm:$0xff]
    %v7505 = vld [vmem:[%s7 + $0x108] sm:$0xff]
    %v7506 = vld [vmem:[%s7 + $0x110] sm:$0xff]
    %v7507 = vld [vmem:[%s7 + $0x118] sm:$0xff]
    %v7508 = vld [vmem:[%s7 + $0x120] sm:$0xff]
    %v7509 = vld [vmem:[%s7 + $0x128] sm:$0xff]
    %v7510 = vld [vmem:[%s7 + $0x130] sm:$0xff]
    %v7511 = vld [vmem:[%s7 + $0x138] sm:$0xff]
    %v7512 = vld [vmem:[%s7 + $0x140] sm:$0xff]
    %v7513 = vld [vmem:[%s7 + $0x148] sm:$0xff]
    %v7514 = vld [vmem:[%s7 + $0x150] sm:$0xff]
    %v7515 = vld [vmem:[%s7 + $0x158] sm:$0xff]
    %v7516 = vld [vmem:[%s7 + $0x160] sm:$0xff]
    %v7517 = vld [vmem:[%s7 + $0x168] sm:$0xff]
    %v7518 = vld [vmem:[%s7 + $0x170] sm:$0xff]
    %v7519 = vld [vmem:[%s7 + $0x178] sm:$0xff]
    %v7520 = vld [vmem:[%s7 + $0x180] sm:$0xff]
    %v7521 = vld [vmem:[%s7 + $0x188] sm:$0xff]
    %v7522 = vld [vmem:[%s7 + $0x190] sm:$0xff]
    %v7523 = vld [vmem:[%s7 + $0x198] sm:$0xff]
    %v7524 = vld [vmem:[%s7 + $0x1a0] sm:$0xff]
    %v7525 = vld [vmem:[%s7 + $0x1a8] sm:$0xff]
    %v7526 = vld [vmem:[%s7 + $0x1b0] sm:$0xff]
    %v7527 = vld [vmem:[%s7 + $0x1b8] sm:$0xff]
    %v7528 = vld [vmem:[%s7 + $0x1c0] sm:$0xff]
    %v7529 = vld [vmem:[%s7 + $0x1c8] sm:$0xff]
    %v7530 = vld [vmem:[%s7 + $0x1d0] sm:$0xff]
    %v7531 = vld [vmem:[%s7 + $0x1d8] sm:$0xff]
    %v7532 = vld [vmem:[%s7 + $0x1e0] sm:$0xff]
    %v7533 = vld [vmem:[%s7 + $0x1e8] sm:$0xff]
    %v7534 = vld [vmem:[%s7 + $0x1f0] sm:$0xff]
    %v7535 = vld [vmem:[%s7 + $0x1f8] sm:$0xff]
    %v7536 = vld [vmem:[#allocation14] sm:$0x1]
    %v7538 = vlaneseq
    %v7539 = vshrl.u32 %v7538, 7
    %v7540 = vsub.s32 0, %v7539
    %v7541 = vrot.slane %v7536, %v7540
    %7543 = vmatprep.subr.mxu0 0.0
    %7544 = vmatpush1.msra.mxu0 %v7472
    %7545 = vmatprep.subr.mxu0 0.0
    %7546 = vmatpush1.msra.mxu0 %v7473
    %7547 = vmatprep.subr.mxu0 0.0
    %7548 = vmatpush1.msra.mxu0 %v7474
    %7549 = vmatprep.subr.mxu0 0.0
    %7550 = vmatpush1.msra.mxu0 %v7475
    %7551 = vmatprep.subr.mxu0 0.0
    %7552 = vmatpush1.msra.mxu0 %v7476
    %7553 = vmatprep.subr.mxu0 0.0
    %7554 = vmatpush1.msra.mxu0 %v7477
    %7555 = vmatprep.subr.mxu0 0.0
    %7556 = vmatpush1.msra.mxu0 %v7478
    %7557 = vmatprep.subr.mxu0 0.0
    %7558 = vmatpush1.msra.mxu0 %v7479
    %7559 = vmatprep.subr.mxu0 0.0
    %7560 = vmatpush1.msra.mxu0 %v7480
    %7561 = vmatprep.subr.mxu0 0.0
    %7562 = vmatpush1.msra.mxu0 %v7481
    %7563 = vmatprep.subr.mxu0 0.0
    %7564 = vmatpush1.msra.mxu0 %v7482
    %7565 = vmatprep.subr.mxu0 0.0
    %7566 = vmatpush1.msra.mxu0 %v7483
    %7567 = vmatprep.subr.mxu0 0.0
    %7568 = vmatpush1.msra.mxu0 %v7484
    %7569 = vmatprep.subr.mxu0 0.0
    %7570 = vmatpush1.msra.mxu0 %v7485
    %7571 = vmatprep.subr.mxu0 0.0
    %7572 = vmatpush1.msra.mxu0 %v7486
    %7573 = vmatprep.subr.mxu0 0.0
    %7574 = vmatpush1.msra.mxu0 %v7487
    %7575 = vmatprep.subr.mxu0 0.0
    %7576 = vmatpush1.msra.mxu0 %v7488
    %7577 = vmatprep.subr.mxu0 0.0
    %7578 = vmatpush1.msra.mxu0 %v7489
    %7579 = vmatprep.subr.mxu0 0.0
    %7580 = vmatpush1.msra.mxu0 %v7490
    %7581 = vmatprep.subr.mxu0 0.0
    %7582 = vmatpush1.msra.mxu0 %v7491
    %7583 = vmatprep.subr.mxu0 0.0
    %7584 = vmatpush1.msra.mxu0 %v7492
    %7585 = vmatprep.subr.mxu0 0.0
    %7586 = vmatpush1.msra.mxu0 %v7493
    %7587 = vmatprep.subr.mxu0 0.0
    %7588 = vmatpush1.msra.mxu0 %v7494
    %7589 = vmatprep.subr.mxu0 0.0
    %7590 = vmatpush1.msra.mxu0 %v7495
    %7591 = vmatprep.subr.mxu0 0.0
    %7592 = vmatpush1.msra.mxu0 %v7496
    %7593 = vmatprep.subr.mxu0 0.0
    %7594 = vmatpush1.msra.mxu0 %v7497
    %7595 = vmatprep.subr.mxu0 0.0
    %7596 = vmatpush1.msra.mxu0 %v7498
    %7597 = vmatprep.subr.mxu0 0.0
    %7598 = vmatpush1.msra.mxu0 %v7499
    %7599 = vmatprep.subr.mxu0 0.0
    %7600 = vmatpush1.msra.mxu0 %v7500
    %7601 = vmatprep.subr.mxu0 0.0
    %7602 = vmatpush1.msra.mxu0 %v7501
    %7603 = vmatprep.subr.mxu0 0.0
    %7604 = vmatpush1.msra.mxu0 %v7502
    %7605 = vmatprep.subr.mxu0 0.0
    %7606 = vmatpush1.msra.mxu0 %v7503
    %7607 = vmatprep.mubr.f32.mxu0 %v7469
    %7608 = vmatmul.mubr.f32.gmra.mrb[0].mxu0 %v7468
    %v7609 = vpop.f32.mrb[0].mxu0
    %v7610 = vadd.f32 %v7541, %v7609
    %v7611 = vpop.f32.mrb[0].mxu0
    %7612 = vdwg.mxu0
    %7613 = vmatprep.subr.mxu0 0.0
    %7614 = vmatpush1.msra.mxu0 %v7504
    %7615 = vmatprep.subr.mxu0 0.0
    %7616 = vmatpush1.msra.mxu0 %v7505
    %7617 = vmatprep.subr.mxu0 0.0
    %7618 = vmatpush1.msra.mxu0 %v7506
    %7619 = vmatprep.subr.mxu0 0.0
    %7620 = vmatpush1.msra.mxu0 %v7507
    %7621 = vmatprep.subr.mxu0 0.0
    %7622 = vmatpush1.msra.mxu0 %v7508
    %7623 = vmatprep.subr.mxu0 0.0
    %7624 = vmatpush1.msra.mxu0 %v7509
    %7625 = vmatprep.subr.mxu0 0.0
    %7626 = vmatpush1.msra.mxu0 %v7510
    %7627 = vmatprep.subr.mxu0 0.0
    %7628 = vmatpush1.msra.mxu0 %v7511
    %7629 = vmatprep.subr.mxu0 0.0
    %7630 = vmatpush1.msra.mxu0 %v7512
    %7631 = vmatprep.subr.mxu0 0.0
    %7632 = vmatpush1.msra.mxu0 %v7513
    %7633 = vmatprep.subr.mxu0 0.0
    %7634 = vmatpush1.msra.mxu0 %v7514
    %7635 = vmatprep.subr.mxu0 0.0
    %7636 = vmatpush1.msra.mxu0 %v7515
    %7637 = vmatprep.subr.mxu0 0.0
    %7638 = vmatpush1.msra.mxu0 %v7516
    %7639 = vmatprep.subr.mxu0 0.0
    %7640 = vmatpush1.msra.mxu0 %v7517
    %7641 = vmatprep.subr.mxu0 0.0
    %7642 = vmatpush1.msra.mxu0 %v7518
    %7643 = vmatprep.subr.mxu0 0.0
    %7644 = vmatpush1.msra.mxu0 %v7519
    %7645 = vmatprep.subr.mxu0 0.0
    %7646 = vmatpush1.msra.mxu0 %v7520
    %7647 = vmatprep.subr.mxu0 0.0
    %7648 = vmatpush1.msra.mxu0 %v7521
    %7649 = vmatprep.subr.mxu0 0.0
    %7650 = vmatpush1.msra.mxu0 %v7522
    %7651 = vmatprep.subr.mxu0 0.0
    %7652 = vmatpush1.msra.mxu0 %v7523
    %7653 = vmatprep.subr.mxu0 0.0
    %7654 = vmatpush1.msra.mxu0 %v7524
    %7655 = vmatprep.subr.mxu0 0.0
    %7656 = vmatpush1.msra.mxu0 %v7525
    %7657 = vmatprep.subr.mxu0 0.0
    %7658 = vmatpush1.msra.mxu0 %v7526
    %7659 = vmatprep.subr.mxu0 0.0
    %7660 = vmatpush1.msra.mxu0 %v7527
    %7661 = vmatprep.subr.mxu0 0.0
    %7662 = vmatpush1.msra.mxu0 %v7528
    %7663 = vmatprep.subr.mxu0 0.0
    %7664 = vmatpush1.msra.mxu0 %v7529
    %7665 = vmatprep.subr.mxu0 0.0
    %7666 = vmatpush1.msra.mxu0 %v7530
    %7667 = vmatprep.subr.mxu0 0.0
    %7668 = vmatpush1.msra.mxu0 %v7531
    %7669 = vmatprep.subr.mxu0 0.0
    %7670 = vmatpush1.msra.mxu0 %v7532
    %7671 = vmatprep.subr.mxu0 0.0
    %7672 = vmatpush1.msra.mxu0 %v7533
    %7673 = vmatprep.subr.mxu0 0.0
    %7674 = vmatpush1.msra.mxu0 %v7534
    %7675 = vmatprep.subr.mxu0 0.0
    %7676 = vmatpush1.msra.mxu0 %v7535
    %7677 = vmatprep.mubr.f32.mxu0 %v7471
    %7678 = vmatmul.mubr.f32.gmra.mrb[0].mxu0 %v7470
    %v7679 = vpop.f32.mrb[0].mxu0
    %v7680 = vadd.f32 %v7610, %v7679
    %v7681 = vpop.f32.mrb[0].mxu0
    %7682 = vdwg.mxu0
    %vm7683 = vcmask 74752
    %7684 = vst.msk [vmem:[#allocation15] sm:$0x3] %vm7683, %v7680
    // Predicated region
    $region66: #{fedavg_cnn_forward.1} parent=1 // pred_check
      _
    $region67: #{fedavg_cnn_forward.1} parent=1 // pred_check_branch
      %7686 = sbr.rel (0) target = $region69
    $region68: #{fedavg_cnn_forward.1} parent=1 // pred_region
      %s7688 = ssub.s32 32, 32
      %7689 = vsyncadd [#allocation5], %s7688
      %s7691 = sshll.u32 [#allocation15], 4
      %s7692 = int_to_ptr.vmem [resolvable:$true] %s7691
      %7694 = dma.vmem_to_hbm [thread:$0]  %s7692, 32, %s9, [#allocation5]
    $region69: #{fedavg_cnn_forward.1} parent=1 // pred_fallthru
      _
    // Predicated region
    $region70: #{fedavg_cnn_forward.1} parent=1 // pred_check
      _
    $region71: #{fedavg_cnn_forward.1} parent=1 // pred_check_branch
      %7696 = sbr.rel (0) target = $region73
    $region72: #{fedavg_cnn_forward.1} parent=1 // pred_region
      %7697 = dma.done [#allocation5], 32
    $region73: #{fedavg_cnn_forward.1} parent=1 // pred_fallthru
      _
    %7698 = vsyncpa [#allocation4], 1
    %7699 = vsyncpa [#allocation7], 1
    %7700 = vsyncpa [#allocation10], 1
    %7701 = vsyncpa [#allocation13], 1
    %7702 = vsyncpa [#allocation5], 1

</llo_original>
